<compile_context>
chip_gen: v7x
topology: tpu7x:2x2x1
jax: 0.10.0
libtpu: 0.0.40
codegen_flags: <defaults>
</compile_context>

<pallas_src>
import functools
import jax
import jax.numpy as jnp
from jax.experimental import pallas as pl
from jax.experimental.pallas import tpu as pltpu


def _round_up(x, m):
    return (x + m - 1) // m * m


# ----------------------------- Pallas kernel --------------------------------
def _mm_fused_kernel(*refs, has_residual, relu, softmax):
    if has_residual:
        a_ref, b_ref, bias_ref, res_ref, o_ref, acc_ref = refs
    else:
        a_ref, b_ref, bias_ref, o_ref, acc_ref = refs
        res_ref = None

    k = pl.program_id(2)

    @pl.when(k == 0)
    def _():
        acc_ref[...] = jnp.zeros_like(acc_ref)

    # bf16 x bf16 on the MXU, f32 accumulation into the VMEM scratch.
    acc_ref[...] += jnp.dot(a_ref[...], b_ref[...],
                            preferred_element_type=jnp.float32)

    @pl.when(k == pl.num_programs(2) - 1)
    def _():
        out = acc_ref[...] + bias_ref[...]
        if res_ref is not None:
            out = out + res_ref[...].astype(jnp.float32)
        if relu:
            out = jnp.maximum(out, 0.0)
        if softmax:
            m = jnp.max(out, axis=-1, keepdims=True)
            e = jnp.exp(out - m)
            s = jnp.sum(e, axis=-1, keepdims=True)
            out = e * pl.reciprocal(s, approx=True)
        o_ref[...] = out.astype(o_ref.dtype)


def fused_matmul(a, b, bias, residual=None, relu=False, softmax=False,
                 out_dtype=jnp.bfloat16):
    """epilogue((a @ b) + bias [+ residual]) with bf16 MXU inputs, f32 acc."""
    M, K = a.shape
    K2, N = b.shape
    assert K == K2

    # ---- pad N to a lane-dense multiple of 128 (weights/bias are constants
    #      under jit -> padding is constant-folded). -1e30 bias masks padded
    #      logits out of the softmax head. ----
    Np = max(128, _round_up(N, 128))
    if Np != N:
        b = jnp.pad(b, ((0, 0), (0, Np - N)))
        pad_val = -1e30 if softmax else 0.0
        bias = jnp.pad(bias, (0, Np - N), constant_values=pad_val)
        if residual is not None:
            residual = jnp.pad(residual, ((0, 0), (0, Np - N)))

    # ---- M tiling: at least 2 row tiles when M >= 64 so the megacore
    #      'parallel' grid axis can use a second TensorCore. ----
    if M >= 256:
        TM = 128
    elif M >= 64:
        TM = _round_up(M, 16) // 2
    else:
        TM = _round_up(M, 8)
    Mp = _round_up(M, TM)
    if Mp != M:
        a = jnp.pad(a, ((0, Mp - M), (0, 0)))
        if residual is not None:
            residual = jnp.pad(residual, ((0, Mp - M), (0, 0)))

    # ---- K tiling only when K is large (keeps B tiles inside VMEM budget). ----
    if K > 1024:
        TK = 512
        Kp = _round_up(K, TK)
        if Kp != K:
            a = jnp.pad(a, ((0, 0), (0, Kp - K)))
            b = jnp.pad(b, ((0, Kp - K), (0, 0)))
    else:
        TK, Kp = K, K

    # ---- N tiling for large channel counts. ----
    if Np > 512:
        TN = 512 if Np % 512 == 0 else (256 if Np % 256 == 0 else 128)
    else:
        TN = Np
    if softmax:
        assert TN == Np, "softmax epilogue needs the full N axis in one tile"

    a = a.astype(jnp.bfloat16)
    b = b.astype(jnp.bfloat16)
    bias = bias.reshape(1, Np).astype(jnp.float32)

    in_specs = [
        pl.BlockSpec((TM, TK), lambda i, j, k: (i, k)),   # A tile
        pl.BlockSpec((TK, TN), lambda i, j, k: (k, j)),   # B tile
        pl.BlockSpec((1, TN), lambda i, j, k: (0, j)),    # fused BN bias
    ]
    operands = [a, b, bias]
    if residual is not None:
        in_specs.append(pl.BlockSpec((TM, TN), lambda i, j, k: (i, j)))
        operands.append(residual.astype(jnp.bfloat16))

    kernel = functools.partial(_mm_fused_kernel,
                               has_residual=residual is not None,
                               relu=relu, softmax=softmax)
    out = pl.pallas_call(
        kernel,
        out_shape=jax.ShapeDtypeStruct((Mp, Np), out_dtype),
        grid=(Mp // TM, Np // TN, Kp // TK),
        in_specs=in_specs,
        out_specs=pl.BlockSpec((TM, TN), lambda i, j, k: (i, j)),
        scratch_shapes=[pltpu.VMEM((TM, TN), jnp.float32)],
        compiler_params=pltpu.CompilerParams(
            dimension_semantics=("parallel", "parallel", "arbitrary"),
            vmem_limit_bytes=32 * 1024 * 1024),
    )(*operands)

    if Mp != M or Np != N:
        out = out[:M, :N]
    return out


# ------------------------------ conv helpers ---------------------------------
def im2col(x, kh, kw, stride, pad):
    """x: (N,H,W,C) -> patches (N*OH*OW, kh*kw*C), OH, OW."""
    if pad > 0:
        x = jnp.pad(x, ((0, 0), (pad, pad), (pad, pad), (0, 0)))
    N, H, W, C = x.shape
    oh = (H - kh) // stride + 1
    ow = (W - kw) // stride + 1
    cols = []
    for i in range(kh):
        for j in range(kw):
            cols.append(x[:, i:i + stride * (oh - 1) + 1:stride,
                          j:j + stride * (ow - 1) + 1:stride, :])
    patches = jnp.stack(cols, axis=3)           # (N, oh, ow, kh*kw, C)
    return patches.reshape(N * oh * ow, kh * kw * C), oh, ow


def conv_bn(x, w, bn, stride=1, padding=0, relu=False, residual=None):
    """Conv2d(bias=False) + BatchNorm (eval) [+ residual] [+ ReLU], NHWC bf16.
    w is PyTorch-layout (O, I, KH, KW); BN scale is folded into w."""
    O, I, KH, KW = w.shape
    n = x.shape[0]
    if KH == 1 and KW == 1:
        # 1x1 conv: no im2col materialization, just (strided) reshape.
        assert padding == 0
        if stride > 1:
            x = x[:, ::stride, ::stride, :]
        _, oh, ow, _ = x.shape
        a = x.reshape(n * oh * ow, I)
    else:
        # TODO(synk): fold the 3x3 taps into the kernel's K reduction grid
        # instead of materializing the 9x im2col patch tensor in HBM.
        a, oh, ow = im2col(x, KH, KW, stride, padding)

    gamma, beta, mean, var, eps = bn
    scale = gamma / jnp.sqrt(var + eps)
    bias = beta - mean * scale
    # Fold BN scale into the weight matrix (constant-folded under jit).
    b = jnp.transpose(w, (2, 3, 1, 0)).reshape(KH * KW * I, O) * scale[None, :]
    res = None if residual is None else residual.reshape(-1, O)
    out = fused_matmul(a, b, bias, residual=res, relu=relu,
                       out_dtype=jnp.bfloat16)
    return out.reshape(n, oh, ow, O)


# ---------------------------- parameter init ---------------------------------
def _key_iter(key):
    while True:
        key, sub = jax.random.split(key)
        yield sub


def kaiming_conv(key, o, i, kh, kw):
    # kaiming_normal_, mode='fan_out', nonlinearity='relu'
    fan_out = o * kh * kw
    std = (2.0 / fan_out) ** 0.5
    return jax.random.normal(key, (o, i, kh, kw), jnp.float32) * std


def bn_params(c):
    # PyTorch defaults: gamma=1, beta=0, running_mean=0, running_var=1
    return (jnp.ones((c,), jnp.float32), jnp.zeros((c,), jnp.float32),
            jnp.zeros((c,), jnp.float32), jnp.ones((c,), jnp.float32), 1e-5)


def make_bottleneck_params(keys, inplanes, planes, stride, expansion=4):
    width = planes
    p = {
        "conv1_w": kaiming_conv(next(keys), width, inplanes, 1, 1),
        "bn1": bn_params(width),
        "conv2_w": kaiming_conv(next(keys), width, width, 3, 3),
        "bn2": bn_params(width),
        "conv3_w": kaiming_conv(next(keys), planes * expansion, width, 1, 1),
        "bn3": bn_params(planes * expansion),
    }
    if stride != 1 or inplanes != planes * expansion:
        p["down_w"] = kaiming_conv(next(keys), planes * expansion, inplanes, 1, 1)
        p["down_bn"] = bn_params(planes * expansion)
    return p


def make_params(key, layers=(2, 2, 2), num_classes=15, expansion=4):
    keys = _key_iter(key)
    params = {}
    inplanes = 16
    params["conv1_w"] = kaiming_conv(next(keys), inplanes, 1, 3, 3)  # channels=1
    params["bn1"] = bn_params(inplanes)
    for li, (planes, nblocks, stride) in enumerate(
            zip((16, 32, 64), layers, (1, 2, 2)), start=1):
        blocks = []
        s = stride
        for _ in range(nblocks):
            blocks.append((make_bottleneck_params(keys, inplanes, planes, s,
                                                  expansion), s))
            inplanes = planes * expansion
            s = 1
        params[f"layer{li}"] = blocks
    fan_in = 64 * expansion
    bound = 1.0 / (fan_in ** 0.5)
    params["fc_w"] = jax.random.uniform(next(keys), (num_classes, fan_in),
                                        jnp.float32, -bound, bound)
    params["fc_b"] = jax.random.uniform(next(keys), (num_classes,),
                                        jnp.float32, -bound, bound)
    return params


# ------------------------------ model forward --------------------------------
def bottleneck_forward(x, p, stride):
    identity = x
    out = conv_bn(x, p["conv1_w"], p["bn1"], stride=1, padding=0, relu=True)
    out = conv_bn(out, p["conv2_w"], p["bn2"], stride=stride, padding=1,
                  relu=True)
    if "down_w" in p:
        identity = conv_bn(x, p["down_w"], p["down_bn"], stride=stride,
                           padding=0, relu=False)
    # conv3 + bn3 + residual add + final ReLU fused in one kernel call
    out = conv_bn(out, p["conv3_w"], p["bn3"], stride=1, padding=0, relu=True,
                  residual=identity)
    return out


def resnet_forward(params, x_nchw):
    # NCHW -> NHWC, bf16 activations throughout the conv trunk.
    x = jnp.transpose(x_nchw, (0, 2, 3, 1)).astype(jnp.bfloat16)
    x = conv_bn(x, params["conv1_w"], params["bn1"], stride=1, padding=1,
                relu=True)
    for lname in ("layer1", "layer2", "layer3"):
        for bp, stride in params[lname]:
            x = bottleneck_forward(x, bp, stride)
        # nn.Dropout(0.5) is identity in eval mode
    # AdaptiveAvgPool2d((1,1)) -> global mean (tiny; done as JAX glue)
    x_f = jnp.mean(x.astype(jnp.float32), axis=(1, 2))        # (N, 64*exp)
    # USLinear + Softmax(dim=1) fused in the Pallas kernel epilogue
    probs = fused_matmul(x_f, params["fc_w"].T, params["fc_b"],
                         relu=False, softmax=True, out_dtype=jnp.float32)
    return probs


# ---------------------------------- main --------------------------------------
if __name__ == "__main__":
    key = jax.random.PRNGKey(0)
    kparam, kx = jax.random.split(key)
    # Small Bottleneck config (layers=[2,2,2]); a true ResNet50-depth stack is
    # just more blocks of the same fused kernel.
    params = make_params(kparam, layers=(2, 2, 2), num_classes=15)
    # Module declares self.channels = 1 -> input (N, 1, H, W)
    x = jax.random.normal(kx, (2, 1, 16, 16), jnp.float32)

    # jit with params closed over so BN folding / weight padding / bf16 casts
    # are constant-folded once at compile time.
    fwd = jax.jit(lambda inp: resnet_forward(params, inp))
    out = jax.block_until_ready(fwd(x))

    assert out.shape == (2, 15)
    assert bool(jnp.all(jnp.isfinite(out)))
    # softmax rows sum to ~1 (approx reciprocal in the epilogue)
    assert bool(jnp.allclose(jnp.sum(out, axis=1), 1.0, atol=5e-3))
    print("KERNEL_OK")
</pallas_src>

<mosaic_0001>
module attributes {stable_mosaic.version = 11 : i64} {
  func.func @_mm_fused_kernel(%arg0: i32, %arg1: i32, %arg2: i32, %arg3: memref<128x9xbf16, #tpu.memory_space<vmem>>, %arg4: memref<9x128xbf16, #tpu.memory_space<vmem>>, %arg5: memref<1x128xf32, #tpu.memory_space<vmem>>, %arg6: memref<128x128xbf16, #tpu.memory_space<vmem>>, %arg7: memref<128x128xf32, #tpu.memory_space<vmem>>) attributes {dimension_semantics = [#tpu.dimension_semantics<parallel>, #tpu.dimension_semantics<parallel>, #tpu.dimension_semantics<arbitrary>], iteration_bounds = array<i64: 4, 1, 1>, scalar_prefetch = 0 : i64, scratch_operands = 1 : i64, tpu.core_type = #tpu.core_type<tc>, window_params = [{transform_indices = @transform_0, window_bounds = array<i64: 128, 9>}, {transform_indices = @transform_1, window_bounds = array<i64: 9, 128>}, {transform_indices = @transform_2, window_bounds = array<i64: 1, 128>}, {transform_indices = @transform_3, window_bounds = array<i64: 128, 128>}]} {
    %c0_i32 = arith.constant 0 : i32
    %0 = arith.cmpi eq, %arg2, %c0_i32 : i32
    %1 = arith.extui %0 : i1 to i32
    %c0_i32_0 = arith.constant 0 : i32
    %2 = arith.cmpi ne, %1, %c0_i32_0 : i32
    scf.if %2 {
      %cst_10 = arith.constant 0.000000e+00 : f32
      %12 = vector.broadcast %cst_10 : f32 to vector<128x128xf32>
      %c0_11 = arith.constant 0 : index
      %c0_12 = arith.constant 0 : index
      %13 = vector.load %arg7[%c0_11, %c0_12] : memref<128x128xf32, #tpu.memory_space<vmem>>, vector<128x128xf32>
      tpu.vector_store %arg7[%c0_11, %c0_12], %12 {strides = array<i32>} : memref<128x128xf32, #tpu.memory_space<vmem>>, vector<128x128xf32>,
    } else {
    }
    %c0 = arith.constant 0 : index
    %c0_1 = arith.constant 0 : index
    %3 = vector.load %arg7[%c0, %c0_1] : memref<128x128xf32, #tpu.memory_space<vmem>>, vector<128x128xf32>
    %c0_2 = arith.constant 0 : index
    %c0_3 = arith.constant 0 : index
    %4 = vector.load %arg3[%c0_2, %c0_3] : memref<128x9xbf16, #tpu.memory_space<vmem>>, vector<128x9xbf16>
    %c0_4 = arith.constant 0 : index
    %c0_5 = arith.constant 0 : index
    %5 = vector.load %arg4[%c0_4, %c0_5] : memref<9x128xbf16, #tpu.memory_space<vmem>>, vector<9x128xbf16>
    %cst = arith.constant dense<0.000000e+00> : vector<128x128xf32>
    %6 = tpu.matmul %4, %5, %cst {dimension_numbers = #tpu.dot_dimension_numbers<[1], [0], [0], [1], [0, 0, 1, 1], [], []>} : vector<128x9xbf16>, vector<9x128xbf16>, vector<128x128xf32> -> vector<128x128xf32>
    %7 = arith.addf %3, %6 : vector<128x128xf32>
    %c0_6 = arith.constant 0 : index
    %c0_7 = arith.constant 0 : index
    %8 = vector.load %arg7[%c0_6, %c0_7] : memref<128x128xf32, #tpu.memory_space<vmem>>, vector<128x128xf32>
    tpu.vector_store %arg7[%c0_6, %c0_7], %7 {strides = array<i32>} : memref<128x128xf32, #tpu.memory_space<vmem>>, vector<128x128xf32>,
    %c0_i32_8 = arith.constant 0 : i32
    %9 = arith.cmpi eq, %arg2, %c0_i32_8 : i32
    %10 = arith.extui %9 : i1 to i32
    %c0_i32_9 = arith.constant 0 : i32
    %11 = arith.cmpi ne, %10, %c0_i32_9 : i32
    scf.if %11 {
      %c0_10 = arith.constant 0 : index
      %c0_11 = arith.constant 0 : index
      %12 = vector.load %arg7[%c0_10, %c0_11] : memref<128x128xf32, #tpu.memory_space<vmem>>, vector<128x128xf32>
      %c0_12 = arith.constant 0 : index
      %c0_13 = arith.constant 0 : index
      %13 = vector.load %arg5[%c0_12, %c0_13] : memref<1x128xf32, #tpu.memory_space<vmem>>, vector<1x128xf32>
      %14 = vector.broadcast %13 : vector<1x128xf32> to vector<128x128xf32>
      %15 = arith.addf %12, %14 : vector<128x128xf32>
      %cst_14 = arith.constant 0.000000e+00 : f32
      %16 = vector.broadcast %cst_14 : f32 to vector<128x128xf32>
      %17 = arith.maximumf %15, %16 : vector<128x128xf32>
      %18 = arith.truncf %17 : vector<128x128xf32> to vector<128x128xbf16>
      %c0_15 = arith.constant 0 : index
      %c0_16 = arith.constant 0 : index
      %19 = vector.load %arg6[%c0_15, %c0_16] : memref<128x128xbf16, #tpu.memory_space<vmem>>, vector<128x128xbf16>
      tpu.vector_store %arg6[%c0_15, %c0_16], %18 {strides = array<i32>} : memref<128x128xbf16, #tpu.memory_space<vmem>>, vector<128x128xbf16>,
    } else {
    }
    return
  }
  func.func @transform_0(%arg0: i32, %arg1: i32, %arg2: i32) -> (i32, i32) {
    %c0_i32 = arith.constant 0 : i32
    return %arg0, %arg2 : i32, i32
  }
  func.func @transform_1(%arg0: i32, %arg1: i32, %arg2: i32) -> (i32, i32) {
    %c0_i32 = arith.constant 0 : i32
    return %arg2, %arg1 : i32, i32
  }
  func.func @transform_2(%arg0: i32, %arg1: i32, %arg2: i32) -> (i32, i32) {
    %c0_i32 = arith.constant 0 : i32
    %c0_i32_0 = arith.constant 0 : i32
    return %c0_i32, %arg1 : i32, i32
  }
  func.func @transform_3(%arg0: i32, %arg1: i32, %arg2: i32) -> (i32, i32) {
    %c0_i32 = arith.constant 0 : i32
    return %arg0, %arg1 : i32, i32
  }
}

module attributes {stable_mosaic.version = 11 : i64} {
  func.func @_mm_fused_kernel(%arg0: i32, %arg1: i32, %arg2: i32, %arg3: memref<128x16xbf16, #tpu.memory_space<vmem>>, %arg4: memref<16x128xbf16, #tpu.memory_space<vmem>>, %arg5: memref<1x128xf32, #tpu.memory_space<vmem>>, %arg6: memref<128x128xbf16, #tpu.memory_space<vmem>>, %arg7: memref<128x128xf32, #tpu.memory_space<vmem>>) attributes {dimension_semantics = [#tpu.dimension_semantics<parallel>, #tpu.dimension_semantics<parallel>, #tpu.dimension_semantics<arbitrary>], iteration_bounds = array<i64: 4, 1, 1>, scalar_prefetch = 0 : i64, scratch_operands = 1 : i64, tpu.core_type = #tpu.core_type<tc>, window_params = [{transform_indices = @transform_0, window_bounds = array<i64: 128, 16>}, {transform_indices = @transform_1, window_bounds = array<i64: 16, 128>}, {transform_indices = @transform_2, window_bounds = array<i64: 1, 128>}, {transform_indices = @transform_3, window_bounds = array<i64: 128, 128>}]} {
    %c0_i32 = arith.constant 0 : i32
    %0 = arith.cmpi eq, %arg2, %c0_i32 : i32
    %1 = arith.extui %0 : i1 to i32
    %c0_i32_0 = arith.constant 0 : i32
    %2 = arith.cmpi ne, %1, %c0_i32_0 : i32
    scf.if %2 {
      %cst_10 = arith.constant 0.000000e+00 : f32
      %12 = vector.broadcast %cst_10 : f32 to vector<128x128xf32>
      %c0_11 = arith.constant 0 : index
      %c0_12 = arith.constant 0 : index
      %13 = vector.load %arg7[%c0_11, %c0_12] : memref<128x128xf32, #tpu.memory_space<vmem>>, vector<128x128xf32>
      tpu.vector_store %arg7[%c0_11, %c0_12], %12 {strides = array<i32>} : memref<128x128xf32, #tpu.memory_space<vmem>>, vector<128x128xf32>,
    } else {
    }
    %c0 = arith.constant 0 : index
    %c0_1 = arith.constant 0 : index
    %3 = vector.load %arg7[%c0, %c0_1] : memref<128x128xf32, #tpu.memory_space<vmem>>, vector<128x128xf32>
    %c0_2 = arith.constant 0 : index
    %c0_3 = arith.constant 0 : index
    %4 = vector.load %arg3[%c0_2, %c0_3] : memref<128x16xbf16, #tpu.memory_space<vmem>>, vector<128x16xbf16>
    %c0_4 = arith.constant 0 : index
    %c0_5 = arith.constant 0 : index
    %5 = vector.load %arg4[%c0_4, %c0_5] : memref<16x128xbf16, #tpu.memory_space<vmem>>, vector<16x128xbf16>
    %cst = arith.constant dense<0.000000e+00> : vector<128x128xf32>
    %6 = tpu.matmul %4, %5, %cst {dimension_numbers = #tpu.dot_dimension_numbers<[1], [0], [0], [1], [0, 0, 1, 1], [], []>} : vector<128x16xbf16>, vector<16x128xbf16>, vector<128x128xf32> -> vector<128x128xf32>
    %7 = arith.addf %3, %6 : vector<128x128xf32>
    %c0_6 = arith.constant 0 : index
    %c0_7 = arith.constant 0 : index
    %8 = vector.load %arg7[%c0_6, %c0_7] : memref<128x128xf32, #tpu.memory_space<vmem>>, vector<128x128xf32>
    tpu.vector_store %arg7[%c0_6, %c0_7], %7 {strides = array<i32>} : memref<128x128xf32, #tpu.memory_space<vmem>>, vector<128x128xf32>,
    %c0_i32_8 = arith.constant 0 : i32
    %9 = arith.cmpi eq, %arg2, %c0_i32_8 : i32
    %10 = arith.extui %9 : i1 to i32
    %c0_i32_9 = arith.constant 0 : i32
    %11 = arith.cmpi ne, %10, %c0_i32_9 : i32
    scf.if %11 {
      %c0_10 = arith.constant 0 : index
      %c0_11 = arith.constant 0 : index
      %12 = vector.load %arg7[%c0_10, %c0_11] : memref<128x128xf32, #tpu.memory_space<vmem>>, vector<128x128xf32>
      %c0_12 = arith.constant 0 : index
      %c0_13 = arith.constant 0 : index
      %13 = vector.load %arg5[%c0_12, %c0_13] : memref<1x128xf32, #tpu.memory_space<vmem>>, vector<1x128xf32>
      %14 = vector.broadcast %13 : vector<1x128xf32> to vector<128x128xf32>
      %15 = arith.addf %12, %14 : vector<128x128xf32>
      %cst_14 = arith.constant 0.000000e+00 : f32
      %16 = vector.broadcast %cst_14 : f32 to vector<128x128xf32>
      %17 = arith.maximumf %15, %16 : vector<128x128xf32>
      %18 = arith.truncf %17 : vector<128x128xf32> to vector<128x128xbf16>
      %c0_15 = arith.constant 0 : index
      %c0_16 = arith.constant 0 : index
      %19 = vector.load %arg6[%c0_15, %c0_16] : memref<128x128xbf16, #tpu.memory_space<vmem>>, vector<128x128xbf16>
      tpu.vector_store %arg6[%c0_15, %c0_16], %18 {strides = array<i32>} : memref<128x128xbf16, #tpu.memory_space<vmem>>, vector<128x128xbf16>,
    } else {
    }
    return
  }
  func.func @transform_0(%arg0: i32, %arg1: i32, %arg2: i32) -> (i32, i32) {
    %c0_i32 = arith.constant 0 : i32
    return %arg0, %arg2 : i32, i32
  }
  func.func @transform_1(%arg0: i32, %arg1: i32, %arg2: i32) -> (i32, i32) {
    %c0_i32 = arith.constant 0 : i32
    return %arg2, %arg1 : i32, i32
  }
  func.func @transform_2(%arg0: i32, %arg1: i32, %arg2: i32) -> (i32, i32) {
    %c0_i32 = arith.constant 0 : i32
    %c0_i32_0 = arith.constant 0 : i32
    return %c0_i32, %arg1 : i32, i32
  }
  func.func @transform_3(%arg0: i32, %arg1: i32, %arg2: i32) -> (i32, i32) {
    %c0_i32 = arith.constant 0 : i32
    return %arg0, %arg1 : i32, i32
  }
}

module attributes {stable_mosaic.version = 11 : i64} {
  func.func @_mm_fused_kernel(%arg0: i32, %arg1: i32, %arg2: i32, %arg3: memref<128x144xbf16, #tpu.memory_space<vmem>>, %arg4: memref<144x128xbf16, #tpu.memory_space<vmem>>, %arg5: memref<1x128xf32, #tpu.memory_space<vmem>>, %arg6: memref<128x128xbf16, #tpu.memory_space<vmem>>, %arg7: memref<128x128xf32, #tpu.memory_space<vmem>>) attributes {dimension_semantics = [#tpu.dimension_semantics<parallel>, #tpu.dimension_semantics<parallel>, #tpu.dimension_semantics<arbitrary>], iteration_bounds = array<i64: 4, 1, 1>, scalar_prefetch = 0 : i64, scratch_operands = 1 : i64, tpu.core_type = #tpu.core_type<tc>, window_params = [{transform_indices = @transform_0, window_bounds = array<i64: 128, 144>}, {transform_indices = @transform_1, window_bounds = array<i64: 144, 128>}, {transform_indices = @transform_2, window_bounds = array<i64: 1, 128>}, {transform_indices = @transform_3, window_bounds = array<i64: 128, 128>}]} {
    %c0_i32 = arith.constant 0 : i32
    %0 = arith.cmpi eq, %arg2, %c0_i32 : i32
    %1 = arith.extui %0 : i1 to i32
    %c0_i32_0 = arith.constant 0 : i32
    %2 = arith.cmpi ne, %1, %c0_i32_0 : i32
    scf.if %2 {
      %cst_10 = arith.constant 0.000000e+00 : f32
      %12 = vector.broadcast %cst_10 : f32 to vector<128x128xf32>
      %c0_11 = arith.constant 0 : index
      %c0_12 = arith.constant 0 : index
      %13 = vector.load %arg7[%c0_11, %c0_12] : memref<128x128xf32, #tpu.memory_space<vmem>>, vector<128x128xf32>
      tpu.vector_store %arg7[%c0_11, %c0_12], %12 {strides = array<i32>} : memref<128x128xf32, #tpu.memory_space<vmem>>, vector<128x128xf32>,
    } else {
    }
    %c0 = arith.constant 0 : index
    %c0_1 = arith.constant 0 : index
    %3 = vector.load %arg7[%c0, %c0_1] : memref<128x128xf32, #tpu.memory_space<vmem>>, vector<128x128xf32>
    %c0_2 = arith.constant 0 : index
    %c0_3 = arith.constant 0 : index
    %4 = vector.load %arg3[%c0_2, %c0_3] : memref<128x144xbf16, #tpu.memory_space<vmem>>, vector<128x144xbf16>
    %c0_4 = arith.constant 0 : index
    %c0_5 = arith.constant 0 : index
    %5 = vector.load %arg4[%c0_4, %c0_5] : memref<144x128xbf16, #tpu.memory_space<vmem>>, vector<144x128xbf16>
    %cst = arith.constant dense<0.000000e+00> : vector<128x128xf32>
    %6 = tpu.matmul %4, %5, %cst {dimension_numbers = #tpu.dot_dimension_numbers<[1], [0], [0], [1], [0, 0, 1, 1], [], []>} : vector<128x144xbf16>, vector<144x128xbf16>, vector<128x128xf32> -> vector<128x128xf32>
    %7 = arith.addf %3, %6 : vector<128x128xf32>
    %c0_6 = arith.constant 0 : index
    %c0_7 = arith.constant 0 : index
    %8 = vector.load %arg7[%c0_6, %c0_7] : memref<128x128xf32, #tpu.memory_space<vmem>>, vector<128x128xf32>
    tpu.vector_store %arg7[%c0_6, %c0_7], %7 {strides = array<i32>} : memref<128x128xf32, #tpu.memory_space<vmem>>, vector<128x128xf32>,
    %c0_i32_8 = arith.constant 0 : i32
    %9 = arith.cmpi eq, %arg2, %c0_i32_8 : i32
    %10 = arith.extui %9 : i1 to i32
    %c0_i32_9 = arith.constant 0 : i32
    %11 = arith.cmpi ne, %10, %c0_i32_9 : i32
    scf.if %11 {
      %c0_10 = arith.constant 0 : index
      %c0_11 = arith.constant 0 : index
      %12 = vector.load %arg7[%c0_10, %c0_11] : memref<128x128xf32, #tpu.memory_space<vmem>>, vector<128x128xf32>
      %c0_12 = arith.constant 0 : index
      %c0_13 = arith.constant 0 : index
      %13 = vector.load %arg5[%c0_12, %c0_13] : memref<1x128xf32, #tpu.memory_space<vmem>>, vector<1x128xf32>
      %14 = vector.broadcast %13 : vector<1x128xf32> to vector<128x128xf32>
      %15 = arith.addf %12, %14 : vector<128x128xf32>
      %cst_14 = arith.constant 0.000000e+00 : f32
      %16 = vector.broadcast %cst_14 : f32 to vector<128x128xf32>
      %17 = arith.maximumf %15, %16 : vector<128x128xf32>
      %18 = arith.truncf %17 : vector<128x128xf32> to vector<128x128xbf16>
      %c0_15 = arith.constant 0 : index
      %c0_16 = arith.constant 0 : index
      %19 = vector.load %arg6[%c0_15, %c0_16] : memref<128x128xbf16, #tpu.memory_space<vmem>>, vector<128x128xbf16>
      tpu.vector_store %arg6[%c0_15, %c0_16], %18 {strides = array<i32>} : memref<128x128xbf16, #tpu.memory_space<vmem>>, vector<128x128xbf16>,
    } else {
    }
    return
  }
  func.func @transform_0(%arg0: i32, %arg1: i32, %arg2: i32) -> (i32, i32) {
    %c0_i32 = arith.constant 0 : i32
    return %arg0, %arg2 : i32, i32
  }
  func.func @transform_1(%arg0: i32, %arg1: i32, %arg2: i32) -> (i32, i32) {
    %c0_i32 = arith.constant 0 : i32
    return %arg2, %arg1 : i32, i32
  }
  func.func @transform_2(%arg0: i32, %arg1: i32, %arg2: i32) -> (i32, i32) {
    %c0_i32 = arith.constant 0 : i32
    %c0_i32_0 = arith.constant 0 : i32
    return %c0_i32, %arg1 : i32, i32
  }
  func.func @transform_3(%arg0: i32, %arg1: i32, %arg2: i32) -> (i32, i32) {
    %c0_i32 = arith.constant 0 : i32
    return %arg0, %arg1 : i32, i32
  }
}

module attributes {stable_mosaic.version = 11 : i64} {
  func.func @_mm_fused_kernel(%arg0: i32, %arg1: i32, %arg2: i32, %arg3: memref<128x16xbf16, #tpu.memory_space<vmem>>, %arg4: memref<16x128xbf16, #tpu.memory_space<vmem>>, %arg5: memref<1x128xf32, #tpu.memory_space<vmem>>, %arg6: memref<128x128xbf16, #tpu.memory_space<vmem>>, %arg7: memref<128x128xf32, #tpu.memory_space<vmem>>) attributes {dimension_semantics = [#tpu.dimension_semantics<parallel>, #tpu.dimension_semantics<parallel>, #tpu.dimension_semantics<arbitrary>], iteration_bounds = array<i64: 4, 1, 1>, scalar_prefetch = 0 : i64, scratch_operands = 1 : i64, tpu.core_type = #tpu.core_type<tc>, window_params = [{transform_indices = @transform_0, window_bounds = array<i64: 128, 16>}, {transform_indices = @transform_1, window_bounds = array<i64: 16, 128>}, {transform_indices = @transform_2, window_bounds = array<i64: 1, 128>}, {transform_indices = @transform_3, window_bounds = array<i64: 128, 128>}]} {
    %c0_i32 = arith.constant 0 : i32
    %0 = arith.cmpi eq, %arg2, %c0_i32 : i32
    %1 = arith.extui %0 : i1 to i32
    %c0_i32_0 = arith.constant 0 : i32
    %2 = arith.cmpi ne, %1, %c0_i32_0 : i32
    scf.if %2 {
      %cst_10 = arith.constant 0.000000e+00 : f32
      %12 = vector.broadcast %cst_10 : f32 to vector<128x128xf32>
      %c0_11 = arith.constant 0 : index
      %c0_12 = arith.constant 0 : index
      %13 = vector.load %arg7[%c0_11, %c0_12] : memref<128x128xf32, #tpu.memory_space<vmem>>, vector<128x128xf32>
      tpu.vector_store %arg7[%c0_11, %c0_12], %12 {strides = array<i32>} : memref<128x128xf32, #tpu.memory_space<vmem>>, vector<128x128xf32>,
    } else {
    }
    %c0 = arith.constant 0 : index
    %c0_1 = arith.constant 0 : index
    %3 = vector.load %arg7[%c0, %c0_1] : memref<128x128xf32, #tpu.memory_space<vmem>>, vector<128x128xf32>
    %c0_2 = arith.constant 0 : index
    %c0_3 = arith.constant 0 : index
    %4 = vector.load %arg3[%c0_2, %c0_3] : memref<128x16xbf16, #tpu.memory_space<vmem>>, vector<128x16xbf16>
    %c0_4 = arith.constant 0 : index
    %c0_5 = arith.constant 0 : index
    %5 = vector.load %arg4[%c0_4, %c0_5] : memref<16x128xbf16, #tpu.memory_space<vmem>>, vector<16x128xbf16>
    %cst = arith.constant dense<0.000000e+00> : vector<128x128xf32>
    %6 = tpu.matmul %4, %5, %cst {dimension_numbers = #tpu.dot_dimension_numbers<[1], [0], [0], [1], [0, 0, 1, 1], [], []>} : vector<128x16xbf16>, vector<16x128xbf16>, vector<128x128xf32> -> vector<128x128xf32>
    %7 = arith.addf %3, %6 : vector<128x128xf32>
    %c0_6 = arith.constant 0 : index
    %c0_7 = arith.constant 0 : index
    %8 = vector.load %arg7[%c0_6, %c0_7] : memref<128x128xf32, #tpu.memory_space<vmem>>, vector<128x128xf32>
    tpu.vector_store %arg7[%c0_6, %c0_7], %7 {strides = array<i32>} : memref<128x128xf32, #tpu.memory_space<vmem>>, vector<128x128xf32>,
    %c0_i32_8 = arith.constant 0 : i32
    %9 = arith.cmpi eq, %arg2, %c0_i32_8 : i32
    %10 = arith.extui %9 : i1 to i32
    %c0_i32_9 = arith.constant 0 : i32
    %11 = arith.cmpi ne, %10, %c0_i32_9 : i32
    scf.if %11 {
      %c0_10 = arith.constant 0 : index
      %c0_11 = arith.constant 0 : index
      %12 = vector.load %arg7[%c0_10, %c0_11] : memref<128x128xf32, #tpu.memory_space<vmem>>, vector<128x128xf32>
      %c0_12 = arith.constant 0 : index
      %c0_13 = arith.constant 0 : index
      %13 = vector.load %arg5[%c0_12, %c0_13] : memref<1x128xf32, #tpu.memory_space<vmem>>, vector<1x128xf32>
      %14 = vector.broadcast %13 : vector<1x128xf32> to vector<128x128xf32>
      %15 = arith.addf %12, %14 : vector<128x128xf32>
      %16 = arith.truncf %15 : vector<128x128xf32> to vector<128x128xbf16>
      %c0_14 = arith.constant 0 : index
      %c0_15 = arith.constant 0 : index
      %17 = vector.load %arg6[%c0_14, %c0_15] : memref<128x128xbf16, #tpu.memory_space<vmem>>, vector<128x128xbf16>
      tpu.vector_store %arg6[%c0_14, %c0_15], %16 {strides = array<i32>} : memref<128x128xbf16, #tpu.memory_space<vmem>>, vector<128x128xbf16>,
    } else {
    }
    return
  }
  func.func @transform_0(%arg0: i32, %arg1: i32, %arg2: i32) -> (i32, i32) {
    %c0_i32 = arith.constant 0 : i32
    return %arg0, %arg2 : i32, i32
  }
  func.func @transform_1(%arg0: i32, %arg1: i32, %arg2: i32) -> (i32, i32) {
    %c0_i32 = arith.constant 0 : i32
    return %arg2, %arg1 : i32, i32
  }
  func.func @transform_2(%arg0: i32, %arg1: i32, %arg2: i32) -> (i32, i32) {
    %c0_i32 = arith.constant 0 : i32
    %c0_i32_0 = arith.constant 0 : i32
    return %c0_i32, %arg1 : i32, i32
  }
  func.func @transform_3(%arg0: i32, %arg1: i32, %arg2: i32) -> (i32, i32) {
    %c0_i32 = arith.constant 0 : i32
    return %arg0, %arg1 : i32, i32
  }
}

module attributes {stable_mosaic.version = 11 : i64} {
  func.func @_mm_fused_kernel(%arg0: i32, %arg1: i32, %arg2: i32, %arg3: memref<128x16xbf16, #tpu.memory_space<vmem>>, %arg4: memref<16x128xbf16, #tpu.memory_space<vmem>>, %arg5: memref<1x128xf32, #tpu.memory_space<vmem>>, %arg6: memref<128x128xbf16, #tpu.memory_space<vmem>>, %arg7: memref<128x128xbf16, #tpu.memory_space<vmem>>, %arg8: memref<128x128xf32, #tpu.memory_space<vmem>>) attributes {dimension_semantics = [#tpu.dimension_semantics<parallel>, #tpu.dimension_semantics<parallel>, #tpu.dimension_semantics<arbitrary>], iteration_bounds = array<i64: 4, 1, 1>, scalar_prefetch = 0 : i64, scratch_operands = 1 : i64, tpu.core_type = #tpu.core_type<tc>, window_params = [{transform_indices = @transform_0, window_bounds = array<i64: 128, 16>}, {transform_indices = @transform_1, window_bounds = array<i64: 16, 128>}, {transform_indices = @transform_2, window_bounds = array<i64: 1, 128>}, {transform_indices = @transform_3, window_bounds = array<i64: 128, 128>}, {transform_indices = @transform_4, window_bounds = array<i64: 128, 128>}]} {
    %c0_i32 = arith.constant 0 : i32
    %0 = arith.cmpi eq, %arg2, %c0_i32 : i32
    %1 = arith.extui %0 : i1 to i32
    %c0_i32_0 = arith.constant 0 : i32
    %2 = arith.cmpi ne, %1, %c0_i32_0 : i32
    scf.if %2 {
      %cst_10 = arith.constant 0.000000e+00 : f32
      %12 = vector.broadcast %cst_10 : f32 to vector<128x128xf32>
      %c0_11 = arith.constant 0 : index
      %c0_12 = arith.constant 0 : index
      %13 = vector.load %arg8[%c0_11, %c0_12] : memref<128x128xf32, #tpu.memory_space<vmem>>, vector<128x128xf32>
      tpu.vector_store %arg8[%c0_11, %c0_12], %12 {strides = array<i32>} : memref<128x128xf32, #tpu.memory_space<vmem>>, vector<128x128xf32>,
    } else {
    }
    %c0 = arith.constant 0 : index
    %c0_1 = arith.constant 0 : index
    %3 = vector.load %arg8[%c0, %c0_1] : memref<128x128xf32, #tpu.memory_space<vmem>>, vector<128x128xf32>
    %c0_2 = arith.constant 0 : index
    %c0_3 = arith.constant 0 : index
    %4 = vector.load %arg3[%c0_2, %c0_3] : memref<128x16xbf16, #tpu.memory_space<vmem>>, vector<128x16xbf16>
    %c0_4 = arith.constant 0 : index
    %c0_5 = arith.constant 0 : index
    %5 = vector.load %arg4[%c0_4, %c0_5] : memref<16x128xbf16, #tpu.memory_space<vmem>>, vector<16x128xbf16>
    %cst = arith.constant dense<0.000000e+00> : vector<128x128xf32>
    %6 = tpu.matmul %4, %5, %cst {dimension_numbers = #tpu.dot_dimension_numbers<[1], [0], [0], [1], [0, 0, 1, 1], [], []>} : vector<128x16xbf16>, vector<16x128xbf16>, vector<128x128xf32> -> vector<128x128xf32>
    %7 = arith.addf %3, %6 : vector<128x128xf32>
    %c0_6 = arith.constant 0 : index
    %c0_7 = arith.constant 0 : index
    %8 = vector.load %arg8[%c0_6, %c0_7] : memref<128x128xf32, #tpu.memory_space<vmem>>, vector<128x128xf32>
    tpu.vector_store %arg8[%c0_6, %c0_7], %7 {strides = array<i32>} : memref<128x128xf32, #tpu.memory_space<vmem>>, vector<128x128xf32>,
    %c0_i32_8 = arith.constant 0 : i32
    %9 = arith.cmpi eq, %arg2, %c0_i32_8 : i32
    %10 = arith.extui %9 : i1 to i32
    %c0_i32_9 = arith.constant 0 : i32
    %11 = arith.cmpi ne, %10, %c0_i32_9 : i32
    scf.if %11 {
      %c0_10 = arith.constant 0 : index
      %c0_11 = arith.constant 0 : index
      %12 = vector.load %arg8[%c0_10, %c0_11] : memref<128x128xf32, #tpu.memory_space<vmem>>, vector<128x128xf32>
      %c0_12 = arith.constant 0 : index
      %c0_13 = arith.constant 0 : index
      %13 = vector.load %arg5[%c0_12, %c0_13] : memref<1x128xf32, #tpu.memory_space<vmem>>, vector<1x128xf32>
      %14 = vector.broadcast %13 : vector<1x128xf32> to vector<128x128xf32>
      %15 = arith.addf %12, %14 : vector<128x128xf32>
      %c0_14 = arith.constant 0 : index
      %c0_15 = arith.constant 0 : index
      %16 = vector.load %arg6[%c0_14, %c0_15] : memref<128x128xbf16, #tpu.memory_space<vmem>>, vector<128x128xbf16>
      %17 = arith.extf %16 : vector<128x128xbf16> to vector<128x128xf32>
      %18 = arith.addf %15, %17 : vector<128x128xf32>
      %cst_16 = arith.constant 0.000000e+00 : f32
      %19 = vector.broadcast %cst_16 : f32 to vector<128x128xf32>
      %20 = arith.maximumf %18, %19 : vector<128x128xf32>
      %21 = arith.truncf %20 : vector<128x128xf32> to vector<128x128xbf16>
      %c0_17 = arith.constant 0 : index
      %c0_18 = arith.constant 0 : index
      %22 = vector.load %arg7[%c0_17, %c0_18] : memref<128x128xbf16, #tpu.memory_space<vmem>>, vector<128x128xbf16>
      tpu.vector_store %arg7[%c0_17, %c0_18], %21 {strides = array<i32>} : memref<128x128xbf16, #tpu.memory_space<vmem>>, vector<128x128xbf16>,
    } else {
    }
    return
  }
  func.func @transform_0(%arg0: i32, %arg1: i32, %arg2: i32) -> (i32, i32) {
    %c0_i32 = arith.constant 0 : i32
    return %arg0, %arg2 : i32, i32
  }
  func.func @transform_1(%arg0: i32, %arg1: i32, %arg2: i32) -> (i32, i32) {
    %c0_i32 = arith.constant 0 : i32
    return %arg2, %arg1 : i32, i32
  }
  func.func @transform_2(%arg0: i32, %arg1: i32, %arg2: i32) -> (i32, i32) {
    %c0_i32 = arith.constant 0 : i32
    %c0_i32_0 = arith.constant 0 : i32
    return %c0_i32, %arg1 : i32, i32
  }
  func.func @transform_3(%arg0: i32, %arg1: i32, %arg2: i32) -> (i32, i32) {
    %c0_i32 = arith.constant 0 : i32
    return %arg0, %arg1 : i32, i32
  }
  func.func @transform_4(%arg0: i32, %arg1: i32, %arg2: i32) -> (i32, i32) {
    %c0_i32 = arith.constant 0 : i32
    return %arg0, %arg1 : i32, i32
  }
}

module attributes {stable_mosaic.version = 11 : i64} {
  func.func @_mm_fused_kernel(%arg0: i32, %arg1: i32, %arg2: i32, %arg3: memref<128x64xbf16, #tpu.memory_space<vmem>>, %arg4: memref<64x128xbf16, #tpu.memory_space<vmem>>, %arg5: memref<1x128xf32, #tpu.memory_space<vmem>>, %arg6: memref<128x128xbf16, #tpu.memory_space<vmem>>, %arg7: memref<128x128xf32, #tpu.memory_space<vmem>>) attributes {dimension_semantics = [#tpu.dimension_semantics<parallel>, #tpu.dimension_semantics<parallel>, #tpu.dimension_semantics<arbitrary>], iteration_bounds = array<i64: 4, 1, 1>, scalar_prefetch = 0 : i64, scratch_operands = 1 : i64, tpu.core_type = #tpu.core_type<tc>, window_params = [{transform_indices = @transform_0, window_bounds = array<i64: 128, 64>}, {transform_indices = @transform_1, window_bounds = array<i64: 64, 128>}, {transform_indices = @transform_2, window_bounds = array<i64: 1, 128>}, {transform_indices = @transform_3, window_bounds = array<i64: 128, 128>}]} {
    %c0_i32 = arith.constant 0 : i32
    %0 = arith.cmpi eq, %arg2, %c0_i32 : i32
    %1 = arith.extui %0 : i1 to i32
    %c0_i32_0 = arith.constant 0 : i32
    %2 = arith.cmpi ne, %1, %c0_i32_0 : i32
    scf.if %2 {
      %cst_10 = arith.constant 0.000000e+00 : f32
      %12 = vector.broadcast %cst_10 : f32 to vector<128x128xf32>
      %c0_11 = arith.constant 0 : index
      %c0_12 = arith.constant 0 : index
      %13 = vector.load %arg7[%c0_11, %c0_12] : memref<128x128xf32, #tpu.memory_space<vmem>>, vector<128x128xf32>
      tpu.vector_store %arg7[%c0_11, %c0_12], %12 {strides = array<i32>} : memref<128x128xf32, #tpu.memory_space<vmem>>, vector<128x128xf32>,
    } else {
    }
    %c0 = arith.constant 0 : index
    %c0_1 = arith.constant 0 : index
    %3 = vector.load %arg7[%c0, %c0_1] : memref<128x128xf32, #tpu.memory_space<vmem>>, vector<128x128xf32>
    %c0_2 = arith.constant 0 : index
    %c0_3 = arith.constant 0 : index
    %4 = vector.load %arg3[%c0_2, %c0_3] : memref<128x64xbf16, #tpu.memory_space<vmem>>, vector<128x64xbf16>
    %c0_4 = arith.constant 0 : index
    %c0_5 = arith.constant 0 : index
    %5 = vector.load %arg4[%c0_4, %c0_5] : memref<64x128xbf16, #tpu.memory_space<vmem>>, vector<64x128xbf16>
    %cst = arith.constant dense<0.000000e+00> : vector<128x128xf32>
    %6 = tpu.matmul %4, %5, %cst {dimension_numbers = #tpu.dot_dimension_numbers<[1], [0], [0], [1], [0, 0, 1, 1], [], []>} : vector<128x64xbf16>, vector<64x128xbf16>, vector<128x128xf32> -> vector<128x128xf32>
    %7 = arith.addf %3, %6 : vector<128x128xf32>
    %c0_6 = arith.constant 0 : index
    %c0_7 = arith.constant 0 : index
    %8 = vector.load %arg7[%c0_6, %c0_7] : memref<128x128xf32, #tpu.memory_space<vmem>>, vector<128x128xf32>
    tpu.vector_store %arg7[%c0_6, %c0_7], %7 {strides = array<i32>} : memref<128x128xf32, #tpu.memory_space<vmem>>, vector<128x128xf32>,
    %c0_i32_8 = arith.constant 0 : i32
    %9 = arith.cmpi eq, %arg2, %c0_i32_8 : i32
    %10 = arith.extui %9 : i1 to i32
    %c0_i32_9 = arith.constant 0 : i32
    %11 = arith.cmpi ne, %10, %c0_i32_9 : i32
    scf.if %11 {
      %c0_10 = arith.constant 0 : index
      %c0_11 = arith.constant 0 : index
      %12 = vector.load %arg7[%c0_10, %c0_11] : memref<128x128xf32, #tpu.memory_space<vmem>>, vector<128x128xf32>
      %c0_12 = arith.constant 0 : index
      %c0_13 = arith.constant 0 : index
      %13 = vector.load %arg5[%c0_12, %c0_13] : memref<1x128xf32, #tpu.memory_space<vmem>>, vector<1x128xf32>
      %14 = vector.broadcast %13 : vector<1x128xf32> to vector<128x128xf32>
      %15 = arith.addf %12, %14 : vector<128x128xf32>
      %cst_14 = arith.constant 0.000000e+00 : f32
      %16 = vector.broadcast %cst_14 : f32 to vector<128x128xf32>
      %17 = arith.maximumf %15, %16 : vector<128x128xf32>
      %18 = arith.truncf %17 : vector<128x128xf32> to vector<128x128xbf16>
      %c0_15 = arith.constant 0 : index
      %c0_16 = arith.constant 0 : index
      %19 = vector.load %arg6[%c0_15, %c0_16] : memref<128x128xbf16, #tpu.memory_space<vmem>>, vector<128x128xbf16>
      tpu.vector_store %arg6[%c0_15, %c0_16], %18 {strides = array<i32>} : memref<128x128xbf16, #tpu.memory_space<vmem>>, vector<128x128xbf16>,
    } else {
    }
    return
  }
  func.func @transform_0(%arg0: i32, %arg1: i32, %arg2: i32) -> (i32, i32) {
    %c0_i32 = arith.constant 0 : i32
    return %arg0, %arg2 : i32, i32
  }
  func.func @transform_1(%arg0: i32, %arg1: i32, %arg2: i32) -> (i32, i32) {
    %c0_i32 = arith.constant 0 : i32
    return %arg2, %arg1 : i32, i32
  }
  func.func @transform_2(%arg0: i32, %arg1: i32, %arg2: i32) -> (i32, i32) {
    %c0_i32 = arith.constant 0 : i32
    %c0_i32_0 = arith.constant 0 : i32
    return %c0_i32, %arg1 : i32, i32
  }
  func.func @transform_3(%arg0: i32, %arg1: i32, %arg2: i32) -> (i32, i32) {
    %c0_i32 = arith.constant 0 : i32
    return %arg0, %arg1 : i32, i32
  }
}

module attributes {stable_mosaic.version = 11 : i64} {
  func.func @_mm_fused_kernel(%arg0: i32, %arg1: i32, %arg2: i32, %arg3: memref<64x288xbf16, #tpu.memory_space<vmem>>, %arg4: memref<288x128xbf16, #tpu.memory_space<vmem>>, %arg5: memref<1x128xf32, #tpu.memory_space<vmem>>, %arg6: memref<64x128xbf16, #tpu.memory_space<vmem>>, %arg7: memref<64x128xf32, #tpu.memory_space<vmem>>) attributes {dimension_semantics = [#tpu.dimension_semantics<parallel>, #tpu.dimension_semantics<parallel>, #tpu.dimension_semantics<arbitrary>], iteration_bounds = array<i64: 2, 1, 1>, scalar_prefetch = 0 : i64, scratch_operands = 1 : i64, tpu.core_type = #tpu.core_type<tc>, window_params = [{transform_indices = @transform_0, window_bounds = array<i64: 64, 288>}, {transform_indices = @transform_1, window_bounds = array<i64: 288, 128>}, {transform_indices = @transform_2, window_bounds = array<i64: 1, 128>}, {transform_indices = @transform_3, window_bounds = array<i64: 64, 128>}]} {
    %c0_i32 = arith.constant 0 : i32
    %0 = arith.cmpi eq, %arg2, %c0_i32 : i32
    %1 = arith.extui %0 : i1 to i32
    %c0_i32_0 = arith.constant 0 : i32
    %2 = arith.cmpi ne, %1, %c0_i32_0 : i32
    scf.if %2 {
      %cst_10 = arith.constant 0.000000e+00 : f32
      %12 = vector.broadcast %cst_10 : f32 to vector<64x128xf32>
      %c0_11 = arith.constant 0 : index
      %c0_12 = arith.constant 0 : index
      %13 = vector.load %arg7[%c0_11, %c0_12] : memref<64x128xf32, #tpu.memory_space<vmem>>, vector<64x128xf32>
      tpu.vector_store %arg7[%c0_11, %c0_12], %12 {strides = array<i32>} : memref<64x128xf32, #tpu.memory_space<vmem>>, vector<64x128xf32>,
    } else {
    }
    %c0 = arith.constant 0 : index
    %c0_1 = arith.constant 0 : index
    %3 = vector.load %arg7[%c0, %c0_1] : memref<64x128xf32, #tpu.memory_space<vmem>>, vector<64x128xf32>
    %c0_2 = arith.constant 0 : index
    %c0_3 = arith.constant 0 : index
    %4 = vector.load %arg3[%c0_2, %c0_3] : memref<64x288xbf16, #tpu.memory_space<vmem>>, vector<64x288xbf16>
    %c0_4 = arith.constant 0 : index
    %c0_5 = arith.constant 0 : index
    %5 = vector.load %arg4[%c0_4, %c0_5] : memref<288x128xbf16, #tpu.memory_space<vmem>>, vector<288x128xbf16>
    %cst = arith.constant dense<0.000000e+00> : vector<64x128xf32>
    %6 = tpu.matmul %4, %5, %cst {dimension_numbers = #tpu.dot_dimension_numbers<[1], [0], [0], [1], [0, 0, 1, 1], [], []>} : vector<64x288xbf16>, vector<288x128xbf16>, vector<64x128xf32> -> vector<64x128xf32>
    %7 = arith.addf %3, %6 : vector<64x128xf32>
    %c0_6 = arith.constant 0 : index
    %c0_7 = arith.constant 0 : index
    %8 = vector.load %arg7[%c0_6, %c0_7] : memref<64x128xf32, #tpu.memory_space<vmem>>, vector<64x128xf32>
    tpu.vector_store %arg7[%c0_6, %c0_7], %7 {strides = array<i32>} : memref<64x128xf32, #tpu.memory_space<vmem>>, vector<64x128xf32>,
    %c0_i32_8 = arith.constant 0 : i32
    %9 = arith.cmpi eq, %arg2, %c0_i32_8 : i32
    %10 = arith.extui %9 : i1 to i32
    %c0_i32_9 = arith.constant 0 : i32
    %11 = arith.cmpi ne, %10, %c0_i32_9 : i32
    scf.if %11 {
      %c0_10 = arith.constant 0 : index
      %c0_11 = arith.constant 0 : index
      %12 = vector.load %arg7[%c0_10, %c0_11] : memref<64x128xf32, #tpu.memory_space<vmem>>, vector<64x128xf32>
      %c0_12 = arith.constant 0 : index
      %c0_13 = arith.constant 0 : index
      %13 = vector.load %arg5[%c0_12, %c0_13] : memref<1x128xf32, #tpu.memory_space<vmem>>, vector<1x128xf32>
      %14 = vector.broadcast %13 : vector<1x128xf32> to vector<64x128xf32>
      %15 = arith.addf %12, %14 : vector<64x128xf32>
      %cst_14 = arith.constant 0.000000e+00 : f32
      %16 = vector.broadcast %cst_14 : f32 to vector<64x128xf32>
      %17 = arith.maximumf %15, %16 : vector<64x128xf32>
      %18 = arith.truncf %17 : vector<64x128xf32> to vector<64x128xbf16>
      %c0_15 = arith.constant 0 : index
      %c0_16 = arith.constant 0 : index
      %19 = vector.load %arg6[%c0_15, %c0_16] : memref<64x128xbf16, #tpu.memory_space<vmem>>, vector<64x128xbf16>
      tpu.vector_store %arg6[%c0_15, %c0_16], %18 {strides = array<i32>} : memref<64x128xbf16, #tpu.memory_space<vmem>>, vector<64x128xbf16>,
    } else {
    }
    return
  }
  func.func @transform_0(%arg0: i32, %arg1: i32, %arg2: i32) -> (i32, i32) {
    %c0_i32 = arith.constant 0 : i32
    return %arg0, %arg2 : i32, i32
  }
  func.func @transform_1(%arg0: i32, %arg1: i32, %arg2: i32) -> (i32, i32) {
    %c0_i32 = arith.constant 0 : i32
    return %arg2, %arg1 : i32, i32
  }
  func.func @transform_2(%arg0: i32, %arg1: i32, %arg2: i32) -> (i32, i32) {
    %c0_i32 = arith.constant 0 : i32
    %c0_i32_0 = arith.constant 0 : i32
    return %c0_i32, %arg1 : i32, i32
  }
  func.func @transform_3(%arg0: i32, %arg1: i32, %arg2: i32) -> (i32, i32) {
    %c0_i32 = arith.constant 0 : i32
    return %arg0, %arg1 : i32, i32
  }
}

module attributes {stable_mosaic.version = 11 : i64} {
  func.func @_mm_fused_kernel(%arg0: i32, %arg1: i32, %arg2: i32, %arg3: memref<64x64xbf16, #tpu.memory_space<vmem>>, %arg4: memref<64x128xbf16, #tpu.memory_space<vmem>>, %arg5: memref<1x128xf32, #tpu.memory_space<vmem>>, %arg6: memref<64x128xbf16, #tpu.memory_space<vmem>>, %arg7: memref<64x128xf32, #tpu.memory_space<vmem>>) attributes {dimension_semantics = [#tpu.dimension_semantics<parallel>, #tpu.dimension_semantics<parallel>, #tpu.dimension_semantics<arbitrary>], iteration_bounds = array<i64: 2, 1, 1>, scalar_prefetch = 0 : i64, scratch_operands = 1 : i64, tpu.core_type = #tpu.core_type<tc>, window_params = [{transform_indices = @transform_0, window_bounds = array<i64: 64, 64>}, {transform_indices = @transform_1, window_bounds = array<i64: 64, 128>}, {transform_indices = @transform_2, window_bounds = array<i64: 1, 128>}, {transform_indices = @transform_3, window_bounds = array<i64: 64, 128>}]} {
    %c0_i32 = arith.constant 0 : i32
    %0 = arith.cmpi eq, %arg2, %c0_i32 : i32
    %1 = arith.extui %0 : i1 to i32
    %c0_i32_0 = arith.constant 0 : i32
    %2 = arith.cmpi ne, %1, %c0_i32_0 : i32
    scf.if %2 {
      %cst_10 = arith.constant 0.000000e+00 : f32
      %12 = vector.broadcast %cst_10 : f32 to vector<64x128xf32>
      %c0_11 = arith.constant 0 : index
      %c0_12 = arith.constant 0 : index
      %13 = vector.load %arg7[%c0_11, %c0_12] : memref<64x128xf32, #tpu.memory_space<vmem>>, vector<64x128xf32>
      tpu.vector_store %arg7[%c0_11, %c0_12], %12 {strides = array<i32>} : memref<64x128xf32, #tpu.memory_space<vmem>>, vector<64x128xf32>,
    } else {
    }
    %c0 = arith.constant 0 : index
    %c0_1 = arith.constant 0 : index
    %3 = vector.load %arg7[%c0, %c0_1] : memref<64x128xf32, #tpu.memory_space<vmem>>, vector<64x128xf32>
    %c0_2 = arith.constant 0 : index
    %c0_3 = arith.constant 0 : index
    %4 = vector.load %arg3[%c0_2, %c0_3] : memref<64x64xbf16, #tpu.memory_space<vmem>>, vector<64x64xbf16>
    %c0_4 = arith.constant 0 : index
    %c0_5 = arith.constant 0 : index
    %5 = vector.load %arg4[%c0_4, %c0_5] : memref<64x128xbf16, #tpu.memory_space<vmem>>, vector<64x128xbf16>
    %cst = arith.constant dense<0.000000e+00> : vector<64x128xf32>
    %6 = tpu.matmul %4, %5, %cst {dimension_numbers = #tpu.dot_dimension_numbers<[1], [0], [0], [1], [0, 0, 1, 1], [], []>} : vector<64x64xbf16>, vector<64x128xbf16>, vector<64x128xf32> -> vector<64x128xf32>
    %7 = arith.addf %3, %6 : vector<64x128xf32>
    %c0_6 = arith.constant 0 : index
    %c0_7 = arith.constant 0 : index
    %8 = vector.load %arg7[%c0_6, %c0_7] : memref<64x128xf32, #tpu.memory_space<vmem>>, vector<64x128xf32>
    tpu.vector_store %arg7[%c0_6, %c0_7], %7 {strides = array<i32>} : memref<64x128xf32, #tpu.memory_space<vmem>>, vector<64x128xf32>,
    %c0_i32_8 = arith.constant 0 : i32
    %9 = arith.cmpi eq, %arg2, %c0_i32_8 : i32
    %10 = arith.extui %9 : i1 to i32
    %c0_i32_9 = arith.constant 0 : i32
    %11 = arith.cmpi ne, %10, %c0_i32_9 : i32
    scf.if %11 {
      %c0_10 = arith.constant 0 : index
      %c0_11 = arith.constant 0 : index
      %12 = vector.load %arg7[%c0_10, %c0_11] : memref<64x128xf32, #tpu.memory_space<vmem>>, vector<64x128xf32>
      %c0_12 = arith.constant 0 : index
      %c0_13 = arith.constant 0 : index
      %13 = vector.load %arg5[%c0_12, %c0_13] : memref<1x128xf32, #tpu.memory_space<vmem>>, vector<1x128xf32>
      %14 = vector.broadcast %13 : vector<1x128xf32> to vector<64x128xf32>
      %15 = arith.addf %12, %14 : vector<64x128xf32>
      %16 = arith.truncf %15 : vector<64x128xf32> to vector<64x128xbf16>
      %c0_14 = arith.constant 0 : index
      %c0_15 = arith.constant 0 : index
      %17 = vector.load %arg6[%c0_14, %c0_15] : memref<64x128xbf16, #tpu.memory_space<vmem>>, vector<64x128xbf16>
      tpu.vector_store %arg6[%c0_14, %c0_15], %16 {strides = array<i32>} : memref<64x128xbf16, #tpu.memory_space<vmem>>, vector<64x128xbf16>,
    } else {
    }
    return
  }
  func.func @transform_0(%arg0: i32, %arg1: i32, %arg2: i32) -> (i32, i32) {
    %c0_i32 = arith.constant 0 : i32
    return %arg0, %arg2 : i32, i32
  }
  func.func @transform_1(%arg0: i32, %arg1: i32, %arg2: i32) -> (i32, i32) {
    %c0_i32 = arith.constant 0 : i32
    return %arg2, %arg1 : i32, i32
  }
  func.func @transform_2(%arg0: i32, %arg1: i32, %arg2: i32) -> (i32, i32) {
    %c0_i32 = arith.constant 0 : i32
    %c0_i32_0 = arith.constant 0 : i32
    return %c0_i32, %arg1 : i32, i32
  }
  func.func @transform_3(%arg0: i32, %arg1: i32, %arg2: i32) -> (i32, i32) {
    %c0_i32 = arith.constant 0 : i32
    return %arg0, %arg1 : i32, i32
  }
}

module attributes {stable_mosaic.version = 11 : i64} {
  func.func @_mm_fused_kernel(%arg0: i32, %arg1: i32, %arg2: i32, %arg3: memref<64x32xbf16, #tpu.memory_space<vmem>>, %arg4: memref<32x128xbf16, #tpu.memory_space<vmem>>, %arg5: memref<1x128xf32, #tpu.memory_space<vmem>>, %arg6: memref<64x128xbf16, #tpu.memory_space<vmem>>, %arg7: memref<64x128xbf16, #tpu.memory_space<vmem>>, %arg8: memref<64x128xf32, #tpu.memory_space<vmem>>) attributes {dimension_semantics = [#tpu.dimension_semantics<parallel>, #tpu.dimension_semantics<parallel>, #tpu.dimension_semantics<arbitrary>], iteration_bounds = array<i64: 2, 1, 1>, scalar_prefetch = 0 : i64, scratch_operands = 1 : i64, tpu.core_type = #tpu.core_type<tc>, window_params = [{transform_indices = @transform_0, window_bounds = array<i64: 64, 32>}, {transform_indices = @transform_1, window_bounds = array<i64: 32, 128>}, {transform_indices = @transform_2, window_bounds = array<i64: 1, 128>}, {transform_indices = @transform_3, window_bounds = array<i64: 64, 128>}, {transform_indices = @transform_4, window_bounds = array<i64: 64, 128>}]} {
    %c0_i32 = arith.constant 0 : i32
    %0 = arith.cmpi eq, %arg2, %c0_i32 : i32
    %1 = arith.extui %0 : i1 to i32
    %c0_i32_0 = arith.constant 0 : i32
    %2 = arith.cmpi ne, %1, %c0_i32_0 : i32
    scf.if %2 {
      %cst_10 = arith.constant 0.000000e+00 : f32
      %12 = vector.broadcast %cst_10 : f32 to vector<64x128xf32>
      %c0_11 = arith.constant 0 : index
      %c0_12 = arith.constant 0 : index
      %13 = vector.load %arg8[%c0_11, %c0_12] : memref<64x128xf32, #tpu.memory_space<vmem>>, vector<64x128xf32>
      tpu.vector_store %arg8[%c0_11, %c0_12], %12 {strides = array<i32>} : memref<64x128xf32, #tpu.memory_space<vmem>>, vector<64x128xf32>,
    } else {
    }
    %c0 = arith.constant 0 : index
    %c0_1 = arith.constant 0 : index
    %3 = vector.load %arg8[%c0, %c0_1] : memref<64x128xf32, #tpu.memory_space<vmem>>, vector<64x128xf32>
    %c0_2 = arith.constant 0 : index
    %c0_3 = arith.constant 0 : index
    %4 = vector.load %arg3[%c0_2, %c0_3] : memref<64x32xbf16, #tpu.memory_space<vmem>>, vector<64x32xbf16>
    %c0_4 = arith.constant 0 : index
    %c0_5 = arith.constant 0 : index
    %5 = vector.load %arg4[%c0_4, %c0_5] : memref<32x128xbf16, #tpu.memory_space<vmem>>, vector<32x128xbf16>
    %cst = arith.constant dense<0.000000e+00> : vector<64x128xf32>
    %6 = tpu.matmul %4, %5, %cst {dimension_numbers = #tpu.dot_dimension_numbers<[1], [0], [0], [1], [0, 0, 1, 1], [], []>} : vector<64x32xbf16>, vector<32x128xbf16>, vector<64x128xf32> -> vector<64x128xf32>
    %7 = arith.addf %3, %6 : vector<64x128xf32>
    %c0_6 = arith.constant 0 : index
    %c0_7 = arith.constant 0 : index
    %8 = vector.load %arg8[%c0_6, %c0_7] : memref<64x128xf32, #tpu.memory_space<vmem>>, vector<64x128xf32>
    tpu.vector_store %arg8[%c0_6, %c0_7], %7 {strides = array<i32>} : memref<64x128xf32, #tpu.memory_space<vmem>>, vector<64x128xf32>,
    %c0_i32_8 = arith.constant 0 : i32
    %9 = arith.cmpi eq, %arg2, %c0_i32_8 : i32
    %10 = arith.extui %9 : i1 to i32
    %c0_i32_9 = arith.constant 0 : i32
    %11 = arith.cmpi ne, %10, %c0_i32_9 : i32
    scf.if %11 {
      %c0_10 = arith.constant 0 : index
      %c0_11 = arith.constant 0 : index
      %12 = vector.load %arg8[%c0_10, %c0_11] : memref<64x128xf32, #tpu.memory_space<vmem>>, vector<64x128xf32>
      %c0_12 = arith.constant 0 : index
      %c0_13 = arith.constant 0 : index
      %13 = vector.load %arg5[%c0_12, %c0_13] : memref<1x128xf32, #tpu.memory_space<vmem>>, vector<1x128xf32>
      %14 = vector.broadcast %13 : vector<1x128xf32> to vector<64x128xf32>
      %15 = arith.addf %12, %14 : vector<64x128xf32>
      %c0_14 = arith.constant 0 : index
      %c0_15 = arith.constant 0 : index
      %16 = vector.load %arg6[%c0_14, %c0_15] : memref<64x128xbf16, #tpu.memory_space<vmem>>, vector<64x128xbf16>
      %17 = arith.extf %16 : vector<64x128xbf16> to vector<64x128xf32>
      %18 = arith.addf %15, %17 : vector<64x128xf32>
      %cst_16 = arith.constant 0.000000e+00 : f32
      %19 = vector.broadcast %cst_16 : f32 to vector<64x128xf32>
      %20 = arith.maximumf %18, %19 : vector<64x128xf32>
      %21 = arith.truncf %20 : vector<64x128xf32> to vector<64x128xbf16>
      %c0_17 = arith.constant 0 : index
      %c0_18 = arith.constant 0 : index
      %22 = vector.load %arg7[%c0_17, %c0_18] : memref<64x128xbf16, #tpu.memory_space<vmem>>, vector<64x128xbf16>
      tpu.vector_store %arg7[%c0_17, %c0_18], %21 {strides = array<i32>} : memref<64x128xbf16, #tpu.memory_space<vmem>>, vector<64x128xbf16>,
    } else {
    }
    return
  }
  func.func @transform_0(%arg0: i32, %arg1: i32, %arg2: i32) -> (i32, i32) {
    %c0_i32 = arith.constant 0 : i32
    return %arg0, %arg2 : i32, i32
  }
  func.func @transform_1(%arg0: i32, %arg1: i32, %arg2: i32) -> (i32, i32) {
    %c0_i32 = arith.constant 0 : i32
    return %arg2, %arg1 : i32, i32
  }
  func.func @transform_2(%arg0: i32, %arg1: i32, %arg2: i32) -> (i32, i32) {
    %c0_i32 = arith.constant 0 : i32
    %c0_i32_0 = arith.constant 0 : i32
    return %c0_i32, %arg1 : i32, i32
  }
  func.func @transform_3(%arg0: i32, %arg1: i32, %arg2: i32) -> (i32, i32) {
    %c0_i32 = arith.constant 0 : i32
    return %arg0, %arg1 : i32, i32
  }
  func.func @transform_4(%arg0: i32, %arg1: i32, %arg2: i32) -> (i32, i32) {
    %c0_i32 = arith.constant 0 : i32
    return %arg0, %arg1 : i32, i32
  }
}

module attributes {stable_mosaic.version = 11 : i64} {
  func.func @_mm_fused_kernel(%arg0: i32, %arg1: i32, %arg2: i32, %arg3: memref<64x128xbf16, #tpu.memory_space<vmem>>, %arg4: memref<128x128xbf16, #tpu.memory_space<vmem>>, %arg5: memref<1x128xf32, #tpu.memory_space<vmem>>, %arg6: memref<64x128xbf16, #tpu.memory_space<vmem>>, %arg7: memref<64x128xf32, #tpu.memory_space<vmem>>) attributes {dimension_semantics = [#tpu.dimension_semantics<parallel>, #tpu.dimension_semantics<parallel>, #tpu.dimension_semantics<arbitrary>], iteration_bounds = array<i64: 2, 1, 1>, scalar_prefetch = 0 : i64, scratch_operands = 1 : i64, tpu.core_type = #tpu.core_type<tc>, window_params = [{transform_indices = @transform_0, window_bounds = array<i64: 64, 128>}, {transform_indices = @transform_1, window_bounds = array<i64: 128, 128>}, {transform_indices = @transform_2, window_bounds = array<i64: 1, 128>}, {transform_indices = @transform_3, window_bounds = array<i64: 64, 128>}]} {
    %c0_i32 = arith.constant 0 : i32
    %0 = arith.cmpi eq, %arg2, %c0_i32 : i32
    %1 = arith.extui %0 : i1 to i32
    %c0_i32_0 = arith.constant 0 : i32
    %2 = arith.cmpi ne, %1, %c0_i32_0 : i32
    scf.if %2 {
      %cst_10 = arith.constant 0.000000e+00 : f32
      %12 = vector.broadcast %cst_10 : f32 to vector<64x128xf32>
      %c0_11 = arith.constant 0 : index
      %c0_12 = arith.constant 0 : index
      %13 = vector.load %arg7[%c0_11, %c0_12] : memref<64x128xf32, #tpu.memory_space<vmem>>, vector<64x128xf32>
      tpu.vector_store %arg7[%c0_11, %c0_12], %12 {strides = array<i32>} : memref<64x128xf32, #tpu.memory_space<vmem>>, vector<64x128xf32>,
    } else {
    }
    %c0 = arith.constant 0 : index
    %c0_1 = arith.constant 0 : index
    %3 = vector.load %arg7[%c0, %c0_1] : memref<64x128xf32, #tpu.memory_space<vmem>>, vector<64x128xf32>
    %c0_2 = arith.constant 0 : index
    %c0_3 = arith.constant 0 : index
    %4 = vector.load %arg3[%c0_2, %c0_3] : memref<64x128xbf16, #tpu.memory_space<vmem>>, vector<64x128xbf16>
    %c0_4 = arith.constant 0 : index
    %c0_5 = arith.constant 0 : index
    %5 = vector.load %arg4[%c0_4, %c0_5] : memref<128x128xbf16, #tpu.memory_space<vmem>>, vector<128x128xbf16>
    %cst = arith.constant dense<0.000000e+00> : vector<64x128xf32>
    %6 = tpu.matmul %4, %5, %cst {dimension_numbers = #tpu.dot_dimension_numbers<[1], [0], [0], [1], [0, 0, 1, 1], [], []>} : vector<64x128xbf16>, vector<128x128xbf16>, vector<64x128xf32> -> vector<64x128xf32>
    %7 = arith.addf %3, %6 : vector<64x128xf32>
    %c0_6 = arith.constant 0 : index
    %c0_7 = arith.constant 0 : index
    %8 = vector.load %arg7[%c0_6, %c0_7] : memref<64x128xf32, #tpu.memory_space<vmem>>, vector<64x128xf32>
    tpu.vector_store %arg7[%c0_6, %c0_7], %7 {strides = array<i32>} : memref<64x128xf32, #tpu.memory_space<vmem>>, vector<64x128xf32>,
    %c0_i32_8 = arith.constant 0 : i32
    %9 = arith.cmpi eq, %arg2, %c0_i32_8 : i32
    %10 = arith.extui %9 : i1 to i32
    %c0_i32_9 = arith.constant 0 : i32
    %11 = arith.cmpi ne, %10, %c0_i32_9 : i32
    scf.if %11 {
      %c0_10 = arith.constant 0 : index
      %c0_11 = arith.constant 0 : index
      %12 = vector.load %arg7[%c0_10, %c0_11] : memref<64x128xf32, #tpu.memory_space<vmem>>, vector<64x128xf32>
      %c0_12 = arith.constant 0 : index
      %c0_13 = arith.constant 0 : index
      %13 = vector.load %arg5[%c0_12, %c0_13] : memref<1x128xf32, #tpu.memory_space<vmem>>, vector<1x128xf32>
      %14 = vector.broadcast %13 : vector<1x128xf32> to vector<64x128xf32>
      %15 = arith.addf %12, %14 : vector<64x128xf32>
      %cst_14 = arith.constant 0.000000e+00 : f32
      %16 = vector.broadcast %cst_14 : f32 to vector<64x128xf32>
      %17 = arith.maximumf %15, %16 : vector<64x128xf32>
      %18 = arith.truncf %17 : vector<64x128xf32> to vector<64x128xbf16>
      %c0_15 = arith.constant 0 : index
      %c0_16 = arith.constant 0 : index
      %19 = vector.load %arg6[%c0_15, %c0_16] : memref<64x128xbf16, #tpu.memory_space<vmem>>, vector<64x128xbf16>
      tpu.vector_store %arg6[%c0_15, %c0_16], %18 {strides = array<i32>} : memref<64x128xbf16, #tpu.memory_space<vmem>>, vector<64x128xbf16>,
    } else {
    }
    return
  }
  func.func @transform_0(%arg0: i32, %arg1: i32, %arg2: i32) -> (i32, i32) {
    %c0_i32 = arith.constant 0 : i32
    return %arg0, %arg2 : i32, i32
  }
  func.func @transform_1(%arg0: i32, %arg1: i32, %arg2: i32) -> (i32, i32) {
    %c0_i32 = arith.constant 0 : i32
    return %arg2, %arg1 : i32, i32
  }
  func.func @transform_2(%arg0: i32, %arg1: i32, %arg2: i32) -> (i32, i32) {
    %c0_i32 = arith.constant 0 : i32
    %c0_i32_0 = arith.constant 0 : i32
    return %c0_i32, %arg1 : i32, i32
  }
  func.func @transform_3(%arg0: i32, %arg1: i32, %arg2: i32) -> (i32, i32) {
    %c0_i32 = arith.constant 0 : i32
    return %arg0, %arg1 : i32, i32
  }
}

module attributes {stable_mosaic.version = 11 : i64} {
  func.func @_mm_fused_kernel(%arg0: i32, %arg1: i32, %arg2: i32, %arg3: memref<32x576xbf16, #tpu.memory_space<vmem>>, %arg4: memref<576x128xbf16, #tpu.memory_space<vmem>>, %arg5: memref<1x128xf32, #tpu.memory_space<vmem>>, %arg6: memref<32x128xbf16, #tpu.memory_space<vmem>>, %arg7: memref<32x128xf32, #tpu.memory_space<vmem>>) attributes {dimension_semantics = [#tpu.dimension_semantics<parallel>, #tpu.dimension_semantics<parallel>, #tpu.dimension_semantics<arbitrary>], iteration_bounds = array<i64: 1, 1, 1>, scalar_prefetch = 0 : i64, scratch_operands = 1 : i64, tpu.core_type = #tpu.core_type<tc>, window_params = [{transform_indices = @transform_0, window_bounds = array<i64: 32, 576>}, {transform_indices = @transform_1, window_bounds = array<i64: 576, 128>}, {transform_indices = @transform_2, window_bounds = array<i64: 1, 128>}, {transform_indices = @transform_3, window_bounds = array<i64: 32, 128>}]} {
    %c0_i32 = arith.constant 0 : i32
    %0 = arith.cmpi eq, %arg2, %c0_i32 : i32
    %1 = arith.extui %0 : i1 to i32
    %c0_i32_0 = arith.constant 0 : i32
    %2 = arith.cmpi ne, %1, %c0_i32_0 : i32
    scf.if %2 {
      %cst_10 = arith.constant 0.000000e+00 : f32
      %12 = vector.broadcast %cst_10 : f32 to vector<32x128xf32>
      %c0_11 = arith.constant 0 : index
      %c0_12 = arith.constant 0 : index
      %13 = vector.load %arg7[%c0_11, %c0_12] : memref<32x128xf32, #tpu.memory_space<vmem>>, vector<32x128xf32>
      tpu.vector_store %arg7[%c0_11, %c0_12], %12 {strides = array<i32>} : memref<32x128xf32, #tpu.memory_space<vmem>>, vector<32x128xf32>,
    } else {
    }
    %c0 = arith.constant 0 : index
    %c0_1 = arith.constant 0 : index
    %3 = vector.load %arg7[%c0, %c0_1] : memref<32x128xf32, #tpu.memory_space<vmem>>, vector<32x128xf32>
    %c0_2 = arith.constant 0 : index
    %c0_3 = arith.constant 0 : index
    %4 = vector.load %arg3[%c0_2, %c0_3] : memref<32x576xbf16, #tpu.memory_space<vmem>>, vector<32x576xbf16>
    %c0_4 = arith.constant 0 : index
    %c0_5 = arith.constant 0 : index
    %5 = vector.load %arg4[%c0_4, %c0_5] : memref<576x128xbf16, #tpu.memory_space<vmem>>, vector<576x128xbf16>
    %cst = arith.constant dense<0.000000e+00> : vector<32x128xf32>
    %6 = tpu.matmul %4, %5, %cst {dimension_numbers = #tpu.dot_dimension_numbers<[1], [0], [0], [1], [0, 0, 1, 1], [], []>} : vector<32x576xbf16>, vector<576x128xbf16>, vector<32x128xf32> -> vector<32x128xf32>
    %7 = arith.addf %3, %6 : vector<32x128xf32>
    %c0_6 = arith.constant 0 : index
    %c0_7 = arith.constant 0 : index
    %8 = vector.load %arg7[%c0_6, %c0_7] : memref<32x128xf32, #tpu.memory_space<vmem>>, vector<32x128xf32>
    tpu.vector_store %arg7[%c0_6, %c0_7], %7 {strides = array<i32>} : memref<32x128xf32, #tpu.memory_space<vmem>>, vector<32x128xf32>,
    %c0_i32_8 = arith.constant 0 : i32
    %9 = arith.cmpi eq, %arg2, %c0_i32_8 : i32
    %10 = arith.extui %9 : i1 to i32
    %c0_i32_9 = arith.constant 0 : i32
    %11 = arith.cmpi ne, %10, %c0_i32_9 : i32
    scf.if %11 {
      %c0_10 = arith.constant 0 : index
      %c0_11 = arith.constant 0 : index
      %12 = vector.load %arg7[%c0_10, %c0_11] : memref<32x128xf32, #tpu.memory_space<vmem>>, vector<32x128xf32>
      %c0_12 = arith.constant 0 : index
      %c0_13 = arith.constant 0 : index
      %13 = vector.load %arg5[%c0_12, %c0_13] : memref<1x128xf32, #tpu.memory_space<vmem>>, vector<1x128xf32>
      %14 = vector.broadcast %13 : vector<1x128xf32> to vector<32x128xf32>
      %15 = arith.addf %12, %14 : vector<32x128xf32>
      %cst_14 = arith.constant 0.000000e+00 : f32
      %16 = vector.broadcast %cst_14 : f32 to vector<32x128xf32>
      %17 = arith.maximumf %15, %16 : vector<32x128xf32>
      %18 = arith.truncf %17 : vector<32x128xf32> to vector<32x128xbf16>
      %c0_15 = arith.constant 0 : index
      %c0_16 = arith.constant 0 : index
      %19 = vector.load %arg6[%c0_15, %c0_16] : memref<32x128xbf16, #tpu.memory_space<vmem>>, vector<32x128xbf16>
      tpu.vector_store %arg6[%c0_15, %c0_16], %18 {strides = array<i32>} : memref<32x128xbf16, #tpu.memory_space<vmem>>, vector<32x128xbf16>,
    } else {
    }
    return
  }
  func.func @transform_0(%arg0: i32, %arg1: i32, %arg2: i32) -> (i32, i32) {
    %c0_i32 = arith.constant 0 : i32
    return %arg0, %arg2 : i32, i32
  }
  func.func @transform_1(%arg0: i32, %arg1: i32, %arg2: i32) -> (i32, i32) {
    %c0_i32 = arith.constant 0 : i32
    return %arg2, %arg1 : i32, i32
  }
  func.func @transform_2(%arg0: i32, %arg1: i32, %arg2: i32) -> (i32, i32) {
    %c0_i32 = arith.constant 0 : i32
    %c0_i32_0 = arith.constant 0 : i32
    return %c0_i32, %arg1 : i32, i32
  }
  func.func @transform_3(%arg0: i32, %arg1: i32, %arg2: i32) -> (i32, i32) {
    %c0_i32 = arith.constant 0 : i32
    return %arg0, %arg1 : i32, i32
  }
}

module attributes {stable_mosaic.version = 11 : i64} {
  func.func @_mm_fused_kernel(%arg0: i32, %arg1: i32, %arg2: i32, %arg3: memref<32x128xbf16, #tpu.memory_space<vmem>>, %arg4: memref<128x256xbf16, #tpu.memory_space<vmem>>, %arg5: memref<1x256xf32, #tpu.memory_space<vmem>>, %arg6: memref<32x256xbf16, #tpu.memory_space<vmem>>, %arg7: memref<32x256xf32, #tpu.memory_space<vmem>>) attributes {dimension_semantics = [#tpu.dimension_semantics<parallel>, #tpu.dimension_semantics<parallel>, #tpu.dimension_semantics<arbitrary>], iteration_bounds = array<i64: 1, 1, 1>, scalar_prefetch = 0 : i64, scratch_operands = 1 : i64, tpu.core_type = #tpu.core_type<tc>, window_params = [{transform_indices = @transform_0, window_bounds = array<i64: 32, 128>}, {transform_indices = @transform_1, window_bounds = array<i64: 128, 256>}, {transform_indices = @transform_2, window_bounds = array<i64: 1, 256>}, {transform_indices = @transform_3, window_bounds = array<i64: 32, 256>}]} {
    %c0_i32 = arith.constant 0 : i32
    %0 = arith.cmpi eq, %arg2, %c0_i32 : i32
    %1 = arith.extui %0 : i1 to i32
    %c0_i32_0 = arith.constant 0 : i32
    %2 = arith.cmpi ne, %1, %c0_i32_0 : i32
    scf.if %2 {
      %cst_10 = arith.constant 0.000000e+00 : f32
      %12 = vector.broadcast %cst_10 : f32 to vector<32x256xf32>
      %c0_11 = arith.constant 0 : index
      %c0_12 = arith.constant 0 : index
      %13 = vector.load %arg7[%c0_11, %c0_12] : memref<32x256xf32, #tpu.memory_space<vmem>>, vector<32x256xf32>
      tpu.vector_store %arg7[%c0_11, %c0_12], %12 {strides = array<i32>} : memref<32x256xf32, #tpu.memory_space<vmem>>, vector<32x256xf32>,
    } else {
    }
    %c0 = arith.constant 0 : index
    %c0_1 = arith.constant 0 : index
    %3 = vector.load %arg7[%c0, %c0_1] : memref<32x256xf32, #tpu.memory_space<vmem>>, vector<32x256xf32>
    %c0_2 = arith.constant 0 : index
    %c0_3 = arith.constant 0 : index
    %4 = vector.load %arg3[%c0_2, %c0_3] : memref<32x128xbf16, #tpu.memory_space<vmem>>, vector<32x128xbf16>
    %c0_4 = arith.constant 0 : index
    %c0_5 = arith.constant 0 : index
    %5 = vector.load %arg4[%c0_4, %c0_5] : memref<128x256xbf16, #tpu.memory_space<vmem>>, vector<128x256xbf16>
    %cst = arith.constant dense<0.000000e+00> : vector<32x256xf32>
    %6 = tpu.matmul %4, %5, %cst {dimension_numbers = #tpu.dot_dimension_numbers<[1], [0], [0], [1], [0, 0, 1, 1], [], []>} : vector<32x128xbf16>, vector<128x256xbf16>, vector<32x256xf32> -> vector<32x256xf32>
    %7 = arith.addf %3, %6 : vector<32x256xf32>
    %c0_6 = arith.constant 0 : index
    %c0_7 = arith.constant 0 : index
    %8 = vector.load %arg7[%c0_6, %c0_7] : memref<32x256xf32, #tpu.memory_space<vmem>>, vector<32x256xf32>
    tpu.vector_store %arg7[%c0_6, %c0_7], %7 {strides = array<i32>} : memref<32x256xf32, #tpu.memory_space<vmem>>, vector<32x256xf32>,
    %c0_i32_8 = arith.constant 0 : i32
    %9 = arith.cmpi eq, %arg2, %c0_i32_8 : i32
    %10 = arith.extui %9 : i1 to i32
    %c0_i32_9 = arith.constant 0 : i32
    %11 = arith.cmpi ne, %10, %c0_i32_9 : i32
    scf.if %11 {
      %c0_10 = arith.constant 0 : index
      %c0_11 = arith.constant 0 : index
      %12 = vector.load %arg7[%c0_10, %c0_11] : memref<32x256xf32, #tpu.memory_space<vmem>>, vector<32x256xf32>
      %c0_12 = arith.constant 0 : index
      %c0_13 = arith.constant 0 : index
      %13 = vector.load %arg5[%c0_12, %c0_13] : memref<1x256xf32, #tpu.memory_space<vmem>>, vector<1x256xf32>
      %14 = vector.broadcast %13 : vector<1x256xf32> to vector<32x256xf32>
      %15 = arith.addf %12, %14 : vector<32x256xf32>
      %16 = arith.truncf %15 : vector<32x256xf32> to vector<32x256xbf16>
      %c0_14 = arith.constant 0 : index
      %c0_15 = arith.constant 0 : index
      %17 = vector.load %arg6[%c0_14, %c0_15] : memref<32x256xbf16, #tpu.memory_space<vmem>>, vector<32x256xbf16>
      tpu.vector_store %arg6[%c0_14, %c0_15], %16 {strides = array<i32>} : memref<32x256xbf16, #tpu.memory_space<vmem>>, vector<32x256xbf16>,
    } else {
    }
    return
  }
  func.func @transform_0(%arg0: i32, %arg1: i32, %arg2: i32) -> (i32, i32) {
    %c0_i32 = arith.constant 0 : i32
    return %arg0, %arg2 : i32, i32
  }
  func.func @transform_1(%arg0: i32, %arg1: i32, %arg2: i32) -> (i32, i32) {
    %c0_i32 = arith.constant 0 : i32
    return %arg2, %arg1 : i32, i32
  }
  func.func @transform_2(%arg0: i32, %arg1: i32, %arg2: i32) -> (i32, i32) {
    %c0_i32 = arith.constant 0 : i32
    %c0_i32_0 = arith.constant 0 : i32
    return %c0_i32, %arg1 : i32, i32
  }
  func.func @transform_3(%arg0: i32, %arg1: i32, %arg2: i32) -> (i32, i32) {
    %c0_i32 = arith.constant 0 : i32
    return %arg0, %arg1 : i32, i32
  }
}

module attributes {stable_mosaic.version = 11 : i64} {
  func.func @_mm_fused_kernel(%arg0: i32, %arg1: i32, %arg2: i32, %arg3: memref<32x64xbf16, #tpu.memory_space<vmem>>, %arg4: memref<64x256xbf16, #tpu.memory_space<vmem>>, %arg5: memref<1x256xf32, #tpu.memory_space<vmem>>, %arg6: memref<32x256xbf16, #tpu.memory_space<vmem>>, %arg7: memref<32x256xbf16, #tpu.memory_space<vmem>>, %arg8: memref<32x256xf32, #tpu.memory_space<vmem>>) attributes {dimension_semantics = [#tpu.dimension_semantics<parallel>, #tpu.dimension_semantics<parallel>, #tpu.dimension_semantics<arbitrary>], iteration_bounds = array<i64: 1, 1, 1>, scalar_prefetch = 0 : i64, scratch_operands = 1 : i64, tpu.core_type = #tpu.core_type<tc>, window_params = [{transform_indices = @transform_0, window_bounds = array<i64: 32, 64>}, {transform_indices = @transform_1, window_bounds = array<i64: 64, 256>}, {transform_indices = @transform_2, window_bounds = array<i64: 1, 256>}, {transform_indices = @transform_3, window_bounds = array<i64: 32, 256>}, {transform_indices = @transform_4, window_bounds = array<i64: 32, 256>}]} {
    %c0_i32 = arith.constant 0 : i32
    %0 = arith.cmpi eq, %arg2, %c0_i32 : i32
    %1 = arith.extui %0 : i1 to i32
    %c0_i32_0 = arith.constant 0 : i32
    %2 = arith.cmpi ne, %1, %c0_i32_0 : i32
    scf.if %2 {
      %cst_10 = arith.constant 0.000000e+00 : f32
      %12 = vector.broadcast %cst_10 : f32 to vector<32x256xf32>
      %c0_11 = arith.constant 0 : index
      %c0_12 = arith.constant 0 : index
      %13 = vector.load %arg8[%c0_11, %c0_12] : memref<32x256xf32, #tpu.memory_space<vmem>>, vector<32x256xf32>
      tpu.vector_store %arg8[%c0_11, %c0_12], %12 {strides = array<i32>} : memref<32x256xf32, #tpu.memory_space<vmem>>, vector<32x256xf32>,
    } else {
    }
    %c0 = arith.constant 0 : index
    %c0_1 = arith.constant 0 : index
    %3 = vector.load %arg8[%c0, %c0_1] : memref<32x256xf32, #tpu.memory_space<vmem>>, vector<32x256xf32>
    %c0_2 = arith.constant 0 : index
    %c0_3 = arith.constant 0 : index
    %4 = vector.load %arg3[%c0_2, %c0_3] : memref<32x64xbf16, #tpu.memory_space<vmem>>, vector<32x64xbf16>
    %c0_4 = arith.constant 0 : index
    %c0_5 = arith.constant 0 : index
    %5 = vector.load %arg4[%c0_4, %c0_5] : memref<64x256xbf16, #tpu.memory_space<vmem>>, vector<64x256xbf16>
    %cst = arith.constant dense<0.000000e+00> : vector<32x256xf32>
    %6 = tpu.matmul %4, %5, %cst {dimension_numbers = #tpu.dot_dimension_numbers<[1], [0], [0], [1], [0, 0, 1, 1], [], []>} : vector<32x64xbf16>, vector<64x256xbf16>, vector<32x256xf32> -> vector<32x256xf32>
    %7 = arith.addf %3, %6 : vector<32x256xf32>
    %c0_6 = arith.constant 0 : index
    %c0_7 = arith.constant 0 : index
    %8 = vector.load %arg8[%c0_6, %c0_7] : memref<32x256xf32, #tpu.memory_space<vmem>>, vector<32x256xf32>
    tpu.vector_store %arg8[%c0_6, %c0_7], %7 {strides = array<i32>} : memref<32x256xf32, #tpu.memory_space<vmem>>, vector<32x256xf32>,
    %c0_i32_8 = arith.constant 0 : i32
    %9 = arith.cmpi eq, %arg2, %c0_i32_8 : i32
    %10 = arith.extui %9 : i1 to i32
    %c0_i32_9 = arith.constant 0 : i32
    %11 = arith.cmpi ne, %10, %c0_i32_9 : i32
    scf.if %11 {
      %c0_10 = arith.constant 0 : index
      %c0_11 = arith.constant 0 : index
      %12 = vector.load %arg8[%c0_10, %c0_11] : memref<32x256xf32, #tpu.memory_space<vmem>>, vector<32x256xf32>
      %c0_12 = arith.constant 0 : index
      %c0_13 = arith.constant 0 : index
      %13 = vector.load %arg5[%c0_12, %c0_13] : memref<1x256xf32, #tpu.memory_space<vmem>>, vector<1x256xf32>
      %14 = vector.broadcast %13 : vector<1x256xf32> to vector<32x256xf32>
      %15 = arith.addf %12, %14 : vector<32x256xf32>
      %c0_14 = arith.constant 0 : index
      %c0_15 = arith.constant 0 : index
      %16 = vector.load %arg6[%c0_14, %c0_15] : memref<32x256xbf16, #tpu.memory_space<vmem>>, vector<32x256xbf16>
      %17 = arith.extf %16 : vector<32x256xbf16> to vector<32x256xf32>
      %18 = arith.addf %15, %17 : vector<32x256xf32>
      %cst_16 = arith.constant 0.000000e+00 : f32
      %19 = vector.broadcast %cst_16 : f32 to vector<32x256xf32>
      %20 = arith.maximumf %18, %19 : vector<32x256xf32>
      %21 = arith.truncf %20 : vector<32x256xf32> to vector<32x256xbf16>
      %c0_17 = arith.constant 0 : index
      %c0_18 = arith.constant 0 : index
      %22 = vector.load %arg7[%c0_17, %c0_18] : memref<32x256xbf16, #tpu.memory_space<vmem>>, vector<32x256xbf16>
      tpu.vector_store %arg7[%c0_17, %c0_18], %21 {strides = array<i32>} : memref<32x256xbf16, #tpu.memory_space<vmem>>, vector<32x256xbf16>,
    } else {
    }
    return
  }
  func.func @transform_0(%arg0: i32, %arg1: i32, %arg2: i32) -> (i32, i32) {
    %c0_i32 = arith.constant 0 : i32
    return %arg0, %arg2 : i32, i32
  }
  func.func @transform_1(%arg0: i32, %arg1: i32, %arg2: i32) -> (i32, i32) {
    %c0_i32 = arith.constant 0 : i32
    return %arg2, %arg1 : i32, i32
  }
  func.func @transform_2(%arg0: i32, %arg1: i32, %arg2: i32) -> (i32, i32) {
    %c0_i32 = arith.constant 0 : i32
    %c0_i32_0 = arith.constant 0 : i32
    return %c0_i32, %arg1 : i32, i32
  }
  func.func @transform_3(%arg0: i32, %arg1: i32, %arg2: i32) -> (i32, i32) {
    %c0_i32 = arith.constant 0 : i32
    return %arg0, %arg1 : i32, i32
  }
  func.func @transform_4(%arg0: i32, %arg1: i32, %arg2: i32) -> (i32, i32) {
    %c0_i32 = arith.constant 0 : i32
    return %arg0, %arg1 : i32, i32
  }
}

module attributes {stable_mosaic.version = 11 : i64} {
  func.func @_mm_fused_kernel(%arg0: i32, %arg1: i32, %arg2: i32, %arg3: memref<32x256xbf16, #tpu.memory_space<vmem>>, %arg4: memref<256x128xbf16, #tpu.memory_space<vmem>>, %arg5: memref<1x128xf32, #tpu.memory_space<vmem>>, %arg6: memref<32x128xbf16, #tpu.memory_space<vmem>>, %arg7: memref<32x128xf32, #tpu.memory_space<vmem>>) attributes {dimension_semantics = [#tpu.dimension_semantics<parallel>, #tpu.dimension_semantics<parallel>, #tpu.dimension_semantics<arbitrary>], iteration_bounds = array<i64: 1, 1, 1>, scalar_prefetch = 0 : i64, scratch_operands = 1 : i64, tpu.core_type = #tpu.core_type<tc>, window_params = [{transform_indices = @transform_0, window_bounds = array<i64: 32, 256>}, {transform_indices = @transform_1, window_bounds = array<i64: 256, 128>}, {transform_indices = @transform_2, window_bounds = array<i64: 1, 128>}, {transform_indices = @transform_3, window_bounds = array<i64: 32, 128>}]} {
    %c0_i32 = arith.constant 0 : i32
    %0 = arith.cmpi eq, %arg2, %c0_i32 : i32
    %1 = arith.extui %0 : i1 to i32
    %c0_i32_0 = arith.constant 0 : i32
    %2 = arith.cmpi ne, %1, %c0_i32_0 : i32
    scf.if %2 {
      %cst_10 = arith.constant 0.000000e+00 : f32
      %12 = vector.broadcast %cst_10 : f32 to vector<32x128xf32>
      %c0_11 = arith.constant 0 : index
      %c0_12 = arith.constant 0 : index
      %13 = vector.load %arg7[%c0_11, %c0_12] : memref<32x128xf32, #tpu.memory_space<vmem>>, vector<32x128xf32>
      tpu.vector_store %arg7[%c0_11, %c0_12], %12 {strides = array<i32>} : memref<32x128xf32, #tpu.memory_space<vmem>>, vector<32x128xf32>,
    } else {
    }
    %c0 = arith.constant 0 : index
    %c0_1 = arith.constant 0 : index
    %3 = vector.load %arg7[%c0, %c0_1] : memref<32x128xf32, #tpu.memory_space<vmem>>, vector<32x128xf32>
    %c0_2 = arith.constant 0 : index
    %c0_3 = arith.constant 0 : index
    %4 = vector.load %arg3[%c0_2, %c0_3] : memref<32x256xbf16, #tpu.memory_space<vmem>>, vector<32x256xbf16>
    %c0_4 = arith.constant 0 : index
    %c0_5 = arith.constant 0 : index
    %5 = vector.load %arg4[%c0_4, %c0_5] : memref<256x128xbf16, #tpu.memory_space<vmem>>, vector<256x128xbf16>
    %cst = arith.constant dense<0.000000e+00> : vector<32x128xf32>
    %6 = tpu.matmul %4, %5, %cst {dimension_numbers = #tpu.dot_dimension_numbers<[1], [0], [0], [1], [0, 0, 1, 1], [], []>} : vector<32x256xbf16>, vector<256x128xbf16>, vector<32x128xf32> -> vector<32x128xf32>
    %7 = arith.addf %3, %6 : vector<32x128xf32>
    %c0_6 = arith.constant 0 : index
    %c0_7 = arith.constant 0 : index
    %8 = vector.load %arg7[%c0_6, %c0_7] : memref<32x128xf32, #tpu.memory_space<vmem>>, vector<32x128xf32>
    tpu.vector_store %arg7[%c0_6, %c0_7], %7 {strides = array<i32>} : memref<32x128xf32, #tpu.memory_space<vmem>>, vector<32x128xf32>,
    %c0_i32_8 = arith.constant 0 : i32
    %9 = arith.cmpi eq, %arg2, %c0_i32_8 : i32
    %10 = arith.extui %9 : i1 to i32
    %c0_i32_9 = arith.constant 0 : i32
    %11 = arith.cmpi ne, %10, %c0_i32_9 : i32
    scf.if %11 {
      %c0_10 = arith.constant 0 : index
      %c0_11 = arith.constant 0 : index
      %12 = vector.load %arg7[%c0_10, %c0_11] : memref<32x128xf32, #tpu.memory_space<vmem>>, vector<32x128xf32>
      %c0_12 = arith.constant 0 : index
      %c0_13 = arith.constant 0 : index
      %13 = vector.load %arg5[%c0_12, %c0_13] : memref<1x128xf32, #tpu.memory_space<vmem>>, vector<1x128xf32>
      %14 = vector.broadcast %13 : vector<1x128xf32> to vector<32x128xf32>
      %15 = arith.addf %12, %14 : vector<32x128xf32>
      %cst_14 = arith.constant 0.000000e+00 : f32
      %16 = vector.broadcast %cst_14 : f32 to vector<32x128xf32>
      %17 = arith.maximumf %15, %16 : vector<32x128xf32>
      %18 = arith.truncf %17 : vector<32x128xf32> to vector<32x128xbf16>
      %c0_15 = arith.constant 0 : index
      %c0_16 = arith.constant 0 : index
      %19 = vector.load %arg6[%c0_15, %c0_16] : memref<32x128xbf16, #tpu.memory_space<vmem>>, vector<32x128xbf16>
      tpu.vector_store %arg6[%c0_15, %c0_16], %18 {strides = array<i32>} : memref<32x128xbf16, #tpu.memory_space<vmem>>, vector<32x128xbf16>,
    } else {
    }
    return
  }
  func.func @transform_0(%arg0: i32, %arg1: i32, %arg2: i32) -> (i32, i32) {
    %c0_i32 = arith.constant 0 : i32
    return %arg0, %arg2 : i32, i32
  }
  func.func @transform_1(%arg0: i32, %arg1: i32, %arg2: i32) -> (i32, i32) {
    %c0_i32 = arith.constant 0 : i32
    return %arg2, %arg1 : i32, i32
  }
  func.func @transform_2(%arg0: i32, %arg1: i32, %arg2: i32) -> (i32, i32) {
    %c0_i32 = arith.constant 0 : i32
    %c0_i32_0 = arith.constant 0 : i32
    return %c0_i32, %arg1 : i32, i32
  }
  func.func @transform_3(%arg0: i32, %arg1: i32, %arg2: i32) -> (i32, i32) {
    %c0_i32 = arith.constant 0 : i32
    return %arg0, %arg1 : i32, i32
  }
}

module attributes {stable_mosaic.version = 11 : i64} {
  func.func @_mm_fused_kernel(%arg0: i32, %arg1: i32, %arg2: i32, %arg3: memref<8x256xbf16, #tpu.memory_space<vmem>>, %arg4: memref<256x128xbf16, #tpu.memory_space<vmem>>, %arg5: memref<1x128xf32, #tpu.memory_space<vmem>>, %arg6: memref<8x128xf32, #tpu.memory_space<vmem>>, %arg7: memref<8x128xf32, #tpu.memory_space<vmem>>) attributes {dimension_semantics = [#tpu.dimension_semantics<parallel>, #tpu.dimension_semantics<parallel>, #tpu.dimension_semantics<arbitrary>], iteration_bounds = array<i64: 1, 1, 1>, scalar_prefetch = 0 : i64, scratch_operands = 1 : i64, tpu.core_type = #tpu.core_type<tc>, window_params = [{transform_indices = @transform_0, window_bounds = array<i64: 8, 256>}, {transform_indices = @transform_1, window_bounds = array<i64: 256, 128>}, {transform_indices = @transform_2, window_bounds = array<i64: 1, 128>}, {transform_indices = @transform_3, window_bounds = array<i64: 8, 128>}]} {
    %c0_i32 = arith.constant 0 : i32
    %0 = arith.cmpi eq, %arg2, %c0_i32 : i32
    %1 = arith.extui %0 : i1 to i32
    %c0_i32_0 = arith.constant 0 : i32
    %2 = arith.cmpi ne, %1, %c0_i32_0 : i32
    scf.if %2 {
      %cst_10 = arith.constant 0.000000e+00 : f32
      %12 = vector.broadcast %cst_10 : f32 to vector<8x128xf32>
      %c0_11 = arith.constant 0 : index
      %c0_12 = arith.constant 0 : index
      %13 = vector.load %arg7[%c0_11, %c0_12] : memref<8x128xf32, #tpu.memory_space<vmem>>, vector<8x128xf32>
      tpu.vector_store %arg7[%c0_11, %c0_12], %12 {strides = array<i32>} : memref<8x128xf32, #tpu.memory_space<vmem>>, vector<8x128xf32>,
    } else {
    }
    %c0 = arith.constant 0 : index
    %c0_1 = arith.constant 0 : index
    %3 = vector.load %arg7[%c0, %c0_1] : memref<8x128xf32, #tpu.memory_space<vmem>>, vector<8x128xf32>
    %c0_2 = arith.constant 0 : index
    %c0_3 = arith.constant 0 : index
    %4 = vector.load %arg3[%c0_2, %c0_3] : memref<8x256xbf16, #tpu.memory_space<vmem>>, vector<8x256xbf16>
    %c0_4 = arith.constant 0 : index
    %c0_5 = arith.constant 0 : index
    %5 = vector.load %arg4[%c0_4, %c0_5] : memref<256x128xbf16, #tpu.memory_space<vmem>>, vector<256x128xbf16>
    %cst = arith.constant dense<0.000000e+00> : vector<8x128xf32>
    %6 = tpu.matmul %4, %5, %cst {dimension_numbers = #tpu.dot_dimension_numbers<[1], [0], [0], [1], [0, 0, 1, 1], [], []>} : vector<8x256xbf16>, vector<256x128xbf16>, vector<8x128xf32> -> vector<8x128xf32>
    %7 = arith.addf %3, %6 : vector<8x128xf32>
    %c0_6 = arith.constant 0 : index
    %c0_7 = arith.constant 0 : index
    %8 = vector.load %arg7[%c0_6, %c0_7] : memref<8x128xf32, #tpu.memory_space<vmem>>, vector<8x128xf32>
    tpu.vector_store %arg7[%c0_6, %c0_7], %7 {strides = array<i32>} : memref<8x128xf32, #tpu.memory_space<vmem>>, vector<8x128xf32>,
    %c0_i32_8 = arith.constant 0 : i32
    %9 = arith.cmpi eq, %arg2, %c0_i32_8 : i32
    %10 = arith.extui %9 : i1 to i32
    %c0_i32_9 = arith.constant 0 : i32
    %11 = arith.cmpi ne, %10, %c0_i32_9 : i32
    scf.if %11 {
      %c0_10 = arith.constant 0 : index
      %c0_11 = arith.constant 0 : index
      %12 = vector.load %arg7[%c0_10, %c0_11] : memref<8x128xf32, #tpu.memory_space<vmem>>, vector<8x128xf32>
      %c0_12 = arith.constant 0 : index
      %c0_13 = arith.constant 0 : index
      %13 = vector.load %arg5[%c0_12, %c0_13] : memref<1x128xf32, #tpu.memory_space<vmem>>, vector<1x128xf32>
      %14 = vector.broadcast %13 : vector<1x128xf32> to vector<8x128xf32>
      %15 = arith.addf %12, %14 : vector<8x128xf32>
      %cst_14 = arith.constant dense<0xFF800000> : vector<8xf32>
      %16 = vector.multi_reduction <maximumf>, %15, %cst_14 [1] : vector<8x128xf32> to vector<8xf32>
      %17 = vector.shape_cast %16 : vector<8xf32> to vector<8x1xf32>
      %18 = vector.broadcast %17 : vector<8x1xf32> to vector<8x128xf32>
      %19 = arith.subf %15, %18 : vector<8x128xf32>
      %20 = math.exp %19 : vector<8x128xf32>
      %cst_15 = arith.constant dense<0.000000e+00> : vector<8xf32>
      %21 = vector.multi_reduction <add>, %20, %cst_15 [1] : vector<8x128xf32> to vector<8xf32>
      %22 = vector.shape_cast %21 : vector<8xf32> to vector<8x1xf32>
      %23 = tpu.reciprocal %22 {approx = true} : vector<8x1xf32> -> vector<8x1xf32>
      %24 = vector.broadcast %23 : vector<8x1xf32> to vector<8x128xf32>
      %25 = arith.mulf %20, %24 : vector<8x128xf32>
      %c0_16 = arith.constant 0 : index
      %c0_17 = arith.constant 0 : index
      %26 = vector.load %arg6[%c0_16, %c0_17] : memref<8x128xf32, #tpu.memory_space<vmem>>, vector<8x128xf32>
      tpu.vector_store %arg6[%c0_16, %c0_17], %25 {strides = array<i32>} : memref<8x128xf32, #tpu.memory_space<vmem>>, vector<8x128xf32>,
    } else {
    }
    return
  }
  func.func @transform_0(%arg0: i32, %arg1: i32, %arg2: i32) -> (i32, i32) {
    %c0_i32 = arith.constant 0 : i32
    return %arg0, %arg2 : i32, i32
  }
  func.func @transform_1(%arg0: i32, %arg1: i32, %arg2: i32) -> (i32, i32) {
    %c0_i32 = arith.constant 0 : i32
    return %arg2, %arg1 : i32, i32
  }
  func.func @transform_2(%arg0: i32, %arg1: i32, %arg2: i32) -> (i32, i32) {
    %c0_i32 = arith.constant 0 : i32
    %c0_i32_0 = arith.constant 0 : i32
    return %c0_i32, %arg1 : i32, i32
  }
  func.func @transform_3(%arg0: i32, %arg1: i32, %arg2: i32) -> (i32, i32) {
    %c0_i32 = arith.constant 0 : i32
    return %arg0, %arg1 : i32, i32
  }
}

</mosaic_0001>

<llo_original>
// kernel: _lambda_.23
$region0: #{_lambda_.23}
  #allocation0 [shape = 'u32[]', space=smem, size = 0x4, offset = 0x4, fixed_abs, tag = 'smem constant byte address 0x4 - core index']
  #allocation1 [shape = 'u32[144,128]{1,0:T(1,128)}', space=vmem, size = 0x12000, scoped, tag = 'internal scratch']
  #allocation2 [shape = 'f32[128,128]{1,0:T(8,128)}', space=vmem, size = 0x10000, scoped, tag = 'scratch operand']
  %s0 = inlined_call_operand.vmem [shape: bf16[512,9], index: 0, kind: input, shape index: {}]
  %s1 = inlined_call_operand.hbm [shape: bf16[9,128], index: 1, kind: input, shape index: {}]
  %s2 = inlined_call_operand.vmem [shape: f32[1,128], index: 2, kind: input, shape index: {}]
  %s3 = inlined_call_operand.vmem [shape: bf16[512,128], index: 3, kind: output, shape index: {}]
  %s4 = sld [smem:[#allocation0]]
  $region57: #{_lambda_.23} parent=0
    _
  %s6 = ssub.s32 1, %s4
  %s7 = scalar_select 0, %s6, %s4
  $region1: #{_lambda_.23} parent=0
    #allocation3 [shape = 'u8[4096]{0}', space=vmem, size = 0x1000, scoped, tag = 'input window, operand 1, single buffered']
    #allocation4 [shape = 's32[2]{0}', space=sflag, size = 0x8, scoped, tag = 'scoped memory for _lambda_.23']
    %8 = vsyncpa [#allocation4], 0
    loop: start=0, step=1, limit=6
    $region2: #{_lambda_.23} parent=1 // loop_pre_header
      _
    $region3: #{_lambda_.23} parent=1 // loop_header
      %s10 = sphi 0, %s14
      %p11 = scmp.ge.s32.totalorder %s10, 6
      %s17 = sphi 0, %s36
      %s18 = sphi 0, %s32
      %s19 = sphi 0, %s28
      %s20 = sphi 0, %s17
      %s21 = sphi 0, %s18
      %s22 = sphi 0, %s19
      %s23 = sphi 0, %s20
      %s24 = sphi 0, %s21
      %s25 = sphi 0, %s22
      %s41 = sphi 0, %s43
      %s44 = sphi 0, %s41
      %s45 = sphi 0, %s44
      %s61 = sphi 0, %s45
      %s69 = sphi 0, %s71
      %s72 = sphi 0, %s69
      %s73 = sphi 0, %s72
      %s89 = sphi 0, %s73
      %s95 = sphi 0, %s97
      %s98 = sphi 0, %s95
      %s99 = sphi 0, %s98
      %s115 = sphi 0, %s99
      %s123 = sphi 0, %s125
      %s126 = sphi 0, %s123
      %s127 = sphi 0, %s126
      %s143 = sphi 0, %s127
    $region4: #{_lambda_.23} parent=1 // loop_header_branch
      %13 = sbr.rel (%p11) target = $region8
    $region5: #{_lambda_.23} parent=1 // loop_body
      %s15 = ssub.s32 %s10, 1
      %s16 = ssub.s32 %s10, 2
      %s26 = sadd.s32 1, %s19
      %p27 = scmp.ge.s32.totalorder %s26, 1
      %s28 = scalar_select %p27, 0, %s26
      %s29 = sadd.s32 1, %s18
      %s30 = scalar_select %p27, %s29, %s18
      %p31 = scmp.ge.s32.totalorder %s30, 1
      %s32 = scalar_select %p31, 0, %s30
      %s33 = sadd.s32 1, %s17
      %s34 = scalar_select %p31, %s33, %s17
      %p35 = scmp.ge.s32.totalorder %s34, 4
      %s36 = scalar_select %p35, 0, %s34
      %s37 = ssub.s32 %s17, %s36
      %s38 = ssub.s32 %s19, %s28
      %s39 = sor.u32 %s37, %s38
      %p40 = scmp.eq.s32.totalorder %s39, 0
      %s42 = sadd.s32 %s41, 1
      %s43 = scalar_select %p40, %s41, %s42
      %p46 = pneg %p40
      %p47 = scmp.eq.s32.totalorder %s10, 3
      %p48 = por %p46, %p47
      %p49 = scmp.ne.s32.totalorder %s41, %s44
      %p50 = scmp.eq.s32.totalorder %s10, 0
      %p51 = por %p49, %p50
      %p52 = scmp.ne.s32.totalorder %s41, %s44
      %p53 = scmp.eq.s32.totalorder %s15, 3
      %p54 = por %p52, %p53
      %p55 = scmp.ne.s32.totalorder %s44, %s45
      %p56 = scmp.eq.s32.totalorder %s15, 0
      %p57 = por %p55, %p56
      %p58 = scmp.ne.s32.totalorder %s44, %s45
      %p59 = scmp.eq.s32.totalorder %s16, 3
      %p60 = por %p58, %p59
      %p62 = scmp.ne.s32.totalorder %s45, %s61
      %p63 = scmp.eq.s32.totalorder %s16, 0
      %p64 = por %p62, %p63
      %s65 = ssub.s32 %s19, %s28
      %s66 = ssub.s32 %s18, %s32
      %s67 = sor.u32 %s65, %s66
      %p68 = scmp.eq.s32.totalorder %s67, 0
      %s70 = sadd.s32 %s69, 1
      %s71 = scalar_select %p68, %s69, %s70
      %p74 = pneg %p68
      %p75 = scmp.eq.s32.totalorder %s10, 3
      %p76 = por %p74, %p75
      %p77 = scmp.ne.s32.totalorder %s69, %s72
      %p78 = scmp.eq.s32.totalorder %s10, 0
      %p79 = por %p77, %p78
      %p80 = scmp.ne.s32.totalorder %s69, %s72
      %p81 = scmp.eq.s32.totalorder %s15, 3
      %p82 = por %p80, %p81
      %p83 = scmp.ne.s32.totalorder %s72, %s73
      %p84 = scmp.eq.s32.totalorder %s15, 0
      %p85 = por %p83, %p84
      %p86 = scmp.ne.s32.totalorder %s72, %s73
      %p87 = scmp.eq.s32.totalorder %s16, 3
      %p88 = por %p86, %p87
      %p90 = scmp.ne.s32.totalorder %s73, %s89
      %p91 = scmp.eq.s32.totalorder %s16, 0
      %p92 = por %p90, %p91
      %s93 = ssub.s32 %s18, %s32
      %p94 = scmp.eq.s32.totalorder %s93, 0
      %s96 = sadd.s32 %s95, 1
      %s97 = scalar_select %p94, %s95, %s96
      %p100 = pneg %p94
      %p101 = scmp.eq.s32.totalorder %s10, 3
      %p102 = por %p100, %p101
      %p103 = scmp.ne.s32.totalorder %s95, %s98
      %p104 = scmp.eq.s32.totalorder %s10, 0
      %p105 = por %p103, %p104
      %p106 = scmp.ne.s32.totalorder %s95, %s98
      %p107 = scmp.eq.s32.totalorder %s15, 3
      %p108 = por %p106, %p107
      %p109 = scmp.ne.s32.totalorder %s98, %s99
      %p110 = scmp.eq.s32.totalorder %s15, 0
      %p111 = por %p109, %p110
      %p112 = scmp.ne.s32.totalorder %s98, %s99
      %p113 = scmp.eq.s32.totalorder %s16, 3
      %p114 = por %p112, %p113
      %p116 = scmp.ne.s32.totalorder %s99, %s115
      %p117 = scmp.eq.s32.totalorder %s16, 0
      %p118 = por %p116, %p117
      %s119 = ssub.s32 %s17, %s36
      %s120 = ssub.s32 %s18, %s32
      %s121 = sor.u32 %s119, %s120
      %p122 = scmp.eq.s32.totalorder %s121, 0
      %s124 = sadd.s32 %s123, 1
      %s125 = scalar_select %p122, %s123, %s124
      %p128 = pneg %p122
      %p129 = scmp.eq.s32.totalorder %s10, 3
      %p130 = por %p128, %p129
      %p131 = scmp.ne.s32.totalorder %s123, %s126
      %p132 = scmp.eq.s32.totalorder %s10, 0
      %p133 = por %p131, %p132
      %p134 = scmp.ne.s32.totalorder %s123, %s126
      %p135 = scmp.eq.s32.totalorder %s15, 3
      %p136 = por %p134, %p135
      %p137 = scmp.ne.s32.totalorder %s126, %s127
      %p138 = scmp.eq.s32.totalorder %s15, 0
      %p139 = por %p137, %p138
      %p140 = scmp.ne.s32.totalorder %s126, %s127
      %p141 = scmp.eq.s32.totalorder %s16, 3
      %p142 = por %p140, %p141
      %p144 = scmp.ne.s32.totalorder %s127, %s143
      %p145 = scmp.eq.s32.totalorder %s16, 0
      %p146 = por %p144, %p145
      %p147 = scmp.le.s32.totalorder 1, %s10
      %p148 = scmp.lt.s32.totalorder %s10, 5
      %p149 = pnand %p147, %p148
      %p150 = pneg %p149
      // Predicated region
      $region9: #{_lambda_.23} parent=5 // pred_check
        _
      $region10: #{_lambda_.23} parent=5 // pred_check_branch
        %152 = sbr.rel (%p149) target = $region12
      $region11: #{_lambda_.23} parent=5 // pred_region
        %s153 = ssub.s32 %s10, 1
        // Predicated region
        $region13: #{_lambda_.23} parent=11 // pred_check
          %p154 = pneg %p85
        $region14: #{_lambda_.23} parent=11 // pred_check_branch
          %156 = sbr.rel (%p154) target = $region16
        $region15: #{_lambda_.23} parent=11 // pred_region
          %s157 = smul.u32 2, %s22
          %s159 = ssub.s32 128, 128
          %160 = vsyncadd [#allocation4], %s159
          %s161 = sadd.s32 %s21, %s157
          %s162 = smul.addr %s161, 64
          %s163 = scalar_lea.hbm %s1, %s162
          %s164 = sshll.u32 [#allocation3], 4
          %s165 = int_to_ptr.vmem [resolvable:$true] %s164
          %170 = dma.hbm_to_vmem [thread:$0]  %s163, 128, %s165, [#allocation4], 64, 64, 4
        $region16: #{_lambda_.23} parent=11 // pred_fallthru
          _
        // Predicated region
        $region17: #{_lambda_.23} parent=11 // pred_check
          %p171 = pneg %p111
        $region18: #{_lambda_.23} parent=11 // pred_check_branch
          %173 = sbr.rel (%p171) target = $region20
        $region19: #{_lambda_.23} parent=11 // pred_region
          %p174 = scmp.lt.s32.totalorder %s21, 0
          %s175 = scalar_select %p174, %s21, 0
          %s176 = scalar_lea.vmem %s2, %s175
        $region20: #{_lambda_.23} parent=11 // pred_fallthru
          _
      $region12: #{_lambda_.23} parent=5 // pred_fallthru
        _
      %p177 = scmp.lt.s32.totalorder %s10, 4
      // Predicated region
      $region21: #{_lambda_.23} parent=5 // pred_check
        %p178 = pneg %p177
      $region22: #{_lambda_.23} parent=5 // pred_check_branch
        %180 = sbr.rel (%p178) target = $region24
      $region23: #{_lambda_.23} parent=5 // pred_region
        // Predicated region
        $region25: #{_lambda_.23} parent=23 // pred_check
          %p181 = pneg %p51
        $region26: #{_lambda_.23} parent=23 // pred_check_branch
          %183 = sbr.rel (%p181) target = $region28
        $region27: #{_lambda_.23} parent=23 // pred_region
          %s184 = smul.u32 16, %s17
          %p185 = scmp.lt.s32.totalorder %s184, 63
          %s186 = scalar_select %p185, %s184, 63
          %p187 = scmp.lt.s32.totalorder %s19, 0
          %s188 = scalar_select %p187, %s19, 0
          %s189 = sadd.s32 %s188, %s186
          %s190 = smul.addr %s189, 4
          %s191 = scalar_lea.vmem %s0, %s190
          %s192 = smul.u32 16, %s17
        $region28: #{_lambda_.23} parent=23 // pred_fallthru
          _
      $region24: #{_lambda_.23} parent=5 // pred_fallthru
        _
      %p193 = scmp.le.s32.totalorder 1, %s10
      %p194 = scmp.lt.s32.totalorder %s10, 5
      %p195 = pnand %p193, %p194
      %p196 = pneg %p195
      // Predicated region
      $region29: #{_lambda_.23} parent=5 // pred_check
        _
      $region30: #{_lambda_.23} parent=5 // pred_check_branch
        %198 = sbr.rel (%p195) target = $region32
      $region31: #{_lambda_.23} parent=5 // pred_region
        %s199 = ssub.s32 %s10, 1
        // Predicated region
        $region33: #{_lambda_.23} parent=31 // pred_check
          %p200 = pneg %p85
        $region34: #{_lambda_.23} parent=31 // pred_check_branch
          %202 = sbr.rel (%p200) target = $region36
        $region35: #{_lambda_.23} parent=31 // pred_region
          %203 = dma.done [#allocation4], 128
        $region36: #{_lambda_.23} parent=31 // pred_fallthru
          _
        %s204 = smul.u32 16, %s20
        %p205 = scmp.lt.s32.totalorder %s204, 63
        %s206 = scalar_select %p205, %s204, 63
        %p207 = scmp.lt.s32.totalorder %s22, 0
        %s208 = scalar_select %p207, %s22, 0
        %s209 = sadd.s32 %s208, %s206
        %s210 = smul.addr %s209, 4
        %s211 = scalar_lea.vmem %s0, %s210
        %p212 = pneg %p57
        %p213 = pneg %p54
        %p214 = pneg %p85
        %p215 = pneg %p82
        %p216 = scmp.lt.s32.totalorder %s21, 0
        %s217 = scalar_select %p216, %s21, 0
        %s218 = scalar_lea.vmem %s2, %s217
        %p219 = pneg %p111
        %p220 = pneg %p108
        %p221 = pneg %p139
        %p222 = pneg %p136
        %s223 = smul.u32 16, %s20
        %p224 = scmp.lt.s32.totalorder %s223, 63
        %s225 = scalar_select %p224, %s223, 63
        %p226 = scmp.lt.s32.totalorder %s21, 0
        %s227 = scalar_select %p226, %s21, 0
        %s228 = sadd.s32 %s227, %s225
        %s229 = smul.addr %s228, 4
        %s230 = scalar_lea.vmem %s3, %s229
        %s231 = smul.u32 16, %s20
        %p232 = scmp.lt.s32.totalorder %s231, 63
        %s233 = scalar_select %p232, %s231, 63
        %p234 = scmp.lt.s32.totalorder %s22, 0
        %s235 = scalar_select %p234, %s22, 0
        %s236 = sadd.s32 %s235, %s233
        %s237 = smul.addr %s236, 4
        %s238 = scalar_lea.vmem %s0, %s237
        %s239 = smul.u32 16, %s20
        %s240 = smul.u32 2, %s22
        %p241 = scmp.lt.s32.totalorder %s21, 0
        %s242 = scalar_select %p241, %s21, 0
        %s243 = scalar_lea.vmem %s2, %s242
        %s244 = smul.u32 16, %s20
        %p245 = scmp.lt.s32.totalorder %s244, 63
        %s246 = scalar_select %p245, %s244, 63
        %p247 = scmp.lt.s32.totalorder %s21, 0
        %s248 = scalar_select %p247, %s21, 0
        %s249 = sadd.s32 %s248, %s246
        %s250 = smul.addr %s249, 4
        %s251 = scalar_lea.vmem %s3, %s250
        %s252 = smul.u32 16, %s20
        %p254 = scmp.eq.s32.totalorder %s22, 0
        // Predicated region
        $region37: #{_lambda_.23} parent=31 // pred_check
          %p255 = pneg %p254
        $region38: #{_lambda_.23} parent=31 // pred_check_branch
          %257 = sbr.rel (%p255) target = $region40
        $region39: #{_lambda_.23} parent=31 // pred_region
          %258 = vst [vmem:[#allocation2] sm:$0xff] 0.0
          %259 = vst [vmem:[#allocation2 + $0x8] sm:$0xff] 0.0
          %260 = vst [vmem:[#allocation2 + $0x10] sm:$0xff] 0.0
          %261 = vst [vmem:[#allocation2 + $0x18] sm:$0xff] 0.0
          %262 = vst [vmem:[#allocation2 + $0x20] sm:$0xff] 0.0
          %263 = vst [vmem:[#allocation2 + $0x28] sm:$0xff] 0.0
          %264 = vst [vmem:[#allocation2 + $0x30] sm:$0xff] 0.0
          %265 = vst [vmem:[#allocation2 + $0x38] sm:$0xff] 0.0
          %266 = vst [vmem:[#allocation2 + $0x40] sm:$0xff] 0.0
          %267 = vst [vmem:[#allocation2 + $0x48] sm:$0xff] 0.0
          %268 = vst [vmem:[#allocation2 + $0x50] sm:$0xff] 0.0
          %269 = vst [vmem:[#allocation2 + $0x58] sm:$0xff] 0.0
          %270 = vst [vmem:[#allocation2 + $0x60] sm:$0xff] 0.0
          %271 = vst [vmem:[#allocation2 + $0x68] sm:$0xff] 0.0
          %272 = vst [vmem:[#allocation2 + $0x70] sm:$0xff] 0.0
          %273 = vst [vmem:[#allocation2 + $0x78] sm:$0xff] 0.0
        $region40: #{_lambda_.23} parent=31 // pred_fallthru
          _
        %v274 = vld [vmem:[#allocation2] sm:$0xff]
        %v275 = vld [vmem:[#allocation2 + $0x8] sm:$0xff]
        %v276 = vld [vmem:[#allocation2 + $0x10] sm:$0xff]
        %v277 = vld [vmem:[#allocation2 + $0x18] sm:$0xff]
        %v278 = vld [vmem:[#allocation2 + $0x20] sm:$0xff]
        %v279 = vld [vmem:[#allocation2 + $0x28] sm:$0xff]
        %v280 = vld [vmem:[#allocation2 + $0x30] sm:$0xff]
        %v281 = vld [vmem:[#allocation2 + $0x38] sm:$0xff]
        %v282 = vld [vmem:[#allocation2 + $0x40] sm:$0xff]
        %v283 = vld [vmem:[#allocation2 + $0x48] sm:$0xff]
        %v284 = vld [vmem:[#allocation2 + $0x50] sm:$0xff]
        %v285 = vld [vmem:[#allocation2 + $0x58] sm:$0xff]
        %v286 = vld [vmem:[#allocation2 + $0x60] sm:$0xff]
        %v287 = vld [vmem:[#allocation2 + $0x68] sm:$0xff]
        %v288 = vld [vmem:[#allocation2 + $0x70] sm:$0xff]
        %v289 = vld [vmem:[#allocation2 + $0x78] sm:$0xff]
        %v290 = vld [vmem:[%s238] sm:$0xf]
        %v291 = vld [vmem:[%s238 + $0x4] sm:$0xf]
        %v292 = vld [vmem:[%s238 + $0x8] sm:$0xf]
        %v293 = vld [vmem:[%s238 + $0xc] sm:$0xf]
        %v294 = vld [vmem:[%s238 + $0x10] sm:$0xf]
        %v295 = vld [vmem:[%s238 + $0x14] sm:$0xf]
        %v296 = vld [vmem:[%s238 + $0x18] sm:$0xf]
        %v297 = vld [vmem:[%s238 + $0x1c] sm:$0xf]
        %v298 = vld [vmem:[%s238 + $0x20] sm:$0xf]
        %v299 = vld [vmem:[%s238 + $0x24] sm:$0xf]
        %v300 = vld [vmem:[%s238 + $0x28] sm:$0xf]
        %v301 = vld [vmem:[%s238 + $0x2c] sm:$0xf]
        %v302 = vld [vmem:[%s238 + $0x30] sm:$0xf]
        %v303 = vld [vmem:[%s238 + $0x34] sm:$0xf]
        %v304 = vld [vmem:[%s238 + $0x38] sm:$0xf]
        %v305 = vld [vmem:[%s238 + $0x3c] sm:$0xf]
        %v306 = vld [vmem:[#allocation3] sm:$0xf]
        %v307 = vld [vmem:[#allocation3 + $0x4] sm:$0x1]
        %v324 = vunpack.c.l.b16 %v290
        %v325 = vunpack.c.l.b16 %v291
        %v326 = vunpack.c.l.b16 %v292
        %v327 = vunpack.c.l.b16 %v293
        %v328 = vunpack.c.l.b16 %v294
        %v329 = vunpack.c.l.b16 %v295
        %v330 = vunpack.c.l.b16 %v296
        %v331 = vunpack.c.l.b16 %v297
        %v332 = vunpack.c.l.b16 %v298
        %v333 = vunpack.c.l.b16 %v299
        %v334 = vunpack.c.l.b16 %v300
        %v335 = vunpack.c.l.b16 %v301
        %v336 = vunpack.c.l.b16 %v302
        %v337 = vunpack.c.l.b16 %v303
        %v338 = vunpack.c.l.b16 %v304
        %v339 = vunpack.c.l.b16 %v305
        %v340 = vpack.c.b16 %v325, %v324
        %v341 = vpack.c.b16 %v327, %v326
        %v342 = vpack.c.b16 %v329, %v328
        %v343 = vpack.c.b16 %v331, %v330
        %v344 = vpack.c.b16 %v333, %v332
        %v345 = vpack.c.b16 %v335, %v334
        %v346 = vpack.c.b16 %v337, %v336
        %v347 = vpack.c.b16 %v339, %v338
        %v350 = vunpack.c.l.b16 %v306
        %v351 = vunpack.c.l.b16 %v307
        %v352 = vpack.c.b16 %v351, %v350
        %vm353 = vcmask 72704
        %v355 = vsel %vm353, %v340, 0
        %v358 = vsel %vm353, %v341, 0
        %v361 = vsel %vm353, %v342, 0
        %v364 = vsel %vm353, %v343, 0
        %v367 = vsel %vm353, %v344, 0
        %v370 = vsel %vm353, %v345, 0
        %v373 = vsel %vm353, %v346, 0
        %v376 = vsel %vm353, %v347, 0
        %vm378 = vcmask 1043456
        %vm379 = vcmask 1044480
        %v380 = vsel %vm378, 4294967295, 65535
        %v381 = vsel %vm379, %v380, 0
        %v383 = vand.u32 %v352, %v381
        %385 = vmatprep.subr.bf16.mxu0 0
        %386 = vmatpush1.bf16.msra.mxu0 %v383
        %387 = vmatprep.subr.bf16.mxu0 0
        %388 = vmatpush1.bf16.msra.mxu0 0
        %389 = vmatprep.subr.bf16.mxu0 0
        %390 = vmatpush1.bf16.msra.mxu0 0
        %391 = vmatprep.subr.bf16.mxu0 0
        %392 = vmatpush1.bf16.msra.mxu0 0
        %393 = vmatprep.subr.bf16.mxu0 0
        %394 = vmatpush1.bf16.msra.mxu0 0
        %395 = vmatprep.subr.bf16.mxu0 0
        %396 = vmatpush1.bf16.msra.mxu0 0
        %397 = vmatprep.subr.bf16.mxu0 0
        %398 = vmatpush1.bf16.msra.mxu0 0
        %399 = vmatprep.subr.bf16.mxu0 0
        %400 = vmatpush1.bf16.msra.mxu0 0
        %401 = vmatprep.subr.bf16.mxu0 0
        %402 = vmatpush1.bf16.msra.mxu0 0
        %403 = vmatprep.subr.bf16.mxu0 0
        %404 = vmatpush1.bf16.msra.mxu0 0
        %405 = vmatprep.subr.bf16.mxu0 0
        %406 = vmatpush1.bf16.msra.mxu0 0
        %407 = vmatprep.subr.bf16.mxu0 0
        %408 = vmatpush1.bf16.msra.mxu0 0
        %409 = vmatprep.subr.bf16.mxu0 0
        %410 = vmatpush1.bf16.msra.mxu0 0
        %411 = vmatprep.subr.bf16.mxu0 0
        %412 = vmatpush1.bf16.msra.mxu0 0
        %413 = vmatprep.subr.bf16.mxu0 0
        %414 = vmatpush1.bf16.msra.mxu0 0
        %415 = vmatprep.subr.bf16.mxu0 0
        %416 = vmatpush1.bf16.msra.mxu0 0
        %417 = vmatprep.mubr.bf16.mxu0 0
        %418 = vmatmul.mubr.bf16.gmra.mrb[0].mxu0 %v355
        %v419 = vpop.f32.mrb[0].mxu0
        %v420 = vadd.f32 0.0, %v419
        %v421 = vpop.f32.mrb[0].mxu0
        %v422 = vpop.f32.mrb[0].mxu0
        %v423 = vadd.f32 0.0, %v422
        %v424 = vpop.f32.mrb[0].mxu0
        %425 = vmatprep.mubr.bf16.mxu0 0
        %426 = vmatmul.mubr.bf16.gmra.mrb[0].mxu0 %v358
        %v427 = vpop.f32.mrb[0].mxu0
        %v428 = vadd.f32 0.0, %v427
        %v429 = vpop.f32.mrb[0].mxu0
        %v430 = vpop.f32.mrb[0].mxu0
        %v431 = vadd.f32 0.0, %v430
        %v432 = vpop.f32.mrb[0].mxu0
        %433 = vmatprep.mubr.bf16.mxu0 0
        %434 = vmatmul.mubr.bf16.gmra.mrb[0].mxu0 %v361
        %v435 = vpop.f32.mrb[0].mxu0
        %v436 = vadd.f32 0.0, %v435
        %v437 = vpop.f32.mrb[0].mxu0
        %v438 = vpop.f32.mrb[0].mxu0
        %v439 = vadd.f32 0.0, %v438
        %v440 = vpop.f32.mrb[0].mxu0
        %441 = vmatprep.mubr.bf16.mxu0 0
        %442 = vmatmul.mubr.bf16.gmra.mrb[0].mxu0 %v364
        %v443 = vpop.f32.mrb[0].mxu0
        %v444 = vadd.f32 0.0, %v443
        %v445 = vpop.f32.mrb[0].mxu0
        %v446 = vpop.f32.mrb[0].mxu0
        %v447 = vadd.f32 0.0, %v446
        %v448 = vpop.f32.mrb[0].mxu0
        %449 = vmatprep.mubr.bf16.mxu0 0
        %450 = vmatmul.mubr.bf16.gmra.mrb[0].mxu0 %v367
        %v451 = vpop.f32.mrb[0].mxu0
        %v452 = vadd.f32 0.0, %v451
        %v453 = vpop.f32.mrb[0].mxu0
        %v454 = vpop.f32.mrb[0].mxu0
        %v455 = vadd.f32 0.0, %v454
        %v456 = vpop.f32.mrb[0].mxu0
        %457 = vmatprep.mubr.bf16.mxu0 0
        %458 = vmatmul.mubr.bf16.gmra.mrb[0].mxu0 %v370
        %v459 = vpop.f32.mrb[0].mxu0
        %v460 = vadd.f32 0.0, %v459
        %v461 = vpop.f32.mrb[0].mxu0
        %v462 = vpop.f32.mrb[0].mxu0
        %v463 = vadd.f32 0.0, %v462
        %v464 = vpop.f32.mrb[0].mxu0
        %465 = vmatprep.mubr.bf16.mxu0 0
        %466 = vmatmul.mubr.bf16.gmra.mrb[0].mxu0 %v373
        %v467 = vpop.f32.mrb[0].mxu0
        %v468 = vadd.f32 0.0, %v467
        %v469 = vpop.f32.mrb[0].mxu0
        %v470 = vpop.f32.mrb[0].mxu0
        %v471 = vadd.f32 0.0, %v470
        %v472 = vpop.f32.mrb[0].mxu0
        %473 = vmatprep.mubr.bf16.mxu0 0
        %474 = vmatmul.mubr.bf16.gmra.mrb[0].mxu0 %v376
        %v475 = vpop.f32.mrb[0].mxu0
        %v476 = vadd.f32 0.0, %v475
        %v477 = vpop.f32.mrb[0].mxu0
        %v478 = vpop.f32.mrb[0].mxu0
        %v479 = vadd.f32 0.0, %v478
        %v480 = vpop.f32.mrb[0].mxu0
        %481 = vdwg.mxu0
        %v482 = vadd.f32 %v274, %v420
        %v483 = vadd.f32 %v275, %v423
        %v484 = vadd.f32 %v276, %v428
        %v485 = vadd.f32 %v277, %v431
        %v486 = vadd.f32 %v278, %v436
        %v487 = vadd.f32 %v279, %v439
        %v488 = vadd.f32 %v280, %v444
        %v489 = vadd.f32 %v281, %v447
        %v490 = vadd.f32 %v282, %v452
        %v491 = vadd.f32 %v283, %v455
        %v492 = vadd.f32 %v284, %v460
        %v493 = vadd.f32 %v285, %v463
        %v494 = vadd.f32 %v286, %v468
        %v495 = vadd.f32 %v287, %v471
        %v496 = vadd.f32 %v288, %v476
        %v497 = vadd.f32 %v289, %v479
        %498 = vst [vmem:[#allocation2] sm:$0xff] %v482
        %499 = vst [vmem:[#allocation2 + $0x8] sm:$0xff] %v483
        %500 = vst [vmem:[#allocation2 + $0x10] sm:$0xff] %v484
        %501 = vst [vmem:[#allocation2 + $0x18] sm:$0xff] %v485
        %502 = vst [vmem:[#allocation2 + $0x20] sm:$0xff] %v486
        %503 = vst [vmem:[#allocation2 + $0x28] sm:$0xff] %v487
        %504 = vst [vmem:[#allocation2 + $0x30] sm:$0xff] %v488
        %505 = vst [vmem:[#allocation2 + $0x38] sm:$0xff] %v489
        %506 = vst [vmem:[#allocation2 + $0x40] sm:$0xff] %v490
        %507 = vst [vmem:[#allocation2 + $0x48] sm:$0xff] %v491
        %508 = vst [vmem:[#allocation2 + $0x50] sm:$0xff] %v492
        %509 = vst [vmem:[#allocation2 + $0x58] sm:$0xff] %v493
        %510 = vst [vmem:[#allocation2 + $0x60] sm:$0xff] %v494
        %511 = vst [vmem:[#allocation2 + $0x68] sm:$0xff] %v495
        %512 = vst [vmem:[#allocation2 + $0x70] sm:$0xff] %v496
        %513 = vst [vmem:[#allocation2 + $0x78] sm:$0xff] %v497
        // Predicated region
        $region41: #{_lambda_.23} parent=31 // pred_check
          %p514 = pneg %p254
        $region42: #{_lambda_.23} parent=31 // pred_check_branch
          %516 = sbr.rel (%p514) target = $region44
        $region43: #{_lambda_.23} parent=31 // pred_region
          %v517 = vld [vmem:[#allocation2] sm:$0xff]
          %v518 = vld [vmem:[#allocation2 + $0x8] sm:$0xff]
          %v519 = vld [vmem:[#allocation2 + $0x10] sm:$0xff]
          %v520 = vld [vmem:[#allocation2 + $0x18] sm:$0xff]
          %v521 = vld [vmem:[#allocation2 + $0x20] sm:$0xff]
          %v522 = vld [vmem:[#allocation2 + $0x28] sm:$0xff]
          %v523 = vld [vmem:[#allocation2 + $0x30] sm:$0xff]
          %v524 = vld [vmem:[#allocation2 + $0x38] sm:$0xff]
          %v525 = vld [vmem:[#allocation2 + $0x40] sm:$0xff]
          %v526 = vld [vmem:[#allocation2 + $0x48] sm:$0xff]
          %v527 = vld [vmem:[#allocation2 + $0x50] sm:$0xff]
          %v528 = vld [vmem:[#allocation2 + $0x58] sm:$0xff]
          %v529 = vld [vmem:[#allocation2 + $0x60] sm:$0xff]
          %v530 = vld [vmem:[#allocation2 + $0x68] sm:$0xff]
          %v531 = vld [vmem:[#allocation2 + $0x70] sm:$0xff]
          %v532 = vld [vmem:[#allocation2 + $0x78] sm:$0xff]
          %v533 = vld [vmem:[%s243] sm:$0x1]
          %v535 = vlaneseq
          %v536 = vshrl.u32 %v535, 7
          %v537 = vsub.s32 0, %v536
          %v538 = vrot.slane %v533, %v537
          %v540 = vadd.f32 %v517, %v538
          %v541 = vadd.f32 %v518, %v538
          %v542 = vadd.f32 %v519, %v538
          %v543 = vadd.f32 %v520, %v538
          %v544 = vadd.f32 %v521, %v538
          %v545 = vadd.f32 %v522, %v538
          %v546 = vadd.f32 %v523, %v538
          %v547 = vadd.f32 %v524, %v538
          %v548 = vadd.f32 %v525, %v538
          %v549 = vadd.f32 %v526, %v538
          %v550 = vadd.f32 %v527, %v538
          %v551 = vadd.f32 %v528, %v538
          %v552 = vadd.f32 %v529, %v538
          %v553 = vadd.f32 %v530, %v538
          %v554 = vadd.f32 %v531, %v538
          %v555 = vadd.f32 %v532, %v538
          %v556 = vmax.f32 %v540, 0.0
          %v557 = vmax.f32 %v541, 0.0
          %v558 = vmax.f32 %v542, 0.0
          %v559 = vmax.f32 %v543, 0.0
          %v560 = vmax.f32 %v544, 0.0
          %v561 = vmax.f32 %v545, 0.0
          %v562 = vmax.f32 %v546, 0.0
          %v563 = vmax.f32 %v547, 0.0
          %v564 = vmax.f32 %v548, 0.0
          %v565 = vmax.f32 %v549, 0.0
          %v566 = vmax.f32 %v550, 0.0
          %v567 = vmax.f32 %v551, 0.0
          %v568 = vmax.f32 %v552, 0.0
          %v569 = vmax.f32 %v553, 0.0
          %v570 = vmax.f32 %v554, 0.0
          %v571 = vmax.f32 %v555, 0.0
          %v572 = vpack.c.bf16 %v557, %v556
          %v573 = vpack.c.bf16 %v559, %v558
          %v574 = vpack.c.bf16 %v561, %v560
          %v575 = vpack.c.bf16 %v563, %v562
          %v576 = vpack.c.bf16 %v565, %v564
          %v577 = vpack.c.bf16 %v567, %v566
          %v578 = vpack.c.bf16 %v569, %v568
          %v579 = vpack.c.bf16 %v571, %v570
          %v588 = vunpack.c.l.b16 %v572
          %v589 = vunpack.c.h.b16 %v572
          %v590 = vunpack.c.l.b16 %v573
          %v591 = vunpack.c.h.b16 %v573
          %v592 = vunpack.c.l.b16 %v574
          %v593 = vunpack.c.h.b16 %v574
          %v594 = vunpack.c.l.b16 %v575
          %v595 = vunpack.c.h.b16 %v575
          %v596 = vunpack.c.l.b16 %v576
          %v597 = vunpack.c.h.b16 %v576
          %v598 = vunpack.c.l.b16 %v577
          %v599 = vunpack.c.h.b16 %v577
          %v600 = vunpack.c.l.b16 %v578
          %v601 = vunpack.c.h.b16 %v578
          %v602 = vunpack.c.l.b16 %v579
          %v603 = vunpack.c.h.b16 %v579
          %v604 = vpack.c.b16 %v588, %v588
          %v605 = vpack.c.b16 %v589, %v589
          %v606 = vpack.c.b16 %v590, %v590
          %v607 = vpack.c.b16 %v591, %v591
          %v608 = vpack.c.b16 %v592, %v592
          %v609 = vpack.c.b16 %v593, %v593
          %v610 = vpack.c.b16 %v594, %v594
          %v611 = vpack.c.b16 %v595, %v595
          %v612 = vpack.c.b16 %v596, %v596
          %v613 = vpack.c.b16 %v597, %v597
          %v614 = vpack.c.b16 %v598, %v598
          %v615 = vpack.c.b16 %v599, %v599
          %v616 = vpack.c.b16 %v600, %v600
          %v617 = vpack.c.b16 %v601, %v601
          %v618 = vpack.c.b16 %v602, %v602
          %v619 = vpack.c.b16 %v603, %v603
          %636 = vst [vmem:[%s251] sm:$0xf] %v604
          %637 = vst [vmem:[%s251 + $0x4] sm:$0xf] %v605
          %638 = vst [vmem:[%s251 + $0x8] sm:$0xf] %v606
          %639 = vst [vmem:[%s251 + $0xc] sm:$0xf] %v607
          %640 = vst [vmem:[%s251 + $0x10] sm:$0xf] %v608
          %641 = vst [vmem:[%s251 + $0x14] sm:$0xf] %v609
          %642 = vst [vmem:[%s251 + $0x18] sm:$0xf] %v610
          %643 = vst [vmem:[%s251 + $0x1c] sm:$0xf] %v611
          %644 = vst [vmem:[%s251 + $0x20] sm:$0xf] %v612
          %645 = vst [vmem:[%s251 + $0x24] sm:$0xf] %v613
          %646 = vst [vmem:[%s251 + $0x28] sm:$0xf] %v614
          %647 = vst [vmem:[%s251 + $0x2c] sm:$0xf] %v615
          %648 = vst [vmem:[%s251 + $0x30] sm:$0xf] %v616
          %649 = vst [vmem:[%s251 + $0x34] sm:$0xf] %v617
          %650 = vst [vmem:[%s251 + $0x38] sm:$0xf] %v618
          %651 = vst [vmem:[%s251 + $0x3c] sm:$0xf] %v619
        $region44: #{_lambda_.23} parent=31 // pred_fallthru
          _
        %s652 = smul.u32 16, %s20
        %p653 = scmp.lt.s32.totalorder %s652, 63
        %s654 = scalar_select %p653, %s652, 63
        %p655 = scmp.lt.s32.totalorder %s21, 0
        %s656 = scalar_select %p655, %s21, 0
        %s657 = sadd.s32 %s656, %s654
        %s658 = smul.addr %s657, 4
        %s659 = scalar_lea.vmem %s3, %s658
        // Predicated region
        $region45: #{_lambda_.23} parent=31 // pred_check
          %p660 = pneg %p136
        $region46: #{_lambda_.23} parent=31 // pred_check_branch
          %662 = sbr.rel (%p660) target = $region48
        $region47: #{_lambda_.23} parent=31 // pred_region
          %s663 = smul.u32 16, %s20
        $region48: #{_lambda_.23} parent=31 // pred_fallthru
          _
      $region32: #{_lambda_.23} parent=5 // pred_fallthru
        _
      %p664 = scmp.le.s32.totalorder 2, %s10
      // Predicated region
      $region49: #{_lambda_.23} parent=5 // pred_check
        %p665 = pneg %p664
      $region50: #{_lambda_.23} parent=5 // pred_check_branch
        %667 = sbr.rel (%p665) target = $region52
      $region51: #{_lambda_.23} parent=5 // pred_region
        %s668 = ssub.s32 %s10, 2
        // Predicated region
        $region53: #{_lambda_.23} parent=51 // pred_check
          %p669 = pneg %p142
        $region54: #{_lambda_.23} parent=51 // pred_check_branch
          %671 = sbr.rel (%p669) target = $region56
        $region55: #{_lambda_.23} parent=51 // pred_region
          %s672 = smul.u32 16, %s23
          %p673 = scmp.lt.s32.totalorder %s672, 63
          %s674 = scalar_select %p673, %s672, 63
          %p675 = scmp.lt.s32.totalorder %s24, 0
          %s676 = scalar_select %p675, %s24, 0
          %s677 = sadd.s32 %s676, %s674
          %s678 = smul.addr %s677, 4
          %s679 = scalar_lea.vmem %s3, %s678
        $region56: #{_lambda_.23} parent=51 // pred_fallthru
          _
      $region52: #{_lambda_.23} parent=5 // pred_fallthru
        _
    $region6: #{_lambda_.23} parent=1 // loop_footer
      %s14 = sadd.s32 1, %s10
    $region7: #{_lambda_.23} parent=1 // loop_footer_branch
      %9 = sbr.rel target = $region3
    $region8: #{_lambda_.23} parent=1 // loop_exit
      _
    %680 = vsyncpa [#allocation4], 1
    %s681 = scalar_lea.sflag [#allocation4], 1
    %682 = vsyncpa %s681, 1

// kernel: _lambda_.24
$region0: #{_lambda_.24}
  #allocation0 [shape = 'u32[]', space=smem, size = 0x4, offset = 0x4, fixed_abs, tag = 'smem constant byte address 0x4 - core index']
  #allocation1 [shape = 'u32[144,128]{1,0:T(1,128)}', space=vmem, size = 0x12000, scoped, tag = 'internal scratch']
  #allocation2 [shape = 'f32[128,128]{1,0:T(8,128)}', space=vmem, size = 0x10000, scoped, tag = 'scratch operand']
  %s0 = inlined_call_operand.vmem [shape: bf16[512,16], index: 0, kind: input, shape index: {}]
  %s1 = inlined_call_operand.hbm [shape: bf16[16,128], index: 1, kind: input, shape index: {}]
  %s2 = inlined_call_operand.vmem [shape: f32[1,128], index: 2, kind: input, shape index: {}]
  %s3 = inlined_call_operand.vmem [shape: bf16[512,128], index: 3, kind: output, shape index: {}]
  %s4 = sld [smem:[#allocation0]]
  $region57: #{_lambda_.24} parent=0
    _
  %s6 = ssub.s32 1, %s4
  %s7 = scalar_select 0, %s6, %s4
  $region1: #{_lambda_.24} parent=0
    #allocation3 [shape = 'u8[4096]{0}', space=vmem, size = 0x1000, scoped, tag = 'input window, operand 1, single buffered']
    #allocation4 [shape = 's32[2]{0}', space=sflag, size = 0x8, scoped, tag = 'scoped memory for _lambda_.24']
    %8 = vsyncpa [#allocation4], 0
    loop: start=0, step=1, limit=6
    $region2: #{_lambda_.24} parent=1 // loop_pre_header
      _
    $region3: #{_lambda_.24} parent=1 // loop_header
      %s10 = sphi 0, %s14
      %p11 = scmp.ge.s32.totalorder %s10, 6
      %s17 = sphi 0, %s36
      %s18 = sphi 0, %s32
      %s19 = sphi 0, %s28
      %s20 = sphi 0, %s17
      %s21 = sphi 0, %s18
      %s22 = sphi 0, %s19
      %s23 = sphi 0, %s20
      %s24 = sphi 0, %s21
      %s25 = sphi 0, %s22
      %s41 = sphi 0, %s43
      %s44 = sphi 0, %s41
      %s45 = sphi 0, %s44
      %s61 = sphi 0, %s45
      %s69 = sphi 0, %s71
      %s72 = sphi 0, %s69
      %s73 = sphi 0, %s72
      %s89 = sphi 0, %s73
      %s95 = sphi 0, %s97
      %s98 = sphi 0, %s95
      %s99 = sphi 0, %s98
      %s115 = sphi 0, %s99
      %s123 = sphi 0, %s125
      %s126 = sphi 0, %s123
      %s127 = sphi 0, %s126
      %s143 = sphi 0, %s127
    $region4: #{_lambda_.24} parent=1 // loop_header_branch
      %13 = sbr.rel (%p11) target = $region8
    $region5: #{_lambda_.24} parent=1 // loop_body
      %s15 = ssub.s32 %s10, 1
      %s16 = ssub.s32 %s10, 2
      %s26 = sadd.s32 1, %s19
      %p27 = scmp.ge.s32.totalorder %s26, 1
      %s28 = scalar_select %p27, 0, %s26
      %s29 = sadd.s32 1, %s18
      %s30 = scalar_select %p27, %s29, %s18
      %p31 = scmp.ge.s32.totalorder %s30, 1
      %s32 = scalar_select %p31, 0, %s30
      %s33 = sadd.s32 1, %s17
      %s34 = scalar_select %p31, %s33, %s17
      %p35 = scmp.ge.s32.totalorder %s34, 4
      %s36 = scalar_select %p35, 0, %s34
      %s37 = ssub.s32 %s17, %s36
      %s38 = ssub.s32 %s19, %s28
      %s39 = sor.u32 %s37, %s38
      %p40 = scmp.eq.s32.totalorder %s39, 0
      %s42 = sadd.s32 %s41, 1
      %s43 = scalar_select %p40, %s41, %s42
      %p46 = pneg %p40
      %p47 = scmp.eq.s32.totalorder %s10, 3
      %p48 = por %p46, %p47
      %p49 = scmp.ne.s32.totalorder %s41, %s44
      %p50 = scmp.eq.s32.totalorder %s10, 0
      %p51 = por %p49, %p50
      %p52 = scmp.ne.s32.totalorder %s41, %s44
      %p53 = scmp.eq.s32.totalorder %s15, 3
      %p54 = por %p52, %p53
      %p55 = scmp.ne.s32.totalorder %s44, %s45
      %p56 = scmp.eq.s32.totalorder %s15, 0
      %p57 = por %p55, %p56
      %p58 = scmp.ne.s32.totalorder %s44, %s45
      %p59 = scmp.eq.s32.totalorder %s16, 3
      %p60 = por %p58, %p59
      %p62 = scmp.ne.s32.totalorder %s45, %s61
      %p63 = scmp.eq.s32.totalorder %s16, 0
      %p64 = por %p62, %p63
      %s65 = ssub.s32 %s19, %s28
      %s66 = ssub.s32 %s18, %s32
      %s67 = sor.u32 %s65, %s66
      %p68 = scmp.eq.s32.totalorder %s67, 0
      %s70 = sadd.s32 %s69, 1
      %s71 = scalar_select %p68, %s69, %s70
      %p74 = pneg %p68
      %p75 = scmp.eq.s32.totalorder %s10, 3
      %p76 = por %p74, %p75
      %p77 = scmp.ne.s32.totalorder %s69, %s72
      %p78 = scmp.eq.s32.totalorder %s10, 0
      %p79 = por %p77, %p78
      %p80 = scmp.ne.s32.totalorder %s69, %s72
      %p81 = scmp.eq.s32.totalorder %s15, 3
      %p82 = por %p80, %p81
      %p83 = scmp.ne.s32.totalorder %s72, %s73
      %p84 = scmp.eq.s32.totalorder %s15, 0
      %p85 = por %p83, %p84
      %p86 = scmp.ne.s32.totalorder %s72, %s73
      %p87 = scmp.eq.s32.totalorder %s16, 3
      %p88 = por %p86, %p87
      %p90 = scmp.ne.s32.totalorder %s73, %s89
      %p91 = scmp.eq.s32.totalorder %s16, 0
      %p92 = por %p90, %p91
      %s93 = ssub.s32 %s18, %s32
      %p94 = scmp.eq.s32.totalorder %s93, 0
      %s96 = sadd.s32 %s95, 1
      %s97 = scalar_select %p94, %s95, %s96
      %p100 = pneg %p94
      %p101 = scmp.eq.s32.totalorder %s10, 3
      %p102 = por %p100, %p101
      %p103 = scmp.ne.s32.totalorder %s95, %s98
      %p104 = scmp.eq.s32.totalorder %s10, 0
      %p105 = por %p103, %p104
      %p106 = scmp.ne.s32.totalorder %s95, %s98
      %p107 = scmp.eq.s32.totalorder %s15, 3
      %p108 = por %p106, %p107
      %p109 = scmp.ne.s32.totalorder %s98, %s99
      %p110 = scmp.eq.s32.totalorder %s15, 0
      %p111 = por %p109, %p110
      %p112 = scmp.ne.s32.totalorder %s98, %s99
      %p113 = scmp.eq.s32.totalorder %s16, 3
      %p114 = por %p112, %p113
      %p116 = scmp.ne.s32.totalorder %s99, %s115
      %p117 = scmp.eq.s32.totalorder %s16, 0
      %p118 = por %p116, %p117
      %s119 = ssub.s32 %s17, %s36
      %s120 = ssub.s32 %s18, %s32
      %s121 = sor.u32 %s119, %s120
      %p122 = scmp.eq.s32.totalorder %s121, 0
      %s124 = sadd.s32 %s123, 1
      %s125 = scalar_select %p122, %s123, %s124
      %p128 = pneg %p122
      %p129 = scmp.eq.s32.totalorder %s10, 3
      %p130 = por %p128, %p129
      %p131 = scmp.ne.s32.totalorder %s123, %s126
      %p132 = scmp.eq.s32.totalorder %s10, 0
      %p133 = por %p131, %p132
      %p134 = scmp.ne.s32.totalorder %s123, %s126
      %p135 = scmp.eq.s32.totalorder %s15, 3
      %p136 = por %p134, %p135
      %p137 = scmp.ne.s32.totalorder %s126, %s127
      %p138 = scmp.eq.s32.totalorder %s15, 0
      %p139 = por %p137, %p138
      %p140 = scmp.ne.s32.totalorder %s126, %s127
      %p141 = scmp.eq.s32.totalorder %s16, 3
      %p142 = por %p140, %p141
      %p144 = scmp.ne.s32.totalorder %s127, %s143
      %p145 = scmp.eq.s32.totalorder %s16, 0
      %p146 = por %p144, %p145
      %p147 = scmp.le.s32.totalorder 1, %s10
      %p148 = scmp.lt.s32.totalorder %s10, 5
      %p149 = pnand %p147, %p148
      %p150 = pneg %p149
      // Predicated region
      $region9: #{_lambda_.24} parent=5 // pred_check
        _
      $region10: #{_lambda_.24} parent=5 // pred_check_branch
        %152 = sbr.rel (%p149) target = $region12
      $region11: #{_lambda_.24} parent=5 // pred_region
        %s153 = ssub.s32 %s10, 1
        // Predicated region
        $region13: #{_lambda_.24} parent=11 // pred_check
          %p154 = pneg %p85
        $region14: #{_lambda_.24} parent=11 // pred_check_branch
          %156 = sbr.rel (%p154) target = $region16
        $region15: #{_lambda_.24} parent=11 // pred_region
          %s157 = smul.u32 2, %s22
          %s159 = ssub.s32 128, 128
          %160 = vsyncadd [#allocation4], %s159
          %s161 = sadd.s32 %s21, %s157
          %s162 = smul.addr %s161, 64
          %s163 = scalar_lea.hbm %s1, %s162
          %s164 = sshll.u32 [#allocation3], 4
          %s165 = int_to_ptr.vmem [resolvable:$true] %s164
          %170 = dma.hbm_to_vmem [thread:$0]  %s163, 128, %s165, [#allocation4], 64, 64, 4
        $region16: #{_lambda_.24} parent=11 // pred_fallthru
          _
        // Predicated region
        $region17: #{_lambda_.24} parent=11 // pred_check
          %p171 = pneg %p111
        $region18: #{_lambda_.24} parent=11 // pred_check_branch
          %173 = sbr.rel (%p171) target = $region20
        $region19: #{_lambda_.24} parent=11 // pred_region
          %p174 = scmp.lt.s32.totalorder %s21, 0
          %s175 = scalar_select %p174, %s21, 0
          %s176 = scalar_lea.vmem %s2, %s175
        $region20: #{_lambda_.24} parent=11 // pred_fallthru
          _
      $region12: #{_lambda_.24} parent=5 // pred_fallthru
        _
      %p177 = scmp.lt.s32.totalorder %s10, 4
      // Predicated region
      $region21: #{_lambda_.24} parent=5 // pred_check
        %p178 = pneg %p177
      $region22: #{_lambda_.24} parent=5 // pred_check_branch
        %180 = sbr.rel (%p178) target = $region24
      $region23: #{_lambda_.24} parent=5 // pred_region
        // Predicated region
        $region25: #{_lambda_.24} parent=23 // pred_check
          %p181 = pneg %p51
        $region26: #{_lambda_.24} parent=23 // pred_check_branch
          %183 = sbr.rel (%p181) target = $region28
        $region27: #{_lambda_.24} parent=23 // pred_region
          %s184 = smul.u32 16, %s17
          %p185 = scmp.lt.s32.totalorder %s184, 63
          %s186 = scalar_select %p185, %s184, 63
          %p187 = scmp.lt.s32.totalorder %s19, 0
          %s188 = scalar_select %p187, %s19, 0
          %s189 = sadd.s32 %s188, %s186
          %s190 = smul.addr %s189, 4
          %s191 = scalar_lea.vmem %s0, %s190
          %s192 = smul.u32 16, %s17
        $region28: #{_lambda_.24} parent=23 // pred_fallthru
          _
      $region24: #{_lambda_.24} parent=5 // pred_fallthru
        _
      %p193 = scmp.le.s32.totalorder 1, %s10
      %p194 = scmp.lt.s32.totalorder %s10, 5
      %p195 = pnand %p193, %p194
      %p196 = pneg %p195
      // Predicated region
      $region29: #{_lambda_.24} parent=5 // pred_check
        _
      $region30: #{_lambda_.24} parent=5 // pred_check_branch
        %198 = sbr.rel (%p195) target = $region32
      $region31: #{_lambda_.24} parent=5 // pred_region
        %s199 = ssub.s32 %s10, 1
        // Predicated region
        $region33: #{_lambda_.24} parent=31 // pred_check
          %p200 = pneg %p85
        $region34: #{_lambda_.24} parent=31 // pred_check_branch
          %202 = sbr.rel (%p200) target = $region36
        $region35: #{_lambda_.24} parent=31 // pred_region
          %203 = dma.done [#allocation4], 128
        $region36: #{_lambda_.24} parent=31 // pred_fallthru
          _
        %s204 = smul.u32 16, %s20
        %p205 = scmp.lt.s32.totalorder %s204, 63
        %s206 = scalar_select %p205, %s204, 63
        %p207 = scmp.lt.s32.totalorder %s22, 0
        %s208 = scalar_select %p207, %s22, 0
        %s209 = sadd.s32 %s208, %s206
        %s210 = smul.addr %s209, 4
        %s211 = scalar_lea.vmem %s0, %s210
        %p212 = pneg %p57
        %p213 = pneg %p54
        %p214 = pneg %p85
        %p215 = pneg %p82
        %p216 = scmp.lt.s32.totalorder %s21, 0
        %s217 = scalar_select %p216, %s21, 0
        %s218 = scalar_lea.vmem %s2, %s217
        %p219 = pneg %p111
        %p220 = pneg %p108
        %p221 = pneg %p139
        %p222 = pneg %p136
        %s223 = smul.u32 16, %s20
        %p224 = scmp.lt.s32.totalorder %s223, 63
        %s225 = scalar_select %p224, %s223, 63
        %p226 = scmp.lt.s32.totalorder %s21, 0
        %s227 = scalar_select %p226, %s21, 0
        %s228 = sadd.s32 %s227, %s225
        %s229 = smul.addr %s228, 4
        %s230 = scalar_lea.vmem %s3, %s229
        %s231 = smul.u32 16, %s20
        %p232 = scmp.lt.s32.totalorder %s231, 63
        %s233 = scalar_select %p232, %s231, 63
        %p234 = scmp.lt.s32.totalorder %s22, 0
        %s235 = scalar_select %p234, %s22, 0
        %s236 = sadd.s32 %s235, %s233
        %s237 = smul.addr %s236, 4
        %s238 = scalar_lea.vmem %s0, %s237
        %s239 = smul.u32 16, %s20
        %s240 = smul.u32 2, %s22
        %p241 = scmp.lt.s32.totalorder %s21, 0
        %s242 = scalar_select %p241, %s21, 0
        %s243 = scalar_lea.vmem %s2, %s242
        %s244 = smul.u32 16, %s20
        %p245 = scmp.lt.s32.totalorder %s244, 63
        %s246 = scalar_select %p245, %s244, 63
        %p247 = scmp.lt.s32.totalorder %s21, 0
        %s248 = scalar_select %p247, %s21, 0
        %s249 = sadd.s32 %s248, %s246
        %s250 = smul.addr %s249, 4
        %s251 = scalar_lea.vmem %s3, %s250
        %s252 = smul.u32 16, %s20
        %p254 = scmp.eq.s32.totalorder %s22, 0
        // Predicated region
        $region37: #{_lambda_.24} parent=31 // pred_check
          %p255 = pneg %p254
        $region38: #{_lambda_.24} parent=31 // pred_check_branch
          %257 = sbr.rel (%p255) target = $region40
        $region39: #{_lambda_.24} parent=31 // pred_region
          %258 = vst [vmem:[#allocation2] sm:$0xff] 0.0
          %259 = vst [vmem:[#allocation2 + $0x8] sm:$0xff] 0.0
          %260 = vst [vmem:[#allocation2 + $0x10] sm:$0xff] 0.0
          %261 = vst [vmem:[#allocation2 + $0x18] sm:$0xff] 0.0
          %262 = vst [vmem:[#allocation2 + $0x20] sm:$0xff] 0.0
          %263 = vst [vmem:[#allocation2 + $0x28] sm:$0xff] 0.0
          %264 = vst [vmem:[#allocation2 + $0x30] sm:$0xff] 0.0
          %265 = vst [vmem:[#allocation2 + $0x38] sm:$0xff] 0.0
          %266 = vst [vmem:[#allocation2 + $0x40] sm:$0xff] 0.0
          %267 = vst [vmem:[#allocation2 + $0x48] sm:$0xff] 0.0
          %268 = vst [vmem:[#allocation2 + $0x50] sm:$0xff] 0.0
          %269 = vst [vmem:[#allocation2 + $0x58] sm:$0xff] 0.0
          %270 = vst [vmem:[#allocation2 + $0x60] sm:$0xff] 0.0
          %271 = vst [vmem:[#allocation2 + $0x68] sm:$0xff] 0.0
          %272 = vst [vmem:[#allocation2 + $0x70] sm:$0xff] 0.0
          %273 = vst [vmem:[#allocation2 + $0x78] sm:$0xff] 0.0
        $region40: #{_lambda_.24} parent=31 // pred_fallthru
          _
        %v274 = vld [vmem:[#allocation2] sm:$0xff]
        %v275 = vld [vmem:[#allocation2 + $0x8] sm:$0xff]
        %v276 = vld [vmem:[#allocation2 + $0x10] sm:$0xff]
        %v277 = vld [vmem:[#allocation2 + $0x18] sm:$0xff]
        %v278 = vld [vmem:[#allocation2 + $0x20] sm:$0xff]
        %v279 = vld [vmem:[#allocation2 + $0x28] sm:$0xff]
        %v280 = vld [vmem:[#allocation2 + $0x30] sm:$0xff]
        %v281 = vld [vmem:[#allocation2 + $0x38] sm:$0xff]
        %v282 = vld [vmem:[#allocation2 + $0x40] sm:$0xff]
        %v283 = vld [vmem:[#allocation2 + $0x48] sm:$0xff]
        %v284 = vld [vmem:[#allocation2 + $0x50] sm:$0xff]
        %v285 = vld [vmem:[#allocation2 + $0x58] sm:$0xff]
        %v286 = vld [vmem:[#allocation2 + $0x60] sm:$0xff]
        %v287 = vld [vmem:[#allocation2 + $0x68] sm:$0xff]
        %v288 = vld [vmem:[#allocation2 + $0x70] sm:$0xff]
        %v289 = vld [vmem:[#allocation2 + $0x78] sm:$0xff]
        %v290 = vld [vmem:[%s238] sm:$0xf]
        %v291 = vld [vmem:[%s238 + $0x4] sm:$0xf]
        %v292 = vld [vmem:[%s238 + $0x8] sm:$0xf]
        %v293 = vld [vmem:[%s238 + $0xc] sm:$0xf]
        %v294 = vld [vmem:[%s238 + $0x10] sm:$0xf]
        %v295 = vld [vmem:[%s238 + $0x14] sm:$0xf]
        %v296 = vld [vmem:[%s238 + $0x18] sm:$0xf]
        %v297 = vld [vmem:[%s238 + $0x1c] sm:$0xf]
        %v298 = vld [vmem:[%s238 + $0x20] sm:$0xf]
        %v299 = vld [vmem:[%s238 + $0x24] sm:$0xf]
        %v300 = vld [vmem:[%s238 + $0x28] sm:$0xf]
        %v301 = vld [vmem:[%s238 + $0x2c] sm:$0xf]
        %v302 = vld [vmem:[%s238 + $0x30] sm:$0xf]
        %v303 = vld [vmem:[%s238 + $0x34] sm:$0xf]
        %v304 = vld [vmem:[%s238 + $0x38] sm:$0xf]
        %v305 = vld [vmem:[%s238 + $0x3c] sm:$0xf]
        %v306 = vld [vmem:[#allocation3] sm:$0xf]
        %v307 = vld [vmem:[#allocation3 + $0x4] sm:$0xf]
        %v324 = vunpack.c.l.b16 %v290
        %v325 = vunpack.c.l.b16 %v291
        %v326 = vunpack.c.l.b16 %v292
        %v327 = vunpack.c.l.b16 %v293
        %v328 = vunpack.c.l.b16 %v294
        %v329 = vunpack.c.l.b16 %v295
        %v330 = vunpack.c.l.b16 %v296
        %v331 = vunpack.c.l.b16 %v297
        %v332 = vunpack.c.l.b16 %v298
        %v333 = vunpack.c.l.b16 %v299
        %v334 = vunpack.c.l.b16 %v300
        %v335 = vunpack.c.l.b16 %v301
        %v336 = vunpack.c.l.b16 %v302
        %v337 = vunpack.c.l.b16 %v303
        %v338 = vunpack.c.l.b16 %v304
        %v339 = vunpack.c.l.b16 %v305
        %v340 = vpack.c.b16 %v325, %v324
        %v341 = vpack.c.b16 %v327, %v326
        %v342 = vpack.c.b16 %v329, %v328
        %v343 = vpack.c.b16 %v331, %v330
        %v344 = vpack.c.b16 %v333, %v332
        %v345 = vpack.c.b16 %v335, %v334
        %v346 = vpack.c.b16 %v337, %v336
        %v347 = vpack.c.b16 %v339, %v338
        %v350 = vunpack.c.l.b16 %v306
        %v351 = vunpack.c.l.b16 %v307
        %v352 = vpack.c.b16 %v351, %v350
        %vm354 = vcmask 130048
        %v356 = vsel %vm354, %v340, 0
        %v359 = vsel %vm354, %v341, 0
        %v362 = vsel %vm354, %v342, 0
        %v365 = vsel %vm354, %v343, 0
        %v368 = vsel %vm354, %v344, 0
        %v371 = vsel %vm354, %v345, 0
        %v374 = vsel %vm354, %v346, 0
        %v377 = vsel %vm354, %v347, 0
        %379 = vmatprep.subr.bf16.mxu0 0
        %380 = vmatpush1.bf16.msra.mxu0 %v352
        %381 = vmatprep.subr.bf16.mxu0 0
        %382 = vmatpush1.bf16.msra.mxu0 0
        %383 = vmatprep.subr.bf16.mxu0 0
        %384 = vmatpush1.bf16.msra.mxu0 0
        %385 = vmatprep.subr.bf16.mxu0 0
        %386 = vmatpush1.bf16.msra.mxu0 0
        %387 = vmatprep.subr.bf16.mxu0 0
        %388 = vmatpush1.bf16.msra.mxu0 0
        %389 = vmatprep.subr.bf16.mxu0 0
        %390 = vmatpush1.bf16.msra.mxu0 0
        %391 = vmatprep.subr.bf16.mxu0 0
        %392 = vmatpush1.bf16.msra.mxu0 0
        %393 = vmatprep.subr.bf16.mxu0 0
        %394 = vmatpush1.bf16.msra.mxu0 0
        %395 = vmatprep.subr.bf16.mxu0 0
        %396 = vmatpush1.bf16.msra.mxu0 0
        %397 = vmatprep.subr.bf16.mxu0 0
        %398 = vmatpush1.bf16.msra.mxu0 0
        %399 = vmatprep.subr.bf16.mxu0 0
        %400 = vmatpush1.bf16.msra.mxu0 0
        %401 = vmatprep.subr.bf16.mxu0 0
        %402 = vmatpush1.bf16.msra.mxu0 0
        %403 = vmatprep.subr.bf16.mxu0 0
        %404 = vmatpush1.bf16.msra.mxu0 0
        %405 = vmatprep.subr.bf16.mxu0 0
        %406 = vmatpush1.bf16.msra.mxu0 0
        %407 = vmatprep.subr.bf16.mxu0 0
        %408 = vmatpush1.bf16.msra.mxu0 0
        %409 = vmatprep.subr.bf16.mxu0 0
        %410 = vmatpush1.bf16.msra.mxu0 0
        %411 = vmatprep.mubr.bf16.mxu0 0
        %412 = vmatmul.mubr.bf16.gmra.mrb[0].mxu0 %v356
        %v413 = vpop.f32.mrb[0].mxu0
        %v414 = vadd.f32 0.0, %v413
        %v415 = vpop.f32.mrb[0].mxu0
        %v416 = vpop.f32.mrb[0].mxu0
        %v417 = vadd.f32 0.0, %v416
        %v418 = vpop.f32.mrb[0].mxu0
        %419 = vmatprep.mubr.bf16.mxu0 0
        %420 = vmatmul.mubr.bf16.gmra.mrb[0].mxu0 %v359
        %v421 = vpop.f32.mrb[0].mxu0
        %v422 = vadd.f32 0.0, %v421
        %v423 = vpop.f32.mrb[0].mxu0
        %v424 = vpop.f32.mrb[0].mxu0
        %v425 = vadd.f32 0.0, %v424
        %v426 = vpop.f32.mrb[0].mxu0
        %427 = vmatprep.mubr.bf16.mxu0 0
        %428 = vmatmul.mubr.bf16.gmra.mrb[0].mxu0 %v362
        %v429 = vpop.f32.mrb[0].mxu0
        %v430 = vadd.f32 0.0, %v429
        %v431 = vpop.f32.mrb[0].mxu0
        %v432 = vpop.f32.mrb[0].mxu0
        %v433 = vadd.f32 0.0, %v432
        %v434 = vpop.f32.mrb[0].mxu0
        %435 = vmatprep.mubr.bf16.mxu0 0
        %436 = vmatmul.mubr.bf16.gmra.mrb[0].mxu0 %v365
        %v437 = vpop.f32.mrb[0].mxu0
        %v438 = vadd.f32 0.0, %v437
        %v439 = vpop.f32.mrb[0].mxu0
        %v440 = vpop.f32.mrb[0].mxu0
        %v441 = vadd.f32 0.0, %v440
        %v442 = vpop.f32.mrb[0].mxu0
        %443 = vmatprep.mubr.bf16.mxu0 0
        %444 = vmatmul.mubr.bf16.gmra.mrb[0].mxu0 %v368
        %v445 = vpop.f32.mrb[0].mxu0
        %v446 = vadd.f32 0.0, %v445
        %v447 = vpop.f32.mrb[0].mxu0
        %v448 = vpop.f32.mrb[0].mxu0
        %v449 = vadd.f32 0.0, %v448
        %v450 = vpop.f32.mrb[0].mxu0
        %451 = vmatprep.mubr.bf16.mxu0 0
        %452 = vmatmul.mubr.bf16.gmra.mrb[0].mxu0 %v371
        %v453 = vpop.f32.mrb[0].mxu0
        %v454 = vadd.f32 0.0, %v453
        %v455 = vpop.f32.mrb[0].mxu0
        %v456 = vpop.f32.mrb[0].mxu0
        %v457 = vadd.f32 0.0, %v456
        %v458 = vpop.f32.mrb[0].mxu0
        %459 = vmatprep.mubr.bf16.mxu0 0
        %460 = vmatmul.mubr.bf16.gmra.mrb[0].mxu0 %v374
        %v461 = vpop.f32.mrb[0].mxu0
        %v462 = vadd.f32 0.0, %v461
        %v463 = vpop.f32.mrb[0].mxu0
        %v464 = vpop.f32.mrb[0].mxu0
        %v465 = vadd.f32 0.0, %v464
        %v466 = vpop.f32.mrb[0].mxu0
        %467 = vmatprep.mubr.bf16.mxu0 0
        %468 = vmatmul.mubr.bf16.gmra.mrb[0].mxu0 %v377
        %v469 = vpop.f32.mrb[0].mxu0
        %v470 = vadd.f32 0.0, %v469
        %v471 = vpop.f32.mrb[0].mxu0
        %v472 = vpop.f32.mrb[0].mxu0
        %v473 = vadd.f32 0.0, %v472
        %v474 = vpop.f32.mrb[0].mxu0
        %475 = vdwg.mxu0
        %v476 = vadd.f32 %v274, %v414
        %v477 = vadd.f32 %v275, %v417
        %v478 = vadd.f32 %v276, %v422
        %v479 = vadd.f32 %v277, %v425
        %v480 = vadd.f32 %v278, %v430
        %v481 = vadd.f32 %v279, %v433
        %v482 = vadd.f32 %v280, %v438
        %v483 = vadd.f32 %v281, %v441
        %v484 = vadd.f32 %v282, %v446
        %v485 = vadd.f32 %v283, %v449
        %v486 = vadd.f32 %v284, %v454
        %v487 = vadd.f32 %v285, %v457
        %v488 = vadd.f32 %v286, %v462
        %v489 = vadd.f32 %v287, %v465
        %v490 = vadd.f32 %v288, %v470
        %v491 = vadd.f32 %v289, %v473
        %492 = vst [vmem:[#allocation2] sm:$0xff] %v476
        %493 = vst [vmem:[#allocation2 + $0x8] sm:$0xff] %v477
        %494 = vst [vmem:[#allocation2 + $0x10] sm:$0xff] %v478
        %495 = vst [vmem:[#allocation2 + $0x18] sm:$0xff] %v479
        %496 = vst [vmem:[#allocation2 + $0x20] sm:$0xff] %v480
        %497 = vst [vmem:[#allocation2 + $0x28] sm:$0xff] %v481
        %498 = vst [vmem:[#allocation2 + $0x30] sm:$0xff] %v482
        %499 = vst [vmem:[#allocation2 + $0x38] sm:$0xff] %v483
        %500 = vst [vmem:[#allocation2 + $0x40] sm:$0xff] %v484
        %501 = vst [vmem:[#allocation2 + $0x48] sm:$0xff] %v485
        %502 = vst [vmem:[#allocation2 + $0x50] sm:$0xff] %v486
        %503 = vst [vmem:[#allocation2 + $0x58] sm:$0xff] %v487
        %504 = vst [vmem:[#allocation2 + $0x60] sm:$0xff] %v488
        %505 = vst [vmem:[#allocation2 + $0x68] sm:$0xff] %v489
        %506 = vst [vmem:[#allocation2 + $0x70] sm:$0xff] %v490
        %507 = vst [vmem:[#allocation2 + $0x78] sm:$0xff] %v491
        // Predicated region
        $region41: #{_lambda_.24} parent=31 // pred_check
          %p508 = pneg %p254
        $region42: #{_lambda_.24} parent=31 // pred_check_branch
          %510 = sbr.rel (%p508) target = $region44
        $region43: #{_lambda_.24} parent=31 // pred_region
          %v511 = vld [vmem:[#allocation2] sm:$0xff]
          %v512 = vld [vmem:[#allocation2 + $0x8] sm:$0xff]
          %v513 = vld [vmem:[#allocation2 + $0x10] sm:$0xff]
          %v514 = vld [vmem:[#allocation2 + $0x18] sm:$0xff]
          %v515 = vld [vmem:[#allocation2 + $0x20] sm:$0xff]
          %v516 = vld [vmem:[#allocation2 + $0x28] sm:$0xff]
          %v517 = vld [vmem:[#allocation2 + $0x30] sm:$0xff]
          %v518 = vld [vmem:[#allocation2 + $0x38] sm:$0xff]
          %v519 = vld [vmem:[#allocation2 + $0x40] sm:$0xff]
          %v520 = vld [vmem:[#allocation2 + $0x48] sm:$0xff]
          %v521 = vld [vmem:[#allocation2 + $0x50] sm:$0xff]
          %v522 = vld [vmem:[#allocation2 + $0x58] sm:$0xff]
          %v523 = vld [vmem:[#allocation2 + $0x60] sm:$0xff]
          %v524 = vld [vmem:[#allocation2 + $0x68] sm:$0xff]
          %v525 = vld [vmem:[#allocation2 + $0x70] sm:$0xff]
          %v526 = vld [vmem:[#allocation2 + $0x78] sm:$0xff]
          %v527 = vld [vmem:[%s243] sm:$0x1]
          %v529 = vlaneseq
          %v530 = vshrl.u32 %v529, 7
          %v531 = vsub.s32 0, %v530
          %v532 = vrot.slane %v527, %v531
          %v534 = vadd.f32 %v511, %v532
          %v535 = vadd.f32 %v512, %v532
          %v536 = vadd.f32 %v513, %v532
          %v537 = vadd.f32 %v514, %v532
          %v538 = vadd.f32 %v515, %v532
          %v539 = vadd.f32 %v516, %v532
          %v540 = vadd.f32 %v517, %v532
          %v541 = vadd.f32 %v518, %v532
          %v542 = vadd.f32 %v519, %v532
          %v543 = vadd.f32 %v520, %v532
          %v544 = vadd.f32 %v521, %v532
          %v545 = vadd.f32 %v522, %v532
          %v546 = vadd.f32 %v523, %v532
          %v547 = vadd.f32 %v524, %v532
          %v548 = vadd.f32 %v525, %v532
          %v549 = vadd.f32 %v526, %v532
          %v550 = vmax.f32 %v534, 0.0
          %v551 = vmax.f32 %v535, 0.0
          %v552 = vmax.f32 %v536, 0.0
          %v553 = vmax.f32 %v537, 0.0
          %v554 = vmax.f32 %v538, 0.0
          %v555 = vmax.f32 %v539, 0.0
          %v556 = vmax.f32 %v540, 0.0
          %v557 = vmax.f32 %v541, 0.0
          %v558 = vmax.f32 %v542, 0.0
          %v559 = vmax.f32 %v543, 0.0
          %v560 = vmax.f32 %v544, 0.0
          %v561 = vmax.f32 %v545, 0.0
          %v562 = vmax.f32 %v546, 0.0
          %v563 = vmax.f32 %v547, 0.0
          %v564 = vmax.f32 %v548, 0.0
          %v565 = vmax.f32 %v549, 0.0
          %v566 = vpack.c.bf16 %v551, %v550
          %v567 = vpack.c.bf16 %v553, %v552
          %v568 = vpack.c.bf16 %v555, %v554
          %v569 = vpack.c.bf16 %v557, %v556
          %v570 = vpack.c.bf16 %v559, %v558
          %v571 = vpack.c.bf16 %v561, %v560
          %v572 = vpack.c.bf16 %v563, %v562
          %v573 = vpack.c.bf16 %v565, %v564
          %v582 = vunpack.c.l.b16 %v566
          %v583 = vunpack.c.h.b16 %v566
          %v584 = vunpack.c.l.b16 %v567
          %v585 = vunpack.c.h.b16 %v567
          %v586 = vunpack.c.l.b16 %v568
          %v587 = vunpack.c.h.b16 %v568
          %v588 = vunpack.c.l.b16 %v569
          %v589 = vunpack.c.h.b16 %v569
          %v590 = vunpack.c.l.b16 %v570
          %v591 = vunpack.c.h.b16 %v570
          %v592 = vunpack.c.l.b16 %v571
          %v593 = vunpack.c.h.b16 %v571
          %v594 = vunpack.c.l.b16 %v572
          %v595 = vunpack.c.h.b16 %v572
          %v596 = vunpack.c.l.b16 %v573
          %v597 = vunpack.c.h.b16 %v573
          %v598 = vpack.c.b16 %v582, %v582
          %v599 = vpack.c.b16 %v583, %v583
          %v600 = vpack.c.b16 %v584, %v584
          %v601 = vpack.c.b16 %v585, %v585
          %v602 = vpack.c.b16 %v586, %v586
          %v603 = vpack.c.b16 %v587, %v587
          %v604 = vpack.c.b16 %v588, %v588
          %v605 = vpack.c.b16 %v589, %v589
          %v606 = vpack.c.b16 %v590, %v590
          %v607 = vpack.c.b16 %v591, %v591
          %v608 = vpack.c.b16 %v592, %v592
          %v609 = vpack.c.b16 %v593, %v593
          %v610 = vpack.c.b16 %v594, %v594
          %v611 = vpack.c.b16 %v595, %v595
          %v612 = vpack.c.b16 %v596, %v596
          %v613 = vpack.c.b16 %v597, %v597
          %630 = vst [vmem:[%s251] sm:$0xf] %v598
          %631 = vst [vmem:[%s251 + $0x4] sm:$0xf] %v599
          %632 = vst [vmem:[%s251 + $0x8] sm:$0xf] %v600
          %633 = vst [vmem:[%s251 + $0xc] sm:$0xf] %v601
          %634 = vst [vmem:[%s251 + $0x10] sm:$0xf] %v602
          %635 = vst [vmem:[%s251 + $0x14] sm:$0xf] %v603
          %636 = vst [vmem:[%s251 + $0x18] sm:$0xf] %v604
          %637 = vst [vmem:[%s251 + $0x1c] sm:$0xf] %v605
          %638 = vst [vmem:[%s251 + $0x20] sm:$0xf] %v606
          %639 = vst [vmem:[%s251 + $0x24] sm:$0xf] %v607
          %640 = vst [vmem:[%s251 + $0x28] sm:$0xf] %v608
          %641 = vst [vmem:[%s251 + $0x2c] sm:$0xf] %v609
          %642 = vst [vmem:[%s251 + $0x30] sm:$0xf] %v610
          %643 = vst [vmem:[%s251 + $0x34] sm:$0xf] %v611
          %644 = vst [vmem:[%s251 + $0x38] sm:$0xf] %v612
          %645 = vst [vmem:[%s251 + $0x3c] sm:$0xf] %v613
        $region44: #{_lambda_.24} parent=31 // pred_fallthru
          _
        %s646 = smul.u32 16, %s20
        %p647 = scmp.lt.s32.totalorder %s646, 63
        %s648 = scalar_select %p647, %s646, 63
        %p649 = scmp.lt.s32.totalorder %s21, 0
        %s650 = scalar_select %p649, %s21, 0
        %s651 = sadd.s32 %s650, %s648
        %s652 = smul.addr %s651, 4
        %s653 = scalar_lea.vmem %s3, %s652
        // Predicated region
        $region45: #{_lambda_.24} parent=31 // pred_check
          %p654 = pneg %p136
        $region46: #{_lambda_.24} parent=31 // pred_check_branch
          %656 = sbr.rel (%p654) target = $region48
        $region47: #{_lambda_.24} parent=31 // pred_region
          %s657 = smul.u32 16, %s20
        $region48: #{_lambda_.24} parent=31 // pred_fallthru
          _
      $region32: #{_lambda_.24} parent=5 // pred_fallthru
        _
      %p658 = scmp.le.s32.totalorder 2, %s10
      // Predicated region
      $region49: #{_lambda_.24} parent=5 // pred_check
        %p659 = pneg %p658
      $region50: #{_lambda_.24} parent=5 // pred_check_branch
        %661 = sbr.rel (%p659) target = $region52
      $region51: #{_lambda_.24} parent=5 // pred_region
        %s662 = ssub.s32 %s10, 2
        // Predicated region
        $region53: #{_lambda_.24} parent=51 // pred_check
          %p663 = pneg %p142
        $region54: #{_lambda_.24} parent=51 // pred_check_branch
          %665 = sbr.rel (%p663) target = $region56
        $region55: #{_lambda_.24} parent=51 // pred_region
          %s666 = smul.u32 16, %s23
          %p667 = scmp.lt.s32.totalorder %s666, 63
          %s668 = scalar_select %p667, %s666, 63
          %p669 = scmp.lt.s32.totalorder %s24, 0
          %s670 = scalar_select %p669, %s24, 0
          %s671 = sadd.s32 %s670, %s668
          %s672 = smul.addr %s671, 4
          %s673 = scalar_lea.vmem %s3, %s672
        $region56: #{_lambda_.24} parent=51 // pred_fallthru
          _
      $region52: #{_lambda_.24} parent=5 // pred_fallthru
        _
    $region6: #{_lambda_.24} parent=1 // loop_footer
      %s14 = sadd.s32 1, %s10
    $region7: #{_lambda_.24} parent=1 // loop_footer_branch
      %9 = sbr.rel target = $region3
    $region8: #{_lambda_.24} parent=1 // loop_exit
      _
    %674 = vsyncpa [#allocation4], 1
    %s675 = scalar_lea.sflag [#allocation4], 1
    %676 = vsyncpa %s675, 1

// kernel: _lambda_.25
$region0: #{_lambda_.25}
  #allocation0 [shape = 'u32[]', space=smem, size = 0x4, offset = 0x4, fixed_abs, tag = 'smem constant byte address 0x4 - core index']
  #allocation1 [shape = 'u32[144,128]{1,0:T(1,128)}', space=vmem, size = 0x12000, scoped, tag = 'internal scratch']
  #allocation2 [shape = 'f32[128,128]{1,0:T(8,128)}', space=vmem, size = 0x10000, scoped, tag = 'scratch operand']
  %s0 = inlined_call_operand.vmem [shape: bf16[512,144], index: 0, kind: input, shape index: {}]
  %s1 = inlined_call_operand.vmem [shape: bf16[144,128], index: 1, kind: input, shape index: {}]
  %s2 = inlined_call_operand.vmem [shape: f32[1,128], index: 2, kind: input, shape index: {}]
  %s3 = inlined_call_operand.vmem [shape: bf16[512,128], index: 3, kind: output, shape index: {}]
  %s4 = sld [smem:[#allocation0]]
  $region53: #{_lambda_.25} parent=0
    _
  %s6 = ssub.s32 1, %s4
  %s7 = scalar_select 0, %s6, %s4
  loop: start=0, step=1, limit=6
  $region2: #{_lambda_.25} parent=0 // loop_pre_header
    _
  $region3: #{_lambda_.25} parent=0 // loop_header
    %s9 = sphi 0, %s13
    %p10 = scmp.ge.s32.totalorder %s9, 6
    %s16 = sphi 0, %s35
    %s17 = sphi 0, %s31
    %s18 = sphi 0, %s27
    %s19 = sphi 0, %s16
    %s20 = sphi 0, %s17
    %s21 = sphi 0, %s18
    %s22 = sphi 0, %s19
    %s23 = sphi 0, %s20
    %s24 = sphi 0, %s21
    %s40 = sphi 0, %s42
    %s43 = sphi 0, %s40
    %s44 = sphi 0, %s43
    %s60 = sphi 0, %s44
    %s68 = sphi 0, %s70
    %s71 = sphi 0, %s68
    %s72 = sphi 0, %s71
    %s88 = sphi 0, %s72
    %s94 = sphi 0, %s96
    %s97 = sphi 0, %s94
    %s98 = sphi 0, %s97
    %s114 = sphi 0, %s98
    %s122 = sphi 0, %s124
    %s125 = sphi 0, %s122
    %s126 = sphi 0, %s125
    %s142 = sphi 0, %s126
  $region4: #{_lambda_.25} parent=0 // loop_header_branch
    %12 = sbr.rel (%p10) target = $region8
  $region5: #{_lambda_.25} parent=0 // loop_body
    %s14 = ssub.s32 %s9, 1
    %s15 = ssub.s32 %s9, 2
    %s25 = sadd.s32 1, %s18
    %p26 = scmp.ge.s32.totalorder %s25, 1
    %s27 = scalar_select %p26, 0, %s25
    %s28 = sadd.s32 1, %s17
    %s29 = scalar_select %p26, %s28, %s17
    %p30 = scmp.ge.s32.totalorder %s29, 1
    %s31 = scalar_select %p30, 0, %s29
    %s32 = sadd.s32 1, %s16
    %s33 = scalar_select %p30, %s32, %s16
    %p34 = scmp.ge.s32.totalorder %s33, 4
    %s35 = scalar_select %p34, 0, %s33
    %s36 = ssub.s32 %s16, %s35
    %s37 = ssub.s32 %s18, %s27
    %s38 = sor.u32 %s36, %s37
    %p39 = scmp.eq.s32.totalorder %s38, 0
    %s41 = sadd.s32 %s40, 1
    %s42 = scalar_select %p39, %s40, %s41
    %p45 = pneg %p39
    %p46 = scmp.eq.s32.totalorder %s9, 3
    %p47 = por %p45, %p46
    %p48 = scmp.ne.s32.totalorder %s40, %s43
    %p49 = scmp.eq.s32.totalorder %s9, 0
    %p50 = por %p48, %p49
    %p51 = scmp.ne.s32.totalorder %s40, %s43
    %p52 = scmp.eq.s32.totalorder %s14, 3
    %p53 = por %p51, %p52
    %p54 = scmp.ne.s32.totalorder %s43, %s44
    %p55 = scmp.eq.s32.totalorder %s14, 0
    %p56 = por %p54, %p55
    %p57 = scmp.ne.s32.totalorder %s43, %s44
    %p58 = scmp.eq.s32.totalorder %s15, 3
    %p59 = por %p57, %p58
    %p61 = scmp.ne.s32.totalorder %s44, %s60
    %p62 = scmp.eq.s32.totalorder %s15, 0
    %p63 = por %p61, %p62
    %s64 = ssub.s32 %s18, %s27
    %s65 = ssub.s32 %s17, %s31
    %s66 = sor.u32 %s64, %s65
    %p67 = scmp.eq.s32.totalorder %s66, 0
    %s69 = sadd.s32 %s68, 1
    %s70 = scalar_select %p67, %s68, %s69
    %p73 = pneg %p67
    %p74 = scmp.eq.s32.totalorder %s9, 3
    %p75 = por %p73, %p74
    %p76 = scmp.ne.s32.totalorder %s68, %s71
    %p77 = scmp.eq.s32.totalorder %s9, 0
    %p78 = por %p76, %p77
    %p79 = scmp.ne.s32.totalorder %s68, %s71
    %p80 = scmp.eq.s32.totalorder %s14, 3
    %p81 = por %p79, %p80
    %p82 = scmp.ne.s32.totalorder %s71, %s72
    %p83 = scmp.eq.s32.totalorder %s14, 0
    %p84 = por %p82, %p83
    %p85 = scmp.ne.s32.totalorder %s71, %s72
    %p86 = scmp.eq.s32.totalorder %s15, 3
    %p87 = por %p85, %p86
    %p89 = scmp.ne.s32.totalorder %s72, %s88
    %p90 = scmp.eq.s32.totalorder %s15, 0
    %p91 = por %p89, %p90
    %s92 = ssub.s32 %s17, %s31
    %p93 = scmp.eq.s32.totalorder %s92, 0
    %s95 = sadd.s32 %s94, 1
    %s96 = scalar_select %p93, %s94, %s95
    %p99 = pneg %p93
    %p100 = scmp.eq.s32.totalorder %s9, 3
    %p101 = por %p99, %p100
    %p102 = scmp.ne.s32.totalorder %s94, %s97
    %p103 = scmp.eq.s32.totalorder %s9, 0
    %p104 = por %p102, %p103
    %p105 = scmp.ne.s32.totalorder %s94, %s97
    %p106 = scmp.eq.s32.totalorder %s14, 3
    %p107 = por %p105, %p106
    %p108 = scmp.ne.s32.totalorder %s97, %s98
    %p109 = scmp.eq.s32.totalorder %s14, 0
    %p110 = por %p108, %p109
    %p111 = scmp.ne.s32.totalorder %s97, %s98
    %p112 = scmp.eq.s32.totalorder %s15, 3
    %p113 = por %p111, %p112
    %p115 = scmp.ne.s32.totalorder %s98, %s114
    %p116 = scmp.eq.s32.totalorder %s15, 0
    %p117 = por %p115, %p116
    %s118 = ssub.s32 %s16, %s35
    %s119 = ssub.s32 %s17, %s31
    %s120 = sor.u32 %s118, %s119
    %p121 = scmp.eq.s32.totalorder %s120, 0
    %s123 = sadd.s32 %s122, 1
    %s124 = scalar_select %p121, %s122, %s123
    %p127 = pneg %p121
    %p128 = scmp.eq.s32.totalorder %s9, 3
    %p129 = por %p127, %p128
    %p130 = scmp.ne.s32.totalorder %s122, %s125
    %p131 = scmp.eq.s32.totalorder %s9, 0
    %p132 = por %p130, %p131
    %p133 = scmp.ne.s32.totalorder %s122, %s125
    %p134 = scmp.eq.s32.totalorder %s14, 3
    %p135 = por %p133, %p134
    %p136 = scmp.ne.s32.totalorder %s125, %s126
    %p137 = scmp.eq.s32.totalorder %s14, 0
    %p138 = por %p136, %p137
    %p139 = scmp.ne.s32.totalorder %s125, %s126
    %p140 = scmp.eq.s32.totalorder %s15, 3
    %p141 = por %p139, %p140
    %p143 = scmp.ne.s32.totalorder %s126, %s142
    %p144 = scmp.eq.s32.totalorder %s15, 0
    %p145 = por %p143, %p144
    %p146 = scmp.le.s32.totalorder 1, %s9
    %p147 = scmp.lt.s32.totalorder %s9, 5
    %p148 = pnand %p146, %p147
    %p149 = pneg %p148
    // Predicated region
    $region9: #{_lambda_.25} parent=5 // pred_check
      _
    $region10: #{_lambda_.25} parent=5 // pred_check_branch
      %151 = sbr.rel (%p148) target = $region12
    $region11: #{_lambda_.25} parent=5 // pred_region
      %s152 = ssub.s32 %s9, 1
      // Predicated region
      $region13: #{_lambda_.25} parent=11 // pred_check
        %p153 = pneg %p84
      $region14: #{_lambda_.25} parent=11 // pred_check_branch
        %155 = sbr.rel (%p153) target = $region16
      $region15: #{_lambda_.25} parent=11 // pred_region
        %s156 = smul.u32 18, %s21
        %p157 = scmp.lt.s32.totalorder %s156, 17
        %s158 = scalar_select %p157, %s156, 17
        %p159 = scmp.lt.s32.totalorder %s20, 0
        %s160 = scalar_select %p159, %s20, 0
        %s161 = sadd.s32 %s160, %s158
        %s162 = smul.addr %s161, 4
        %s163 = scalar_lea.vmem %s1, %s162
        %s164 = smul.u32 18, %s21
      $region16: #{_lambda_.25} parent=11 // pred_fallthru
        _
      // Predicated region
      $region17: #{_lambda_.25} parent=11 // pred_check
        %p165 = pneg %p110
      $region18: #{_lambda_.25} parent=11 // pred_check_branch
        %167 = sbr.rel (%p165) target = $region20
      $region19: #{_lambda_.25} parent=11 // pred_region
        %p168 = scmp.lt.s32.totalorder %s20, 0
        %s169 = scalar_select %p168, %s20, 0
        %s170 = scalar_lea.vmem %s2, %s169
      $region20: #{_lambda_.25} parent=11 // pred_fallthru
        _
    $region12: #{_lambda_.25} parent=5 // pred_fallthru
      _
    %p171 = scmp.lt.s32.totalorder %s9, 4
    // Predicated region
    $region21: #{_lambda_.25} parent=5 // pred_check
      %p172 = pneg %p171
    $region22: #{_lambda_.25} parent=5 // pred_check_branch
      %174 = sbr.rel (%p172) target = $region24
    $region23: #{_lambda_.25} parent=5 // pred_region
      // Predicated region
      $region25: #{_lambda_.25} parent=23 // pred_check
        %p175 = pneg %p50
      $region26: #{_lambda_.25} parent=23 // pred_check_branch
        %177 = sbr.rel (%p175) target = $region28
      $region27: #{_lambda_.25} parent=23 // pred_region
        %s178 = smul.u32 16, %s16
        %s179 = smul.u32 2, %s18
        %p180 = scmp.lt.s32.totalorder %s178, 63
        %s181 = scalar_select %p180, %s178, 63
        %p182 = scmp.lt.s32.totalorder %s179, 1
        %s183 = scalar_select %p182, %s179, 1
        %s184 = smul.addr %s181, 2
        %s185 = sadd.s32 %s183, %s184
        %s186 = smul.addr %s185, 4
        %s187 = scalar_lea.vmem %s0, %s186
        %s188 = smul.u32 16, %s16
        %s189 = smul.u32 2, %s18
      $region28: #{_lambda_.25} parent=23 // pred_fallthru
        _
    $region24: #{_lambda_.25} parent=5 // pred_fallthru
      _
    %p190 = scmp.le.s32.totalorder 1, %s9
    %p191 = scmp.lt.s32.totalorder %s9, 5
    %p192 = pnand %p190, %p191
    %p193 = pneg %p192
    // Predicated region
    $region29: #{_lambda_.25} parent=5 // pred_check
      _
    $region30: #{_lambda_.25} parent=5 // pred_check_branch
      %195 = sbr.rel (%p192) target = $region32
    $region31: #{_lambda_.25} parent=5 // pred_region
      %s196 = ssub.s32 %s9, 1
      %s197 = smul.u32 16, %s19
      %s198 = smul.u32 2, %s21
      %p199 = scmp.lt.s32.totalorder %s197, 63
      %s200 = scalar_select %p199, %s197, 63
      %p201 = scmp.lt.s32.totalorder %s198, 1
      %s202 = scalar_select %p201, %s198, 1
      %s203 = smul.addr %s200, 2
      %s204 = sadd.s32 %s202, %s203
      %s205 = smul.addr %s204, 4
      %s206 = scalar_lea.vmem %s0, %s205
      %p207 = pneg %p56
      %p208 = pneg %p53
      %s209 = smul.u32 18, %s21
      %p210 = scmp.lt.s32.totalorder %s209, 17
      %s211 = scalar_select %p210, %s209, 17
      %p212 = scmp.lt.s32.totalorder %s20, 0
      %s213 = scalar_select %p212, %s20, 0
      %s214 = sadd.s32 %s213, %s211
      %s215 = smul.addr %s214, 4
      %s216 = scalar_lea.vmem %s1, %s215
      %p217 = pneg %p84
      %p218 = pneg %p81
      %p219 = scmp.lt.s32.totalorder %s20, 0
      %s220 = scalar_select %p219, %s20, 0
      %s221 = scalar_lea.vmem %s2, %s220
      %p222 = pneg %p110
      %p223 = pneg %p107
      %p224 = pneg %p138
      %p225 = pneg %p135
      %s226 = smul.u32 16, %s19
      %p227 = scmp.lt.s32.totalorder %s226, 63
      %s228 = scalar_select %p227, %s226, 63
      %p229 = scmp.lt.s32.totalorder %s20, 0
      %s230 = scalar_select %p229, %s20, 0
      %s231 = sadd.s32 %s230, %s228
      %s232 = smul.addr %s231, 4
      %s233 = scalar_lea.vmem %s3, %s232
      %s234 = smul.u32 16, %s19
      %s235 = smul.u32 2, %s21
      %p236 = scmp.lt.s32.totalorder %s234, 63
      %s237 = scalar_select %p236, %s234, 63
      %p238 = scmp.lt.s32.totalorder %s235, 1
      %s239 = scalar_select %p238, %s235, 1
      %s240 = smul.addr %s237, 2
      %s241 = sadd.s32 %s239, %s240
      %s242 = smul.addr %s241, 4
      %s243 = scalar_lea.vmem %s0, %s242
      %s244 = smul.u32 16, %s19
      %s245 = smul.u32 2, %s21
      %s246 = smul.u32 18, %s21
      %p247 = scmp.lt.s32.totalorder %s246, 17
      %s248 = scalar_select %p247, %s246, 17
      %p249 = scmp.lt.s32.totalorder %s20, 0
      %s250 = scalar_select %p249, %s20, 0
      %s251 = sadd.s32 %s250, %s248
      %s252 = smul.addr %s251, 4
      %s253 = scalar_lea.vmem %s1, %s252
      %s254 = smul.u32 18, %s21
      %p255 = scmp.lt.s32.totalorder %s20, 0
      %s256 = scalar_select %p255, %s20, 0
      %s257 = scalar_lea.vmem %s2, %s256
      %s258 = smul.u32 16, %s19
      %p259 = scmp.lt.s32.totalorder %s258, 63
      %s260 = scalar_select %p259, %s258, 63
      %p261 = scmp.lt.s32.totalorder %s20, 0
      %s262 = scalar_select %p261, %s20, 0
      %s263 = sadd.s32 %s262, %s260
      %s264 = smul.addr %s263, 4
      %s265 = scalar_lea.vmem %s3, %s264
      %s266 = smul.u32 16, %s19
      %p268 = scmp.eq.s32.totalorder %s21, 0
      // Predicated region
      $region33: #{_lambda_.25} parent=31 // pred_check
        %p269 = pneg %p268
      $region34: #{_lambda_.25} parent=31 // pred_check_branch
        %271 = sbr.rel (%p269) target = $region36
      $region35: #{_lambda_.25} parent=31 // pred_region
        %272 = vst [vmem:[#allocation2] sm:$0xff] 0.0
        %273 = vst [vmem:[#allocation2 + $0x8] sm:$0xff] 0.0
        %274 = vst [vmem:[#allocation2 + $0x10] sm:$0xff] 0.0
        %275 = vst [vmem:[#allocation2 + $0x18] sm:$0xff] 0.0
        %276 = vst [vmem:[#allocation2 + $0x20] sm:$0xff] 0.0
        %277 = vst [vmem:[#allocation2 + $0x28] sm:$0xff] 0.0
        %278 = vst [vmem:[#allocation2 + $0x30] sm:$0xff] 0.0
        %279 = vst [vmem:[#allocation2 + $0x38] sm:$0xff] 0.0
        %280 = vst [vmem:[#allocation2 + $0x40] sm:$0xff] 0.0
        %281 = vst [vmem:[#allocation2 + $0x48] sm:$0xff] 0.0
        %282 = vst [vmem:[#allocation2 + $0x50] sm:$0xff] 0.0
        %283 = vst [vmem:[#allocation2 + $0x58] sm:$0xff] 0.0
        %284 = vst [vmem:[#allocation2 + $0x60] sm:$0xff] 0.0
        %285 = vst [vmem:[#allocation2 + $0x68] sm:$0xff] 0.0
        %286 = vst [vmem:[#allocation2 + $0x70] sm:$0xff] 0.0
        %287 = vst [vmem:[#allocation2 + $0x78] sm:$0xff] 0.0
      $region36: #{_lambda_.25} parent=31 // pred_fallthru
        _
      %v288 = vld [vmem:[#allocation2] sm:$0xff]
      %v289 = vld [vmem:[#allocation2 + $0x8] sm:$0xff]
      %v290 = vld [vmem:[#allocation2 + $0x10] sm:$0xff]
      %v291 = vld [vmem:[#allocation2 + $0x18] sm:$0xff]
      %v292 = vld [vmem:[#allocation2 + $0x20] sm:$0xff]
      %v293 = vld [vmem:[#allocation2 + $0x28] sm:$0xff]
      %v294 = vld [vmem:[#allocation2 + $0x30] sm:$0xff]
      %v295 = vld [vmem:[#allocation2 + $0x38] sm:$0xff]
      %v296 = vld [vmem:[#allocation2 + $0x40] sm:$0xff]
      %v297 = vld [vmem:[#allocation2 + $0x48] sm:$0xff]
      %v298 = vld [vmem:[#allocation2 + $0x50] sm:$0xff]
      %v299 = vld [vmem:[#allocation2 + $0x58] sm:$0xff]
      %v300 = vld [vmem:[#allocation2 + $0x60] sm:$0xff]
      %v301 = vld [vmem:[#allocation2 + $0x68] sm:$0xff]
      %v302 = vld [vmem:[#allocation2 + $0x70] sm:$0xff]
      %v303 = vld [vmem:[#allocation2 + $0x78] sm:$0xff]
      %v304 = vld [vmem:[%s243] sm:$0xff]
      %v305 = vld [vmem:[%s243 + $0x8] sm:$0xff]
      %v306 = vld [vmem:[%s243 + $0x10] sm:$0xff]
      %v307 = vld [vmem:[%s243 + $0x18] sm:$0xff]
      %v308 = vld [vmem:[%s243 + $0x20] sm:$0xff]
      %v309 = vld [vmem:[%s243 + $0x28] sm:$0xff]
      %v310 = vld [vmem:[%s243 + $0x30] sm:$0xff]
      %v311 = vld [vmem:[%s243 + $0x38] sm:$0xff]
      %v312 = vld [vmem:[%s243 + $0x40] sm:$0xff]
      %v313 = vld [vmem:[%s243 + $0x48] sm:$0xff]
      %v314 = vld [vmem:[%s243 + $0x50] sm:$0xff]
      %v315 = vld [vmem:[%s243 + $0x58] sm:$0xff]
      %v316 = vld [vmem:[%s243 + $0x60] sm:$0xff]
      %v317 = vld [vmem:[%s243 + $0x68] sm:$0xff]
      %v318 = vld [vmem:[%s243 + $0x70] sm:$0xff]
      %v319 = vld [vmem:[%s243 + $0x78] sm:$0xff]
      %v320 = vld [vmem:[%s253] sm:$0xf]
      %v321 = vld [vmem:[%s253 + $0x4] sm:$0xf]
      %v322 = vld [vmem:[%s253 + $0x8] sm:$0xf]
      %v323 = vld [vmem:[%s253 + $0xc] sm:$0xf]
      %v324 = vld [vmem:[%s253 + $0x10] sm:$0xf]
      %v325 = vld [vmem:[%s253 + $0x14] sm:$0xf]
      %v326 = vld [vmem:[%s253 + $0x18] sm:$0xf]
      %v327 = vld [vmem:[%s253 + $0x1c] sm:$0xf]
      %v328 = vld [vmem:[%s253 + $0x20] sm:$0xf]
      %v329 = vld [vmem:[%s253 + $0x24] sm:$0xf]
      %v330 = vld [vmem:[%s253 + $0x28] sm:$0xf]
      %v331 = vld [vmem:[%s253 + $0x2c] sm:$0xf]
      %v332 = vld [vmem:[%s253 + $0x30] sm:$0xf]
      %v333 = vld [vmem:[%s253 + $0x34] sm:$0xf]
      %v334 = vld [vmem:[%s253 + $0x38] sm:$0xf]
      %v335 = vld [vmem:[%s253 + $0x3c] sm:$0xf]
      %v336 = vld [vmem:[%s253 + $0x40] sm:$0xf]
      %v337 = vld [vmem:[%s253 + $0x44] sm:$0xf]
      %v354 = vunpack.c.l.b16 %v304
      %v355 = vunpack.c.h.b16 %v304
      %v356 = vunpack.c.l.b16 %v305
      %v357 = vunpack.c.h.b16 %v305
      %v358 = vunpack.c.l.b16 %v306
      %v359 = vunpack.c.h.b16 %v306
      %v360 = vunpack.c.l.b16 %v307
      %v361 = vunpack.c.h.b16 %v307
      %v362 = vunpack.c.l.b16 %v308
      %v363 = vunpack.c.h.b16 %v308
      %v364 = vunpack.c.l.b16 %v309
      %v365 = vunpack.c.h.b16 %v309
      %v366 = vunpack.c.l.b16 %v310
      %v367 = vunpack.c.h.b16 %v310
      %v368 = vunpack.c.l.b16 %v311
      %v369 = vunpack.c.h.b16 %v311
      %v370 = vunpack.c.l.b16 %v312
      %v371 = vunpack.c.h.b16 %v312
      %v372 = vunpack.c.l.b16 %v313
      %v373 = vunpack.c.h.b16 %v313
      %v374 = vunpack.c.l.b16 %v314
      %v375 = vunpack.c.h.b16 %v314
      %v376 = vunpack.c.l.b16 %v315
      %v377 = vunpack.c.h.b16 %v315
      %v378 = vunpack.c.l.b16 %v316
      %v379 = vunpack.c.h.b16 %v316
      %v380 = vunpack.c.l.b16 %v317
      %v381 = vunpack.c.h.b16 %v317
      %v382 = vunpack.c.l.b16 %v318
      %v383 = vunpack.c.h.b16 %v318
      %v384 = vunpack.c.l.b16 %v319
      %v385 = vunpack.c.h.b16 %v319
      %v386 = vpack.c.b16 %v356, %v354
      %v387 = vpack.c.b16 %v357, %v355
      %v388 = vpack.c.b16 %v360, %v358
      %v389 = vpack.c.b16 %v361, %v359
      %v390 = vpack.c.b16 %v364, %v362
      %v391 = vpack.c.b16 %v365, %v363
      %v392 = vpack.c.b16 %v368, %v366
      %v393 = vpack.c.b16 %v369, %v367
      %v394 = vpack.c.b16 %v372, %v370
      %v395 = vpack.c.b16 %v373, %v371
      %v396 = vpack.c.b16 %v376, %v374
      %v397 = vpack.c.b16 %v377, %v375
      %v398 = vpack.c.b16 %v380, %v378
      %v399 = vpack.c.b16 %v381, %v379
      %v400 = vpack.c.b16 %v384, %v382
      %v401 = vpack.c.b16 %v385, %v383
      %v428 = vunpack.c.l.b16 %v320
      %v429 = vunpack.c.l.b16 %v321
      %v430 = vunpack.c.l.b16 %v322
      %v431 = vunpack.c.l.b16 %v323
      %v432 = vunpack.c.l.b16 %v324
      %v433 = vunpack.c.l.b16 %v325
      %v434 = vunpack.c.l.b16 %v326
      %v435 = vunpack.c.l.b16 %v327
      %v436 = vunpack.c.l.b16 %v328
      %v437 = vunpack.c.l.b16 %v329
      %v438 = vunpack.c.l.b16 %v330
      %v439 = vunpack.c.l.b16 %v331
      %v440 = vunpack.c.l.b16 %v332
      %v441 = vunpack.c.l.b16 %v333
      %v442 = vunpack.c.l.b16 %v334
      %v443 = vunpack.c.l.b16 %v335
      %v444 = vunpack.c.l.b16 %v336
      %v445 = vunpack.c.l.b16 %v337
      %v446 = vpack.c.b16 %v429, %v428
      %v447 = vpack.c.b16 %v431, %v430
      %v448 = vpack.c.b16 %v433, %v432
      %v449 = vpack.c.b16 %v435, %v434
      %v450 = vpack.c.b16 %v437, %v436
      %v451 = vpack.c.b16 %v439, %v438
      %v452 = vpack.c.b16 %v441, %v440
      %v453 = vpack.c.b16 %v443, %v442
      %v454 = vpack.c.b16 %v445, %v444
      %vm464 = vcmask 130048
      %v466 = vsel %vm464, %v387, 0
      %v469 = vsel %vm464, %v389, 0
      %v472 = vsel %vm464, %v391, 0
      %v475 = vsel %vm464, %v393, 0
      %v478 = vsel %vm464, %v395, 0
      %v481 = vsel %vm464, %v397, 0
      %v484 = vsel %vm464, %v399, 0
      %v487 = vsel %vm464, %v401, 0
      %489 = vmatprep.subr.bf16.mxu0 0
      %490 = vmatpush1.bf16.msra.mxu0 %v446
      %491 = vmatprep.subr.bf16.mxu0 0
      %492 = vmatpush1.bf16.msra.mxu0 %v447
      %493 = vmatprep.subr.bf16.mxu0 0
      %494 = vmatpush1.bf16.msra.mxu0 %v448
      %495 = vmatprep.subr.bf16.mxu0 0
      %496 = vmatpush1.bf16.msra.mxu0 %v449
      %497 = vmatprep.subr.bf16.mxu0 0
      %498 = vmatpush1.bf16.msra.mxu0 %v450
      %499 = vmatprep.subr.bf16.mxu0 0
      %500 = vmatpush1.bf16.msra.mxu0 %v451
      %501 = vmatprep.subr.bf16.mxu0 0
      %502 = vmatpush1.bf16.msra.mxu0 %v452
      %503 = vmatprep.subr.bf16.mxu0 0
      %504 = vmatpush1.bf16.msra.mxu0 %v453
      %505 = vmatprep.subr.bf16.mxu0 0
      %506 = vmatpush1.bf16.msra.mxu0 %v454
      %507 = vmatprep.subr.bf16.mxu0 0
      %508 = vmatpush1.bf16.msra.mxu0 0
      %509 = vmatprep.subr.bf16.mxu0 0
      %510 = vmatpush1.bf16.msra.mxu0 0
      %511 = vmatprep.subr.bf16.mxu0 0
      %512 = vmatpush1.bf16.msra.mxu0 0
      %513 = vmatprep.subr.bf16.mxu0 0
      %514 = vmatpush1.bf16.msra.mxu0 0
      %515 = vmatprep.subr.bf16.mxu0 0
      %516 = vmatpush1.bf16.msra.mxu0 0
      %517 = vmatprep.subr.bf16.mxu0 0
      %518 = vmatpush1.bf16.msra.mxu0 0
      %519 = vmatprep.subr.bf16.mxu0 0
      %520 = vmatpush1.bf16.msra.mxu0 0
      %521 = vmatprep.mubr.bf16.mxu0 %v466
      %522 = vmatmul.mubr.bf16.gmra.mrb[0].mxu0 %v386
      %v523 = vpop.f32.mrb[0].mxu0
      %v524 = vadd.f32 0.0, %v523
      %v525 = vpop.f32.mrb[0].mxu0
      %v526 = vpop.f32.mrb[0].mxu0
      %v527 = vadd.f32 0.0, %v526
      %v528 = vpop.f32.mrb[0].mxu0
      %529 = vmatprep.mubr.bf16.mxu0 %v469
      %530 = vmatmul.mubr.bf16.gmra.mrb[0].mxu0 %v388
      %v531 = vpop.f32.mrb[0].mxu0
      %v532 = vadd.f32 0.0, %v531
      %v533 = vpop.f32.mrb[0].mxu0
      %v534 = vpop.f32.mrb[0].mxu0
      %v535 = vadd.f32 0.0, %v534
      %v536 = vpop.f32.mrb[0].mxu0
      %537 = vmatprep.mubr.bf16.mxu0 %v472
      %538 = vmatmul.mubr.bf16.gmra.mrb[0].mxu0 %v390
      %v539 = vpop.f32.mrb[0].mxu0
      %v540 = vadd.f32 0.0, %v539
      %v541 = vpop.f32.mrb[0].mxu0
      %v542 = vpop.f32.mrb[0].mxu0
      %v543 = vadd.f32 0.0, %v542
      %v544 = vpop.f32.mrb[0].mxu0
      %545 = vmatprep.mubr.bf16.mxu0 %v475
      %546 = vmatmul.mubr.bf16.gmra.mrb[0].mxu0 %v392
      %v547 = vpop.f32.mrb[0].mxu0
      %v548 = vadd.f32 0.0, %v547
      %v549 = vpop.f32.mrb[0].mxu0
      %v550 = vpop.f32.mrb[0].mxu0
      %v551 = vadd.f32 0.0, %v550
      %v552 = vpop.f32.mrb[0].mxu0
      %553 = vmatprep.mubr.bf16.mxu0 %v478
      %554 = vmatmul.mubr.bf16.gmra.mrb[0].mxu0 %v394
      %v555 = vpop.f32.mrb[0].mxu0
      %v556 = vadd.f32 0.0, %v555
      %v557 = vpop.f32.mrb[0].mxu0
      %v558 = vpop.f32.mrb[0].mxu0
      %v559 = vadd.f32 0.0, %v558
      %v560 = vpop.f32.mrb[0].mxu0
      %561 = vmatprep.mubr.bf16.mxu0 %v481
      %562 = vmatmul.mubr.bf16.gmra.mrb[0].mxu0 %v396
      %v563 = vpop.f32.mrb[0].mxu0
      %v564 = vadd.f32 0.0, %v563
      %v565 = vpop.f32.mrb[0].mxu0
      %v566 = vpop.f32.mrb[0].mxu0
      %v567 = vadd.f32 0.0, %v566
      %v568 = vpop.f32.mrb[0].mxu0
      %569 = vmatprep.mubr.bf16.mxu0 %v484
      %570 = vmatmul.mubr.bf16.gmra.mrb[0].mxu0 %v398
      %v571 = vpop.f32.mrb[0].mxu0
      %v572 = vadd.f32 0.0, %v571
      %v573 = vpop.f32.mrb[0].mxu0
      %v574 = vpop.f32.mrb[0].mxu0
      %v575 = vadd.f32 0.0, %v574
      %v576 = vpop.f32.mrb[0].mxu0
      %577 = vmatprep.mubr.bf16.mxu0 %v487
      %578 = vmatmul.mubr.bf16.gmra.mrb[0].mxu0 %v400
      %v579 = vpop.f32.mrb[0].mxu0
      %v580 = vadd.f32 0.0, %v579
      %v581 = vpop.f32.mrb[0].mxu0
      %v582 = vpop.f32.mrb[0].mxu0
      %v583 = vadd.f32 0.0, %v582
      %v584 = vpop.f32.mrb[0].mxu0
      %585 = vdwg.mxu0
      %v586 = vadd.f32 %v288, %v524
      %v587 = vadd.f32 %v289, %v527
      %v588 = vadd.f32 %v290, %v532
      %v589 = vadd.f32 %v291, %v535
      %v590 = vadd.f32 %v292, %v540
      %v591 = vadd.f32 %v293, %v543
      %v592 = vadd.f32 %v294, %v548
      %v593 = vadd.f32 %v295, %v551
      %v594 = vadd.f32 %v296, %v556
      %v595 = vadd.f32 %v297, %v559
      %v596 = vadd.f32 %v298, %v564
      %v597 = vadd.f32 %v299, %v567
      %v598 = vadd.f32 %v300, %v572
      %v599 = vadd.f32 %v301, %v575
      %v600 = vadd.f32 %v302, %v580
      %v601 = vadd.f32 %v303, %v583
      %602 = vst [vmem:[#allocation2] sm:$0xff] %v586
      %603 = vst [vmem:[#allocation2 + $0x8] sm:$0xff] %v587
      %604 = vst [vmem:[#allocation2 + $0x10] sm:$0xff] %v588
      %605 = vst [vmem:[#allocation2 + $0x18] sm:$0xff] %v589
      %606 = vst [vmem:[#allocation2 + $0x20] sm:$0xff] %v590
      %607 = vst [vmem:[#allocation2 + $0x28] sm:$0xff] %v591
      %608 = vst [vmem:[#allocation2 + $0x30] sm:$0xff] %v592
      %609 = vst [vmem:[#allocation2 + $0x38] sm:$0xff] %v593
      %610 = vst [vmem:[#allocation2 + $0x40] sm:$0xff] %v594
      %611 = vst [vmem:[#allocation2 + $0x48] sm:$0xff] %v595
      %612 = vst [vmem:[#allocation2 + $0x50] sm:$0xff] %v596
      %613 = vst [vmem:[#allocation2 + $0x58] sm:$0xff] %v597
      %614 = vst [vmem:[#allocation2 + $0x60] sm:$0xff] %v598
      %615 = vst [vmem:[#allocation2 + $0x68] sm:$0xff] %v599
      %616 = vst [vmem:[#allocation2 + $0x70] sm:$0xff] %v600
      %617 = vst [vmem:[#allocation2 + $0x78] sm:$0xff] %v601
      // Predicated region
      $region37: #{_lambda_.25} parent=31 // pred_check
        %p618 = pneg %p268
      $region38: #{_lambda_.25} parent=31 // pred_check_branch
        %620 = sbr.rel (%p618) target = $region40
      $region39: #{_lambda_.25} parent=31 // pred_region
        %v621 = vld [vmem:[#allocation2] sm:$0xff]
        %v622 = vld [vmem:[#allocation2 + $0x8] sm:$0xff]
        %v623 = vld [vmem:[#allocation2 + $0x10] sm:$0xff]
        %v624 = vld [vmem:[#allocation2 + $0x18] sm:$0xff]
        %v625 = vld [vmem:[#allocation2 + $0x20] sm:$0xff]
        %v626 = vld [vmem:[#allocation2 + $0x28] sm:$0xff]
        %v627 = vld [vmem:[#allocation2 + $0x30] sm:$0xff]
        %v628 = vld [vmem:[#allocation2 + $0x38] sm:$0xff]
        %v629 = vld [vmem:[#allocation2 + $0x40] sm:$0xff]
        %v630 = vld [vmem:[#allocation2 + $0x48] sm:$0xff]
        %v631 = vld [vmem:[#allocation2 + $0x50] sm:$0xff]
        %v632 = vld [vmem:[#allocation2 + $0x58] sm:$0xff]
        %v633 = vld [vmem:[#allocation2 + $0x60] sm:$0xff]
        %v634 = vld [vmem:[#allocation2 + $0x68] sm:$0xff]
        %v635 = vld [vmem:[#allocation2 + $0x70] sm:$0xff]
        %v636 = vld [vmem:[#allocation2 + $0x78] sm:$0xff]
        %v637 = vld [vmem:[%s257] sm:$0x1]
        %v639 = vlaneseq
        %v640 = vshrl.u32 %v639, 7
        %v641 = vsub.s32 0, %v640
        %v642 = vrot.slane %v637, %v641
        %v644 = vadd.f32 %v621, %v642
        %v645 = vadd.f32 %v622, %v642
        %v646 = vadd.f32 %v623, %v642
        %v647 = vadd.f32 %v624, %v642
        %v648 = vadd.f32 %v625, %v642
        %v649 = vadd.f32 %v626, %v642
        %v650 = vadd.f32 %v627, %v642
        %v651 = vadd.f32 %v628, %v642
        %v652 = vadd.f32 %v629, %v642
        %v653 = vadd.f32 %v630, %v642
        %v654 = vadd.f32 %v631, %v642
        %v655 = vadd.f32 %v632, %v642
        %v656 = vadd.f32 %v633, %v642
        %v657 = vadd.f32 %v634, %v642
        %v658 = vadd.f32 %v635, %v642
        %v659 = vadd.f32 %v636, %v642
        %v660 = vmax.f32 %v644, 0.0
        %v661 = vmax.f32 %v645, 0.0
        %v662 = vmax.f32 %v646, 0.0
        %v663 = vmax.f32 %v647, 0.0
        %v664 = vmax.f32 %v648, 0.0
        %v665 = vmax.f32 %v649, 0.0
        %v666 = vmax.f32 %v650, 0.0
        %v667 = vmax.f32 %v651, 0.0
        %v668 = vmax.f32 %v652, 0.0
        %v669 = vmax.f32 %v653, 0.0
        %v670 = vmax.f32 %v654, 0.0
        %v671 = vmax.f32 %v655, 0.0
        %v672 = vmax.f32 %v656, 0.0
        %v673 = vmax.f32 %v657, 0.0
        %v674 = vmax.f32 %v658, 0.0
        %v675 = vmax.f32 %v659, 0.0
        %v676 = vpack.c.bf16 %v661, %v660
        %v677 = vpack.c.bf16 %v663, %v662
        %v678 = vpack.c.bf16 %v665, %v664
        %v679 = vpack.c.bf16 %v667, %v666
        %v680 = vpack.c.bf16 %v669, %v668
        %v681 = vpack.c.bf16 %v671, %v670
        %v682 = vpack.c.bf16 %v673, %v672
        %v683 = vpack.c.bf16 %v675, %v674
        %v692 = vunpack.c.l.b16 %v676
        %v693 = vunpack.c.h.b16 %v676
        %v694 = vunpack.c.l.b16 %v677
        %v695 = vunpack.c.h.b16 %v677
        %v696 = vunpack.c.l.b16 %v678
        %v697 = vunpack.c.h.b16 %v678
        %v698 = vunpack.c.l.b16 %v679
        %v699 = vunpack.c.h.b16 %v679
        %v700 = vunpack.c.l.b16 %v680
        %v701 = vunpack.c.h.b16 %v680
        %v702 = vunpack.c.l.b16 %v681
        %v703 = vunpack.c.h.b16 %v681
        %v704 = vunpack.c.l.b16 %v682
        %v705 = vunpack.c.h.b16 %v682
        %v706 = vunpack.c.l.b16 %v683
        %v707 = vunpack.c.h.b16 %v683
        %v708 = vpack.c.b16 %v692, %v692
        %v709 = vpack.c.b16 %v693, %v693
        %v710 = vpack.c.b16 %v694, %v694
        %v711 = vpack.c.b16 %v695, %v695
        %v712 = vpack.c.b16 %v696, %v696
        %v713 = vpack.c.b16 %v697, %v697
        %v714 = vpack.c.b16 %v698, %v698
        %v715 = vpack.c.b16 %v699, %v699
        %v716 = vpack.c.b16 %v700, %v700
        %v717 = vpack.c.b16 %v701, %v701
        %v718 = vpack.c.b16 %v702, %v702
        %v719 = vpack.c.b16 %v703, %v703
        %v720 = vpack.c.b16 %v704, %v704
        %v721 = vpack.c.b16 %v705, %v705
        %v722 = vpack.c.b16 %v706, %v706
        %v723 = vpack.c.b16 %v707, %v707
        %740 = vst [vmem:[%s265] sm:$0xf] %v708
        %741 = vst [vmem:[%s265 + $0x4] sm:$0xf] %v709
        %742 = vst [vmem:[%s265 + $0x8] sm:$0xf] %v710
        %743 = vst [vmem:[%s265 + $0xc] sm:$0xf] %v711
        %744 = vst [vmem:[%s265 + $0x10] sm:$0xf] %v712
        %745 = vst [vmem:[%s265 + $0x14] sm:$0xf] %v713
        %746 = vst [vmem:[%s265 + $0x18] sm:$0xf] %v714
        %747 = vst [vmem:[%s265 + $0x1c] sm:$0xf] %v715
        %748 = vst [vmem:[%s265 + $0x20] sm:$0xf] %v716
        %749 = vst [vmem:[%s265 + $0x24] sm:$0xf] %v717
        %750 = vst [vmem:[%s265 + $0x28] sm:$0xf] %v718
        %751 = vst [vmem:[%s265 + $0x2c] sm:$0xf] %v719
        %752 = vst [vmem:[%s265 + $0x30] sm:$0xf] %v720
        %753 = vst [vmem:[%s265 + $0x34] sm:$0xf] %v721
        %754 = vst [vmem:[%s265 + $0x38] sm:$0xf] %v722
        %755 = vst [vmem:[%s265 + $0x3c] sm:$0xf] %v723
      $region40: #{_lambda_.25} parent=31 // pred_fallthru
        _
      %s756 = smul.u32 16, %s19
      %p757 = scmp.lt.s32.totalorder %s756, 63
      %s758 = scalar_select %p757, %s756, 63
      %p759 = scmp.lt.s32.totalorder %s20, 0
      %s760 = scalar_select %p759, %s20, 0
      %s761 = sadd.s32 %s760, %s758
      %s762 = smul.addr %s761, 4
      %s763 = scalar_lea.vmem %s3, %s762
      // Predicated region
      $region41: #{_lambda_.25} parent=31 // pred_check
        %p764 = pneg %p135
      $region42: #{_lambda_.25} parent=31 // pred_check_branch
        %766 = sbr.rel (%p764) target = $region44
      $region43: #{_lambda_.25} parent=31 // pred_region
        %s767 = smul.u32 16, %s19
      $region44: #{_lambda_.25} parent=31 // pred_fallthru
        _
    $region32: #{_lambda_.25} parent=5 // pred_fallthru
      _
    %p768 = scmp.le.s32.totalorder 2, %s9
    // Predicated region
    $region45: #{_lambda_.25} parent=5 // pred_check
      %p769 = pneg %p768
    $region46: #{_lambda_.25} parent=5 // pred_check_branch
      %771 = sbr.rel (%p769) target = $region48
    $region47: #{_lambda_.25} parent=5 // pred_region
      %s772 = ssub.s32 %s9, 2
      // Predicated region
      $region49: #{_lambda_.25} parent=47 // pred_check
        %p773 = pneg %p141
      $region50: #{_lambda_.25} parent=47 // pred_check_branch
        %775 = sbr.rel (%p773) target = $region52
      $region51: #{_lambda_.25} parent=47 // pred_region
        %s776 = smul.u32 16, %s22
        %p777 = scmp.lt.s32.totalorder %s776, 63
        %s778 = scalar_select %p777, %s776, 63
        %p779 = scmp.lt.s32.totalorder %s23, 0
        %s780 = scalar_select %p779, %s23, 0
        %s781 = sadd.s32 %s780, %s778
        %s782 = smul.addr %s781, 4
        %s783 = scalar_lea.vmem %s3, %s782
      $region52: #{_lambda_.25} parent=47 // pred_fallthru
        _
    $region48: #{_lambda_.25} parent=5 // pred_fallthru
      _
  $region6: #{_lambda_.25} parent=0 // loop_footer
    %s13 = sadd.s32 1, %s9
  $region7: #{_lambda_.25} parent=0 // loop_footer_branch
    %8 = sbr.rel target = $region3
  $region8: #{_lambda_.25} parent=0 // loop_exit
    _

// kernel: _lambda_.26
$region0: #{_lambda_.26}
  #allocation0 [shape = 'u32[]', space=smem, size = 0x4, offset = 0x4, fixed_abs, tag = 'smem constant byte address 0x4 - core index']
  #allocation1 [shape = 'u32[144,128]{1,0:T(1,128)}', space=vmem, size = 0x12000, scoped, tag = 'internal scratch']
  #allocation2 [shape = 'f32[128,128]{1,0:T(8,128)}', space=vmem, size = 0x10000, scoped, tag = 'scratch operand']
  %s0 = inlined_call_operand.vmem [shape: bf16[512,16], index: 0, kind: input, shape index: {}]
  %s1 = inlined_call_operand.vmem [shape: bf16[16,128], index: 1, kind: input, shape index: {}]
  %s2 = inlined_call_operand.vmem [shape: f32[1,128], index: 2, kind: input, shape index: {}]
  %s3 = inlined_call_operand.vmem [shape: bf16[512,128], index: 3, kind: output, shape index: {}]
  %s4 = sld [smem:[#allocation0]]
  $region53: #{_lambda_.26} parent=0
    _
  %s6 = ssub.s32 1, %s4
  %s7 = scalar_select 0, %s6, %s4
  loop: start=0, step=1, limit=6
  $region2: #{_lambda_.26} parent=0 // loop_pre_header
    _
  $region3: #{_lambda_.26} parent=0 // loop_header
    %s9 = sphi 0, %s13
    %p10 = scmp.ge.s32.totalorder %s9, 6
    %s16 = sphi 0, %s35
    %s17 = sphi 0, %s31
    %s18 = sphi 0, %s27
    %s19 = sphi 0, %s16
    %s20 = sphi 0, %s17
    %s21 = sphi 0, %s18
    %s22 = sphi 0, %s19
    %s23 = sphi 0, %s20
    %s24 = sphi 0, %s21
    %s40 = sphi 0, %s42
    %s43 = sphi 0, %s40
    %s44 = sphi 0, %s43
    %s60 = sphi 0, %s44
    %s68 = sphi 0, %s70
    %s71 = sphi 0, %s68
    %s72 = sphi 0, %s71
    %s88 = sphi 0, %s72
    %s94 = sphi 0, %s96
    %s97 = sphi 0, %s94
    %s98 = sphi 0, %s97
    %s114 = sphi 0, %s98
    %s122 = sphi 0, %s124
    %s125 = sphi 0, %s122
    %s126 = sphi 0, %s125
    %s142 = sphi 0, %s126
  $region4: #{_lambda_.26} parent=0 // loop_header_branch
    %12 = sbr.rel (%p10) target = $region8
  $region5: #{_lambda_.26} parent=0 // loop_body
    %s14 = ssub.s32 %s9, 1
    %s15 = ssub.s32 %s9, 2
    %s25 = sadd.s32 1, %s18
    %p26 = scmp.ge.s32.totalorder %s25, 1
    %s27 = scalar_select %p26, 0, %s25
    %s28 = sadd.s32 1, %s17
    %s29 = scalar_select %p26, %s28, %s17
    %p30 = scmp.ge.s32.totalorder %s29, 1
    %s31 = scalar_select %p30, 0, %s29
    %s32 = sadd.s32 1, %s16
    %s33 = scalar_select %p30, %s32, %s16
    %p34 = scmp.ge.s32.totalorder %s33, 4
    %s35 = scalar_select %p34, 0, %s33
    %s36 = ssub.s32 %s16, %s35
    %s37 = ssub.s32 %s18, %s27
    %s38 = sor.u32 %s36, %s37
    %p39 = scmp.eq.s32.totalorder %s38, 0
    %s41 = sadd.s32 %s40, 1
    %s42 = scalar_select %p39, %s40, %s41
    %p45 = pneg %p39
    %p46 = scmp.eq.s32.totalorder %s9, 3
    %p47 = por %p45, %p46
    %p48 = scmp.ne.s32.totalorder %s40, %s43
    %p49 = scmp.eq.s32.totalorder %s9, 0
    %p50 = por %p48, %p49
    %p51 = scmp.ne.s32.totalorder %s40, %s43
    %p52 = scmp.eq.s32.totalorder %s14, 3
    %p53 = por %p51, %p52
    %p54 = scmp.ne.s32.totalorder %s43, %s44
    %p55 = scmp.eq.s32.totalorder %s14, 0
    %p56 = por %p54, %p55
    %p57 = scmp.ne.s32.totalorder %s43, %s44
    %p58 = scmp.eq.s32.totalorder %s15, 3
    %p59 = por %p57, %p58
    %p61 = scmp.ne.s32.totalorder %s44, %s60
    %p62 = scmp.eq.s32.totalorder %s15, 0
    %p63 = por %p61, %p62
    %s64 = ssub.s32 %s18, %s27
    %s65 = ssub.s32 %s17, %s31
    %s66 = sor.u32 %s64, %s65
    %p67 = scmp.eq.s32.totalorder %s66, 0
    %s69 = sadd.s32 %s68, 1
    %s70 = scalar_select %p67, %s68, %s69
    %p73 = pneg %p67
    %p74 = scmp.eq.s32.totalorder %s9, 3
    %p75 = por %p73, %p74
    %p76 = scmp.ne.s32.totalorder %s68, %s71
    %p77 = scmp.eq.s32.totalorder %s9, 0
    %p78 = por %p76, %p77
    %p79 = scmp.ne.s32.totalorder %s68, %s71
    %p80 = scmp.eq.s32.totalorder %s14, 3
    %p81 = por %p79, %p80
    %p82 = scmp.ne.s32.totalorder %s71, %s72
    %p83 = scmp.eq.s32.totalorder %s14, 0
    %p84 = por %p82, %p83
    %p85 = scmp.ne.s32.totalorder %s71, %s72
    %p86 = scmp.eq.s32.totalorder %s15, 3
    %p87 = por %p85, %p86
    %p89 = scmp.ne.s32.totalorder %s72, %s88
    %p90 = scmp.eq.s32.totalorder %s15, 0
    %p91 = por %p89, %p90
    %s92 = ssub.s32 %s17, %s31
    %p93 = scmp.eq.s32.totalorder %s92, 0
    %s95 = sadd.s32 %s94, 1
    %s96 = scalar_select %p93, %s94, %s95
    %p99 = pneg %p93
    %p100 = scmp.eq.s32.totalorder %s9, 3
    %p101 = por %p99, %p100
    %p102 = scmp.ne.s32.totalorder %s94, %s97
    %p103 = scmp.eq.s32.totalorder %s9, 0
    %p104 = por %p102, %p103
    %p105 = scmp.ne.s32.totalorder %s94, %s97
    %p106 = scmp.eq.s32.totalorder %s14, 3
    %p107 = por %p105, %p106
    %p108 = scmp.ne.s32.totalorder %s97, %s98
    %p109 = scmp.eq.s32.totalorder %s14, 0
    %p110 = por %p108, %p109
    %p111 = scmp.ne.s32.totalorder %s97, %s98
    %p112 = scmp.eq.s32.totalorder %s15, 3
    %p113 = por %p111, %p112
    %p115 = scmp.ne.s32.totalorder %s98, %s114
    %p116 = scmp.eq.s32.totalorder %s15, 0
    %p117 = por %p115, %p116
    %s118 = ssub.s32 %s16, %s35
    %s119 = ssub.s32 %s17, %s31
    %s120 = sor.u32 %s118, %s119
    %p121 = scmp.eq.s32.totalorder %s120, 0
    %s123 = sadd.s32 %s122, 1
    %s124 = scalar_select %p121, %s122, %s123
    %p127 = pneg %p121
    %p128 = scmp.eq.s32.totalorder %s9, 3
    %p129 = por %p127, %p128
    %p130 = scmp.ne.s32.totalorder %s122, %s125
    %p131 = scmp.eq.s32.totalorder %s9, 0
    %p132 = por %p130, %p131
    %p133 = scmp.ne.s32.totalorder %s122, %s125
    %p134 = scmp.eq.s32.totalorder %s14, 3
    %p135 = por %p133, %p134
    %p136 = scmp.ne.s32.totalorder %s125, %s126
    %p137 = scmp.eq.s32.totalorder %s14, 0
    %p138 = por %p136, %p137
    %p139 = scmp.ne.s32.totalorder %s125, %s126
    %p140 = scmp.eq.s32.totalorder %s15, 3
    %p141 = por %p139, %p140
    %p143 = scmp.ne.s32.totalorder %s126, %s142
    %p144 = scmp.eq.s32.totalorder %s15, 0
    %p145 = por %p143, %p144
    %p146 = scmp.le.s32.totalorder 1, %s9
    %p147 = scmp.lt.s32.totalorder %s9, 5
    %p148 = pnand %p146, %p147
    %p149 = pneg %p148
    // Predicated region
    $region9: #{_lambda_.26} parent=5 // pred_check
      _
    $region10: #{_lambda_.26} parent=5 // pred_check_branch
      %151 = sbr.rel (%p148) target = $region12
    $region11: #{_lambda_.26} parent=5 // pred_region
      %s152 = ssub.s32 %s9, 1
      // Predicated region
      $region13: #{_lambda_.26} parent=11 // pred_check
        %p153 = pneg %p84
      $region14: #{_lambda_.26} parent=11 // pred_check_branch
        %155 = sbr.rel (%p153) target = $region16
      $region15: #{_lambda_.26} parent=11 // pred_region
        %s156 = smul.u32 2, %s21
        %p157 = scmp.lt.s32.totalorder %s156, 1
        %s158 = scalar_select %p157, %s156, 1
        %p159 = scmp.lt.s32.totalorder %s20, 0
        %s160 = scalar_select %p159, %s20, 0
        %s161 = sadd.s32 %s160, %s158
        %s162 = smul.addr %s161, 4
        %s163 = scalar_lea.vmem %s1, %s162
        %s164 = smul.u32 2, %s21
      $region16: #{_lambda_.26} parent=11 // pred_fallthru
        _
      // Predicated region
      $region17: #{_lambda_.26} parent=11 // pred_check
        %p165 = pneg %p110
      $region18: #{_lambda_.26} parent=11 // pred_check_branch
        %167 = sbr.rel (%p165) target = $region20
      $region19: #{_lambda_.26} parent=11 // pred_region
        %p168 = scmp.lt.s32.totalorder %s20, 0
        %s169 = scalar_select %p168, %s20, 0
        %s170 = scalar_lea.vmem %s2, %s169
      $region20: #{_lambda_.26} parent=11 // pred_fallthru
        _
    $region12: #{_lambda_.26} parent=5 // pred_fallthru
      _
    %p171 = scmp.lt.s32.totalorder %s9, 4
    // Predicated region
    $region21: #{_lambda_.26} parent=5 // pred_check
      %p172 = pneg %p171
    $region22: #{_lambda_.26} parent=5 // pred_check_branch
      %174 = sbr.rel (%p172) target = $region24
    $region23: #{_lambda_.26} parent=5 // pred_region
      // Predicated region
      $region25: #{_lambda_.26} parent=23 // pred_check
        %p175 = pneg %p50
      $region26: #{_lambda_.26} parent=23 // pred_check_branch
        %177 = sbr.rel (%p175) target = $region28
      $region27: #{_lambda_.26} parent=23 // pred_region
        %s178 = smul.u32 16, %s16
        %p179 = scmp.lt.s32.totalorder %s178, 63
        %s180 = scalar_select %p179, %s178, 63
        %p181 = scmp.lt.s32.totalorder %s18, 0
        %s182 = scalar_select %p181, %s18, 0
        %s183 = sadd.s32 %s182, %s180
        %s184 = smul.addr %s183, 4
        %s185 = scalar_lea.vmem %s0, %s184
        %s186 = smul.u32 16, %s16
      $region28: #{_lambda_.26} parent=23 // pred_fallthru
        _
    $region24: #{_lambda_.26} parent=5 // pred_fallthru
      _
    %p187 = scmp.le.s32.totalorder 1, %s9
    %p188 = scmp.lt.s32.totalorder %s9, 5
    %p189 = pnand %p187, %p188
    %p190 = pneg %p189
    // Predicated region
    $region29: #{_lambda_.26} parent=5 // pred_check
      _
    $region30: #{_lambda_.26} parent=5 // pred_check_branch
      %192 = sbr.rel (%p189) target = $region32
    $region31: #{_lambda_.26} parent=5 // pred_region
      %s193 = ssub.s32 %s9, 1
      %s194 = smul.u32 16, %s19
      %p195 = scmp.lt.s32.totalorder %s194, 63
      %s196 = scalar_select %p195, %s194, 63
      %p197 = scmp.lt.s32.totalorder %s21, 0
      %s198 = scalar_select %p197, %s21, 0
      %s199 = sadd.s32 %s198, %s196
      %s200 = smul.addr %s199, 4
      %s201 = scalar_lea.vmem %s0, %s200
      %p202 = pneg %p56
      %p203 = pneg %p53
      %s204 = smul.u32 2, %s21
      %p205 = scmp.lt.s32.totalorder %s204, 1
      %s206 = scalar_select %p205, %s204, 1
      %p207 = scmp.lt.s32.totalorder %s20, 0
      %s208 = scalar_select %p207, %s20, 0
      %s209 = sadd.s32 %s208, %s206
      %s210 = smul.addr %s209, 4
      %s211 = scalar_lea.vmem %s1, %s210
      %p212 = pneg %p84
      %p213 = pneg %p81
      %p214 = scmp.lt.s32.totalorder %s20, 0
      %s215 = scalar_select %p214, %s20, 0
      %s216 = scalar_lea.vmem %s2, %s215
      %p217 = pneg %p110
      %p218 = pneg %p107
      %p219 = pneg %p138
      %p220 = pneg %p135
      %s221 = smul.u32 16, %s19
      %p222 = scmp.lt.s32.totalorder %s221, 63
      %s223 = scalar_select %p222, %s221, 63
      %p224 = scmp.lt.s32.totalorder %s20, 0
      %s225 = scalar_select %p224, %s20, 0
      %s226 = sadd.s32 %s225, %s223
      %s227 = smul.addr %s226, 4
      %s228 = scalar_lea.vmem %s3, %s227
      %s229 = smul.u32 16, %s19
      %p230 = scmp.lt.s32.totalorder %s229, 63
      %s231 = scalar_select %p230, %s229, 63
      %p232 = scmp.lt.s32.totalorder %s21, 0
      %s233 = scalar_select %p232, %s21, 0
      %s234 = sadd.s32 %s233, %s231
      %s235 = smul.addr %s234, 4
      %s236 = scalar_lea.vmem %s0, %s235
      %s237 = smul.u32 16, %s19
      %s238 = smul.u32 2, %s21
      %p239 = scmp.lt.s32.totalorder %s238, 1
      %s240 = scalar_select %p239, %s238, 1
      %p241 = scmp.lt.s32.totalorder %s20, 0
      %s242 = scalar_select %p241, %s20, 0
      %s243 = sadd.s32 %s242, %s240
      %s244 = smul.addr %s243, 4
      %s245 = scalar_lea.vmem %s1, %s244
      %s246 = smul.u32 2, %s21
      %p247 = scmp.lt.s32.totalorder %s20, 0
      %s248 = scalar_select %p247, %s20, 0
      %s249 = scalar_lea.vmem %s2, %s248
      %s250 = smul.u32 16, %s19
      %p251 = scmp.lt.s32.totalorder %s250, 63
      %s252 = scalar_select %p251, %s250, 63
      %p253 = scmp.lt.s32.totalorder %s20, 0
      %s254 = scalar_select %p253, %s20, 0
      %s255 = sadd.s32 %s254, %s252
      %s256 = smul.addr %s255, 4
      %s257 = scalar_lea.vmem %s3, %s256
      %s258 = smul.u32 16, %s19
      %p260 = scmp.eq.s32.totalorder %s21, 0
      // Predicated region
      $region33: #{_lambda_.26} parent=31 // pred_check
        %p261 = pneg %p260
      $region34: #{_lambda_.26} parent=31 // pred_check_branch
        %263 = sbr.rel (%p261) target = $region36
      $region35: #{_lambda_.26} parent=31 // pred_region
        %264 = vst [vmem:[#allocation2] sm:$0xff] 0.0
        %265 = vst [vmem:[#allocation2 + $0x8] sm:$0xff] 0.0
        %266 = vst [vmem:[#allocation2 + $0x10] sm:$0xff] 0.0
        %267 = vst [vmem:[#allocation2 + $0x18] sm:$0xff] 0.0
        %268 = vst [vmem:[#allocation2 + $0x20] sm:$0xff] 0.0
        %269 = vst [vmem:[#allocation2 + $0x28] sm:$0xff] 0.0
        %270 = vst [vmem:[#allocation2 + $0x30] sm:$0xff] 0.0
        %271 = vst [vmem:[#allocation2 + $0x38] sm:$0xff] 0.0
        %272 = vst [vmem:[#allocation2 + $0x40] sm:$0xff] 0.0
        %273 = vst [vmem:[#allocation2 + $0x48] sm:$0xff] 0.0
        %274 = vst [vmem:[#allocation2 + $0x50] sm:$0xff] 0.0
        %275 = vst [vmem:[#allocation2 + $0x58] sm:$0xff] 0.0
        %276 = vst [vmem:[#allocation2 + $0x60] sm:$0xff] 0.0
        %277 = vst [vmem:[#allocation2 + $0x68] sm:$0xff] 0.0
        %278 = vst [vmem:[#allocation2 + $0x70] sm:$0xff] 0.0
        %279 = vst [vmem:[#allocation2 + $0x78] sm:$0xff] 0.0
      $region36: #{_lambda_.26} parent=31 // pred_fallthru
        _
      %v280 = vld [vmem:[#allocation2] sm:$0xff]
      %v281 = vld [vmem:[#allocation2 + $0x8] sm:$0xff]
      %v282 = vld [vmem:[#allocation2 + $0x10] sm:$0xff]
      %v283 = vld [vmem:[#allocation2 + $0x18] sm:$0xff]
      %v284 = vld [vmem:[#allocation2 + $0x20] sm:$0xff]
      %v285 = vld [vmem:[#allocation2 + $0x28] sm:$0xff]
      %v286 = vld [vmem:[#allocation2 + $0x30] sm:$0xff]
      %v287 = vld [vmem:[#allocation2 + $0x38] sm:$0xff]
      %v288 = vld [vmem:[#allocation2 + $0x40] sm:$0xff]
      %v289 = vld [vmem:[#allocation2 + $0x48] sm:$0xff]
      %v290 = vld [vmem:[#allocation2 + $0x50] sm:$0xff]
      %v291 = vld [vmem:[#allocation2 + $0x58] sm:$0xff]
      %v292 = vld [vmem:[#allocation2 + $0x60] sm:$0xff]
      %v293 = vld [vmem:[#allocation2 + $0x68] sm:$0xff]
      %v294 = vld [vmem:[#allocation2 + $0x70] sm:$0xff]
      %v295 = vld [vmem:[#allocation2 + $0x78] sm:$0xff]
      %v296 = vld [vmem:[%s236] sm:$0xf]
      %v297 = vld [vmem:[%s236 + $0x4] sm:$0xf]
      %v298 = vld [vmem:[%s236 + $0x8] sm:$0xf]
      %v299 = vld [vmem:[%s236 + $0xc] sm:$0xf]
      %v300 = vld [vmem:[%s236 + $0x10] sm:$0xf]
      %v301 = vld [vmem:[%s236 + $0x14] sm:$0xf]
      %v302 = vld [vmem:[%s236 + $0x18] sm:$0xf]
      %v303 = vld [vmem:[%s236 + $0x1c] sm:$0xf]
      %v304 = vld [vmem:[%s236 + $0x20] sm:$0xf]
      %v305 = vld [vmem:[%s236 + $0x24] sm:$0xf]
      %v306 = vld [vmem:[%s236 + $0x28] sm:$0xf]
      %v307 = vld [vmem:[%s236 + $0x2c] sm:$0xf]
      %v308 = vld [vmem:[%s236 + $0x30] sm:$0xf]
      %v309 = vld [vmem:[%s236 + $0x34] sm:$0xf]
      %v310 = vld [vmem:[%s236 + $0x38] sm:$0xf]
      %v311 = vld [vmem:[%s236 + $0x3c] sm:$0xf]
      %v312 = vld [vmem:[%s245] sm:$0xf]
      %v313 = vld [vmem:[%s245 + $0x4] sm:$0xf]
      %v330 = vunpack.c.l.b16 %v296
      %v331 = vunpack.c.l.b16 %v297
      %v332 = vunpack.c.l.b16 %v298
      %v333 = vunpack.c.l.b16 %v299
      %v334 = vunpack.c.l.b16 %v300
      %v335 = vunpack.c.l.b16 %v301
      %v336 = vunpack.c.l.b16 %v302
      %v337 = vunpack.c.l.b16 %v303
      %v338 = vunpack.c.l.b16 %v304
      %v339 = vunpack.c.l.b16 %v305
      %v340 = vunpack.c.l.b16 %v306
      %v341 = vunpack.c.l.b16 %v307
      %v342 = vunpack.c.l.b16 %v308
      %v343 = vunpack.c.l.b16 %v309
      %v344 = vunpack.c.l.b16 %v310
      %v345 = vunpack.c.l.b16 %v311
      %v346 = vpack.c.b16 %v331, %v330
      %v347 = vpack.c.b16 %v333, %v332
      %v348 = vpack.c.b16 %v335, %v334
      %v349 = vpack.c.b16 %v337, %v336
      %v350 = vpack.c.b16 %v339, %v338
      %v351 = vpack.c.b16 %v341, %v340
      %v352 = vpack.c.b16 %v343, %v342
      %v353 = vpack.c.b16 %v345, %v344
      %v356 = vunpack.c.l.b16 %v312
      %v357 = vunpack.c.l.b16 %v313
      %v358 = vpack.c.b16 %v357, %v356
      %vm360 = vcmask 130048
      %v362 = vsel %vm360, %v346, 0
      %v365 = vsel %vm360, %v347, 0
      %v368 = vsel %vm360, %v348, 0
      %v371 = vsel %vm360, %v349, 0
      %v374 = vsel %vm360, %v350, 0
      %v377 = vsel %vm360, %v351, 0
      %v380 = vsel %vm360, %v352, 0
      %v383 = vsel %vm360, %v353, 0
      %385 = vmatprep.subr.bf16.mxu0 0
      %386 = vmatpush1.bf16.msra.mxu0 %v358
      %387 = vmatprep.subr.bf16.mxu0 0
      %388 = vmatpush1.bf16.msra.mxu0 0
      %389 = vmatprep.subr.bf16.mxu0 0
      %390 = vmatpush1.bf16.msra.mxu0 0
      %391 = vmatprep.subr.bf16.mxu0 0
      %392 = vmatpush1.bf16.msra.mxu0 0
      %393 = vmatprep.subr.bf16.mxu0 0
      %394 = vmatpush1.bf16.msra.mxu0 0
      %395 = vmatprep.subr.bf16.mxu0 0
      %396 = vmatpush1.bf16.msra.mxu0 0
      %397 = vmatprep.subr.bf16.mxu0 0
      %398 = vmatpush1.bf16.msra.mxu0 0
      %399 = vmatprep.subr.bf16.mxu0 0
      %400 = vmatpush1.bf16.msra.mxu0 0
      %401 = vmatprep.subr.bf16.mxu0 0
      %402 = vmatpush1.bf16.msra.mxu0 0
      %403 = vmatprep.subr.bf16.mxu0 0
      %404 = vmatpush1.bf16.msra.mxu0 0
      %405 = vmatprep.subr.bf16.mxu0 0
      %406 = vmatpush1.bf16.msra.mxu0 0
      %407 = vmatprep.subr.bf16.mxu0 0
      %408 = vmatpush1.bf16.msra.mxu0 0
      %409 = vmatprep.subr.bf16.mxu0 0
      %410 = vmatpush1.bf16.msra.mxu0 0
      %411 = vmatprep.subr.bf16.mxu0 0
      %412 = vmatpush1.bf16.msra.mxu0 0
      %413 = vmatprep.subr.bf16.mxu0 0
      %414 = vmatpush1.bf16.msra.mxu0 0
      %415 = vmatprep.subr.bf16.mxu0 0
      %416 = vmatpush1.bf16.msra.mxu0 0
      %417 = vmatprep.mubr.bf16.mxu0 0
      %418 = vmatmul.mubr.bf16.gmra.mrb[0].mxu0 %v362
      %v419 = vpop.f32.mrb[0].mxu0
      %v420 = vadd.f32 0.0, %v419
      %v421 = vpop.f32.mrb[0].mxu0
      %v422 = vpop.f32.mrb[0].mxu0
      %v423 = vadd.f32 0.0, %v422
      %v424 = vpop.f32.mrb[0].mxu0
      %425 = vmatprep.mubr.bf16.mxu0 0
      %426 = vmatmul.mubr.bf16.gmra.mrb[0].mxu0 %v365
      %v427 = vpop.f32.mrb[0].mxu0
      %v428 = vadd.f32 0.0, %v427
      %v429 = vpop.f32.mrb[0].mxu0
      %v430 = vpop.f32.mrb[0].mxu0
      %v431 = vadd.f32 0.0, %v430
      %v432 = vpop.f32.mrb[0].mxu0
      %433 = vmatprep.mubr.bf16.mxu0 0
      %434 = vmatmul.mubr.bf16.gmra.mrb[0].mxu0 %v368
      %v435 = vpop.f32.mrb[0].mxu0
      %v436 = vadd.f32 0.0, %v435
      %v437 = vpop.f32.mrb[0].mxu0
      %v438 = vpop.f32.mrb[0].mxu0
      %v439 = vadd.f32 0.0, %v438
      %v440 = vpop.f32.mrb[0].mxu0
      %441 = vmatprep.mubr.bf16.mxu0 0
      %442 = vmatmul.mubr.bf16.gmra.mrb[0].mxu0 %v371
      %v443 = vpop.f32.mrb[0].mxu0
      %v444 = vadd.f32 0.0, %v443
      %v445 = vpop.f32.mrb[0].mxu0
      %v446 = vpop.f32.mrb[0].mxu0
      %v447 = vadd.f32 0.0, %v446
      %v448 = vpop.f32.mrb[0].mxu0
      %449 = vmatprep.mubr.bf16.mxu0 0
      %450 = vmatmul.mubr.bf16.gmra.mrb[0].mxu0 %v374
      %v451 = vpop.f32.mrb[0].mxu0
      %v452 = vadd.f32 0.0, %v451
      %v453 = vpop.f32.mrb[0].mxu0
      %v454 = vpop.f32.mrb[0].mxu0
      %v455 = vadd.f32 0.0, %v454
      %v456 = vpop.f32.mrb[0].mxu0
      %457 = vmatprep.mubr.bf16.mxu0 0
      %458 = vmatmul.mubr.bf16.gmra.mrb[0].mxu0 %v377
      %v459 = vpop.f32.mrb[0].mxu0
      %v460 = vadd.f32 0.0, %v459
      %v461 = vpop.f32.mrb[0].mxu0
      %v462 = vpop.f32.mrb[0].mxu0
      %v463 = vadd.f32 0.0, %v462
      %v464 = vpop.f32.mrb[0].mxu0
      %465 = vmatprep.mubr.bf16.mxu0 0
      %466 = vmatmul.mubr.bf16.gmra.mrb[0].mxu0 %v380
      %v467 = vpop.f32.mrb[0].mxu0
      %v468 = vadd.f32 0.0, %v467
      %v469 = vpop.f32.mrb[0].mxu0
      %v470 = vpop.f32.mrb[0].mxu0
      %v471 = vadd.f32 0.0, %v470
      %v472 = vpop.f32.mrb[0].mxu0
      %473 = vmatprep.mubr.bf16.mxu0 0
      %474 = vmatmul.mubr.bf16.gmra.mrb[0].mxu0 %v383
      %v475 = vpop.f32.mrb[0].mxu0
      %v476 = vadd.f32 0.0, %v475
      %v477 = vpop.f32.mrb[0].mxu0
      %v478 = vpop.f32.mrb[0].mxu0
      %v479 = vadd.f32 0.0, %v478
      %v480 = vpop.f32.mrb[0].mxu0
      %481 = vdwg.mxu0
      %v482 = vadd.f32 %v280, %v420
      %v483 = vadd.f32 %v281, %v423
      %v484 = vadd.f32 %v282, %v428
      %v485 = vadd.f32 %v283, %v431
      %v486 = vadd.f32 %v284, %v436
      %v487 = vadd.f32 %v285, %v439
      %v488 = vadd.f32 %v286, %v444
      %v489 = vadd.f32 %v287, %v447
      %v490 = vadd.f32 %v288, %v452
      %v491 = vadd.f32 %v289, %v455
      %v492 = vadd.f32 %v290, %v460
      %v493 = vadd.f32 %v291, %v463
      %v494 = vadd.f32 %v292, %v468
      %v495 = vadd.f32 %v293, %v471
      %v496 = vadd.f32 %v294, %v476
      %v497 = vadd.f32 %v295, %v479
      %498 = vst [vmem:[#allocation2] sm:$0xff] %v482
      %499 = vst [vmem:[#allocation2 + $0x8] sm:$0xff] %v483
      %500 = vst [vmem:[#allocation2 + $0x10] sm:$0xff] %v484
      %501 = vst [vmem:[#allocation2 + $0x18] sm:$0xff] %v485
      %502 = vst [vmem:[#allocation2 + $0x20] sm:$0xff] %v486
      %503 = vst [vmem:[#allocation2 + $0x28] sm:$0xff] %v487
      %504 = vst [vmem:[#allocation2 + $0x30] sm:$0xff] %v488
      %505 = vst [vmem:[#allocation2 + $0x38] sm:$0xff] %v489
      %506 = vst [vmem:[#allocation2 + $0x40] sm:$0xff] %v490
      %507 = vst [vmem:[#allocation2 + $0x48] sm:$0xff] %v491
      %508 = vst [vmem:[#allocation2 + $0x50] sm:$0xff] %v492
      %509 = vst [vmem:[#allocation2 + $0x58] sm:$0xff] %v493
      %510 = vst [vmem:[#allocation2 + $0x60] sm:$0xff] %v494
      %511 = vst [vmem:[#allocation2 + $0x68] sm:$0xff] %v495
      %512 = vst [vmem:[#allocation2 + $0x70] sm:$0xff] %v496
      %513 = vst [vmem:[#allocation2 + $0x78] sm:$0xff] %v497
      // Predicated region
      $region37: #{_lambda_.26} parent=31 // pred_check
        %p514 = pneg %p260
      $region38: #{_lambda_.26} parent=31 // pred_check_branch
        %516 = sbr.rel (%p514) target = $region40
      $region39: #{_lambda_.26} parent=31 // pred_region
        %v517 = vld [vmem:[#allocation2] sm:$0xff]
        %v518 = vld [vmem:[#allocation2 + $0x8] sm:$0xff]
        %v519 = vld [vmem:[#allocation2 + $0x10] sm:$0xff]
        %v520 = vld [vmem:[#allocation2 + $0x18] sm:$0xff]
        %v521 = vld [vmem:[#allocation2 + $0x20] sm:$0xff]
        %v522 = vld [vmem:[#allocation2 + $0x28] sm:$0xff]
        %v523 = vld [vmem:[#allocation2 + $0x30] sm:$0xff]
        %v524 = vld [vmem:[#allocation2 + $0x38] sm:$0xff]
        %v525 = vld [vmem:[#allocation2 + $0x40] sm:$0xff]
        %v526 = vld [vmem:[#allocation2 + $0x48] sm:$0xff]
        %v527 = vld [vmem:[#allocation2 + $0x50] sm:$0xff]
        %v528 = vld [vmem:[#allocation2 + $0x58] sm:$0xff]
        %v529 = vld [vmem:[#allocation2 + $0x60] sm:$0xff]
        %v530 = vld [vmem:[#allocation2 + $0x68] sm:$0xff]
        %v531 = vld [vmem:[#allocation2 + $0x70] sm:$0xff]
        %v532 = vld [vmem:[#allocation2 + $0x78] sm:$0xff]
        %v533 = vld [vmem:[%s249] sm:$0x1]
        %v535 = vlaneseq
        %v536 = vshrl.u32 %v535, 7
        %v537 = vsub.s32 0, %v536
        %v538 = vrot.slane %v533, %v537
        %v540 = vadd.f32 %v517, %v538
        %v541 = vadd.f32 %v518, %v538
        %v542 = vadd.f32 %v519, %v538
        %v543 = vadd.f32 %v520, %v538
        %v544 = vadd.f32 %v521, %v538
        %v545 = vadd.f32 %v522, %v538
        %v546 = vadd.f32 %v523, %v538
        %v547 = vadd.f32 %v524, %v538
        %v548 = vadd.f32 %v525, %v538
        %v549 = vadd.f32 %v526, %v538
        %v550 = vadd.f32 %v527, %v538
        %v551 = vadd.f32 %v528, %v538
        %v552 = vadd.f32 %v529, %v538
        %v553 = vadd.f32 %v530, %v538
        %v554 = vadd.f32 %v531, %v538
        %v555 = vadd.f32 %v532, %v538
        %v556 = vpack.c.bf16 %v541, %v540
        %v557 = vpack.c.bf16 %v543, %v542
        %v558 = vpack.c.bf16 %v545, %v544
        %v559 = vpack.c.bf16 %v547, %v546
        %v560 = vpack.c.bf16 %v549, %v548
        %v561 = vpack.c.bf16 %v551, %v550
        %v562 = vpack.c.bf16 %v553, %v552
        %v563 = vpack.c.bf16 %v555, %v554
        %v572 = vunpack.c.l.b16 %v556
        %v573 = vunpack.c.h.b16 %v556
        %v574 = vunpack.c.l.b16 %v557
        %v575 = vunpack.c.h.b16 %v557
        %v576 = vunpack.c.l.b16 %v558
        %v577 = vunpack.c.h.b16 %v558
        %v578 = vunpack.c.l.b16 %v559
        %v579 = vunpack.c.h.b16 %v559
        %v580 = vunpack.c.l.b16 %v560
        %v581 = vunpack.c.h.b16 %v560
        %v582 = vunpack.c.l.b16 %v561
        %v583 = vunpack.c.h.b16 %v561
        %v584 = vunpack.c.l.b16 %v562
        %v585 = vunpack.c.h.b16 %v562
        %v586 = vunpack.c.l.b16 %v563
        %v587 = vunpack.c.h.b16 %v563
        %v588 = vpack.c.b16 %v572, %v572
        %v589 = vpack.c.b16 %v573, %v573
        %v590 = vpack.c.b16 %v574, %v574
        %v591 = vpack.c.b16 %v575, %v575
        %v592 = vpack.c.b16 %v576, %v576
        %v593 = vpack.c.b16 %v577, %v577
        %v594 = vpack.c.b16 %v578, %v578
        %v595 = vpack.c.b16 %v579, %v579
        %v596 = vpack.c.b16 %v580, %v580
        %v597 = vpack.c.b16 %v581, %v581
        %v598 = vpack.c.b16 %v582, %v582
        %v599 = vpack.c.b16 %v583, %v583
        %v600 = vpack.c.b16 %v584, %v584
        %v601 = vpack.c.b16 %v585, %v585
        %v602 = vpack.c.b16 %v586, %v586
        %v603 = vpack.c.b16 %v587, %v587
        %620 = vst [vmem:[%s257] sm:$0xf] %v588
        %621 = vst [vmem:[%s257 + $0x4] sm:$0xf] %v589
        %622 = vst [vmem:[%s257 + $0x8] sm:$0xf] %v590
        %623 = vst [vmem:[%s257 + $0xc] sm:$0xf] %v591
        %624 = vst [vmem:[%s257 + $0x10] sm:$0xf] %v592
        %625 = vst [vmem:[%s257 + $0x14] sm:$0xf] %v593
        %626 = vst [vmem:[%s257 + $0x18] sm:$0xf] %v594
        %627 = vst [vmem:[%s257 + $0x1c] sm:$0xf] %v595
        %628 = vst [vmem:[%s257 + $0x20] sm:$0xf] %v596
        %629 = vst [vmem:[%s257 + $0x24] sm:$0xf] %v597
        %630 = vst [vmem:[%s257 + $0x28] sm:$0xf] %v598
        %631 = vst [vmem:[%s257 + $0x2c] sm:$0xf] %v599
        %632 = vst [vmem:[%s257 + $0x30] sm:$0xf] %v600
        %633 = vst [vmem:[%s257 + $0x34] sm:$0xf] %v601
        %634 = vst [vmem:[%s257 + $0x38] sm:$0xf] %v602
        %635 = vst [vmem:[%s257 + $0x3c] sm:$0xf] %v603
      $region40: #{_lambda_.26} parent=31 // pred_fallthru
        _
      %s636 = smul.u32 16, %s19
      %p637 = scmp.lt.s32.totalorder %s636, 63
      %s638 = scalar_select %p637, %s636, 63
      %p639 = scmp.lt.s32.totalorder %s20, 0
      %s640 = scalar_select %p639, %s20, 0
      %s641 = sadd.s32 %s640, %s638
      %s642 = smul.addr %s641, 4
      %s643 = scalar_lea.vmem %s3, %s642
      // Predicated region
      $region41: #{_lambda_.26} parent=31 // pred_check
        %p644 = pneg %p135
      $region42: #{_lambda_.26} parent=31 // pred_check_branch
        %646 = sbr.rel (%p644) target = $region44
      $region43: #{_lambda_.26} parent=31 // pred_region
        %s647 = smul.u32 16, %s19
      $region44: #{_lambda_.26} parent=31 // pred_fallthru
        _
    $region32: #{_lambda_.26} parent=5 // pred_fallthru
      _
    %p648 = scmp.le.s32.totalorder 2, %s9
    // Predicated region
    $region45: #{_lambda_.26} parent=5 // pred_check
      %p649 = pneg %p648
    $region46: #{_lambda_.26} parent=5 // pred_check_branch
      %651 = sbr.rel (%p649) target = $region48
    $region47: #{_lambda_.26} parent=5 // pred_region
      %s652 = ssub.s32 %s9, 2
      // Predicated region
      $region49: #{_lambda_.26} parent=47 // pred_check
        %p653 = pneg %p141
      $region50: #{_lambda_.26} parent=47 // pred_check_branch
        %655 = sbr.rel (%p653) target = $region52
      $region51: #{_lambda_.26} parent=47 // pred_region
        %s656 = smul.u32 16, %s22
        %p657 = scmp.lt.s32.totalorder %s656, 63
        %s658 = scalar_select %p657, %s656, 63
        %p659 = scmp.lt.s32.totalorder %s23, 0
        %s660 = scalar_select %p659, %s23, 0
        %s661 = sadd.s32 %s660, %s658
        %s662 = smul.addr %s661, 4
        %s663 = scalar_lea.vmem %s3, %s662
      $region52: #{_lambda_.26} parent=47 // pred_fallthru
        _
    $region48: #{_lambda_.26} parent=5 // pred_fallthru
      _
  $region6: #{_lambda_.26} parent=0 // loop_footer
    %s13 = sadd.s32 1, %s9
  $region7: #{_lambda_.26} parent=0 // loop_footer_branch
    %8 = sbr.rel target = $region3
  $region8: #{_lambda_.26} parent=0 // loop_exit
    _

// kernel: _lambda_.27
$region0: #{_lambda_.27}
  #allocation0 [shape = 'u32[]', space=smem, size = 0x4, offset = 0x4, fixed_abs, tag = 'smem constant byte address 0x4 - core index']
  #allocation1 [shape = 'u32[144,128]{1,0:T(1,128)}', space=vmem, size = 0x12000, scoped, tag = 'internal scratch']
  #allocation2 [shape = 'f32[128,128]{1,0:T(8,128)}', space=vmem, size = 0x10000, scoped, tag = 'scratch operand']
  %s0 = inlined_call_operand.vmem [shape: bf16[512,16], index: 0, kind: input, shape index: {}]
  %s1 = inlined_call_operand.vmem [shape: bf16[16,128], index: 1, kind: input, shape index: {}]
  %s2 = inlined_call_operand.vmem [shape: f32[1,128], index: 2, kind: input, shape index: {}]
  %s3 = inlined_call_operand.vmem [shape: bf16[512,128], index: 3, kind: input, shape index: {}]
  %s4 = inlined_call_operand.vmem [shape: bf16[512,128], index: 4, kind: output, shape index: {}]
  %s5 = sld [smem:[#allocation0]]
  $region57: #{_lambda_.27} parent=0
    _
  %s7 = ssub.s32 1, %s5
  %s8 = scalar_select 0, %s7, %s5
  loop: start=0, step=1, limit=6
  $region2: #{_lambda_.27} parent=0 // loop_pre_header
    _
  $region3: #{_lambda_.27} parent=0 // loop_header
    %s10 = sphi 0, %s14
    %p11 = scmp.ge.s32.totalorder %s10, 6
    %s17 = sphi 0, %s36
    %s18 = sphi 0, %s32
    %s19 = sphi 0, %s28
    %s20 = sphi 0, %s17
    %s21 = sphi 0, %s18
    %s22 = sphi 0, %s19
    %s23 = sphi 0, %s20
    %s24 = sphi 0, %s21
    %s25 = sphi 0, %s22
    %s41 = sphi 0, %s43
    %s44 = sphi 0, %s41
    %s45 = sphi 0, %s44
    %s61 = sphi 0, %s45
    %s69 = sphi 0, %s71
    %s72 = sphi 0, %s69
    %s73 = sphi 0, %s72
    %s89 = sphi 0, %s73
    %s95 = sphi 0, %s97
    %s98 = sphi 0, %s95
    %s99 = sphi 0, %s98
    %s115 = sphi 0, %s99
    %s123 = sphi 0, %s125
    %s126 = sphi 0, %s123
    %s127 = sphi 0, %s126
    %s143 = sphi 0, %s127
    %s151 = sphi 0, %s153
    %s154 = sphi 0, %s151
    %s155 = sphi 0, %s154
    %s171 = sphi 0, %s155
  $region4: #{_lambda_.27} parent=0 // loop_header_branch
    %13 = sbr.rel (%p11) target = $region8
  $region5: #{_lambda_.27} parent=0 // loop_body
    %s15 = ssub.s32 %s10, 1
    %s16 = ssub.s32 %s10, 2
    %s26 = sadd.s32 1, %s19
    %p27 = scmp.ge.s32.totalorder %s26, 1
    %s28 = scalar_select %p27, 0, %s26
    %s29 = sadd.s32 1, %s18
    %s30 = scalar_select %p27, %s29, %s18
    %p31 = scmp.ge.s32.totalorder %s30, 1
    %s32 = scalar_select %p31, 0, %s30
    %s33 = sadd.s32 1, %s17
    %s34 = scalar_select %p31, %s33, %s17
    %p35 = scmp.ge.s32.totalorder %s34, 4
    %s36 = scalar_select %p35, 0, %s34
    %s37 = ssub.s32 %s17, %s36
    %s38 = ssub.s32 %s19, %s28
    %s39 = sor.u32 %s37, %s38
    %p40 = scmp.eq.s32.totalorder %s39, 0
    %s42 = sadd.s32 %s41, 1
    %s43 = scalar_select %p40, %s41, %s42
    %p46 = pneg %p40
    %p47 = scmp.eq.s32.totalorder %s10, 3
    %p48 = por %p46, %p47
    %p49 = scmp.ne.s32.totalorder %s41, %s44
    %p50 = scmp.eq.s32.totalorder %s10, 0
    %p51 = por %p49, %p50
    %p52 = scmp.ne.s32.totalorder %s41, %s44
    %p53 = scmp.eq.s32.totalorder %s15, 3
    %p54 = por %p52, %p53
    %p55 = scmp.ne.s32.totalorder %s44, %s45
    %p56 = scmp.eq.s32.totalorder %s15, 0
    %p57 = por %p55, %p56
    %p58 = scmp.ne.s32.totalorder %s44, %s45
    %p59 = scmp.eq.s32.totalorder %s16, 3
    %p60 = por %p58, %p59
    %p62 = scmp.ne.s32.totalorder %s45, %s61
    %p63 = scmp.eq.s32.totalorder %s16, 0
    %p64 = por %p62, %p63
    %s65 = ssub.s32 %s19, %s28
    %s66 = ssub.s32 %s18, %s32
    %s67 = sor.u32 %s65, %s66
    %p68 = scmp.eq.s32.totalorder %s67, 0
    %s70 = sadd.s32 %s69, 1
    %s71 = scalar_select %p68, %s69, %s70
    %p74 = pneg %p68
    %p75 = scmp.eq.s32.totalorder %s10, 3
    %p76 = por %p74, %p75
    %p77 = scmp.ne.s32.totalorder %s69, %s72
    %p78 = scmp.eq.s32.totalorder %s10, 0
    %p79 = por %p77, %p78
    %p80 = scmp.ne.s32.totalorder %s69, %s72
    %p81 = scmp.eq.s32.totalorder %s15, 3
    %p82 = por %p80, %p81
    %p83 = scmp.ne.s32.totalorder %s72, %s73
    %p84 = scmp.eq.s32.totalorder %s15, 0
    %p85 = por %p83, %p84
    %p86 = scmp.ne.s32.totalorder %s72, %s73
    %p87 = scmp.eq.s32.totalorder %s16, 3
    %p88 = por %p86, %p87
    %p90 = scmp.ne.s32.totalorder %s73, %s89
    %p91 = scmp.eq.s32.totalorder %s16, 0
    %p92 = por %p90, %p91
    %s93 = ssub.s32 %s18, %s32
    %p94 = scmp.eq.s32.totalorder %s93, 0
    %s96 = sadd.s32 %s95, 1
    %s97 = scalar_select %p94, %s95, %s96
    %p100 = pneg %p94
    %p101 = scmp.eq.s32.totalorder %s10, 3
    %p102 = por %p100, %p101
    %p103 = scmp.ne.s32.totalorder %s95, %s98
    %p104 = scmp.eq.s32.totalorder %s10, 0
    %p105 = por %p103, %p104
    %p106 = scmp.ne.s32.totalorder %s95, %s98
    %p107 = scmp.eq.s32.totalorder %s15, 3
    %p108 = por %p106, %p107
    %p109 = scmp.ne.s32.totalorder %s98, %s99
    %p110 = scmp.eq.s32.totalorder %s15, 0
    %p111 = por %p109, %p110
    %p112 = scmp.ne.s32.totalorder %s98, %s99
    %p113 = scmp.eq.s32.totalorder %s16, 3
    %p114 = por %p112, %p113
    %p116 = scmp.ne.s32.totalorder %s99, %s115
    %p117 = scmp.eq.s32.totalorder %s16, 0
    %p118 = por %p116, %p117
    %s119 = ssub.s32 %s17, %s36
    %s120 = ssub.s32 %s18, %s32
    %s121 = sor.u32 %s119, %s120
    %p122 = scmp.eq.s32.totalorder %s121, 0
    %s124 = sadd.s32 %s123, 1
    %s125 = scalar_select %p122, %s123, %s124
    %p128 = pneg %p122
    %p129 = scmp.eq.s32.totalorder %s10, 3
    %p130 = por %p128, %p129
    %p131 = scmp.ne.s32.totalorder %s123, %s126
    %p132 = scmp.eq.s32.totalorder %s10, 0
    %p133 = por %p131, %p132
    %p134 = scmp.ne.s32.totalorder %s123, %s126
    %p135 = scmp.eq.s32.totalorder %s15, 3
    %p136 = por %p134, %p135
    %p137 = scmp.ne.s32.totalorder %s126, %s127
    %p138 = scmp.eq.s32.totalorder %s15, 0
    %p139 = por %p137, %p138
    %p140 = scmp.ne.s32.totalorder %s126, %s127
    %p141 = scmp.eq.s32.totalorder %s16, 3
    %p142 = por %p140, %p141
    %p144 = scmp.ne.s32.totalorder %s127, %s143
    %p145 = scmp.eq.s32.totalorder %s16, 0
    %p146 = por %p144, %p145
    %s147 = ssub.s32 %s17, %s36
    %s148 = ssub.s32 %s18, %s32
    %s149 = sor.u32 %s147, %s148
    %p150 = scmp.eq.s32.totalorder %s149, 0
    %s152 = sadd.s32 %s151, 1
    %s153 = scalar_select %p150, %s151, %s152
    %p156 = pneg %p150
    %p157 = scmp.eq.s32.totalorder %s10, 3
    %p158 = por %p156, %p157
    %p159 = scmp.ne.s32.totalorder %s151, %s154
    %p160 = scmp.eq.s32.totalorder %s10, 0
    %p161 = por %p159, %p160
    %p162 = scmp.ne.s32.totalorder %s151, %s154
    %p163 = scmp.eq.s32.totalorder %s15, 3
    %p164 = por %p162, %p163
    %p165 = scmp.ne.s32.totalorder %s154, %s155
    %p166 = scmp.eq.s32.totalorder %s15, 0
    %p167 = por %p165, %p166
    %p168 = scmp.ne.s32.totalorder %s154, %s155
    %p169 = scmp.eq.s32.totalorder %s16, 3
    %p170 = por %p168, %p169
    %p172 = scmp.ne.s32.totalorder %s155, %s171
    %p173 = scmp.eq.s32.totalorder %s16, 0
    %p174 = por %p172, %p173
    %p175 = scmp.le.s32.totalorder 1, %s10
    %p176 = scmp.lt.s32.totalorder %s10, 5
    %p177 = pnand %p175, %p176
    %p178 = pneg %p177
    // Predicated region
    $region9: #{_lambda_.27} parent=5 // pred_check
      _
    $region10: #{_lambda_.27} parent=5 // pred_check_branch
      %180 = sbr.rel (%p177) target = $region12
    $region11: #{_lambda_.27} parent=5 // pred_region
      %s181 = ssub.s32 %s10, 1
      // Predicated region
      $region13: #{_lambda_.27} parent=11 // pred_check
        %p182 = pneg %p85
      $region14: #{_lambda_.27} parent=11 // pred_check_branch
        %184 = sbr.rel (%p182) target = $region16
      $region15: #{_lambda_.27} parent=11 // pred_region
        %s185 = smul.u32 2, %s22
        %p186 = scmp.lt.s32.totalorder %s185, 1
        %s187 = scalar_select %p186, %s185, 1
        %p188 = scmp.lt.s32.totalorder %s21, 0
        %s189 = scalar_select %p188, %s21, 0
        %s190 = sadd.s32 %s189, %s187
        %s191 = smul.addr %s190, 4
        %s192 = scalar_lea.vmem %s1, %s191
        %s193 = smul.u32 2, %s22
      $region16: #{_lambda_.27} parent=11 // pred_fallthru
        _
      // Predicated region
      $region17: #{_lambda_.27} parent=11 // pred_check
        %p194 = pneg %p111
      $region18: #{_lambda_.27} parent=11 // pred_check_branch
        %196 = sbr.rel (%p194) target = $region20
      $region19: #{_lambda_.27} parent=11 // pred_region
        %p197 = scmp.lt.s32.totalorder %s21, 0
        %s198 = scalar_select %p197, %s21, 0
        %s199 = scalar_lea.vmem %s2, %s198
      $region20: #{_lambda_.27} parent=11 // pred_fallthru
        _
    $region12: #{_lambda_.27} parent=5 // pred_fallthru
      _
    %p200 = scmp.lt.s32.totalorder %s10, 4
    // Predicated region
    $region21: #{_lambda_.27} parent=5 // pred_check
      %p201 = pneg %p200
    $region22: #{_lambda_.27} parent=5 // pred_check_branch
      %203 = sbr.rel (%p201) target = $region24
    $region23: #{_lambda_.27} parent=5 // pred_region
      // Predicated region
      $region25: #{_lambda_.27} parent=23 // pred_check
        %p204 = pneg %p51
      $region26: #{_lambda_.27} parent=23 // pred_check_branch
        %206 = sbr.rel (%p204) target = $region28
      $region27: #{_lambda_.27} parent=23 // pred_region
        %s207 = smul.u32 16, %s17
        %p208 = scmp.lt.s32.totalorder %s207, 63
        %s209 = scalar_select %p208, %s207, 63
        %p210 = scmp.lt.s32.totalorder %s19, 0
        %s211 = scalar_select %p210, %s19, 0
        %s212 = sadd.s32 %s211, %s209
        %s213 = smul.addr %s212, 4
        %s214 = scalar_lea.vmem %s0, %s213
        %s215 = smul.u32 16, %s17
      $region28: #{_lambda_.27} parent=23 // pred_fallthru
        _
      // Predicated region
      $region29: #{_lambda_.27} parent=23 // pred_check
        %p216 = pneg %p133
      $region30: #{_lambda_.27} parent=23 // pred_check_branch
        %218 = sbr.rel (%p216) target = $region32
      $region31: #{_lambda_.27} parent=23 // pred_region
        %s219 = smul.u32 16, %s17
        %p220 = scmp.lt.s32.totalorder %s219, 63
        %s221 = scalar_select %p220, %s219, 63
        %p222 = scmp.lt.s32.totalorder %s18, 0
        %s223 = scalar_select %p222, %s18, 0
        %s224 = sadd.s32 %s223, %s221
        %s225 = smul.addr %s224, 4
        %s226 = scalar_lea.vmem %s3, %s225
        %s227 = smul.u32 16, %s17
      $region32: #{_lambda_.27} parent=23 // pred_fallthru
        _
    $region24: #{_lambda_.27} parent=5 // pred_fallthru
      _
    %p228 = scmp.le.s32.totalorder 1, %s10
    %p229 = scmp.lt.s32.totalorder %s10, 5
    %p230 = pnand %p228, %p229
    %p231 = pneg %p230
    // Predicated region
    $region33: #{_lambda_.27} parent=5 // pred_check
      _
    $region34: #{_lambda_.27} parent=5 // pred_check_branch
      %233 = sbr.rel (%p230) target = $region36
    $region35: #{_lambda_.27} parent=5 // pred_region
      %s234 = ssub.s32 %s10, 1
      %s235 = smul.u32 16, %s20
      %p236 = scmp.lt.s32.totalorder %s235, 63
      %s237 = scalar_select %p236, %s235, 63
      %p238 = scmp.lt.s32.totalorder %s22, 0
      %s239 = scalar_select %p238, %s22, 0
      %s240 = sadd.s32 %s239, %s237
      %s241 = smul.addr %s240, 4
      %s242 = scalar_lea.vmem %s0, %s241
      %p243 = pneg %p57
      %p244 = pneg %p54
      %s245 = smul.u32 2, %s22
      %p246 = scmp.lt.s32.totalorder %s245, 1
      %s247 = scalar_select %p246, %s245, 1
      %p248 = scmp.lt.s32.totalorder %s21, 0
      %s249 = scalar_select %p248, %s21, 0
      %s250 = sadd.s32 %s249, %s247
      %s251 = smul.addr %s250, 4
      %s252 = scalar_lea.vmem %s1, %s251
      %p253 = pneg %p85
      %p254 = pneg %p82
      %p255 = scmp.lt.s32.totalorder %s21, 0
      %s256 = scalar_select %p255, %s21, 0
      %s257 = scalar_lea.vmem %s2, %s256
      %p258 = pneg %p111
      %p259 = pneg %p108
      %s260 = smul.u32 16, %s20
      %p261 = scmp.lt.s32.totalorder %s260, 63
      %s262 = scalar_select %p261, %s260, 63
      %p263 = scmp.lt.s32.totalorder %s21, 0
      %s264 = scalar_select %p263, %s21, 0
      %s265 = sadd.s32 %s264, %s262
      %s266 = smul.addr %s265, 4
      %s267 = scalar_lea.vmem %s3, %s266
      %p268 = pneg %p139
      %p269 = pneg %p136
      %p270 = pneg %p167
      %p271 = pneg %p164
      %s272 = smul.u32 16, %s20
      %p273 = scmp.lt.s32.totalorder %s272, 63
      %s274 = scalar_select %p273, %s272, 63
      %p275 = scmp.lt.s32.totalorder %s21, 0
      %s276 = scalar_select %p275, %s21, 0
      %s277 = sadd.s32 %s276, %s274
      %s278 = smul.addr %s277, 4
      %s279 = scalar_lea.vmem %s4, %s278
      %s280 = smul.u32 16, %s20
      %p281 = scmp.lt.s32.totalorder %s280, 63
      %s282 = scalar_select %p281, %s280, 63
      %p283 = scmp.lt.s32.totalorder %s22, 0
      %s284 = scalar_select %p283, %s22, 0
      %s285 = sadd.s32 %s284, %s282
      %s286 = smul.addr %s285, 4
      %s287 = scalar_lea.vmem %s0, %s286
      %s288 = smul.u32 16, %s20
      %s289 = smul.u32 2, %s22
      %p290 = scmp.lt.s32.totalorder %s289, 1
      %s291 = scalar_select %p290, %s289, 1
      %p292 = scmp.lt.s32.totalorder %s21, 0
      %s293 = scalar_select %p292, %s21, 0
      %s294 = sadd.s32 %s293, %s291
      %s295 = smul.addr %s294, 4
      %s296 = scalar_lea.vmem %s1, %s295
      %s297 = smul.u32 2, %s22
      %p298 = scmp.lt.s32.totalorder %s21, 0
      %s299 = scalar_select %p298, %s21, 0
      %s300 = scalar_lea.vmem %s2, %s299
      %s301 = smul.u32 16, %s20
      %p302 = scmp.lt.s32.totalorder %s301, 63
      %s303 = scalar_select %p302, %s301, 63
      %p304 = scmp.lt.s32.totalorder %s21, 0
      %s305 = scalar_select %p304, %s21, 0
      %s306 = sadd.s32 %s305, %s303
      %s307 = smul.addr %s306, 4
      %s308 = scalar_lea.vmem %s3, %s307
      %s309 = smul.u32 16, %s20
      %s310 = smul.u32 16, %s20
      %p311 = scmp.lt.s32.totalorder %s310, 63
      %s312 = scalar_select %p311, %s310, 63
      %p313 = scmp.lt.s32.totalorder %s21, 0
      %s314 = scalar_select %p313, %s21, 0
      %s315 = sadd.s32 %s314, %s312
      %s316 = smul.addr %s315, 4
      %s317 = scalar_lea.vmem %s4, %s316
      %s318 = smul.u32 16, %s20
      %p320 = scmp.eq.s32.totalorder %s22, 0
      // Predicated region
      $region37: #{_lambda_.27} parent=35 // pred_check
        %p321 = pneg %p320
      $region38: #{_lambda_.27} parent=35 // pred_check_branch
        %323 = sbr.rel (%p321) target = $region40
      $region39: #{_lambda_.27} parent=35 // pred_region
        %324 = vst [vmem:[#allocation2] sm:$0xff] 0.0
        %325 = vst [vmem:[#allocation2 + $0x8] sm:$0xff] 0.0
        %326 = vst [vmem:[#allocation2 + $0x10] sm:$0xff] 0.0
        %327 = vst [vmem:[#allocation2 + $0x18] sm:$0xff] 0.0
        %328 = vst [vmem:[#allocation2 + $0x20] sm:$0xff] 0.0
        %329 = vst [vmem:[#allocation2 + $0x28] sm:$0xff] 0.0
        %330 = vst [vmem:[#allocation2 + $0x30] sm:$0xff] 0.0
        %331 = vst [vmem:[#allocation2 + $0x38] sm:$0xff] 0.0
        %332 = vst [vmem:[#allocation2 + $0x40] sm:$0xff] 0.0
        %333 = vst [vmem:[#allocation2 + $0x48] sm:$0xff] 0.0
        %334 = vst [vmem:[#allocation2 + $0x50] sm:$0xff] 0.0
        %335 = vst [vmem:[#allocation2 + $0x58] sm:$0xff] 0.0
        %336 = vst [vmem:[#allocation2 + $0x60] sm:$0xff] 0.0
        %337 = vst [vmem:[#allocation2 + $0x68] sm:$0xff] 0.0
        %338 = vst [vmem:[#allocation2 + $0x70] sm:$0xff] 0.0
        %339 = vst [vmem:[#allocation2 + $0x78] sm:$0xff] 0.0
      $region40: #{_lambda_.27} parent=35 // pred_fallthru
        _
      %v340 = vld [vmem:[#allocation2] sm:$0xff]
      %v341 = vld [vmem:[#allocation2 + $0x8] sm:$0xff]
      %v342 = vld [vmem:[#allocation2 + $0x10] sm:$0xff]
      %v343 = vld [vmem:[#allocation2 + $0x18] sm:$0xff]
      %v344 = vld [vmem:[#allocation2 + $0x20] sm:$0xff]
      %v345 = vld [vmem:[#allocation2 + $0x28] sm:$0xff]
      %v346 = vld [vmem:[#allocation2 + $0x30] sm:$0xff]
      %v347 = vld [vmem:[#allocation2 + $0x38] sm:$0xff]
      %v348 = vld [vmem:[#allocation2 + $0x40] sm:$0xff]
      %v349 = vld [vmem:[#allocation2 + $0x48] sm:$0xff]
      %v350 = vld [vmem:[#allocation2 + $0x50] sm:$0xff]
      %v351 = vld [vmem:[#allocation2 + $0x58] sm:$0xff]
      %v352 = vld [vmem:[#allocation2 + $0x60] sm:$0xff]
      %v353 = vld [vmem:[#allocation2 + $0x68] sm:$0xff]
      %v354 = vld [vmem:[#allocation2 + $0x70] sm:$0xff]
      %v355 = vld [vmem:[#allocation2 + $0x78] sm:$0xff]
      %v356 = vld [vmem:[%s287] sm:$0xf]
      %v357 = vld [vmem:[%s287 + $0x4] sm:$0xf]
      %v358 = vld [vmem:[%s287 + $0x8] sm:$0xf]
      %v359 = vld [vmem:[%s287 + $0xc] sm:$0xf]
      %v360 = vld [vmem:[%s287 + $0x10] sm:$0xf]
      %v361 = vld [vmem:[%s287 + $0x14] sm:$0xf]
      %v362 = vld [vmem:[%s287 + $0x18] sm:$0xf]
      %v363 = vld [vmem:[%s287 + $0x1c] sm:$0xf]
      %v364 = vld [vmem:[%s287 + $0x20] sm:$0xf]
      %v365 = vld [vmem:[%s287 + $0x24] sm:$0xf]
      %v366 = vld [vmem:[%s287 + $0x28] sm:$0xf]
      %v367 = vld [vmem:[%s287 + $0x2c] sm:$0xf]
      %v368 = vld [vmem:[%s287 + $0x30] sm:$0xf]
      %v369 = vld [vmem:[%s287 + $0x34] sm:$0xf]
      %v370 = vld [vmem:[%s287 + $0x38] sm:$0xf]
      %v371 = vld [vmem:[%s287 + $0x3c] sm:$0xf]
      %v372 = vld [vmem:[%s296] sm:$0xf]
      %v373 = vld [vmem:[%s296 + $0x4] sm:$0xf]
      %v390 = vunpack.c.l.b16 %v356
      %v391 = vunpack.c.l.b16 %v357
      %v392 = vunpack.c.l.b16 %v358
      %v393 = vunpack.c.l.b16 %v359
      %v394 = vunpack.c.l.b16 %v360
      %v395 = vunpack.c.l.b16 %v361
      %v396 = vunpack.c.l.b16 %v362
      %v397 = vunpack.c.l.b16 %v363
      %v398 = vunpack.c.l.b16 %v364
      %v399 = vunpack.c.l.b16 %v365
      %v400 = vunpack.c.l.b16 %v366
      %v401 = vunpack.c.l.b16 %v367
      %v402 = vunpack.c.l.b16 %v368
      %v403 = vunpack.c.l.b16 %v369
      %v404 = vunpack.c.l.b16 %v370
      %v405 = vunpack.c.l.b16 %v371
      %v406 = vpack.c.b16 %v391, %v390
      %v407 = vpack.c.b16 %v393, %v392
      %v408 = vpack.c.b16 %v395, %v394
      %v409 = vpack.c.b16 %v397, %v396
      %v410 = vpack.c.b16 %v399, %v398
      %v411 = vpack.c.b16 %v401, %v400
      %v412 = vpack.c.b16 %v403, %v402
      %v413 = vpack.c.b16 %v405, %v404
      %v416 = vunpack.c.l.b16 %v372
      %v417 = vunpack.c.l.b16 %v373
      %v418 = vpack.c.b16 %v417, %v416
      %vm420 = vcmask 130048
      %v422 = vsel %vm420, %v406, 0
      %v425 = vsel %vm420, %v407, 0
      %v428 = vsel %vm420, %v408, 0
      %v431 = vsel %vm420, %v409, 0
      %v434 = vsel %vm420, %v410, 0
      %v437 = vsel %vm420, %v411, 0
      %v440 = vsel %vm420, %v412, 0
      %v443 = vsel %vm420, %v413, 0
      %445 = vmatprep.subr.bf16.mxu0 0
      %446 = vmatpush1.bf16.msra.mxu0 %v418
      %447 = vmatprep.subr.bf16.mxu0 0
      %448 = vmatpush1.bf16.msra.mxu0 0
      %449 = vmatprep.subr.bf16.mxu0 0
      %450 = vmatpush1.bf16.msra.mxu0 0
      %451 = vmatprep.subr.bf16.mxu0 0
      %452 = vmatpush1.bf16.msra.mxu0 0
      %453 = vmatprep.subr.bf16.mxu0 0
      %454 = vmatpush1.bf16.msra.mxu0 0
      %455 = vmatprep.subr.bf16.mxu0 0
      %456 = vmatpush1.bf16.msra.mxu0 0
      %457 = vmatprep.subr.bf16.mxu0 0
      %458 = vmatpush1.bf16.msra.mxu0 0
      %459 = vmatprep.subr.bf16.mxu0 0
      %460 = vmatpush1.bf16.msra.mxu0 0
      %461 = vmatprep.subr.bf16.mxu0 0
      %462 = vmatpush1.bf16.msra.mxu0 0
      %463 = vmatprep.subr.bf16.mxu0 0
      %464 = vmatpush1.bf16.msra.mxu0 0
      %465 = vmatprep.subr.bf16.mxu0 0
      %466 = vmatpush1.bf16.msra.mxu0 0
      %467 = vmatprep.subr.bf16.mxu0 0
      %468 = vmatpush1.bf16.msra.mxu0 0
      %469 = vmatprep.subr.bf16.mxu0 0
      %470 = vmatpush1.bf16.msra.mxu0 0
      %471 = vmatprep.subr.bf16.mxu0 0
      %472 = vmatpush1.bf16.msra.mxu0 0
      %473 = vmatprep.subr.bf16.mxu0 0
      %474 = vmatpush1.bf16.msra.mxu0 0
      %475 = vmatprep.subr.bf16.mxu0 0
      %476 = vmatpush1.bf16.msra.mxu0 0
      %477 = vmatprep.mubr.bf16.mxu0 0
      %478 = vmatmul.mubr.bf16.gmra.mrb[0].mxu0 %v422
      %v479 = vpop.f32.mrb[0].mxu0
      %v480 = vadd.f32 0.0, %v479
      %v481 = vpop.f32.mrb[0].mxu0
      %v482 = vpop.f32.mrb[0].mxu0
      %v483 = vadd.f32 0.0, %v482
      %v484 = vpop.f32.mrb[0].mxu0
      %485 = vmatprep.mubr.bf16.mxu0 0
      %486 = vmatmul.mubr.bf16.gmra.mrb[0].mxu0 %v425
      %v487 = vpop.f32.mrb[0].mxu0
      %v488 = vadd.f32 0.0, %v487
      %v489 = vpop.f32.mrb[0].mxu0
      %v490 = vpop.f32.mrb[0].mxu0
      %v491 = vadd.f32 0.0, %v490
      %v492 = vpop.f32.mrb[0].mxu0
      %493 = vmatprep.mubr.bf16.mxu0 0
      %494 = vmatmul.mubr.bf16.gmra.mrb[0].mxu0 %v428
      %v495 = vpop.f32.mrb[0].mxu0
      %v496 = vadd.f32 0.0, %v495
      %v497 = vpop.f32.mrb[0].mxu0
      %v498 = vpop.f32.mrb[0].mxu0
      %v499 = vadd.f32 0.0, %v498
      %v500 = vpop.f32.mrb[0].mxu0
      %501 = vmatprep.mubr.bf16.mxu0 0
      %502 = vmatmul.mubr.bf16.gmra.mrb[0].mxu0 %v431
      %v503 = vpop.f32.mrb[0].mxu0
      %v504 = vadd.f32 0.0, %v503
      %v505 = vpop.f32.mrb[0].mxu0
      %v506 = vpop.f32.mrb[0].mxu0
      %v507 = vadd.f32 0.0, %v506
      %v508 = vpop.f32.mrb[0].mxu0
      %509 = vmatprep.mubr.bf16.mxu0 0
      %510 = vmatmul.mubr.bf16.gmra.mrb[0].mxu0 %v434
      %v511 = vpop.f32.mrb[0].mxu0
      %v512 = vadd.f32 0.0, %v511
      %v513 = vpop.f32.mrb[0].mxu0
      %v514 = vpop.f32.mrb[0].mxu0
      %v515 = vadd.f32 0.0, %v514
      %v516 = vpop.f32.mrb[0].mxu0
      %517 = vmatprep.mubr.bf16.mxu0 0
      %518 = vmatmul.mubr.bf16.gmra.mrb[0].mxu0 %v437
      %v519 = vpop.f32.mrb[0].mxu0
      %v520 = vadd.f32 0.0, %v519
      %v521 = vpop.f32.mrb[0].mxu0
      %v522 = vpop.f32.mrb[0].mxu0
      %v523 = vadd.f32 0.0, %v522
      %v524 = vpop.f32.mrb[0].mxu0
      %525 = vmatprep.mubr.bf16.mxu0 0
      %526 = vmatmul.mubr.bf16.gmra.mrb[0].mxu0 %v440
      %v527 = vpop.f32.mrb[0].mxu0
      %v528 = vadd.f32 0.0, %v527
      %v529 = vpop.f32.mrb[0].mxu0
      %v530 = vpop.f32.mrb[0].mxu0
      %v531 = vadd.f32 0.0, %v530
      %v532 = vpop.f32.mrb[0].mxu0
      %533 = vmatprep.mubr.bf16.mxu0 0
      %534 = vmatmul.mubr.bf16.gmra.mrb[0].mxu0 %v443
      %v535 = vpop.f32.mrb[0].mxu0
      %v536 = vadd.f32 0.0, %v535
      %v537 = vpop.f32.mrb[0].mxu0
      %v538 = vpop.f32.mrb[0].mxu0
      %v539 = vadd.f32 0.0, %v538
      %v540 = vpop.f32.mrb[0].mxu0
      %541 = vdwg.mxu0
      %v542 = vadd.f32 %v340, %v480
      %v543 = vadd.f32 %v341, %v483
      %v544 = vadd.f32 %v342, %v488
      %v545 = vadd.f32 %v343, %v491
      %v546 = vadd.f32 %v344, %v496
      %v547 = vadd.f32 %v345, %v499
      %v548 = vadd.f32 %v346, %v504
      %v549 = vadd.f32 %v347, %v507
      %v550 = vadd.f32 %v348, %v512
      %v551 = vadd.f32 %v349, %v515
      %v552 = vadd.f32 %v350, %v520
      %v553 = vadd.f32 %v351, %v523
      %v554 = vadd.f32 %v352, %v528
      %v555 = vadd.f32 %v353, %v531
      %v556 = vadd.f32 %v354, %v536
      %v557 = vadd.f32 %v355, %v539
      %558 = vst [vmem:[#allocation2] sm:$0xff] %v542
      %559 = vst [vmem:[#allocation2 + $0x8] sm:$0xff] %v543
      %560 = vst [vmem:[#allocation2 + $0x10] sm:$0xff] %v544
      %561 = vst [vmem:[#allocation2 + $0x18] sm:$0xff] %v545
      %562 = vst [vmem:[#allocation2 + $0x20] sm:$0xff] %v546
      %563 = vst [vmem:[#allocation2 + $0x28] sm:$0xff] %v547
      %564 = vst [vmem:[#allocation2 + $0x30] sm:$0xff] %v548
      %565 = vst [vmem:[#allocation2 + $0x38] sm:$0xff] %v549
      %566 = vst [vmem:[#allocation2 + $0x40] sm:$0xff] %v550
      %567 = vst [vmem:[#allocation2 + $0x48] sm:$0xff] %v551
      %568 = vst [vmem:[#allocation2 + $0x50] sm:$0xff] %v552
      %569 = vst [vmem:[#allocation2 + $0x58] sm:$0xff] %v553
      %570 = vst [vmem:[#allocation2 + $0x60] sm:$0xff] %v554
      %571 = vst [vmem:[#allocation2 + $0x68] sm:$0xff] %v555
      %572 = vst [vmem:[#allocation2 + $0x70] sm:$0xff] %v556
      %573 = vst [vmem:[#allocation2 + $0x78] sm:$0xff] %v557
      // Predicated region
      $region41: #{_lambda_.27} parent=35 // pred_check
        %p574 = pneg %p320
      $region42: #{_lambda_.27} parent=35 // pred_check_branch
        %576 = sbr.rel (%p574) target = $region44
      $region43: #{_lambda_.27} parent=35 // pred_region
        %v577 = vld [vmem:[#allocation2] sm:$0xff]
        %v578 = vld [vmem:[#allocation2 + $0x8] sm:$0xff]
        %v579 = vld [vmem:[#allocation2 + $0x10] sm:$0xff]
        %v580 = vld [vmem:[#allocation2 + $0x18] sm:$0xff]
        %v581 = vld [vmem:[#allocation2 + $0x20] sm:$0xff]
        %v582 = vld [vmem:[#allocation2 + $0x28] sm:$0xff]
        %v583 = vld [vmem:[#allocation2 + $0x30] sm:$0xff]
        %v584 = vld [vmem:[#allocation2 + $0x38] sm:$0xff]
        %v585 = vld [vmem:[#allocation2 + $0x40] sm:$0xff]
        %v586 = vld [vmem:[#allocation2 + $0x48] sm:$0xff]
        %v587 = vld [vmem:[#allocation2 + $0x50] sm:$0xff]
        %v588 = vld [vmem:[#allocation2 + $0x58] sm:$0xff]
        %v589 = vld [vmem:[#allocation2 + $0x60] sm:$0xff]
        %v590 = vld [vmem:[#allocation2 + $0x68] sm:$0xff]
        %v591 = vld [vmem:[#allocation2 + $0x70] sm:$0xff]
        %v592 = vld [vmem:[#allocation2 + $0x78] sm:$0xff]
        %v593 = vld [vmem:[%s300] sm:$0x1]
        %v595 = vlaneseq
        %v596 = vshrl.u32 %v595, 7
        %v597 = vsub.s32 0, %v596
        %v598 = vrot.slane %v593, %v597
        %v600 = vadd.f32 %v577, %v598
        %v601 = vadd.f32 %v578, %v598
        %v602 = vadd.f32 %v579, %v598
        %v603 = vadd.f32 %v580, %v598
        %v604 = vadd.f32 %v581, %v598
        %v605 = vadd.f32 %v582, %v598
        %v606 = vadd.f32 %v583, %v598
        %v607 = vadd.f32 %v584, %v598
        %v608 = vadd.f32 %v585, %v598
        %v609 = vadd.f32 %v586, %v598
        %v610 = vadd.f32 %v587, %v598
        %v611 = vadd.f32 %v588, %v598
        %v612 = vadd.f32 %v589, %v598
        %v613 = vadd.f32 %v590, %v598
        %v614 = vadd.f32 %v591, %v598
        %v615 = vadd.f32 %v592, %v598
        %v616 = vld [vmem:[%s308] sm:$0xf]
        %v617 = vld [vmem:[%s308 + $0x4] sm:$0xf]
        %v618 = vld [vmem:[%s308 + $0x8] sm:$0xf]
        %v619 = vld [vmem:[%s308 + $0xc] sm:$0xf]
        %v620 = vld [vmem:[%s308 + $0x10] sm:$0xf]
        %v621 = vld [vmem:[%s308 + $0x14] sm:$0xf]
        %v622 = vld [vmem:[%s308 + $0x18] sm:$0xf]
        %v623 = vld [vmem:[%s308 + $0x1c] sm:$0xf]
        %v624 = vld [vmem:[%s308 + $0x20] sm:$0xf]
        %v625 = vld [vmem:[%s308 + $0x24] sm:$0xf]
        %v626 = vld [vmem:[%s308 + $0x28] sm:$0xf]
        %v627 = vld [vmem:[%s308 + $0x2c] sm:$0xf]
        %v628 = vld [vmem:[%s308 + $0x30] sm:$0xf]
        %v629 = vld [vmem:[%s308 + $0x34] sm:$0xf]
        %v630 = vld [vmem:[%s308 + $0x38] sm:$0xf]
        %v631 = vld [vmem:[%s308 + $0x3c] sm:$0xf]
        %v632 = vunpack.c.l.bf16 %v616
        %v633 = vunpack.c.l.bf16 %v617
        %v634 = vunpack.c.l.bf16 %v618
        %v635 = vunpack.c.l.bf16 %v619
        %v636 = vunpack.c.l.bf16 %v620
        %v637 = vunpack.c.l.bf16 %v621
        %v638 = vunpack.c.l.bf16 %v622
        %v639 = vunpack.c.l.bf16 %v623
        %v640 = vunpack.c.l.bf16 %v624
        %v641 = vunpack.c.l.bf16 %v625
        %v642 = vunpack.c.l.bf16 %v626
        %v643 = vunpack.c.l.bf16 %v627
        %v644 = vunpack.c.l.bf16 %v628
        %v645 = vunpack.c.l.bf16 %v629
        %v646 = vunpack.c.l.bf16 %v630
        %v647 = vunpack.c.l.bf16 %v631
        %v648 = vadd.f32 %v600, %v632
        %v649 = vadd.f32 %v601, %v633
        %v650 = vadd.f32 %v602, %v634
        %v651 = vadd.f32 %v603, %v635
        %v652 = vadd.f32 %v604, %v636
        %v653 = vadd.f32 %v605, %v637
        %v654 = vadd.f32 %v606, %v638
        %v655 = vadd.f32 %v607, %v639
        %v656 = vadd.f32 %v608, %v640
        %v657 = vadd.f32 %v609, %v641
        %v658 = vadd.f32 %v610, %v642
        %v659 = vadd.f32 %v611, %v643
        %v660 = vadd.f32 %v612, %v644
        %v661 = vadd.f32 %v613, %v645
        %v662 = vadd.f32 %v614, %v646
        %v663 = vadd.f32 %v615, %v647
        %v664 = vmax.f32 %v648, 0.0
        %v665 = vmax.f32 %v649, 0.0
        %v666 = vmax.f32 %v650, 0.0
        %v667 = vmax.f32 %v651, 0.0
        %v668 = vmax.f32 %v652, 0.0
        %v669 = vmax.f32 %v653, 0.0
        %v670 = vmax.f32 %v654, 0.0
        %v671 = vmax.f32 %v655, 0.0
        %v672 = vmax.f32 %v656, 0.0
        %v673 = vmax.f32 %v657, 0.0
        %v674 = vmax.f32 %v658, 0.0
        %v675 = vmax.f32 %v659, 0.0
        %v676 = vmax.f32 %v660, 0.0
        %v677 = vmax.f32 %v661, 0.0
        %v678 = vmax.f32 %v662, 0.0
        %v679 = vmax.f32 %v663, 0.0
        %v680 = vpack.c.bf16 %v665, %v664
        %v681 = vpack.c.bf16 %v667, %v666
        %v682 = vpack.c.bf16 %v669, %v668
        %v683 = vpack.c.bf16 %v671, %v670
        %v684 = vpack.c.bf16 %v673, %v672
        %v685 = vpack.c.bf16 %v675, %v674
        %v686 = vpack.c.bf16 %v677, %v676
        %v687 = vpack.c.bf16 %v679, %v678
        %v696 = vunpack.c.l.b16 %v680
        %v697 = vunpack.c.h.b16 %v680
        %v698 = vunpack.c.l.b16 %v681
        %v699 = vunpack.c.h.b16 %v681
        %v700 = vunpack.c.l.b16 %v682
        %v701 = vunpack.c.h.b16 %v682
        %v702 = vunpack.c.l.b16 %v683
        %v703 = vunpack.c.h.b16 %v683
        %v704 = vunpack.c.l.b16 %v684
        %v705 = vunpack.c.h.b16 %v684
        %v706 = vunpack.c.l.b16 %v685
        %v707 = vunpack.c.h.b16 %v685
        %v708 = vunpack.c.l.b16 %v686
        %v709 = vunpack.c.h.b16 %v686
        %v710 = vunpack.c.l.b16 %v687
        %v711 = vunpack.c.h.b16 %v687
        %v712 = vpack.c.b16 %v696, %v696
        %v713 = vpack.c.b16 %v697, %v697
        %v714 = vpack.c.b16 %v698, %v698
        %v715 = vpack.c.b16 %v699, %v699
        %v716 = vpack.c.b16 %v700, %v700
        %v717 = vpack.c.b16 %v701, %v701
        %v718 = vpack.c.b16 %v702, %v702
        %v719 = vpack.c.b16 %v703, %v703
        %v720 = vpack.c.b16 %v704, %v704
        %v721 = vpack.c.b16 %v705, %v705
        %v722 = vpack.c.b16 %v706, %v706
        %v723 = vpack.c.b16 %v707, %v707
        %v724 = vpack.c.b16 %v708, %v708
        %v725 = vpack.c.b16 %v709, %v709
        %v726 = vpack.c.b16 %v710, %v710
        %v727 = vpack.c.b16 %v711, %v711
        %744 = vst [vmem:[%s317] sm:$0xf] %v712
        %745 = vst [vmem:[%s317 + $0x4] sm:$0xf] %v713
        %746 = vst [vmem:[%s317 + $0x8] sm:$0xf] %v714
        %747 = vst [vmem:[%s317 + $0xc] sm:$0xf] %v715
        %748 = vst [vmem:[%s317 + $0x10] sm:$0xf] %v716
        %749 = vst [vmem:[%s317 + $0x14] sm:$0xf] %v717
        %750 = vst [vmem:[%s317 + $0x18] sm:$0xf] %v718
        %751 = vst [vmem:[%s317 + $0x1c] sm:$0xf] %v719
        %752 = vst [vmem:[%s317 + $0x20] sm:$0xf] %v720
        %753 = vst [vmem:[%s317 + $0x24] sm:$0xf] %v721
        %754 = vst [vmem:[%s317 + $0x28] sm:$0xf] %v722
        %755 = vst [vmem:[%s317 + $0x2c] sm:$0xf] %v723
        %756 = vst [vmem:[%s317 + $0x30] sm:$0xf] %v724
        %757 = vst [vmem:[%s317 + $0x34] sm:$0xf] %v725
        %758 = vst [vmem:[%s317 + $0x38] sm:$0xf] %v726
        %759 = vst [vmem:[%s317 + $0x3c] sm:$0xf] %v727
      $region44: #{_lambda_.27} parent=35 // pred_fallthru
        _
      %s760 = smul.u32 16, %s20
      %p761 = scmp.lt.s32.totalorder %s760, 63
      %s762 = scalar_select %p761, %s760, 63
      %p763 = scmp.lt.s32.totalorder %s21, 0
      %s764 = scalar_select %p763, %s21, 0
      %s765 = sadd.s32 %s764, %s762
      %s766 = smul.addr %s765, 4
      %s767 = scalar_lea.vmem %s4, %s766
      // Predicated region
      $region45: #{_lambda_.27} parent=35 // pred_check
        %p768 = pneg %p164
      $region46: #{_lambda_.27} parent=35 // pred_check_branch
        %770 = sbr.rel (%p768) target = $region48
      $region47: #{_lambda_.27} parent=35 // pred_region
        %s771 = smul.u32 16, %s20
      $region48: #{_lambda_.27} parent=35 // pred_fallthru
        _
    $region36: #{_lambda_.27} parent=5 // pred_fallthru
      _
    %p772 = scmp.le.s32.totalorder 2, %s10
    // Predicated region
    $region49: #{_lambda_.27} parent=5 // pred_check
      %p773 = pneg %p772
    $region50: #{_lambda_.27} parent=5 // pred_check_branch
      %775 = sbr.rel (%p773) target = $region52
    $region51: #{_lambda_.27} parent=5 // pred_region
      %s776 = ssub.s32 %s10, 2
      // Predicated region
      $region53: #{_lambda_.27} parent=51 // pred_check
        %p777 = pneg %p170
      $region54: #{_lambda_.27} parent=51 // pred_check_branch
        %779 = sbr.rel (%p777) target = $region56
      $region55: #{_lambda_.27} parent=51 // pred_region
        %s780 = smul.u32 16, %s23
        %p781 = scmp.lt.s32.totalorder %s780, 63
        %s782 = scalar_select %p781, %s780, 63
        %p783 = scmp.lt.s32.totalorder %s24, 0
        %s784 = scalar_select %p783, %s24, 0
        %s785 = sadd.s32 %s784, %s782
        %s786 = smul.addr %s785, 4
        %s787 = scalar_lea.vmem %s4, %s786
      $region56: #{_lambda_.27} parent=51 // pred_fallthru
        _
    $region52: #{_lambda_.27} parent=5 // pred_fallthru
      _
  $region6: #{_lambda_.27} parent=0 // loop_footer
    %s14 = sadd.s32 1, %s10
  $region7: #{_lambda_.27} parent=0 // loop_footer_branch
    %9 = sbr.rel target = $region3
  $region8: #{_lambda_.27} parent=0 // loop_exit
    _

// kernel: _lambda_.28
$region0: #{_lambda_.28}
  #allocation0 [shape = 'u32[]', space=smem, size = 0x4, offset = 0x4, fixed_abs, tag = 'smem constant byte address 0x4 - core index']
  #allocation1 [shape = 'u32[144,128]{1,0:T(1,128)}', space=vmem, size = 0x12000, scoped, tag = 'internal scratch']
  #allocation2 [shape = 'f32[128,128]{1,0:T(8,128)}', space=vmem, size = 0x10000, scoped, tag = 'scratch operand']
  %s0 = inlined_call_operand.vmem [shape: bf16[512,64], index: 0, kind: input, shape index: {}]
  %s1 = inlined_call_operand.vmem [shape: bf16[64,128], index: 1, kind: input, shape index: {}]
  %s2 = inlined_call_operand.vmem [shape: f32[1,128], index: 2, kind: input, shape index: {}]
  %s3 = inlined_call_operand.vmem [shape: bf16[512,128], index: 3, kind: output, shape index: {}]
  %s4 = sld [smem:[#allocation0]]
  $region53: #{_lambda_.28} parent=0
    _
  %s6 = ssub.s32 1, %s4
  %s7 = scalar_select 0, %s6, %s4
  loop: start=0, step=1, limit=6
  $region2: #{_lambda_.28} parent=0 // loop_pre_header
    _
  $region3: #{_lambda_.28} parent=0 // loop_header
    %s9 = sphi 0, %s13
    %p10 = scmp.ge.s32.totalorder %s9, 6
    %s16 = sphi 0, %s35
    %s17 = sphi 0, %s31
    %s18 = sphi 0, %s27
    %s19 = sphi 0, %s16
    %s20 = sphi 0, %s17
    %s21 = sphi 0, %s18
    %s22 = sphi 0, %s19
    %s23 = sphi 0, %s20
    %s24 = sphi 0, %s21
    %s40 = sphi 0, %s42
    %s43 = sphi 0, %s40
    %s44 = sphi 0, %s43
    %s60 = sphi 0, %s44
    %s68 = sphi 0, %s70
    %s71 = sphi 0, %s68
    %s72 = sphi 0, %s71
    %s88 = sphi 0, %s72
    %s94 = sphi 0, %s96
    %s97 = sphi 0, %s94
    %s98 = sphi 0, %s97
    %s114 = sphi 0, %s98
    %s122 = sphi 0, %s124
    %s125 = sphi 0, %s122
    %s126 = sphi 0, %s125
    %s142 = sphi 0, %s126
  $region4: #{_lambda_.28} parent=0 // loop_header_branch
    %12 = sbr.rel (%p10) target = $region8
  $region5: #{_lambda_.28} parent=0 // loop_body
    %s14 = ssub.s32 %s9, 1
    %s15 = ssub.s32 %s9, 2
    %s25 = sadd.s32 1, %s18
    %p26 = scmp.ge.s32.totalorder %s25, 1
    %s27 = scalar_select %p26, 0, %s25
    %s28 = sadd.s32 1, %s17
    %s29 = scalar_select %p26, %s28, %s17
    %p30 = scmp.ge.s32.totalorder %s29, 1
    %s31 = scalar_select %p30, 0, %s29
    %s32 = sadd.s32 1, %s16
    %s33 = scalar_select %p30, %s32, %s16
    %p34 = scmp.ge.s32.totalorder %s33, 4
    %s35 = scalar_select %p34, 0, %s33
    %s36 = ssub.s32 %s16, %s35
    %s37 = ssub.s32 %s18, %s27
    %s38 = sor.u32 %s36, %s37
    %p39 = scmp.eq.s32.totalorder %s38, 0
    %s41 = sadd.s32 %s40, 1
    %s42 = scalar_select %p39, %s40, %s41
    %p45 = pneg %p39
    %p46 = scmp.eq.s32.totalorder %s9, 3
    %p47 = por %p45, %p46
    %p48 = scmp.ne.s32.totalorder %s40, %s43
    %p49 = scmp.eq.s32.totalorder %s9, 0
    %p50 = por %p48, %p49
    %p51 = scmp.ne.s32.totalorder %s40, %s43
    %p52 = scmp.eq.s32.totalorder %s14, 3
    %p53 = por %p51, %p52
    %p54 = scmp.ne.s32.totalorder %s43, %s44
    %p55 = scmp.eq.s32.totalorder %s14, 0
    %p56 = por %p54, %p55
    %p57 = scmp.ne.s32.totalorder %s43, %s44
    %p58 = scmp.eq.s32.totalorder %s15, 3
    %p59 = por %p57, %p58
    %p61 = scmp.ne.s32.totalorder %s44, %s60
    %p62 = scmp.eq.s32.totalorder %s15, 0
    %p63 = por %p61, %p62
    %s64 = ssub.s32 %s18, %s27
    %s65 = ssub.s32 %s17, %s31
    %s66 = sor.u32 %s64, %s65
    %p67 = scmp.eq.s32.totalorder %s66, 0
    %s69 = sadd.s32 %s68, 1
    %s70 = scalar_select %p67, %s68, %s69
    %p73 = pneg %p67
    %p74 = scmp.eq.s32.totalorder %s9, 3
    %p75 = por %p73, %p74
    %p76 = scmp.ne.s32.totalorder %s68, %s71
    %p77 = scmp.eq.s32.totalorder %s9, 0
    %p78 = por %p76, %p77
    %p79 = scmp.ne.s32.totalorder %s68, %s71
    %p80 = scmp.eq.s32.totalorder %s14, 3
    %p81 = por %p79, %p80
    %p82 = scmp.ne.s32.totalorder %s71, %s72
    %p83 = scmp.eq.s32.totalorder %s14, 0
    %p84 = por %p82, %p83
    %p85 = scmp.ne.s32.totalorder %s71, %s72
    %p86 = scmp.eq.s32.totalorder %s15, 3
    %p87 = por %p85, %p86
    %p89 = scmp.ne.s32.totalorder %s72, %s88
    %p90 = scmp.eq.s32.totalorder %s15, 0
    %p91 = por %p89, %p90
    %s92 = ssub.s32 %s17, %s31
    %p93 = scmp.eq.s32.totalorder %s92, 0
    %s95 = sadd.s32 %s94, 1
    %s96 = scalar_select %p93, %s94, %s95
    %p99 = pneg %p93
    %p100 = scmp.eq.s32.totalorder %s9, 3
    %p101 = por %p99, %p100
    %p102 = scmp.ne.s32.totalorder %s94, %s97
    %p103 = scmp.eq.s32.totalorder %s9, 0
    %p104 = por %p102, %p103
    %p105 = scmp.ne.s32.totalorder %s94, %s97
    %p106 = scmp.eq.s32.totalorder %s14, 3
    %p107 = por %p105, %p106
    %p108 = scmp.ne.s32.totalorder %s97, %s98
    %p109 = scmp.eq.s32.totalorder %s14, 0
    %p110 = por %p108, %p109
    %p111 = scmp.ne.s32.totalorder %s97, %s98
    %p112 = scmp.eq.s32.totalorder %s15, 3
    %p113 = por %p111, %p112
    %p115 = scmp.ne.s32.totalorder %s98, %s114
    %p116 = scmp.eq.s32.totalorder %s15, 0
    %p117 = por %p115, %p116
    %s118 = ssub.s32 %s16, %s35
    %s119 = ssub.s32 %s17, %s31
    %s120 = sor.u32 %s118, %s119
    %p121 = scmp.eq.s32.totalorder %s120, 0
    %s123 = sadd.s32 %s122, 1
    %s124 = scalar_select %p121, %s122, %s123
    %p127 = pneg %p121
    %p128 = scmp.eq.s32.totalorder %s9, 3
    %p129 = por %p127, %p128
    %p130 = scmp.ne.s32.totalorder %s122, %s125
    %p131 = scmp.eq.s32.totalorder %s9, 0
    %p132 = por %p130, %p131
    %p133 = scmp.ne.s32.totalorder %s122, %s125
    %p134 = scmp.eq.s32.totalorder %s14, 3
    %p135 = por %p133, %p134
    %p136 = scmp.ne.s32.totalorder %s125, %s126
    %p137 = scmp.eq.s32.totalorder %s14, 0
    %p138 = por %p136, %p137
    %p139 = scmp.ne.s32.totalorder %s125, %s126
    %p140 = scmp.eq.s32.totalorder %s15, 3
    %p141 = por %p139, %p140
    %p143 = scmp.ne.s32.totalorder %s126, %s142
    %p144 = scmp.eq.s32.totalorder %s15, 0
    %p145 = por %p143, %p144
    %p146 = scmp.le.s32.totalorder 1, %s9
    %p147 = scmp.lt.s32.totalorder %s9, 5
    %p148 = pnand %p146, %p147
    %p149 = pneg %p148
    // Predicated region
    $region9: #{_lambda_.28} parent=5 // pred_check
      _
    $region10: #{_lambda_.28} parent=5 // pred_check_branch
      %151 = sbr.rel (%p148) target = $region12
    $region11: #{_lambda_.28} parent=5 // pred_region
      %s152 = ssub.s32 %s9, 1
      // Predicated region
      $region13: #{_lambda_.28} parent=11 // pred_check
        %p153 = pneg %p84
      $region14: #{_lambda_.28} parent=11 // pred_check_branch
        %155 = sbr.rel (%p153) target = $region16
      $region15: #{_lambda_.28} parent=11 // pred_region
        %s156 = smul.u32 8, %s21
        %p157 = scmp.lt.s32.totalorder %s156, 7
        %s158 = scalar_select %p157, %s156, 7
        %p159 = scmp.lt.s32.totalorder %s20, 0
        %s160 = scalar_select %p159, %s20, 0
        %s161 = sadd.s32 %s160, %s158
        %s162 = smul.addr %s161, 4
        %s163 = scalar_lea.vmem %s1, %s162
        %s164 = smul.u32 8, %s21
      $region16: #{_lambda_.28} parent=11 // pred_fallthru
        _
      // Predicated region
      $region17: #{_lambda_.28} parent=11 // pred_check
        %p165 = pneg %p110
      $region18: #{_lambda_.28} parent=11 // pred_check_branch
        %167 = sbr.rel (%p165) target = $region20
      $region19: #{_lambda_.28} parent=11 // pred_region
        %p168 = scmp.lt.s32.totalorder %s20, 0
        %s169 = scalar_select %p168, %s20, 0
        %s170 = scalar_lea.vmem %s2, %s169
      $region20: #{_lambda_.28} parent=11 // pred_fallthru
        _
    $region12: #{_lambda_.28} parent=5 // pred_fallthru
      _
    %p171 = scmp.lt.s32.totalorder %s9, 4
    // Predicated region
    $region21: #{_lambda_.28} parent=5 // pred_check
      %p172 = pneg %p171
    $region22: #{_lambda_.28} parent=5 // pred_check_branch
      %174 = sbr.rel (%p172) target = $region24
    $region23: #{_lambda_.28} parent=5 // pred_region
      // Predicated region
      $region25: #{_lambda_.28} parent=23 // pred_check
        %p175 = pneg %p50
      $region26: #{_lambda_.28} parent=23 // pred_check_branch
        %177 = sbr.rel (%p175) target = $region28
      $region27: #{_lambda_.28} parent=23 // pred_region
        %s178 = smul.u32 16, %s16
        %p179 = scmp.lt.s32.totalorder %s178, 63
        %s180 = scalar_select %p179, %s178, 63
        %p181 = scmp.lt.s32.totalorder %s18, 0
        %s182 = scalar_select %p181, %s18, 0
        %s183 = sadd.s32 %s182, %s180
        %s184 = smul.addr %s183, 4
        %s185 = scalar_lea.vmem %s0, %s184
        %s186 = smul.u32 16, %s16
      $region28: #{_lambda_.28} parent=23 // pred_fallthru
        _
    $region24: #{_lambda_.28} parent=5 // pred_fallthru
      _
    %p187 = scmp.le.s32.totalorder 1, %s9
    %p188 = scmp.lt.s32.totalorder %s9, 5
    %p189 = pnand %p187, %p188
    %p190 = pneg %p189
    // Predicated region
    $region29: #{_lambda_.28} parent=5 // pred_check
      _
    $region30: #{_lambda_.28} parent=5 // pred_check_branch
      %192 = sbr.rel (%p189) target = $region32
    $region31: #{_lambda_.28} parent=5 // pred_region
      %s193 = ssub.s32 %s9, 1
      %s194 = smul.u32 16, %s19
      %p195 = scmp.lt.s32.totalorder %s194, 63
      %s196 = scalar_select %p195, %s194, 63
      %p197 = scmp.lt.s32.totalorder %s21, 0
      %s198 = scalar_select %p197, %s21, 0
      %s199 = sadd.s32 %s198, %s196
      %s200 = smul.addr %s199, 4
      %s201 = scalar_lea.vmem %s0, %s200
      %p202 = pneg %p56
      %p203 = pneg %p53
      %s204 = smul.u32 8, %s21
      %p205 = scmp.lt.s32.totalorder %s204, 7
      %s206 = scalar_select %p205, %s204, 7
      %p207 = scmp.lt.s32.totalorder %s20, 0
      %s208 = scalar_select %p207, %s20, 0
      %s209 = sadd.s32 %s208, %s206
      %s210 = smul.addr %s209, 4
      %s211 = scalar_lea.vmem %s1, %s210
      %p212 = pneg %p84
      %p213 = pneg %p81
      %p214 = scmp.lt.s32.totalorder %s20, 0
      %s215 = scalar_select %p214, %s20, 0
      %s216 = scalar_lea.vmem %s2, %s215
      %p217 = pneg %p110
      %p218 = pneg %p107
      %p219 = pneg %p138
      %p220 = pneg %p135
      %s221 = smul.u32 16, %s19
      %p222 = scmp.lt.s32.totalorder %s221, 63
      %s223 = scalar_select %p222, %s221, 63
      %p224 = scmp.lt.s32.totalorder %s20, 0
      %s225 = scalar_select %p224, %s20, 0
      %s226 = sadd.s32 %s225, %s223
      %s227 = smul.addr %s226, 4
      %s228 = scalar_lea.vmem %s3, %s227
      %s229 = smul.u32 16, %s19
      %p230 = scmp.lt.s32.totalorder %s229, 63
      %s231 = scalar_select %p230, %s229, 63
      %p232 = scmp.lt.s32.totalorder %s21, 0
      %s233 = scalar_select %p232, %s21, 0
      %s234 = sadd.s32 %s233, %s231
      %s235 = smul.addr %s234, 4
      %s236 = scalar_lea.vmem %s0, %s235
      %s237 = smul.u32 16, %s19
      %s238 = smul.u32 8, %s21
      %p239 = scmp.lt.s32.totalorder %s238, 7
      %s240 = scalar_select %p239, %s238, 7
      %p241 = scmp.lt.s32.totalorder %s20, 0
      %s242 = scalar_select %p241, %s20, 0
      %s243 = sadd.s32 %s242, %s240
      %s244 = smul.addr %s243, 4
      %s245 = scalar_lea.vmem %s1, %s244
      %s246 = smul.u32 8, %s21
      %p247 = scmp.lt.s32.totalorder %s20, 0
      %s248 = scalar_select %p247, %s20, 0
      %s249 = scalar_lea.vmem %s2, %s248
      %s250 = smul.u32 16, %s19
      %p251 = scmp.lt.s32.totalorder %s250, 63
      %s252 = scalar_select %p251, %s250, 63
      %p253 = scmp.lt.s32.totalorder %s20, 0
      %s254 = scalar_select %p253, %s20, 0
      %s255 = sadd.s32 %s254, %s252
      %s256 = smul.addr %s255, 4
      %s257 = scalar_lea.vmem %s3, %s256
      %s258 = smul.u32 16, %s19
      %p260 = scmp.eq.s32.totalorder %s21, 0
      // Predicated region
      $region33: #{_lambda_.28} parent=31 // pred_check
        %p261 = pneg %p260
      $region34: #{_lambda_.28} parent=31 // pred_check_branch
        %263 = sbr.rel (%p261) target = $region36
      $region35: #{_lambda_.28} parent=31 // pred_region
        %264 = vst [vmem:[#allocation2] sm:$0xff] 0.0
        %265 = vst [vmem:[#allocation2 + $0x8] sm:$0xff] 0.0
        %266 = vst [vmem:[#allocation2 + $0x10] sm:$0xff] 0.0
        %267 = vst [vmem:[#allocation2 + $0x18] sm:$0xff] 0.0
        %268 = vst [vmem:[#allocation2 + $0x20] sm:$0xff] 0.0
        %269 = vst [vmem:[#allocation2 + $0x28] sm:$0xff] 0.0
        %270 = vst [vmem:[#allocation2 + $0x30] sm:$0xff] 0.0
        %271 = vst [vmem:[#allocation2 + $0x38] sm:$0xff] 0.0
        %272 = vst [vmem:[#allocation2 + $0x40] sm:$0xff] 0.0
        %273 = vst [vmem:[#allocation2 + $0x48] sm:$0xff] 0.0
        %274 = vst [vmem:[#allocation2 + $0x50] sm:$0xff] 0.0
        %275 = vst [vmem:[#allocation2 + $0x58] sm:$0xff] 0.0
        %276 = vst [vmem:[#allocation2 + $0x60] sm:$0xff] 0.0
        %277 = vst [vmem:[#allocation2 + $0x68] sm:$0xff] 0.0
        %278 = vst [vmem:[#allocation2 + $0x70] sm:$0xff] 0.0
        %279 = vst [vmem:[#allocation2 + $0x78] sm:$0xff] 0.0
      $region36: #{_lambda_.28} parent=31 // pred_fallthru
        _
      %v280 = vld [vmem:[#allocation2] sm:$0xff]
      %v281 = vld [vmem:[#allocation2 + $0x8] sm:$0xff]
      %v282 = vld [vmem:[#allocation2 + $0x10] sm:$0xff]
      %v283 = vld [vmem:[#allocation2 + $0x18] sm:$0xff]
      %v284 = vld [vmem:[#allocation2 + $0x20] sm:$0xff]
      %v285 = vld [vmem:[#allocation2 + $0x28] sm:$0xff]
      %v286 = vld [vmem:[#allocation2 + $0x30] sm:$0xff]
      %v287 = vld [vmem:[#allocation2 + $0x38] sm:$0xff]
      %v288 = vld [vmem:[#allocation2 + $0x40] sm:$0xff]
      %v289 = vld [vmem:[#allocation2 + $0x48] sm:$0xff]
      %v290 = vld [vmem:[#allocation2 + $0x50] sm:$0xff]
      %v291 = vld [vmem:[#allocation2 + $0x58] sm:$0xff]
      %v292 = vld [vmem:[#allocation2 + $0x60] sm:$0xff]
      %v293 = vld [vmem:[#allocation2 + $0x68] sm:$0xff]
      %v294 = vld [vmem:[#allocation2 + $0x70] sm:$0xff]
      %v295 = vld [vmem:[#allocation2 + $0x78] sm:$0xff]
      %v296 = vld [vmem:[%s236] sm:$0xf]
      %v297 = vld [vmem:[%s236 + $0x4] sm:$0xf]
      %v298 = vld [vmem:[%s236 + $0x8] sm:$0xf]
      %v299 = vld [vmem:[%s236 + $0xc] sm:$0xf]
      %v300 = vld [vmem:[%s236 + $0x10] sm:$0xf]
      %v301 = vld [vmem:[%s236 + $0x14] sm:$0xf]
      %v302 = vld [vmem:[%s236 + $0x18] sm:$0xf]
      %v303 = vld [vmem:[%s236 + $0x1c] sm:$0xf]
      %v304 = vld [vmem:[%s236 + $0x20] sm:$0xf]
      %v305 = vld [vmem:[%s236 + $0x24] sm:$0xf]
      %v306 = vld [vmem:[%s236 + $0x28] sm:$0xf]
      %v307 = vld [vmem:[%s236 + $0x2c] sm:$0xf]
      %v308 = vld [vmem:[%s236 + $0x30] sm:$0xf]
      %v309 = vld [vmem:[%s236 + $0x34] sm:$0xf]
      %v310 = vld [vmem:[%s236 + $0x38] sm:$0xf]
      %v311 = vld [vmem:[%s236 + $0x3c] sm:$0xf]
      %v312 = vld [vmem:[%s245] sm:$0xf]
      %v313 = vld [vmem:[%s245 + $0x4] sm:$0xf]
      %v314 = vld [vmem:[%s245 + $0x8] sm:$0xf]
      %v315 = vld [vmem:[%s245 + $0xc] sm:$0xf]
      %v316 = vld [vmem:[%s245 + $0x10] sm:$0xf]
      %v317 = vld [vmem:[%s245 + $0x14] sm:$0xf]
      %v318 = vld [vmem:[%s245 + $0x18] sm:$0xf]
      %v319 = vld [vmem:[%s245 + $0x1c] sm:$0xf]
      %v336 = vunpack.c.l.b16 %v296
      %v337 = vunpack.c.l.b16 %v297
      %v338 = vunpack.c.l.b16 %v298
      %v339 = vunpack.c.l.b16 %v299
      %v340 = vunpack.c.l.b16 %v300
      %v341 = vunpack.c.l.b16 %v301
      %v342 = vunpack.c.l.b16 %v302
      %v343 = vunpack.c.l.b16 %v303
      %v344 = vunpack.c.l.b16 %v304
      %v345 = vunpack.c.l.b16 %v305
      %v346 = vunpack.c.l.b16 %v306
      %v347 = vunpack.c.l.b16 %v307
      %v348 = vunpack.c.l.b16 %v308
      %v349 = vunpack.c.l.b16 %v309
      %v350 = vunpack.c.l.b16 %v310
      %v351 = vunpack.c.l.b16 %v311
      %v352 = vpack.c.b16 %v337, %v336
      %v353 = vpack.c.b16 %v339, %v338
      %v354 = vpack.c.b16 %v341, %v340
      %v355 = vpack.c.b16 %v343, %v342
      %v356 = vpack.c.b16 %v345, %v344
      %v357 = vpack.c.b16 %v347, %v346
      %v358 = vpack.c.b16 %v349, %v348
      %v359 = vpack.c.b16 %v351, %v350
      %v368 = vunpack.c.l.b16 %v312
      %v369 = vunpack.c.l.b16 %v313
      %v370 = vunpack.c.l.b16 %v314
      %v371 = vunpack.c.l.b16 %v315
      %v372 = vunpack.c.l.b16 %v316
      %v373 = vunpack.c.l.b16 %v317
      %v374 = vunpack.c.l.b16 %v318
      %v375 = vunpack.c.l.b16 %v319
      %v376 = vpack.c.b16 %v369, %v368
      %v377 = vpack.c.b16 %v371, %v370
      %v378 = vpack.c.b16 %v373, %v372
      %v379 = vpack.c.b16 %v375, %v374
      %vm384 = vcmask 523264
      %v386 = vsel %vm384, %v352, 0
      %v389 = vsel %vm384, %v353, 0
      %v392 = vsel %vm384, %v354, 0
      %v395 = vsel %vm384, %v355, 0
      %v398 = vsel %vm384, %v356, 0
      %v401 = vsel %vm384, %v357, 0
      %v404 = vsel %vm384, %v358, 0
      %v407 = vsel %vm384, %v359, 0
      %409 = vmatprep.subr.bf16.mxu0 0
      %410 = vmatpush1.bf16.msra.mxu0 %v376
      %411 = vmatprep.subr.bf16.mxu0 0
      %412 = vmatpush1.bf16.msra.mxu0 %v377
      %413 = vmatprep.subr.bf16.mxu0 0
      %414 = vmatpush1.bf16.msra.mxu0 %v378
      %415 = vmatprep.subr.bf16.mxu0 0
      %416 = vmatpush1.bf16.msra.mxu0 %v379
      %417 = vmatprep.subr.bf16.mxu0 0
      %418 = vmatpush1.bf16.msra.mxu0 0
      %419 = vmatprep.subr.bf16.mxu0 0
      %420 = vmatpush1.bf16.msra.mxu0 0
      %421 = vmatprep.subr.bf16.mxu0 0
      %422 = vmatpush1.bf16.msra.mxu0 0
      %423 = vmatprep.subr.bf16.mxu0 0
      %424 = vmatpush1.bf16.msra.mxu0 0
      %425 = vmatprep.subr.bf16.mxu0 0
      %426 = vmatpush1.bf16.msra.mxu0 0
      %427 = vmatprep.subr.bf16.mxu0 0
      %428 = vmatpush1.bf16.msra.mxu0 0
      %429 = vmatprep.subr.bf16.mxu0 0
      %430 = vmatpush1.bf16.msra.mxu0 0
      %431 = vmatprep.subr.bf16.mxu0 0
      %432 = vmatpush1.bf16.msra.mxu0 0
      %433 = vmatprep.subr.bf16.mxu0 0
      %434 = vmatpush1.bf16.msra.mxu0 0
      %435 = vmatprep.subr.bf16.mxu0 0
      %436 = vmatpush1.bf16.msra.mxu0 0
      %437 = vmatprep.subr.bf16.mxu0 0
      %438 = vmatpush1.bf16.msra.mxu0 0
      %439 = vmatprep.subr.bf16.mxu0 0
      %440 = vmatpush1.bf16.msra.mxu0 0
      %441 = vmatprep.mubr.bf16.mxu0 0
      %442 = vmatmul.mubr.bf16.gmra.mrb[0].mxu0 %v386
      %v443 = vpop.f32.mrb[0].mxu0
      %v444 = vadd.f32 0.0, %v443
      %v445 = vpop.f32.mrb[0].mxu0
      %v446 = vpop.f32.mrb[0].mxu0
      %v447 = vadd.f32 0.0, %v446
      %v448 = vpop.f32.mrb[0].mxu0
      %449 = vmatprep.mubr.bf16.mxu0 0
      %450 = vmatmul.mubr.bf16.gmra.mrb[0].mxu0 %v389
      %v451 = vpop.f32.mrb[0].mxu0
      %v452 = vadd.f32 0.0, %v451
      %v453 = vpop.f32.mrb[0].mxu0
      %v454 = vpop.f32.mrb[0].mxu0
      %v455 = vadd.f32 0.0, %v454
      %v456 = vpop.f32.mrb[0].mxu0
      %457 = vmatprep.mubr.bf16.mxu0 0
      %458 = vmatmul.mubr.bf16.gmra.mrb[0].mxu0 %v392
      %v459 = vpop.f32.mrb[0].mxu0
      %v460 = vadd.f32 0.0, %v459
      %v461 = vpop.f32.mrb[0].mxu0
      %v462 = vpop.f32.mrb[0].mxu0
      %v463 = vadd.f32 0.0, %v462
      %v464 = vpop.f32.mrb[0].mxu0
      %465 = vmatprep.mubr.bf16.mxu0 0
      %466 = vmatmul.mubr.bf16.gmra.mrb[0].mxu0 %v395
      %v467 = vpop.f32.mrb[0].mxu0
      %v468 = vadd.f32 0.0, %v467
      %v469 = vpop.f32.mrb[0].mxu0
      %v470 = vpop.f32.mrb[0].mxu0
      %v471 = vadd.f32 0.0, %v470
      %v472 = vpop.f32.mrb[0].mxu0
      %473 = vmatprep.mubr.bf16.mxu0 0
      %474 = vmatmul.mubr.bf16.gmra.mrb[0].mxu0 %v398
      %v475 = vpop.f32.mrb[0].mxu0
      %v476 = vadd.f32 0.0, %v475
      %v477 = vpop.f32.mrb[0].mxu0
      %v478 = vpop.f32.mrb[0].mxu0
      %v479 = vadd.f32 0.0, %v478
      %v480 = vpop.f32.mrb[0].mxu0
      %481 = vmatprep.mubr.bf16.mxu0 0
      %482 = vmatmul.mubr.bf16.gmra.mrb[0].mxu0 %v401
      %v483 = vpop.f32.mrb[0].mxu0
      %v484 = vadd.f32 0.0, %v483
      %v485 = vpop.f32.mrb[0].mxu0
      %v486 = vpop.f32.mrb[0].mxu0
      %v487 = vadd.f32 0.0, %v486
      %v488 = vpop.f32.mrb[0].mxu0
      %489 = vmatprep.mubr.bf16.mxu0 0
      %490 = vmatmul.mubr.bf16.gmra.mrb[0].mxu0 %v404
      %v491 = vpop.f32.mrb[0].mxu0
      %v492 = vadd.f32 0.0, %v491
      %v493 = vpop.f32.mrb[0].mxu0
      %v494 = vpop.f32.mrb[0].mxu0
      %v495 = vadd.f32 0.0, %v494
      %v496 = vpop.f32.mrb[0].mxu0
      %497 = vmatprep.mubr.bf16.mxu0 0
      %498 = vmatmul.mubr.bf16.gmra.mrb[0].mxu0 %v407
      %v499 = vpop.f32.mrb[0].mxu0
      %v500 = vadd.f32 0.0, %v499
      %v501 = vpop.f32.mrb[0].mxu0
      %v502 = vpop.f32.mrb[0].mxu0
      %v503 = vadd.f32 0.0, %v502
      %v504 = vpop.f32.mrb[0].mxu0
      %505 = vdwg.mxu0
      %v506 = vadd.f32 %v280, %v444
      %v507 = vadd.f32 %v281, %v447
      %v508 = vadd.f32 %v282, %v452
      %v509 = vadd.f32 %v283, %v455
      %v510 = vadd.f32 %v284, %v460
      %v511 = vadd.f32 %v285, %v463
      %v512 = vadd.f32 %v286, %v468
      %v513 = vadd.f32 %v287, %v471
      %v514 = vadd.f32 %v288, %v476
      %v515 = vadd.f32 %v289, %v479
      %v516 = vadd.f32 %v290, %v484
      %v517 = vadd.f32 %v291, %v487
      %v518 = vadd.f32 %v292, %v492
      %v519 = vadd.f32 %v293, %v495
      %v520 = vadd.f32 %v294, %v500
      %v521 = vadd.f32 %v295, %v503
      %522 = vst [vmem:[#allocation2] sm:$0xff] %v506
      %523 = vst [vmem:[#allocation2 + $0x8] sm:$0xff] %v507
      %524 = vst [vmem:[#allocation2 + $0x10] sm:$0xff] %v508
      %525 = vst [vmem:[#allocation2 + $0x18] sm:$0xff] %v509
      %526 = vst [vmem:[#allocation2 + $0x20] sm:$0xff] %v510
      %527 = vst [vmem:[#allocation2 + $0x28] sm:$0xff] %v511
      %528 = vst [vmem:[#allocation2 + $0x30] sm:$0xff] %v512
      %529 = vst [vmem:[#allocation2 + $0x38] sm:$0xff] %v513
      %530 = vst [vmem:[#allocation2 + $0x40] sm:$0xff] %v514
      %531 = vst [vmem:[#allocation2 + $0x48] sm:$0xff] %v515
      %532 = vst [vmem:[#allocation2 + $0x50] sm:$0xff] %v516
      %533 = vst [vmem:[#allocation2 + $0x58] sm:$0xff] %v517
      %534 = vst [vmem:[#allocation2 + $0x60] sm:$0xff] %v518
      %535 = vst [vmem:[#allocation2 + $0x68] sm:$0xff] %v519
      %536 = vst [vmem:[#allocation2 + $0x70] sm:$0xff] %v520
      %537 = vst [vmem:[#allocation2 + $0x78] sm:$0xff] %v521
      // Predicated region
      $region37: #{_lambda_.28} parent=31 // pred_check
        %p538 = pneg %p260
      $region38: #{_lambda_.28} parent=31 // pred_check_branch
        %540 = sbr.rel (%p538) target = $region40
      $region39: #{_lambda_.28} parent=31 // pred_region
        %v541 = vld [vmem:[#allocation2] sm:$0xff]
        %v542 = vld [vmem:[#allocation2 + $0x8] sm:$0xff]
        %v543 = vld [vmem:[#allocation2 + $0x10] sm:$0xff]
        %v544 = vld [vmem:[#allocation2 + $0x18] sm:$0xff]
        %v545 = vld [vmem:[#allocation2 + $0x20] sm:$0xff]
        %v546 = vld [vmem:[#allocation2 + $0x28] sm:$0xff]
        %v547 = vld [vmem:[#allocation2 + $0x30] sm:$0xff]
        %v548 = vld [vmem:[#allocation2 + $0x38] sm:$0xff]
        %v549 = vld [vmem:[#allocation2 + $0x40] sm:$0xff]
        %v550 = vld [vmem:[#allocation2 + $0x48] sm:$0xff]
        %v551 = vld [vmem:[#allocation2 + $0x50] sm:$0xff]
        %v552 = vld [vmem:[#allocation2 + $0x58] sm:$0xff]
        %v553 = vld [vmem:[#allocation2 + $0x60] sm:$0xff]
        %v554 = vld [vmem:[#allocation2 + $0x68] sm:$0xff]
        %v555 = vld [vmem:[#allocation2 + $0x70] sm:$0xff]
        %v556 = vld [vmem:[#allocation2 + $0x78] sm:$0xff]
        %v557 = vld [vmem:[%s249] sm:$0x1]
        %v559 = vlaneseq
        %v560 = vshrl.u32 %v559, 7
        %v561 = vsub.s32 0, %v560
        %v562 = vrot.slane %v557, %v561
        %v564 = vadd.f32 %v541, %v562
        %v565 = vadd.f32 %v542, %v562
        %v566 = vadd.f32 %v543, %v562
        %v567 = vadd.f32 %v544, %v562
        %v568 = vadd.f32 %v545, %v562
        %v569 = vadd.f32 %v546, %v562
        %v570 = vadd.f32 %v547, %v562
        %v571 = vadd.f32 %v548, %v562
        %v572 = vadd.f32 %v549, %v562
        %v573 = vadd.f32 %v550, %v562
        %v574 = vadd.f32 %v551, %v562
        %v575 = vadd.f32 %v552, %v562
        %v576 = vadd.f32 %v553, %v562
        %v577 = vadd.f32 %v554, %v562
        %v578 = vadd.f32 %v555, %v562
        %v579 = vadd.f32 %v556, %v562
        %v580 = vmax.f32 %v564, 0.0
        %v581 = vmax.f32 %v565, 0.0
        %v582 = vmax.f32 %v566, 0.0
        %v583 = vmax.f32 %v567, 0.0
        %v584 = vmax.f32 %v568, 0.0
        %v585 = vmax.f32 %v569, 0.0
        %v586 = vmax.f32 %v570, 0.0
        %v587 = vmax.f32 %v571, 0.0
        %v588 = vmax.f32 %v572, 0.0
        %v589 = vmax.f32 %v573, 0.0
        %v590 = vmax.f32 %v574, 0.0
        %v591 = vmax.f32 %v575, 0.0
        %v592 = vmax.f32 %v576, 0.0
        %v593 = vmax.f32 %v577, 0.0
        %v594 = vmax.f32 %v578, 0.0
        %v595 = vmax.f32 %v579, 0.0
        %v596 = vpack.c.bf16 %v581, %v580
        %v597 = vpack.c.bf16 %v583, %v582
        %v598 = vpack.c.bf16 %v585, %v584
        %v599 = vpack.c.bf16 %v587, %v586
        %v600 = vpack.c.bf16 %v589, %v588
        %v601 = vpack.c.bf16 %v591, %v590
        %v602 = vpack.c.bf16 %v593, %v592
        %v603 = vpack.c.bf16 %v595, %v594
        %v612 = vunpack.c.l.b16 %v596
        %v613 = vunpack.c.h.b16 %v596
        %v614 = vunpack.c.l.b16 %v597
        %v615 = vunpack.c.h.b16 %v597
        %v616 = vunpack.c.l.b16 %v598
        %v617 = vunpack.c.h.b16 %v598
        %v618 = vunpack.c.l.b16 %v599
        %v619 = vunpack.c.h.b16 %v599
        %v620 = vunpack.c.l.b16 %v600
        %v621 = vunpack.c.h.b16 %v600
        %v622 = vunpack.c.l.b16 %v601
        %v623 = vunpack.c.h.b16 %v601
        %v624 = vunpack.c.l.b16 %v602
        %v625 = vunpack.c.h.b16 %v602
        %v626 = vunpack.c.l.b16 %v603
        %v627 = vunpack.c.h.b16 %v603
        %v628 = vpack.c.b16 %v612, %v612
        %v629 = vpack.c.b16 %v613, %v613
        %v630 = vpack.c.b16 %v614, %v614
        %v631 = vpack.c.b16 %v615, %v615
        %v632 = vpack.c.b16 %v616, %v616
        %v633 = vpack.c.b16 %v617, %v617
        %v634 = vpack.c.b16 %v618, %v618
        %v635 = vpack.c.b16 %v619, %v619
        %v636 = vpack.c.b16 %v620, %v620
        %v637 = vpack.c.b16 %v621, %v621
        %v638 = vpack.c.b16 %v622, %v622
        %v639 = vpack.c.b16 %v623, %v623
        %v640 = vpack.c.b16 %v624, %v624
        %v641 = vpack.c.b16 %v625, %v625
        %v642 = vpack.c.b16 %v626, %v626
        %v643 = vpack.c.b16 %v627, %v627
        %660 = vst [vmem:[%s257] sm:$0xf] %v628
        %661 = vst [vmem:[%s257 + $0x4] sm:$0xf] %v629
        %662 = vst [vmem:[%s257 + $0x8] sm:$0xf] %v630
        %663 = vst [vmem:[%s257 + $0xc] sm:$0xf] %v631
        %664 = vst [vmem:[%s257 + $0x10] sm:$0xf] %v632
        %665 = vst [vmem:[%s257 + $0x14] sm:$0xf] %v633
        %666 = vst [vmem:[%s257 + $0x18] sm:$0xf] %v634
        %667 = vst [vmem:[%s257 + $0x1c] sm:$0xf] %v635
        %668 = vst [vmem:[%s257 + $0x20] sm:$0xf] %v636
        %669 = vst [vmem:[%s257 + $0x24] sm:$0xf] %v637
        %670 = vst [vmem:[%s257 + $0x28] sm:$0xf] %v638
        %671 = vst [vmem:[%s257 + $0x2c] sm:$0xf] %v639
        %672 = vst [vmem:[%s257 + $0x30] sm:$0xf] %v640
        %673 = vst [vmem:[%s257 + $0x34] sm:$0xf] %v641
        %674 = vst [vmem:[%s257 + $0x38] sm:$0xf] %v642
        %675 = vst [vmem:[%s257 + $0x3c] sm:$0xf] %v643
      $region40: #{_lambda_.28} parent=31 // pred_fallthru
        _
      %s676 = smul.u32 16, %s19
      %p677 = scmp.lt.s32.totalorder %s676, 63
      %s678 = scalar_select %p677, %s676, 63
      %p679 = scmp.lt.s32.totalorder %s20, 0
      %s680 = scalar_select %p679, %s20, 0
      %s681 = sadd.s32 %s680, %s678
      %s682 = smul.addr %s681, 4
      %s683 = scalar_lea.vmem %s3, %s682
      // Predicated region
      $region41: #{_lambda_.28} parent=31 // pred_check
        %p684 = pneg %p135
      $region42: #{_lambda_.28} parent=31 // pred_check_branch
        %686 = sbr.rel (%p684) target = $region44
      $region43: #{_lambda_.28} parent=31 // pred_region
        %s687 = smul.u32 16, %s19
      $region44: #{_lambda_.28} parent=31 // pred_fallthru
        _
    $region32: #{_lambda_.28} parent=5 // pred_fallthru
      _
    %p688 = scmp.le.s32.totalorder 2, %s9
    // Predicated region
    $region45: #{_lambda_.28} parent=5 // pred_check
      %p689 = pneg %p688
    $region46: #{_lambda_.28} parent=5 // pred_check_branch
      %691 = sbr.rel (%p689) target = $region48
    $region47: #{_lambda_.28} parent=5 // pred_region
      %s692 = ssub.s32 %s9, 2
      // Predicated region
      $region49: #{_lambda_.28} parent=47 // pred_check
        %p693 = pneg %p141
      $region50: #{_lambda_.28} parent=47 // pred_check_branch
        %695 = sbr.rel (%p693) target = $region52
      $region51: #{_lambda_.28} parent=47 // pred_region
        %s696 = smul.u32 16, %s22
        %p697 = scmp.lt.s32.totalorder %s696, 63
        %s698 = scalar_select %p697, %s696, 63
        %p699 = scmp.lt.s32.totalorder %s23, 0
        %s700 = scalar_select %p699, %s23, 0
        %s701 = sadd.s32 %s700, %s698
        %s702 = smul.addr %s701, 4
        %s703 = scalar_lea.vmem %s3, %s702
      $region52: #{_lambda_.28} parent=47 // pred_fallthru
        _
    $region48: #{_lambda_.28} parent=5 // pred_fallthru
      _
  $region6: #{_lambda_.28} parent=0 // loop_footer
    %s13 = sadd.s32 1, %s9
  $region7: #{_lambda_.28} parent=0 // loop_footer_branch
    %8 = sbr.rel target = $region3
  $region8: #{_lambda_.28} parent=0 // loop_exit
    _

// kernel: _lambda_.32
$region0: #{_lambda_.32}
  #allocation0 [shape = 'u32[]', space=smem, size = 0x4, offset = 0x4, fixed_abs, tag = 'smem constant byte address 0x4 - core index']
  #allocation1 [shape = 'u32[144,128]{1,0:T(1,128)}', space=vmem, size = 0x12000, scoped, tag = 'internal scratch']
  #allocation2 [shape = 'f32[64,128]{1,0:T(8,128)}', space=vmem, size = 0x8000, scoped, tag = 'scratch operand']
  %s0 = inlined_call_operand.vmem [shape: bf16[128,288], index: 0, kind: input, shape index: {}]
  %s1 = inlined_call_operand.vmem [shape: bf16[288,128], index: 1, kind: input, shape index: {}]
  %s2 = inlined_call_operand.vmem [shape: f32[1,128], index: 2, kind: input, shape index: {}]
  %s3 = inlined_call_operand.vmem [shape: bf16[128,128], index: 3, kind: output, shape index: {}]
  %s4 = sld [smem:[#allocation0]]
  $region53: #{_lambda_.32} parent=0
    _
  %s6 = ssub.s32 1, %s4
  %s7 = scalar_select 0, %s6, %s4
  loop: start=0, step=1, limit=4
  $region2: #{_lambda_.32} parent=0 // loop_pre_header
    _
  $region3: #{_lambda_.32} parent=0 // loop_header
    %s9 = sphi 0, %s13
    %p10 = scmp.ge.s32.totalorder %s9, 4
    %s16 = sphi 0, %s35
    %s17 = sphi 0, %s31
    %s18 = sphi 0, %s27
    %s19 = sphi 0, %s16
    %s20 = sphi 0, %s17
    %s21 = sphi 0, %s18
    %s22 = sphi 0, %s19
    %s23 = sphi 0, %s20
    %s24 = sphi 0, %s21
    %s40 = sphi 0, %s42
    %s43 = sphi 0, %s40
    %s44 = sphi 0, %s43
    %s60 = sphi 0, %s44
    %s68 = sphi 0, %s70
    %s71 = sphi 0, %s68
    %s72 = sphi 0, %s71
    %s88 = sphi 0, %s72
    %s94 = sphi 0, %s96
    %s97 = sphi 0, %s94
    %s98 = sphi 0, %s97
    %s114 = sphi 0, %s98
    %s122 = sphi 0, %s124
    %s125 = sphi 0, %s122
    %s126 = sphi 0, %s125
    %s142 = sphi 0, %s126
  $region4: #{_lambda_.32} parent=0 // loop_header_branch
    %12 = sbr.rel (%p10) target = $region8
  $region5: #{_lambda_.32} parent=0 // loop_body
    %s14 = ssub.s32 %s9, 1
    %s15 = ssub.s32 %s9, 2
    %s25 = sadd.s32 1, %s18
    %p26 = scmp.ge.s32.totalorder %s25, 1
    %s27 = scalar_select %p26, 0, %s25
    %s28 = sadd.s32 1, %s17
    %s29 = scalar_select %p26, %s28, %s17
    %p30 = scmp.ge.s32.totalorder %s29, 1
    %s31 = scalar_select %p30, 0, %s29
    %s32 = sadd.s32 1, %s16
    %s33 = scalar_select %p30, %s32, %s16
    %p34 = scmp.ge.s32.totalorder %s33, 2
    %s35 = scalar_select %p34, 0, %s33
    %s36 = ssub.s32 %s16, %s35
    %s37 = ssub.s32 %s18, %s27
    %s38 = sor.u32 %s36, %s37
    %p39 = scmp.eq.s32.totalorder %s38, 0
    %s41 = sadd.s32 %s40, 1
    %s42 = scalar_select %p39, %s40, %s41
    %p45 = pneg %p39
    %p46 = scmp.eq.s32.totalorder %s9, 1
    %p47 = por %p45, %p46
    %p48 = scmp.ne.s32.totalorder %s40, %s43
    %p49 = scmp.eq.s32.totalorder %s9, 0
    %p50 = por %p48, %p49
    %p51 = scmp.ne.s32.totalorder %s40, %s43
    %p52 = scmp.eq.s32.totalorder %s14, 1
    %p53 = por %p51, %p52
    %p54 = scmp.ne.s32.totalorder %s43, %s44
    %p55 = scmp.eq.s32.totalorder %s14, 0
    %p56 = por %p54, %p55
    %p57 = scmp.ne.s32.totalorder %s43, %s44
    %p58 = scmp.eq.s32.totalorder %s15, 1
    %p59 = por %p57, %p58
    %p61 = scmp.ne.s32.totalorder %s44, %s60
    %p62 = scmp.eq.s32.totalorder %s15, 0
    %p63 = por %p61, %p62
    %s64 = ssub.s32 %s18, %s27
    %s65 = ssub.s32 %s17, %s31
    %s66 = sor.u32 %s64, %s65
    %p67 = scmp.eq.s32.totalorder %s66, 0
    %s69 = sadd.s32 %s68, 1
    %s70 = scalar_select %p67, %s68, %s69
    %p73 = pneg %p67
    %p74 = scmp.eq.s32.totalorder %s9, 1
    %p75 = por %p73, %p74
    %p76 = scmp.ne.s32.totalorder %s68, %s71
    %p77 = scmp.eq.s32.totalorder %s9, 0
    %p78 = por %p76, %p77
    %p79 = scmp.ne.s32.totalorder %s68, %s71
    %p80 = scmp.eq.s32.totalorder %s14, 1
    %p81 = por %p79, %p80
    %p82 = scmp.ne.s32.totalorder %s71, %s72
    %p83 = scmp.eq.s32.totalorder %s14, 0
    %p84 = por %p82, %p83
    %p85 = scmp.ne.s32.totalorder %s71, %s72
    %p86 = scmp.eq.s32.totalorder %s15, 1
    %p87 = por %p85, %p86
    %p89 = scmp.ne.s32.totalorder %s72, %s88
    %p90 = scmp.eq.s32.totalorder %s15, 0
    %p91 = por %p89, %p90
    %s92 = ssub.s32 %s17, %s31
    %p93 = scmp.eq.s32.totalorder %s92, 0
    %s95 = sadd.s32 %s94, 1
    %s96 = scalar_select %p93, %s94, %s95
    %p99 = pneg %p93
    %p100 = scmp.eq.s32.totalorder %s9, 1
    %p101 = por %p99, %p100
    %p102 = scmp.ne.s32.totalorder %s94, %s97
    %p103 = scmp.eq.s32.totalorder %s9, 0
    %p104 = por %p102, %p103
    %p105 = scmp.ne.s32.totalorder %s94, %s97
    %p106 = scmp.eq.s32.totalorder %s14, 1
    %p107 = por %p105, %p106
    %p108 = scmp.ne.s32.totalorder %s97, %s98
    %p109 = scmp.eq.s32.totalorder %s14, 0
    %p110 = por %p108, %p109
    %p111 = scmp.ne.s32.totalorder %s97, %s98
    %p112 = scmp.eq.s32.totalorder %s15, 1
    %p113 = por %p111, %p112
    %p115 = scmp.ne.s32.totalorder %s98, %s114
    %p116 = scmp.eq.s32.totalorder %s15, 0
    %p117 = por %p115, %p116
    %s118 = ssub.s32 %s16, %s35
    %s119 = ssub.s32 %s17, %s31
    %s120 = sor.u32 %s118, %s119
    %p121 = scmp.eq.s32.totalorder %s120, 0
    %s123 = sadd.s32 %s122, 1
    %s124 = scalar_select %p121, %s122, %s123
    %p127 = pneg %p121
    %p128 = scmp.eq.s32.totalorder %s9, 1
    %p129 = por %p127, %p128
    %p130 = scmp.ne.s32.totalorder %s122, %s125
    %p131 = scmp.eq.s32.totalorder %s9, 0
    %p132 = por %p130, %p131
    %p133 = scmp.ne.s32.totalorder %s122, %s125
    %p134 = scmp.eq.s32.totalorder %s14, 1
    %p135 = por %p133, %p134
    %p136 = scmp.ne.s32.totalorder %s125, %s126
    %p137 = scmp.eq.s32.totalorder %s14, 0
    %p138 = por %p136, %p137
    %p139 = scmp.ne.s32.totalorder %s125, %s126
    %p140 = scmp.eq.s32.totalorder %s15, 1
    %p141 = por %p139, %p140
    %p143 = scmp.ne.s32.totalorder %s126, %s142
    %p144 = scmp.eq.s32.totalorder %s15, 0
    %p145 = por %p143, %p144
    %p146 = scmp.le.s32.totalorder 1, %s9
    %p147 = scmp.lt.s32.totalorder %s9, 3
    %p148 = pnand %p146, %p147
    %p149 = pneg %p148
    // Predicated region
    $region9: #{_lambda_.32} parent=5 // pred_check
      _
    $region10: #{_lambda_.32} parent=5 // pred_check_branch
      %151 = sbr.rel (%p148) target = $region12
    $region11: #{_lambda_.32} parent=5 // pred_region
      %s152 = ssub.s32 %s9, 1
      // Predicated region
      $region13: #{_lambda_.32} parent=11 // pred_check
        %p153 = pneg %p84
      $region14: #{_lambda_.32} parent=11 // pred_check_branch
        %155 = sbr.rel (%p153) target = $region16
      $region15: #{_lambda_.32} parent=11 // pred_region
        %s156 = smul.u32 36, %s21
        %p157 = scmp.lt.s32.totalorder %s156, 35
        %s158 = scalar_select %p157, %s156, 35
        %p159 = scmp.lt.s32.totalorder %s20, 0
        %s160 = scalar_select %p159, %s20, 0
        %s161 = sadd.s32 %s160, %s158
        %s162 = smul.addr %s161, 4
        %s163 = scalar_lea.vmem %s1, %s162
        %s164 = smul.u32 36, %s21
      $region16: #{_lambda_.32} parent=11 // pred_fallthru
        _
      // Predicated region
      $region17: #{_lambda_.32} parent=11 // pred_check
        %p165 = pneg %p110
      $region18: #{_lambda_.32} parent=11 // pred_check_branch
        %167 = sbr.rel (%p165) target = $region20
      $region19: #{_lambda_.32} parent=11 // pred_region
        %p168 = scmp.lt.s32.totalorder %s20, 0
        %s169 = scalar_select %p168, %s20, 0
        %s170 = scalar_lea.vmem %s2, %s169
      $region20: #{_lambda_.32} parent=11 // pred_fallthru
        _
    $region12: #{_lambda_.32} parent=5 // pred_fallthru
      _
    %p171 = scmp.lt.s32.totalorder %s9, 2
    // Predicated region
    $region21: #{_lambda_.32} parent=5 // pred_check
      %p172 = pneg %p171
    $region22: #{_lambda_.32} parent=5 // pred_check_branch
      %174 = sbr.rel (%p172) target = $region24
    $region23: #{_lambda_.32} parent=5 // pred_region
      // Predicated region
      $region25: #{_lambda_.32} parent=23 // pred_check
        %p175 = pneg %p50
      $region26: #{_lambda_.32} parent=23 // pred_check_branch
        %177 = sbr.rel (%p175) target = $region28
      $region27: #{_lambda_.32} parent=23 // pred_region
        %s178 = smul.u32 8, %s16
        %s179 = smul.u32 3, %s18
        %p180 = scmp.lt.s32.totalorder %s178, 15
        %s181 = scalar_select %p180, %s178, 15
        %p182 = scmp.lt.s32.totalorder %s179, 2
        %s183 = scalar_select %p182, %s179, 2
        %s184 = smul.addr %s181, 3
        %s185 = sadd.s32 %s183, %s184
        %s186 = smul.addr %s185, 4
        %s187 = scalar_lea.vmem %s0, %s186
        %s188 = smul.u32 8, %s16
        %s189 = smul.u32 3, %s18
      $region28: #{_lambda_.32} parent=23 // pred_fallthru
        _
    $region24: #{_lambda_.32} parent=5 // pred_fallthru
      _
    %p190 = scmp.le.s32.totalorder 1, %s9
    %p191 = scmp.lt.s32.totalorder %s9, 3
    %p192 = pnand %p190, %p191
    %p193 = pneg %p192
    // Predicated region
    $region29: #{_lambda_.32} parent=5 // pred_check
      _
    $region30: #{_lambda_.32} parent=5 // pred_check_branch
      %195 = sbr.rel (%p192) target = $region32
    $region31: #{_lambda_.32} parent=5 // pred_region
      %s196 = ssub.s32 %s9, 1
      %s197 = smul.u32 8, %s19
      %s198 = smul.u32 3, %s21
      %p199 = scmp.lt.s32.totalorder %s197, 15
      %s200 = scalar_select %p199, %s197, 15
      %p201 = scmp.lt.s32.totalorder %s198, 2
      %s202 = scalar_select %p201, %s198, 2
      %s203 = smul.addr %s200, 3
      %s204 = sadd.s32 %s202, %s203
      %s205 = smul.addr %s204, 4
      %s206 = scalar_lea.vmem %s0, %s205
      %p207 = pneg %p56
      %p208 = pneg %p53
      %s209 = smul.u32 36, %s21
      %p210 = scmp.lt.s32.totalorder %s209, 35
      %s211 = scalar_select %p210, %s209, 35
      %p212 = scmp.lt.s32.totalorder %s20, 0
      %s213 = scalar_select %p212, %s20, 0
      %s214 = sadd.s32 %s213, %s211
      %s215 = smul.addr %s214, 4
      %s216 = scalar_lea.vmem %s1, %s215
      %p217 = pneg %p84
      %p218 = pneg %p81
      %p219 = scmp.lt.s32.totalorder %s20, 0
      %s220 = scalar_select %p219, %s20, 0
      %s221 = scalar_lea.vmem %s2, %s220
      %p222 = pneg %p110
      %p223 = pneg %p107
      %p224 = pneg %p138
      %p225 = pneg %p135
      %s226 = smul.u32 8, %s19
      %p227 = scmp.lt.s32.totalorder %s226, 15
      %s228 = scalar_select %p227, %s226, 15
      %p229 = scmp.lt.s32.totalorder %s20, 0
      %s230 = scalar_select %p229, %s20, 0
      %s231 = sadd.s32 %s230, %s228
      %s232 = smul.addr %s231, 4
      %s233 = scalar_lea.vmem %s3, %s232
      %s234 = smul.u32 8, %s19
      %s235 = smul.u32 3, %s21
      %p236 = scmp.lt.s32.totalorder %s234, 15
      %s237 = scalar_select %p236, %s234, 15
      %p238 = scmp.lt.s32.totalorder %s235, 2
      %s239 = scalar_select %p238, %s235, 2
      %s240 = smul.addr %s237, 3
      %s241 = sadd.s32 %s239, %s240
      %s242 = smul.addr %s241, 4
      %s243 = scalar_lea.vmem %s0, %s242
      %s244 = smul.u32 8, %s19
      %s245 = smul.u32 3, %s21
      %s246 = smul.u32 36, %s21
      %p247 = scmp.lt.s32.totalorder %s246, 35
      %s248 = scalar_select %p247, %s246, 35
      %p249 = scmp.lt.s32.totalorder %s20, 0
      %s250 = scalar_select %p249, %s20, 0
      %s251 = sadd.s32 %s250, %s248
      %s252 = smul.addr %s251, 4
      %s253 = scalar_lea.vmem %s1, %s252
      %s254 = smul.u32 36, %s21
      %p255 = scmp.lt.s32.totalorder %s20, 0
      %s256 = scalar_select %p255, %s20, 0
      %s257 = scalar_lea.vmem %s2, %s256
      %s258 = smul.u32 8, %s19
      %p259 = scmp.lt.s32.totalorder %s258, 15
      %s260 = scalar_select %p259, %s258, 15
      %p261 = scmp.lt.s32.totalorder %s20, 0
      %s262 = scalar_select %p261, %s20, 0
      %s263 = sadd.s32 %s262, %s260
      %s264 = smul.addr %s263, 4
      %s265 = scalar_lea.vmem %s3, %s264
      %s266 = smul.u32 8, %s19
      %p268 = scmp.eq.s32.totalorder %s21, 0
      // Predicated region
      $region33: #{_lambda_.32} parent=31 // pred_check
        %p269 = pneg %p268
      $region34: #{_lambda_.32} parent=31 // pred_check_branch
        %271 = sbr.rel (%p269) target = $region36
      $region35: #{_lambda_.32} parent=31 // pred_region
        %272 = vst [vmem:[#allocation2] sm:$0xff] 0.0
        %273 = vst [vmem:[#allocation2 + $0x8] sm:$0xff] 0.0
        %274 = vst [vmem:[#allocation2 + $0x10] sm:$0xff] 0.0
        %275 = vst [vmem:[#allocation2 + $0x18] sm:$0xff] 0.0
        %276 = vst [vmem:[#allocation2 + $0x20] sm:$0xff] 0.0
        %277 = vst [vmem:[#allocation2 + $0x28] sm:$0xff] 0.0
        %278 = vst [vmem:[#allocation2 + $0x30] sm:$0xff] 0.0
        %279 = vst [vmem:[#allocation2 + $0x38] sm:$0xff] 0.0
      $region36: #{_lambda_.32} parent=31 // pred_fallthru
        _
      %v280 = vld [vmem:[#allocation2] sm:$0xff]
      %v281 = vld [vmem:[#allocation2 + $0x8] sm:$0xff]
      %v282 = vld [vmem:[#allocation2 + $0x10] sm:$0xff]
      %v283 = vld [vmem:[#allocation2 + $0x18] sm:$0xff]
      %v284 = vld [vmem:[#allocation2 + $0x20] sm:$0xff]
      %v285 = vld [vmem:[#allocation2 + $0x28] sm:$0xff]
      %v286 = vld [vmem:[#allocation2 + $0x30] sm:$0xff]
      %v287 = vld [vmem:[#allocation2 + $0x38] sm:$0xff]
      %v288 = vld [vmem:[%s243] sm:$0xff]
      %v289 = vld [vmem:[%s243 + $0x8] sm:$0xf]
      %v290 = vld [vmem:[%s243 + $0xc] sm:$0xff]
      %v291 = vld [vmem:[%s243 + $0x14] sm:$0xf]
      %v292 = vld [vmem:[%s243 + $0x18] sm:$0xff]
      %v293 = vld [vmem:[%s243 + $0x20] sm:$0xf]
      %v294 = vld [vmem:[%s243 + $0x24] sm:$0xff]
      %v295 = vld [vmem:[%s243 + $0x2c] sm:$0xf]
      %v296 = vld [vmem:[%s243 + $0x30] sm:$0xff]
      %v297 = vld [vmem:[%s243 + $0x38] sm:$0xf]
      %v298 = vld [vmem:[%s243 + $0x3c] sm:$0xff]
      %v299 = vld [vmem:[%s243 + $0x44] sm:$0xf]
      %v300 = vld [vmem:[%s243 + $0x48] sm:$0xff]
      %v301 = vld [vmem:[%s243 + $0x50] sm:$0xf]
      %v302 = vld [vmem:[%s243 + $0x54] sm:$0xff]
      %v303 = vld [vmem:[%s243 + $0x5c] sm:$0xf]
      %v304 = vld [vmem:[%s253] sm:$0xf]
      %v305 = vld [vmem:[%s253 + $0x4] sm:$0xf]
      %v306 = vld [vmem:[%s253 + $0x8] sm:$0xf]
      %v307 = vld [vmem:[%s253 + $0xc] sm:$0xf]
      %v308 = vld [vmem:[%s253 + $0x10] sm:$0xf]
      %v309 = vld [vmem:[%s253 + $0x14] sm:$0xf]
      %v310 = vld [vmem:[%s253 + $0x18] sm:$0xf]
      %v311 = vld [vmem:[%s253 + $0x1c] sm:$0xf]
      %v312 = vld [vmem:[%s253 + $0x20] sm:$0xf]
      %v313 = vld [vmem:[%s253 + $0x24] sm:$0xf]
      %v314 = vld [vmem:[%s253 + $0x28] sm:$0xf]
      %v315 = vld [vmem:[%s253 + $0x2c] sm:$0xf]
      %v316 = vld [vmem:[%s253 + $0x30] sm:$0xf]
      %v317 = vld [vmem:[%s253 + $0x34] sm:$0xf]
      %v318 = vld [vmem:[%s253 + $0x38] sm:$0xf]
      %v319 = vld [vmem:[%s253 + $0x3c] sm:$0xf]
      %v320 = vld [vmem:[%s253 + $0x40] sm:$0xf]
      %v321 = vld [vmem:[%s253 + $0x44] sm:$0xf]
      %v322 = vld [vmem:[%s253 + $0x48] sm:$0xf]
      %v323 = vld [vmem:[%s253 + $0x4c] sm:$0xf]
      %v324 = vld [vmem:[%s253 + $0x50] sm:$0xf]
      %v325 = vld [vmem:[%s253 + $0x54] sm:$0xf]
      %v326 = vld [vmem:[%s253 + $0x58] sm:$0xf]
      %v327 = vld [vmem:[%s253 + $0x5c] sm:$0xf]
      %v328 = vld [vmem:[%s253 + $0x60] sm:$0xf]
      %v329 = vld [vmem:[%s253 + $0x64] sm:$0xf]
      %v330 = vld [vmem:[%s253 + $0x68] sm:$0xf]
      %v331 = vld [vmem:[%s253 + $0x6c] sm:$0xf]
      %v332 = vld [vmem:[%s253 + $0x70] sm:$0xf]
      %v333 = vld [vmem:[%s253 + $0x74] sm:$0xf]
      %v334 = vld [vmem:[%s253 + $0x78] sm:$0xf]
      %v335 = vld [vmem:[%s253 + $0x7c] sm:$0xf]
      %v336 = vld [vmem:[%s253 + $0x80] sm:$0xf]
      %v337 = vld [vmem:[%s253 + $0x84] sm:$0xf]
      %v338 = vld [vmem:[%s253 + $0x88] sm:$0xf]
      %v339 = vld [vmem:[%s253 + $0x8c] sm:$0xf]
      %v356 = vunpack.c.l.b16 %v288
      %v357 = vunpack.c.h.b16 %v288
      %v358 = vunpack.c.l.b16 %v289
      %v359 = vunpack.c.l.b16 %v290
      %v360 = vunpack.c.h.b16 %v290
      %v361 = vunpack.c.l.b16 %v291
      %v362 = vunpack.c.l.b16 %v292
      %v363 = vunpack.c.h.b16 %v292
      %v364 = vunpack.c.l.b16 %v293
      %v365 = vunpack.c.l.b16 %v294
      %v366 = vunpack.c.h.b16 %v294
      %v367 = vunpack.c.l.b16 %v295
      %v368 = vunpack.c.l.b16 %v296
      %v369 = vunpack.c.h.b16 %v296
      %v370 = vunpack.c.l.b16 %v297
      %v371 = vunpack.c.l.b16 %v298
      %v372 = vunpack.c.h.b16 %v298
      %v373 = vunpack.c.l.b16 %v299
      %v374 = vunpack.c.l.b16 %v300
      %v375 = vunpack.c.h.b16 %v300
      %v376 = vunpack.c.l.b16 %v301
      %v377 = vunpack.c.l.b16 %v302
      %v378 = vunpack.c.h.b16 %v302
      %v379 = vunpack.c.l.b16 %v303
      %v380 = vpack.c.b16 %v359, %v356
      %v381 = vpack.c.b16 %v360, %v357
      %v382 = vpack.c.b16 %v361, %v358
      %v383 = vpack.c.b16 %v365, %v362
      %v384 = vpack.c.b16 %v366, %v363
      %v385 = vpack.c.b16 %v367, %v364
      %v386 = vpack.c.b16 %v371, %v368
      %v387 = vpack.c.b16 %v372, %v369
      %v388 = vpack.c.b16 %v373, %v370
      %v389 = vpack.c.b16 %v377, %v374
      %v390 = vpack.c.b16 %v378, %v375
      %v391 = vpack.c.b16 %v379, %v376
      %v436 = vunpack.c.l.b16 %v304
      %v437 = vunpack.c.l.b16 %v305
      %v438 = vunpack.c.l.b16 %v306
      %v439 = vunpack.c.l.b16 %v307
      %v440 = vunpack.c.l.b16 %v308
      %v441 = vunpack.c.l.b16 %v309
      %v442 = vunpack.c.l.b16 %v310
      %v443 = vunpack.c.l.b16 %v311
      %v444 = vunpack.c.l.b16 %v312
      %v445 = vunpack.c.l.b16 %v313
      %v446 = vunpack.c.l.b16 %v314
      %v447 = vunpack.c.l.b16 %v315
      %v448 = vunpack.c.l.b16 %v316
      %v449 = vunpack.c.l.b16 %v317
      %v450 = vunpack.c.l.b16 %v318
      %v451 = vunpack.c.l.b16 %v319
      %v452 = vunpack.c.l.b16 %v320
      %v453 = vunpack.c.l.b16 %v321
      %v454 = vunpack.c.l.b16 %v322
      %v455 = vunpack.c.l.b16 %v323
      %v456 = vunpack.c.l.b16 %v324
      %v457 = vunpack.c.l.b16 %v325
      %v458 = vunpack.c.l.b16 %v326
      %v459 = vunpack.c.l.b16 %v327
      %v460 = vunpack.c.l.b16 %v328
      %v461 = vunpack.c.l.b16 %v329
      %v462 = vunpack.c.l.b16 %v330
      %v463 = vunpack.c.l.b16 %v331
      %v464 = vunpack.c.l.b16 %v332
      %v465 = vunpack.c.l.b16 %v333
      %v466 = vunpack.c.l.b16 %v334
      %v467 = vunpack.c.l.b16 %v335
      %v468 = vunpack.c.l.b16 %v336
      %v469 = vunpack.c.l.b16 %v337
      %v470 = vunpack.c.l.b16 %v338
      %v471 = vunpack.c.l.b16 %v339
      %v472 = vpack.c.b16 %v437, %v436
      %v473 = vpack.c.b16 %v439, %v438
      %v474 = vpack.c.b16 %v441, %v440
      %v475 = vpack.c.b16 %v443, %v442
      %v476 = vpack.c.b16 %v445, %v444
      %v477 = vpack.c.b16 %v447, %v446
      %v478 = vpack.c.b16 %v449, %v448
      %v479 = vpack.c.b16 %v451, %v450
      %v480 = vpack.c.b16 %v453, %v452
      %v481 = vpack.c.b16 %v455, %v454
      %v482 = vpack.c.b16 %v457, %v456
      %v483 = vpack.c.b16 %v459, %v458
      %v484 = vpack.c.b16 %v461, %v460
      %v485 = vpack.c.b16 %v463, %v462
      %v486 = vpack.c.b16 %v465, %v464
      %v487 = vpack.c.b16 %v467, %v466
      %v488 = vpack.c.b16 %v469, %v468
      %v489 = vpack.c.b16 %v471, %v470
      %vm508 = vcmask 261120
      %v510 = vsel %vm508, %v382, 0
      %v513 = vsel %vm508, %v385, 0
      %v516 = vsel %vm508, %v388, 0
      %v519 = vsel %vm508, %v391, 0
      %521 = vmatprep.subr.bf16.mxu0 0
      %522 = vmatpush1.bf16.msra.mxu0 %v472
      %523 = vmatprep.subr.bf16.mxu0 0
      %524 = vmatpush1.bf16.msra.mxu0 %v473
      %525 = vmatprep.subr.bf16.mxu0 0
      %526 = vmatpush1.bf16.msra.mxu0 %v474
      %527 = vmatprep.subr.bf16.mxu0 0
      %528 = vmatpush1.bf16.msra.mxu0 %v475
      %529 = vmatprep.subr.bf16.mxu0 0
      %530 = vmatpush1.bf16.msra.mxu0 %v476
      %531 = vmatprep.subr.bf16.mxu0 0
      %532 = vmatpush1.bf16.msra.mxu0 %v477
      %533 = vmatprep.subr.bf16.mxu0 0
      %534 = vmatpush1.bf16.msra.mxu0 %v478
      %535 = vmatprep.subr.bf16.mxu0 0
      %536 = vmatpush1.bf16.msra.mxu0 %v479
      %537 = vmatprep.subr.bf16.mxu0 0
      %538 = vmatpush1.bf16.msra.mxu0 %v480
      %539 = vmatprep.subr.bf16.mxu0 0
      %540 = vmatpush1.bf16.msra.mxu0 %v481
      %541 = vmatprep.subr.bf16.mxu0 0
      %542 = vmatpush1.bf16.msra.mxu0 %v482
      %543 = vmatprep.subr.bf16.mxu0 0
      %544 = vmatpush1.bf16.msra.mxu0 %v483
      %545 = vmatprep.subr.bf16.mxu0 0
      %546 = vmatpush1.bf16.msra.mxu0 %v484
      %547 = vmatprep.subr.bf16.mxu0 0
      %548 = vmatpush1.bf16.msra.mxu0 %v485
      %549 = vmatprep.subr.bf16.mxu0 0
      %550 = vmatpush1.bf16.msra.mxu0 %v486
      %551 = vmatprep.subr.bf16.mxu0 0
      %552 = vmatpush1.bf16.msra.mxu0 %v487
      %553 = vmatprep.mubr.bf16.mxu0 %v381
      %554 = vmatmul.mubr.bf16.gmra.mrb[0].mxu0 %v380
      %v555 = vpop.f32.mrb[0].mxu0
      %v556 = vadd.f32 0.0, %v555
      %v557 = vpop.f32.mrb[0].mxu0
      %v558 = vpop.f32.mrb[0].mxu0
      %v559 = vadd.f32 0.0, %v558
      %v560 = vpop.f32.mrb[0].mxu0
      %561 = vmatprep.mubr.bf16.mxu0 %v384
      %562 = vmatmul.mubr.bf16.gmra.mrb[0].mxu0 %v383
      %v563 = vpop.f32.mrb[0].mxu0
      %v564 = vadd.f32 0.0, %v563
      %v565 = vpop.f32.mrb[0].mxu0
      %v566 = vpop.f32.mrb[0].mxu0
      %v567 = vadd.f32 0.0, %v566
      %v568 = vpop.f32.mrb[0].mxu0
      %569 = vmatprep.mubr.bf16.mxu0 %v387
      %570 = vmatmul.mubr.bf16.gmra.mrb[0].mxu0 %v386
      %v571 = vpop.f32.mrb[0].mxu0
      %v572 = vadd.f32 0.0, %v571
      %v573 = vpop.f32.mrb[0].mxu0
      %v574 = vpop.f32.mrb[0].mxu0
      %v575 = vadd.f32 0.0, %v574
      %v576 = vpop.f32.mrb[0].mxu0
      %577 = vmatprep.mubr.bf16.mxu0 %v390
      %578 = vmatmul.mubr.bf16.gmra.mrb[0].mxu0 %v389
      %v579 = vpop.f32.mrb[0].mxu0
      %v580 = vadd.f32 0.0, %v579
      %v581 = vpop.f32.mrb[0].mxu0
      %v582 = vpop.f32.mrb[0].mxu0
      %v583 = vadd.f32 0.0, %v582
      %v584 = vpop.f32.mrb[0].mxu0
      %585 = vdwg.mxu0
      %586 = vmatprep.subr.bf16.mxu0 0
      %587 = vmatpush1.bf16.msra.mxu0 %v488
      %588 = vmatprep.subr.bf16.mxu0 0
      %589 = vmatpush1.bf16.msra.mxu0 %v489
      %590 = vmatprep.subr.bf16.mxu0 0
      %591 = vmatpush1.bf16.msra.mxu0 0
      %592 = vmatprep.subr.bf16.mxu0 0
      %593 = vmatpush1.bf16.msra.mxu0 0
      %594 = vmatprep.subr.bf16.mxu0 0
      %595 = vmatpush1.bf16.msra.mxu0 0
      %596 = vmatprep.subr.bf16.mxu0 0
      %597 = vmatpush1.bf16.msra.mxu0 0
      %598 = vmatprep.subr.bf16.mxu0 0
      %599 = vmatpush1.bf16.msra.mxu0 0
      %600 = vmatprep.subr.bf16.mxu0 0
      %601 = vmatpush1.bf16.msra.mxu0 0
      %602 = vmatprep.subr.bf16.mxu0 0
      %603 = vmatpush1.bf16.msra.mxu0 0
      %604 = vmatprep.subr.bf16.mxu0 0
      %605 = vmatpush1.bf16.msra.mxu0 0
      %606 = vmatprep.subr.bf16.mxu0 0
      %607 = vmatpush1.bf16.msra.mxu0 0
      %608 = vmatprep.subr.bf16.mxu0 0
      %609 = vmatpush1.bf16.msra.mxu0 0
      %610 = vmatprep.subr.bf16.mxu0 0
      %611 = vmatpush1.bf16.msra.mxu0 0
      %612 = vmatprep.subr.bf16.mxu0 0
      %613 = vmatpush1.bf16.msra.mxu0 0
      %614 = vmatprep.subr.bf16.mxu0 0
      %615 = vmatpush1.bf16.msra.mxu0 0
      %616 = vmatprep.subr.bf16.mxu0 0
      %617 = vmatpush1.bf16.msra.mxu0 0
      %618 = vmatprep.mubr.bf16.mxu0 0
      %619 = vmatmul.mubr.bf16.gmra.mrb[0].mxu0 %v510
      %v620 = vpop.f32.mrb[0].mxu0
      %v621 = vadd.f32 %v556, %v620
      %v622 = vpop.f32.mrb[0].mxu0
      %v623 = vpop.f32.mrb[0].mxu0
      %v624 = vadd.f32 %v559, %v623
      %v625 = vpop.f32.mrb[0].mxu0
      %626 = vmatprep.mubr.bf16.mxu0 0
      %627 = vmatmul.mubr.bf16.gmra.mrb[0].mxu0 %v513
      %v628 = vpop.f32.mrb[0].mxu0
      %v629 = vadd.f32 %v564, %v628
      %v630 = vpop.f32.mrb[0].mxu0
      %v631 = vpop.f32.mrb[0].mxu0
      %v632 = vadd.f32 %v567, %v631
      %v633 = vpop.f32.mrb[0].mxu0
      %634 = vmatprep.mubr.bf16.mxu0 0
      %635 = vmatmul.mubr.bf16.gmra.mrb[0].mxu0 %v516
      %v636 = vpop.f32.mrb[0].mxu0
      %v637 = vadd.f32 %v572, %v636
      %v638 = vpop.f32.mrb[0].mxu0
      %v639 = vpop.f32.mrb[0].mxu0
      %v640 = vadd.f32 %v575, %v639
      %v641 = vpop.f32.mrb[0].mxu0
      %642 = vmatprep.mubr.bf16.mxu0 0
      %643 = vmatmul.mubr.bf16.gmra.mrb[0].mxu0 %v519
      %v644 = vpop.f32.mrb[0].mxu0
      %v645 = vadd.f32 %v580, %v644
      %v646 = vpop.f32.mrb[0].mxu0
      %v647 = vpop.f32.mrb[0].mxu0
      %v648 = vadd.f32 %v583, %v647
      %v649 = vpop.f32.mrb[0].mxu0
      %650 = vdwg.mxu0
      %v651 = vadd.f32 %v280, %v621
      %v652 = vadd.f32 %v281, %v624
      %v653 = vadd.f32 %v282, %v629
      %v654 = vadd.f32 %v283, %v632
      %v655 = vadd.f32 %v284, %v637
      %v656 = vadd.f32 %v285, %v640
      %v657 = vadd.f32 %v286, %v645
      %v658 = vadd.f32 %v287, %v648
      %659 = vst [vmem:[#allocation2] sm:$0xff] %v651
      %660 = vst [vmem:[#allocation2 + $0x8] sm:$0xff] %v652
      %661 = vst [vmem:[#allocation2 + $0x10] sm:$0xff] %v653
      %662 = vst [vmem:[#allocation2 + $0x18] sm:$0xff] %v654
      %663 = vst [vmem:[#allocation2 + $0x20] sm:$0xff] %v655
      %664 = vst [vmem:[#allocation2 + $0x28] sm:$0xff] %v656
      %665 = vst [vmem:[#allocation2 + $0x30] sm:$0xff] %v657
      %666 = vst [vmem:[#allocation2 + $0x38] sm:$0xff] %v658
      // Predicated region
      $region37: #{_lambda_.32} parent=31 // pred_check
        %p667 = pneg %p268
      $region38: #{_lambda_.32} parent=31 // pred_check_branch
        %669 = sbr.rel (%p667) target = $region40
      $region39: #{_lambda_.32} parent=31 // pred_region
        %v670 = vld [vmem:[#allocation2] sm:$0xff]
        %v671 = vld [vmem:[#allocation2 + $0x8] sm:$0xff]
        %v672 = vld [vmem:[#allocation2 + $0x10] sm:$0xff]
        %v673 = vld [vmem:[#allocation2 + $0x18] sm:$0xff]
        %v674 = vld [vmem:[#allocation2 + $0x20] sm:$0xff]
        %v675 = vld [vmem:[#allocation2 + $0x28] sm:$0xff]
        %v676 = vld [vmem:[#allocation2 + $0x30] sm:$0xff]
        %v677 = vld [vmem:[#allocation2 + $0x38] sm:$0xff]
        %v678 = vld [vmem:[%s257] sm:$0x1]
        %v680 = vlaneseq
        %v681 = vshrl.u32 %v680, 7
        %v682 = vsub.s32 0, %v681
        %v683 = vrot.slane %v678, %v682
        %v685 = vadd.f32 %v670, %v683
        %v686 = vadd.f32 %v671, %v683
        %v687 = vadd.f32 %v672, %v683
        %v688 = vadd.f32 %v673, %v683
        %v689 = vadd.f32 %v674, %v683
        %v690 = vadd.f32 %v675, %v683
        %v691 = vadd.f32 %v676, %v683
        %v692 = vadd.f32 %v677, %v683
        %v693 = vmax.f32 %v685, 0.0
        %v694 = vmax.f32 %v686, 0.0
        %v695 = vmax.f32 %v687, 0.0
        %v696 = vmax.f32 %v688, 0.0
        %v697 = vmax.f32 %v689, 0.0
        %v698 = vmax.f32 %v690, 0.0
        %v699 = vmax.f32 %v691, 0.0
        %v700 = vmax.f32 %v692, 0.0
        %v701 = vpack.c.bf16 %v694, %v693
        %v702 = vpack.c.bf16 %v696, %v695
        %v703 = vpack.c.bf16 %v698, %v697
        %v704 = vpack.c.bf16 %v700, %v699
        %v709 = vunpack.c.l.b16 %v701
        %v710 = vunpack.c.h.b16 %v701
        %v711 = vunpack.c.l.b16 %v702
        %v712 = vunpack.c.h.b16 %v702
        %v713 = vunpack.c.l.b16 %v703
        %v714 = vunpack.c.h.b16 %v703
        %v715 = vunpack.c.l.b16 %v704
        %v716 = vunpack.c.h.b16 %v704
        %v717 = vpack.c.b16 %v709, %v709
        %v718 = vpack.c.b16 %v710, %v710
        %v719 = vpack.c.b16 %v711, %v711
        %v720 = vpack.c.b16 %v712, %v712
        %v721 = vpack.c.b16 %v713, %v713
        %v722 = vpack.c.b16 %v714, %v714
        %v723 = vpack.c.b16 %v715, %v715
        %v724 = vpack.c.b16 %v716, %v716
        %733 = vst [vmem:[%s265] sm:$0xf] %v717
        %734 = vst [vmem:[%s265 + $0x4] sm:$0xf] %v718
        %735 = vst [vmem:[%s265 + $0x8] sm:$0xf] %v719
        %736 = vst [vmem:[%s265 + $0xc] sm:$0xf] %v720
        %737 = vst [vmem:[%s265 + $0x10] sm:$0xf] %v721
        %738 = vst [vmem:[%s265 + $0x14] sm:$0xf] %v722
        %739 = vst [vmem:[%s265 + $0x18] sm:$0xf] %v723
        %740 = vst [vmem:[%s265 + $0x1c] sm:$0xf] %v724
      $region40: #{_lambda_.32} parent=31 // pred_fallthru
        _
      %s741 = smul.u32 8, %s19
      %p742 = scmp.lt.s32.totalorder %s741, 15
      %s743 = scalar_select %p742, %s741, 15
      %p744 = scmp.lt.s32.totalorder %s20, 0
      %s745 = scalar_select %p744, %s20, 0
      %s746 = sadd.s32 %s745, %s743
      %s747 = smul.addr %s746, 4
      %s748 = scalar_lea.vmem %s3, %s747
      // Predicated region
      $region41: #{_lambda_.32} parent=31 // pred_check
        %p749 = pneg %p135
      $region42: #{_lambda_.32} parent=31 // pred_check_branch
        %751 = sbr.rel (%p749) target = $region44
      $region43: #{_lambda_.32} parent=31 // pred_region
        %s752 = smul.u32 8, %s19
      $region44: #{_lambda_.32} parent=31 // pred_fallthru
        _
    $region32: #{_lambda_.32} parent=5 // pred_fallthru
      _
    %p753 = scmp.le.s32.totalorder 2, %s9
    // Predicated region
    $region45: #{_lambda_.32} parent=5 // pred_check
      %p754 = pneg %p753
    $region46: #{_lambda_.32} parent=5 // pred_check_branch
      %756 = sbr.rel (%p754) target = $region48
    $region47: #{_lambda_.32} parent=5 // pred_region
      %s757 = ssub.s32 %s9, 2
      // Predicated region
      $region49: #{_lambda_.32} parent=47 // pred_check
        %p758 = pneg %p141
      $region50: #{_lambda_.32} parent=47 // pred_check_branch
        %760 = sbr.rel (%p758) target = $region52
      $region51: #{_lambda_.32} parent=47 // pred_region
        %s761 = smul.u32 8, %s22
        %p762 = scmp.lt.s32.totalorder %s761, 15
        %s763 = scalar_select %p762, %s761, 15
        %p764 = scmp.lt.s32.totalorder %s23, 0
        %s765 = scalar_select %p764, %s23, 0
        %s766 = sadd.s32 %s765, %s763
        %s767 = smul.addr %s766, 4
        %s768 = scalar_lea.vmem %s3, %s767
      $region52: #{_lambda_.32} parent=47 // pred_fallthru
        _
    $region48: #{_lambda_.32} parent=5 // pred_fallthru
      _
  $region6: #{_lambda_.32} parent=0 // loop_footer
    %s13 = sadd.s32 1, %s9
  $region7: #{_lambda_.32} parent=0 // loop_footer_branch
    %8 = sbr.rel target = $region3
  $region8: #{_lambda_.32} parent=0 // loop_exit
    _

// kernel: _lambda_.33
$region0: #{_lambda_.33}
  #allocation0 [shape = 'u32[]', space=smem, size = 0x4, offset = 0x4, fixed_abs, tag = 'smem constant byte address 0x4 - core index']
  #allocation1 [shape = 'u32[144,128]{1,0:T(1,128)}', space=vmem, size = 0x12000, scoped, tag = 'internal scratch']
  #allocation2 [shape = 'f32[64,128]{1,0:T(8,128)}', space=vmem, size = 0x8000, scoped, tag = 'scratch operand']
  %s0 = inlined_call_operand.vmem [shape: bf16[128,64], index: 0, kind: input, shape index: {}]
  %s1 = inlined_call_operand.vmem [shape: bf16[64,128], index: 1, kind: input, shape index: {}]
  %s2 = inlined_call_operand.vmem [shape: f32[1,128], index: 2, kind: input, shape index: {}]
  %s3 = inlined_call_operand.vmem [shape: bf16[128,128], index: 3, kind: output, shape index: {}]
  %s4 = sld [smem:[#allocation0]]
  $region53: #{_lambda_.33} parent=0
    _
  %s6 = ssub.s32 1, %s4
  %s7 = scalar_select 0, %s6, %s4
  loop: start=0, step=1, limit=4
  $region2: #{_lambda_.33} parent=0 // loop_pre_header
    _
  $region3: #{_lambda_.33} parent=0 // loop_header
    %s9 = sphi 0, %s13
    %p10 = scmp.ge.s32.totalorder %s9, 4
    %s16 = sphi 0, %s35
    %s17 = sphi 0, %s31
    %s18 = sphi 0, %s27
    %s19 = sphi 0, %s16
    %s20 = sphi 0, %s17
    %s21 = sphi 0, %s18
    %s22 = sphi 0, %s19
    %s23 = sphi 0, %s20
    %s24 = sphi 0, %s21
    %s40 = sphi 0, %s42
    %s43 = sphi 0, %s40
    %s44 = sphi 0, %s43
    %s60 = sphi 0, %s44
    %s68 = sphi 0, %s70
    %s71 = sphi 0, %s68
    %s72 = sphi 0, %s71
    %s88 = sphi 0, %s72
    %s94 = sphi 0, %s96
    %s97 = sphi 0, %s94
    %s98 = sphi 0, %s97
    %s114 = sphi 0, %s98
    %s122 = sphi 0, %s124
    %s125 = sphi 0, %s122
    %s126 = sphi 0, %s125
    %s142 = sphi 0, %s126
  $region4: #{_lambda_.33} parent=0 // loop_header_branch
    %12 = sbr.rel (%p10) target = $region8
  $region5: #{_lambda_.33} parent=0 // loop_body
    %s14 = ssub.s32 %s9, 1
    %s15 = ssub.s32 %s9, 2
    %s25 = sadd.s32 1, %s18
    %p26 = scmp.ge.s32.totalorder %s25, 1
    %s27 = scalar_select %p26, 0, %s25
    %s28 = sadd.s32 1, %s17
    %s29 = scalar_select %p26, %s28, %s17
    %p30 = scmp.ge.s32.totalorder %s29, 1
    %s31 = scalar_select %p30, 0, %s29
    %s32 = sadd.s32 1, %s16
    %s33 = scalar_select %p30, %s32, %s16
    %p34 = scmp.ge.s32.totalorder %s33, 2
    %s35 = scalar_select %p34, 0, %s33
    %s36 = ssub.s32 %s16, %s35
    %s37 = ssub.s32 %s18, %s27
    %s38 = sor.u32 %s36, %s37
    %p39 = scmp.eq.s32.totalorder %s38, 0
    %s41 = sadd.s32 %s40, 1
    %s42 = scalar_select %p39, %s40, %s41
    %p45 = pneg %p39
    %p46 = scmp.eq.s32.totalorder %s9, 1
    %p47 = por %p45, %p46
    %p48 = scmp.ne.s32.totalorder %s40, %s43
    %p49 = scmp.eq.s32.totalorder %s9, 0
    %p50 = por %p48, %p49
    %p51 = scmp.ne.s32.totalorder %s40, %s43
    %p52 = scmp.eq.s32.totalorder %s14, 1
    %p53 = por %p51, %p52
    %p54 = scmp.ne.s32.totalorder %s43, %s44
    %p55 = scmp.eq.s32.totalorder %s14, 0
    %p56 = por %p54, %p55
    %p57 = scmp.ne.s32.totalorder %s43, %s44
    %p58 = scmp.eq.s32.totalorder %s15, 1
    %p59 = por %p57, %p58
    %p61 = scmp.ne.s32.totalorder %s44, %s60
    %p62 = scmp.eq.s32.totalorder %s15, 0
    %p63 = por %p61, %p62
    %s64 = ssub.s32 %s18, %s27
    %s65 = ssub.s32 %s17, %s31
    %s66 = sor.u32 %s64, %s65
    %p67 = scmp.eq.s32.totalorder %s66, 0
    %s69 = sadd.s32 %s68, 1
    %s70 = scalar_select %p67, %s68, %s69
    %p73 = pneg %p67
    %p74 = scmp.eq.s32.totalorder %s9, 1
    %p75 = por %p73, %p74
    %p76 = scmp.ne.s32.totalorder %s68, %s71
    %p77 = scmp.eq.s32.totalorder %s9, 0
    %p78 = por %p76, %p77
    %p79 = scmp.ne.s32.totalorder %s68, %s71
    %p80 = scmp.eq.s32.totalorder %s14, 1
    %p81 = por %p79, %p80
    %p82 = scmp.ne.s32.totalorder %s71, %s72
    %p83 = scmp.eq.s32.totalorder %s14, 0
    %p84 = por %p82, %p83
    %p85 = scmp.ne.s32.totalorder %s71, %s72
    %p86 = scmp.eq.s32.totalorder %s15, 1
    %p87 = por %p85, %p86
    %p89 = scmp.ne.s32.totalorder %s72, %s88
    %p90 = scmp.eq.s32.totalorder %s15, 0
    %p91 = por %p89, %p90
    %s92 = ssub.s32 %s17, %s31
    %p93 = scmp.eq.s32.totalorder %s92, 0
    %s95 = sadd.s32 %s94, 1
    %s96 = scalar_select %p93, %s94, %s95
    %p99 = pneg %p93
    %p100 = scmp.eq.s32.totalorder %s9, 1
    %p101 = por %p99, %p100
    %p102 = scmp.ne.s32.totalorder %s94, %s97
    %p103 = scmp.eq.s32.totalorder %s9, 0
    %p104 = por %p102, %p103
    %p105 = scmp.ne.s32.totalorder %s94, %s97
    %p106 = scmp.eq.s32.totalorder %s14, 1
    %p107 = por %p105, %p106
    %p108 = scmp.ne.s32.totalorder %s97, %s98
    %p109 = scmp.eq.s32.totalorder %s14, 0
    %p110 = por %p108, %p109
    %p111 = scmp.ne.s32.totalorder %s97, %s98
    %p112 = scmp.eq.s32.totalorder %s15, 1
    %p113 = por %p111, %p112
    %p115 = scmp.ne.s32.totalorder %s98, %s114
    %p116 = scmp.eq.s32.totalorder %s15, 0
    %p117 = por %p115, %p116
    %s118 = ssub.s32 %s16, %s35
    %s119 = ssub.s32 %s17, %s31
    %s120 = sor.u32 %s118, %s119
    %p121 = scmp.eq.s32.totalorder %s120, 0
    %s123 = sadd.s32 %s122, 1
    %s124 = scalar_select %p121, %s122, %s123
    %p127 = pneg %p121
    %p128 = scmp.eq.s32.totalorder %s9, 1
    %p129 = por %p127, %p128
    %p130 = scmp.ne.s32.totalorder %s122, %s125
    %p131 = scmp.eq.s32.totalorder %s9, 0
    %p132 = por %p130, %p131
    %p133 = scmp.ne.s32.totalorder %s122, %s125
    %p134 = scmp.eq.s32.totalorder %s14, 1
    %p135 = por %p133, %p134
    %p136 = scmp.ne.s32.totalorder %s125, %s126
    %p137 = scmp.eq.s32.totalorder %s14, 0
    %p138 = por %p136, %p137
    %p139 = scmp.ne.s32.totalorder %s125, %s126
    %p140 = scmp.eq.s32.totalorder %s15, 1
    %p141 = por %p139, %p140
    %p143 = scmp.ne.s32.totalorder %s126, %s142
    %p144 = scmp.eq.s32.totalorder %s15, 0
    %p145 = por %p143, %p144
    %p146 = scmp.le.s32.totalorder 1, %s9
    %p147 = scmp.lt.s32.totalorder %s9, 3
    %p148 = pnand %p146, %p147
    %p149 = pneg %p148
    // Predicated region
    $region9: #{_lambda_.33} parent=5 // pred_check
      _
    $region10: #{_lambda_.33} parent=5 // pred_check_branch
      %151 = sbr.rel (%p148) target = $region12
    $region11: #{_lambda_.33} parent=5 // pred_region
      %s152 = ssub.s32 %s9, 1
      // Predicated region
      $region13: #{_lambda_.33} parent=11 // pred_check
        %p153 = pneg %p84
      $region14: #{_lambda_.33} parent=11 // pred_check_branch
        %155 = sbr.rel (%p153) target = $region16
      $region15: #{_lambda_.33} parent=11 // pred_region
        %s156 = smul.u32 8, %s21
        %p157 = scmp.lt.s32.totalorder %s156, 7
        %s158 = scalar_select %p157, %s156, 7
        %p159 = scmp.lt.s32.totalorder %s20, 0
        %s160 = scalar_select %p159, %s20, 0
        %s161 = sadd.s32 %s160, %s158
        %s162 = smul.addr %s161, 4
        %s163 = scalar_lea.vmem %s1, %s162
        %s164 = smul.u32 8, %s21
      $region16: #{_lambda_.33} parent=11 // pred_fallthru
        _
      // Predicated region
      $region17: #{_lambda_.33} parent=11 // pred_check
        %p165 = pneg %p110
      $region18: #{_lambda_.33} parent=11 // pred_check_branch
        %167 = sbr.rel (%p165) target = $region20
      $region19: #{_lambda_.33} parent=11 // pred_region
        %p168 = scmp.lt.s32.totalorder %s20, 0
        %s169 = scalar_select %p168, %s20, 0
        %s170 = scalar_lea.vmem %s2, %s169
      $region20: #{_lambda_.33} parent=11 // pred_fallthru
        _
    $region12: #{_lambda_.33} parent=5 // pred_fallthru
      _
    %p171 = scmp.lt.s32.totalorder %s9, 2
    // Predicated region
    $region21: #{_lambda_.33} parent=5 // pred_check
      %p172 = pneg %p171
    $region22: #{_lambda_.33} parent=5 // pred_check_branch
      %174 = sbr.rel (%p172) target = $region24
    $region23: #{_lambda_.33} parent=5 // pred_region
      // Predicated region
      $region25: #{_lambda_.33} parent=23 // pred_check
        %p175 = pneg %p50
      $region26: #{_lambda_.33} parent=23 // pred_check_branch
        %177 = sbr.rel (%p175) target = $region28
      $region27: #{_lambda_.33} parent=23 // pred_region
        %s178 = smul.u32 8, %s16
        %p179 = scmp.lt.s32.totalorder %s178, 15
        %s180 = scalar_select %p179, %s178, 15
        %p181 = scmp.lt.s32.totalorder %s18, 0
        %s182 = scalar_select %p181, %s18, 0
        %s183 = sadd.s32 %s182, %s180
        %s184 = smul.addr %s183, 4
        %s185 = scalar_lea.vmem %s0, %s184
        %s186 = smul.u32 8, %s16
      $region28: #{_lambda_.33} parent=23 // pred_fallthru
        _
    $region24: #{_lambda_.33} parent=5 // pred_fallthru
      _
    %p187 = scmp.le.s32.totalorder 1, %s9
    %p188 = scmp.lt.s32.totalorder %s9, 3
    %p189 = pnand %p187, %p188
    %p190 = pneg %p189
    // Predicated region
    $region29: #{_lambda_.33} parent=5 // pred_check
      _
    $region30: #{_lambda_.33} parent=5 // pred_check_branch
      %192 = sbr.rel (%p189) target = $region32
    $region31: #{_lambda_.33} parent=5 // pred_region
      %s193 = ssub.s32 %s9, 1
      %s194 = smul.u32 8, %s19
      %p195 = scmp.lt.s32.totalorder %s194, 15
      %s196 = scalar_select %p195, %s194, 15
      %p197 = scmp.lt.s32.totalorder %s21, 0
      %s198 = scalar_select %p197, %s21, 0
      %s199 = sadd.s32 %s198, %s196
      %s200 = smul.addr %s199, 4
      %s201 = scalar_lea.vmem %s0, %s200
      %p202 = pneg %p56
      %p203 = pneg %p53
      %s204 = smul.u32 8, %s21
      %p205 = scmp.lt.s32.totalorder %s204, 7
      %s206 = scalar_select %p205, %s204, 7
      %p207 = scmp.lt.s32.totalorder %s20, 0
      %s208 = scalar_select %p207, %s20, 0
      %s209 = sadd.s32 %s208, %s206
      %s210 = smul.addr %s209, 4
      %s211 = scalar_lea.vmem %s1, %s210
      %p212 = pneg %p84
      %p213 = pneg %p81
      %p214 = scmp.lt.s32.totalorder %s20, 0
      %s215 = scalar_select %p214, %s20, 0
      %s216 = scalar_lea.vmem %s2, %s215
      %p217 = pneg %p110
      %p218 = pneg %p107
      %p219 = pneg %p138
      %p220 = pneg %p135
      %s221 = smul.u32 8, %s19
      %p222 = scmp.lt.s32.totalorder %s221, 15
      %s223 = scalar_select %p222, %s221, 15
      %p224 = scmp.lt.s32.totalorder %s20, 0
      %s225 = scalar_select %p224, %s20, 0
      %s226 = sadd.s32 %s225, %s223
      %s227 = smul.addr %s226, 4
      %s228 = scalar_lea.vmem %s3, %s227
      %s229 = smul.u32 8, %s19
      %p230 = scmp.lt.s32.totalorder %s229, 15
      %s231 = scalar_select %p230, %s229, 15
      %p232 = scmp.lt.s32.totalorder %s21, 0
      %s233 = scalar_select %p232, %s21, 0
      %s234 = sadd.s32 %s233, %s231
      %s235 = smul.addr %s234, 4
      %s236 = scalar_lea.vmem %s0, %s235
      %s237 = smul.u32 8, %s19
      %s238 = smul.u32 8, %s21
      %p239 = scmp.lt.s32.totalorder %s238, 7
      %s240 = scalar_select %p239, %s238, 7
      %p241 = scmp.lt.s32.totalorder %s20, 0
      %s242 = scalar_select %p241, %s20, 0
      %s243 = sadd.s32 %s242, %s240
      %s244 = smul.addr %s243, 4
      %s245 = scalar_lea.vmem %s1, %s244
      %s246 = smul.u32 8, %s21
      %p247 = scmp.lt.s32.totalorder %s20, 0
      %s248 = scalar_select %p247, %s20, 0
      %s249 = scalar_lea.vmem %s2, %s248
      %s250 = smul.u32 8, %s19
      %p251 = scmp.lt.s32.totalorder %s250, 15
      %s252 = scalar_select %p251, %s250, 15
      %p253 = scmp.lt.s32.totalorder %s20, 0
      %s254 = scalar_select %p253, %s20, 0
      %s255 = sadd.s32 %s254, %s252
      %s256 = smul.addr %s255, 4
      %s257 = scalar_lea.vmem %s3, %s256
      %s258 = smul.u32 8, %s19
      %p260 = scmp.eq.s32.totalorder %s21, 0
      // Predicated region
      $region33: #{_lambda_.33} parent=31 // pred_check
        %p261 = pneg %p260
      $region34: #{_lambda_.33} parent=31 // pred_check_branch
        %263 = sbr.rel (%p261) target = $region36
      $region35: #{_lambda_.33} parent=31 // pred_region
        %264 = vst [vmem:[#allocation2] sm:$0xff] 0.0
        %265 = vst [vmem:[#allocation2 + $0x8] sm:$0xff] 0.0
        %266 = vst [vmem:[#allocation2 + $0x10] sm:$0xff] 0.0
        %267 = vst [vmem:[#allocation2 + $0x18] sm:$0xff] 0.0
        %268 = vst [vmem:[#allocation2 + $0x20] sm:$0xff] 0.0
        %269 = vst [vmem:[#allocation2 + $0x28] sm:$0xff] 0.0
        %270 = vst [vmem:[#allocation2 + $0x30] sm:$0xff] 0.0
        %271 = vst [vmem:[#allocation2 + $0x38] sm:$0xff] 0.0
      $region36: #{_lambda_.33} parent=31 // pred_fallthru
        _
      %v272 = vld [vmem:[#allocation2] sm:$0xff]
      %v273 = vld [vmem:[#allocation2 + $0x8] sm:$0xff]
      %v274 = vld [vmem:[#allocation2 + $0x10] sm:$0xff]
      %v275 = vld [vmem:[#allocation2 + $0x18] sm:$0xff]
      %v276 = vld [vmem:[#allocation2 + $0x20] sm:$0xff]
      %v277 = vld [vmem:[#allocation2 + $0x28] sm:$0xff]
      %v278 = vld [vmem:[#allocation2 + $0x30] sm:$0xff]
      %v279 = vld [vmem:[#allocation2 + $0x38] sm:$0xff]
      %v280 = vld [vmem:[%s236] sm:$0xf]
      %v281 = vld [vmem:[%s236 + $0x4] sm:$0xf]
      %v282 = vld [vmem:[%s236 + $0x8] sm:$0xf]
      %v283 = vld [vmem:[%s236 + $0xc] sm:$0xf]
      %v284 = vld [vmem:[%s236 + $0x10] sm:$0xf]
      %v285 = vld [vmem:[%s236 + $0x14] sm:$0xf]
      %v286 = vld [vmem:[%s236 + $0x18] sm:$0xf]
      %v287 = vld [vmem:[%s236 + $0x1c] sm:$0xf]
      %v288 = vld [vmem:[%s245] sm:$0xf]
      %v289 = vld [vmem:[%s245 + $0x4] sm:$0xf]
      %v290 = vld [vmem:[%s245 + $0x8] sm:$0xf]
      %v291 = vld [vmem:[%s245 + $0xc] sm:$0xf]
      %v292 = vld [vmem:[%s245 + $0x10] sm:$0xf]
      %v293 = vld [vmem:[%s245 + $0x14] sm:$0xf]
      %v294 = vld [vmem:[%s245 + $0x18] sm:$0xf]
      %v295 = vld [vmem:[%s245 + $0x1c] sm:$0xf]
      %v304 = vunpack.c.l.b16 %v280
      %v305 = vunpack.c.l.b16 %v281
      %v306 = vunpack.c.l.b16 %v282
      %v307 = vunpack.c.l.b16 %v283
      %v308 = vunpack.c.l.b16 %v284
      %v309 = vunpack.c.l.b16 %v285
      %v310 = vunpack.c.l.b16 %v286
      %v311 = vunpack.c.l.b16 %v287
      %v312 = vpack.c.b16 %v305, %v304
      %v313 = vpack.c.b16 %v307, %v306
      %v314 = vpack.c.b16 %v309, %v308
      %v315 = vpack.c.b16 %v311, %v310
      %v324 = vunpack.c.l.b16 %v288
      %v325 = vunpack.c.l.b16 %v289
      %v326 = vunpack.c.l.b16 %v290
      %v327 = vunpack.c.l.b16 %v291
      %v328 = vunpack.c.l.b16 %v292
      %v329 = vunpack.c.l.b16 %v293
      %v330 = vunpack.c.l.b16 %v294
      %v331 = vunpack.c.l.b16 %v295
      %v332 = vpack.c.b16 %v325, %v324
      %v333 = vpack.c.b16 %v327, %v326
      %v334 = vpack.c.b16 %v329, %v328
      %v335 = vpack.c.b16 %v331, %v330
      %vm340 = vcmask 523264
      %v342 = vsel %vm340, %v312, 0
      %v345 = vsel %vm340, %v313, 0
      %v348 = vsel %vm340, %v314, 0
      %v351 = vsel %vm340, %v315, 0
      %353 = vmatprep.subr.bf16.mxu0 0
      %354 = vmatpush1.bf16.msra.mxu0 %v332
      %355 = vmatprep.subr.bf16.mxu0 0
      %356 = vmatpush1.bf16.msra.mxu0 %v333
      %357 = vmatprep.subr.bf16.mxu0 0
      %358 = vmatpush1.bf16.msra.mxu0 %v334
      %359 = vmatprep.subr.bf16.mxu0 0
      %360 = vmatpush1.bf16.msra.mxu0 %v335
      %361 = vmatprep.subr.bf16.mxu0 0
      %362 = vmatpush1.bf16.msra.mxu0 0
      %363 = vmatprep.subr.bf16.mxu0 0
      %364 = vmatpush1.bf16.msra.mxu0 0
      %365 = vmatprep.subr.bf16.mxu0 0
      %366 = vmatpush1.bf16.msra.mxu0 0
      %367 = vmatprep.subr.bf16.mxu0 0
      %368 = vmatpush1.bf16.msra.mxu0 0
      %369 = vmatprep.subr.bf16.mxu0 0
      %370 = vmatpush1.bf16.msra.mxu0 0
      %371 = vmatprep.subr.bf16.mxu0 0
      %372 = vmatpush1.bf16.msra.mxu0 0
      %373 = vmatprep.subr.bf16.mxu0 0
      %374 = vmatpush1.bf16.msra.mxu0 0
      %375 = vmatprep.subr.bf16.mxu0 0
      %376 = vmatpush1.bf16.msra.mxu0 0
      %377 = vmatprep.subr.bf16.mxu0 0
      %378 = vmatpush1.bf16.msra.mxu0 0
      %379 = vmatprep.subr.bf16.mxu0 0
      %380 = vmatpush1.bf16.msra.mxu0 0
      %381 = vmatprep.subr.bf16.mxu0 0
      %382 = vmatpush1.bf16.msra.mxu0 0
      %383 = vmatprep.subr.bf16.mxu0 0
      %384 = vmatpush1.bf16.msra.mxu0 0
      %385 = vmatprep.mubr.bf16.mxu0 0
      %386 = vmatmul.mubr.bf16.gmra.mrb[0].mxu0 %v342
      %v387 = vpop.f32.mrb[0].mxu0
      %v388 = vadd.f32 0.0, %v387
      %v389 = vpop.f32.mrb[0].mxu0
      %v390 = vpop.f32.mrb[0].mxu0
      %v391 = vadd.f32 0.0, %v390
      %v392 = vpop.f32.mrb[0].mxu0
      %393 = vmatprep.mubr.bf16.mxu0 0
      %394 = vmatmul.mubr.bf16.gmra.mrb[0].mxu0 %v345
      %v395 = vpop.f32.mrb[0].mxu0
      %v396 = vadd.f32 0.0, %v395
      %v397 = vpop.f32.mrb[0].mxu0
      %v398 = vpop.f32.mrb[0].mxu0
      %v399 = vadd.f32 0.0, %v398
      %v400 = vpop.f32.mrb[0].mxu0
      %401 = vmatprep.mubr.bf16.mxu0 0
      %402 = vmatmul.mubr.bf16.gmra.mrb[0].mxu0 %v348
      %v403 = vpop.f32.mrb[0].mxu0
      %v404 = vadd.f32 0.0, %v403
      %v405 = vpop.f32.mrb[0].mxu0
      %v406 = vpop.f32.mrb[0].mxu0
      %v407 = vadd.f32 0.0, %v406
      %v408 = vpop.f32.mrb[0].mxu0
      %409 = vmatprep.mubr.bf16.mxu0 0
      %410 = vmatmul.mubr.bf16.gmra.mrb[0].mxu0 %v351
      %v411 = vpop.f32.mrb[0].mxu0
      %v412 = vadd.f32 0.0, %v411
      %v413 = vpop.f32.mrb[0].mxu0
      %v414 = vpop.f32.mrb[0].mxu0
      %v415 = vadd.f32 0.0, %v414
      %v416 = vpop.f32.mrb[0].mxu0
      %417 = vdwg.mxu0
      %v418 = vadd.f32 %v272, %v388
      %v419 = vadd.f32 %v273, %v391
      %v420 = vadd.f32 %v274, %v396
      %v421 = vadd.f32 %v275, %v399
      %v422 = vadd.f32 %v276, %v404
      %v423 = vadd.f32 %v277, %v407
      %v424 = vadd.f32 %v278, %v412
      %v425 = vadd.f32 %v279, %v415
      %426 = vst [vmem:[#allocation2] sm:$0xff] %v418
      %427 = vst [vmem:[#allocation2 + $0x8] sm:$0xff] %v419
      %428 = vst [vmem:[#allocation2 + $0x10] sm:$0xff] %v420
      %429 = vst [vmem:[#allocation2 + $0x18] sm:$0xff] %v421
      %430 = vst [vmem:[#allocation2 + $0x20] sm:$0xff] %v422
      %431 = vst [vmem:[#allocation2 + $0x28] sm:$0xff] %v423
      %432 = vst [vmem:[#allocation2 + $0x30] sm:$0xff] %v424
      %433 = vst [vmem:[#allocation2 + $0x38] sm:$0xff] %v425
      // Predicated region
      $region37: #{_lambda_.33} parent=31 // pred_check
        %p434 = pneg %p260
      $region38: #{_lambda_.33} parent=31 // pred_check_branch
        %436 = sbr.rel (%p434) target = $region40
      $region39: #{_lambda_.33} parent=31 // pred_region
        %v437 = vld [vmem:[#allocation2] sm:$0xff]
        %v438 = vld [vmem:[#allocation2 + $0x8] sm:$0xff]
        %v439 = vld [vmem:[#allocation2 + $0x10] sm:$0xff]
        %v440 = vld [vmem:[#allocation2 + $0x18] sm:$0xff]
        %v441 = vld [vmem:[#allocation2 + $0x20] sm:$0xff]
        %v442 = vld [vmem:[#allocation2 + $0x28] sm:$0xff]
        %v443 = vld [vmem:[#allocation2 + $0x30] sm:$0xff]
        %v444 = vld [vmem:[#allocation2 + $0x38] sm:$0xff]
        %v445 = vld [vmem:[%s249] sm:$0x1]
        %v447 = vlaneseq
        %v448 = vshrl.u32 %v447, 7
        %v449 = vsub.s32 0, %v448
        %v450 = vrot.slane %v445, %v449
        %v452 = vadd.f32 %v437, %v450
        %v453 = vadd.f32 %v438, %v450
        %v454 = vadd.f32 %v439, %v450
        %v455 = vadd.f32 %v440, %v450
        %v456 = vadd.f32 %v441, %v450
        %v457 = vadd.f32 %v442, %v450
        %v458 = vadd.f32 %v443, %v450
        %v459 = vadd.f32 %v444, %v450
        %v460 = vpack.c.bf16 %v453, %v452
        %v461 = vpack.c.bf16 %v455, %v454
        %v462 = vpack.c.bf16 %v457, %v456
        %v463 = vpack.c.bf16 %v459, %v458
        %v468 = vunpack.c.l.b16 %v460
        %v469 = vunpack.c.h.b16 %v460
        %v470 = vunpack.c.l.b16 %v461
        %v471 = vunpack.c.h.b16 %v461
        %v472 = vunpack.c.l.b16 %v462
        %v473 = vunpack.c.h.b16 %v462
        %v474 = vunpack.c.l.b16 %v463
        %v475 = vunpack.c.h.b16 %v463
        %v476 = vpack.c.b16 %v468, %v468
        %v477 = vpack.c.b16 %v469, %v469
        %v478 = vpack.c.b16 %v470, %v470
        %v479 = vpack.c.b16 %v471, %v471
        %v480 = vpack.c.b16 %v472, %v472
        %v481 = vpack.c.b16 %v473, %v473
        %v482 = vpack.c.b16 %v474, %v474
        %v483 = vpack.c.b16 %v475, %v475
        %492 = vst [vmem:[%s257] sm:$0xf] %v476
        %493 = vst [vmem:[%s257 + $0x4] sm:$0xf] %v477
        %494 = vst [vmem:[%s257 + $0x8] sm:$0xf] %v478
        %495 = vst [vmem:[%s257 + $0xc] sm:$0xf] %v479
        %496 = vst [vmem:[%s257 + $0x10] sm:$0xf] %v480
        %497 = vst [vmem:[%s257 + $0x14] sm:$0xf] %v481
        %498 = vst [vmem:[%s257 + $0x18] sm:$0xf] %v482
        %499 = vst [vmem:[%s257 + $0x1c] sm:$0xf] %v483
      $region40: #{_lambda_.33} parent=31 // pred_fallthru
        _
      %s500 = smul.u32 8, %s19
      %p501 = scmp.lt.s32.totalorder %s500, 15
      %s502 = scalar_select %p501, %s500, 15
      %p503 = scmp.lt.s32.totalorder %s20, 0
      %s504 = scalar_select %p503, %s20, 0
      %s505 = sadd.s32 %s504, %s502
      %s506 = smul.addr %s505, 4
      %s507 = scalar_lea.vmem %s3, %s506
      // Predicated region
      $region41: #{_lambda_.33} parent=31 // pred_check
        %p508 = pneg %p135
      $region42: #{_lambda_.33} parent=31 // pred_check_branch
        %510 = sbr.rel (%p508) target = $region44
      $region43: #{_lambda_.33} parent=31 // pred_region
        %s511 = smul.u32 8, %s19
      $region44: #{_lambda_.33} parent=31 // pred_fallthru
        _
    $region32: #{_lambda_.33} parent=5 // pred_fallthru
      _
    %p512 = scmp.le.s32.totalorder 2, %s9
    // Predicated region
    $region45: #{_lambda_.33} parent=5 // pred_check
      %p513 = pneg %p512
    $region46: #{_lambda_.33} parent=5 // pred_check_branch
      %515 = sbr.rel (%p513) target = $region48
    $region47: #{_lambda_.33} parent=5 // pred_region
      %s516 = ssub.s32 %s9, 2
      // Predicated region
      $region49: #{_lambda_.33} parent=47 // pred_check
        %p517 = pneg %p141
      $region50: #{_lambda_.33} parent=47 // pred_check_branch
        %519 = sbr.rel (%p517) target = $region52
      $region51: #{_lambda_.33} parent=47 // pred_region
        %s520 = smul.u32 8, %s22
        %p521 = scmp.lt.s32.totalorder %s520, 15
        %s522 = scalar_select %p521, %s520, 15
        %p523 = scmp.lt.s32.totalorder %s23, 0
        %s524 = scalar_select %p523, %s23, 0
        %s525 = sadd.s32 %s524, %s522
        %s526 = smul.addr %s525, 4
        %s527 = scalar_lea.vmem %s3, %s526
      $region52: #{_lambda_.33} parent=47 // pred_fallthru
        _
    $region48: #{_lambda_.33} parent=5 // pred_fallthru
      _
  $region6: #{_lambda_.33} parent=0 // loop_footer
    %s13 = sadd.s32 1, %s9
  $region7: #{_lambda_.33} parent=0 // loop_footer_branch
    %8 = sbr.rel target = $region3
  $region8: #{_lambda_.33} parent=0 // loop_exit
    _

// kernel: _lambda_.34
$region0: #{_lambda_.34}
  #allocation0 [shape = 'u32[]', space=smem, size = 0x4, offset = 0x4, fixed_abs, tag = 'smem constant byte address 0x4 - core index']
  #allocation1 [shape = 'u32[144,128]{1,0:T(1,128)}', space=vmem, size = 0x12000, scoped, tag = 'internal scratch']
  #allocation2 [shape = 'f32[64,128]{1,0:T(8,128)}', space=vmem, size = 0x8000, scoped, tag = 'scratch operand']
  %s0 = inlined_call_operand.vmem [shape: bf16[128,32], index: 0, kind: input, shape index: {}]
  %s1 = inlined_call_operand.vmem [shape: bf16[32,128], index: 1, kind: input, shape index: {}]
  %s2 = inlined_call_operand.vmem [shape: f32[1,128], index: 2, kind: input, shape index: {}]
  %s3 = inlined_call_operand.vmem [shape: bf16[128,128], index: 3, kind: input, shape index: {}]
  %s4 = inlined_call_operand.vmem [shape: bf16[128,128], index: 4, kind: output, shape index: {}]
  %s5 = sld [smem:[#allocation0]]
  $region57: #{_lambda_.34} parent=0
    _
  %s7 = ssub.s32 1, %s5
  %s8 = scalar_select 0, %s7, %s5
  loop: start=0, step=1, limit=4
  $region2: #{_lambda_.34} parent=0 // loop_pre_header
    _
  $region3: #{_lambda_.34} parent=0 // loop_header
    %s10 = sphi 0, %s14
    %p11 = scmp.ge.s32.totalorder %s10, 4
    %s17 = sphi 0, %s36
    %s18 = sphi 0, %s32
    %s19 = sphi 0, %s28
    %s20 = sphi 0, %s17
    %s21 = sphi 0, %s18
    %s22 = sphi 0, %s19
    %s23 = sphi 0, %s20
    %s24 = sphi 0, %s21
    %s25 = sphi 0, %s22
    %s41 = sphi 0, %s43
    %s44 = sphi 0, %s41
    %s45 = sphi 0, %s44
    %s61 = sphi 0, %s45
    %s69 = sphi 0, %s71
    %s72 = sphi 0, %s69
    %s73 = sphi 0, %s72
    %s89 = sphi 0, %s73
    %s95 = sphi 0, %s97
    %s98 = sphi 0, %s95
    %s99 = sphi 0, %s98
    %s115 = sphi 0, %s99
    %s123 = sphi 0, %s125
    %s126 = sphi 0, %s123
    %s127 = sphi 0, %s126
    %s143 = sphi 0, %s127
    %s151 = sphi 0, %s153
    %s154 = sphi 0, %s151
    %s155 = sphi 0, %s154
    %s171 = sphi 0, %s155
  $region4: #{_lambda_.34} parent=0 // loop_header_branch
    %13 = sbr.rel (%p11) target = $region8
  $region5: #{_lambda_.34} parent=0 // loop_body
    %s15 = ssub.s32 %s10, 1
    %s16 = ssub.s32 %s10, 2
    %s26 = sadd.s32 1, %s19
    %p27 = scmp.ge.s32.totalorder %s26, 1
    %s28 = scalar_select %p27, 0, %s26
    %s29 = sadd.s32 1, %s18
    %s30 = scalar_select %p27, %s29, %s18
    %p31 = scmp.ge.s32.totalorder %s30, 1
    %s32 = scalar_select %p31, 0, %s30
    %s33 = sadd.s32 1, %s17
    %s34 = scalar_select %p31, %s33, %s17
    %p35 = scmp.ge.s32.totalorder %s34, 2
    %s36 = scalar_select %p35, 0, %s34
    %s37 = ssub.s32 %s17, %s36
    %s38 = ssub.s32 %s19, %s28
    %s39 = sor.u32 %s37, %s38
    %p40 = scmp.eq.s32.totalorder %s39, 0
    %s42 = sadd.s32 %s41, 1
    %s43 = scalar_select %p40, %s41, %s42
    %p46 = pneg %p40
    %p47 = scmp.eq.s32.totalorder %s10, 1
    %p48 = por %p46, %p47
    %p49 = scmp.ne.s32.totalorder %s41, %s44
    %p50 = scmp.eq.s32.totalorder %s10, 0
    %p51 = por %p49, %p50
    %p52 = scmp.ne.s32.totalorder %s41, %s44
    %p53 = scmp.eq.s32.totalorder %s15, 1
    %p54 = por %p52, %p53
    %p55 = scmp.ne.s32.totalorder %s44, %s45
    %p56 = scmp.eq.s32.totalorder %s15, 0
    %p57 = por %p55, %p56
    %p58 = scmp.ne.s32.totalorder %s44, %s45
    %p59 = scmp.eq.s32.totalorder %s16, 1
    %p60 = por %p58, %p59
    %p62 = scmp.ne.s32.totalorder %s45, %s61
    %p63 = scmp.eq.s32.totalorder %s16, 0
    %p64 = por %p62, %p63
    %s65 = ssub.s32 %s19, %s28
    %s66 = ssub.s32 %s18, %s32
    %s67 = sor.u32 %s65, %s66
    %p68 = scmp.eq.s32.totalorder %s67, 0
    %s70 = sadd.s32 %s69, 1
    %s71 = scalar_select %p68, %s69, %s70
    %p74 = pneg %p68
    %p75 = scmp.eq.s32.totalorder %s10, 1
    %p76 = por %p74, %p75
    %p77 = scmp.ne.s32.totalorder %s69, %s72
    %p78 = scmp.eq.s32.totalorder %s10, 0
    %p79 = por %p77, %p78
    %p80 = scmp.ne.s32.totalorder %s69, %s72
    %p81 = scmp.eq.s32.totalorder %s15, 1
    %p82 = por %p80, %p81
    %p83 = scmp.ne.s32.totalorder %s72, %s73
    %p84 = scmp.eq.s32.totalorder %s15, 0
    %p85 = por %p83, %p84
    %p86 = scmp.ne.s32.totalorder %s72, %s73
    %p87 = scmp.eq.s32.totalorder %s16, 1
    %p88 = por %p86, %p87
    %p90 = scmp.ne.s32.totalorder %s73, %s89
    %p91 = scmp.eq.s32.totalorder %s16, 0
    %p92 = por %p90, %p91
    %s93 = ssub.s32 %s18, %s32
    %p94 = scmp.eq.s32.totalorder %s93, 0
    %s96 = sadd.s32 %s95, 1
    %s97 = scalar_select %p94, %s95, %s96
    %p100 = pneg %p94
    %p101 = scmp.eq.s32.totalorder %s10, 1
    %p102 = por %p100, %p101
    %p103 = scmp.ne.s32.totalorder %s95, %s98
    %p104 = scmp.eq.s32.totalorder %s10, 0
    %p105 = por %p103, %p104
    %p106 = scmp.ne.s32.totalorder %s95, %s98
    %p107 = scmp.eq.s32.totalorder %s15, 1
    %p108 = por %p106, %p107
    %p109 = scmp.ne.s32.totalorder %s98, %s99
    %p110 = scmp.eq.s32.totalorder %s15, 0
    %p111 = por %p109, %p110
    %p112 = scmp.ne.s32.totalorder %s98, %s99
    %p113 = scmp.eq.s32.totalorder %s16, 1
    %p114 = por %p112, %p113
    %p116 = scmp.ne.s32.totalorder %s99, %s115
    %p117 = scmp.eq.s32.totalorder %s16, 0
    %p118 = por %p116, %p117
    %s119 = ssub.s32 %s17, %s36
    %s120 = ssub.s32 %s18, %s32
    %s121 = sor.u32 %s119, %s120
    %p122 = scmp.eq.s32.totalorder %s121, 0
    %s124 = sadd.s32 %s123, 1
    %s125 = scalar_select %p122, %s123, %s124
    %p128 = pneg %p122
    %p129 = scmp.eq.s32.totalorder %s10, 1
    %p130 = por %p128, %p129
    %p131 = scmp.ne.s32.totalorder %s123, %s126
    %p132 = scmp.eq.s32.totalorder %s10, 0
    %p133 = por %p131, %p132
    %p134 = scmp.ne.s32.totalorder %s123, %s126
    %p135 = scmp.eq.s32.totalorder %s15, 1
    %p136 = por %p134, %p135
    %p137 = scmp.ne.s32.totalorder %s126, %s127
    %p138 = scmp.eq.s32.totalorder %s15, 0
    %p139 = por %p137, %p138
    %p140 = scmp.ne.s32.totalorder %s126, %s127
    %p141 = scmp.eq.s32.totalorder %s16, 1
    %p142 = por %p140, %p141
    %p144 = scmp.ne.s32.totalorder %s127, %s143
    %p145 = scmp.eq.s32.totalorder %s16, 0
    %p146 = por %p144, %p145
    %s147 = ssub.s32 %s17, %s36
    %s148 = ssub.s32 %s18, %s32
    %s149 = sor.u32 %s147, %s148
    %p150 = scmp.eq.s32.totalorder %s149, 0
    %s152 = sadd.s32 %s151, 1
    %s153 = scalar_select %p150, %s151, %s152
    %p156 = pneg %p150
    %p157 = scmp.eq.s32.totalorder %s10, 1
    %p158 = por %p156, %p157
    %p159 = scmp.ne.s32.totalorder %s151, %s154
    %p160 = scmp.eq.s32.totalorder %s10, 0
    %p161 = por %p159, %p160
    %p162 = scmp.ne.s32.totalorder %s151, %s154
    %p163 = scmp.eq.s32.totalorder %s15, 1
    %p164 = por %p162, %p163
    %p165 = scmp.ne.s32.totalorder %s154, %s155
    %p166 = scmp.eq.s32.totalorder %s15, 0
    %p167 = por %p165, %p166
    %p168 = scmp.ne.s32.totalorder %s154, %s155
    %p169 = scmp.eq.s32.totalorder %s16, 1
    %p170 = por %p168, %p169
    %p172 = scmp.ne.s32.totalorder %s155, %s171
    %p173 = scmp.eq.s32.totalorder %s16, 0
    %p174 = por %p172, %p173
    %p175 = scmp.le.s32.totalorder 1, %s10
    %p176 = scmp.lt.s32.totalorder %s10, 3
    %p177 = pnand %p175, %p176
    %p178 = pneg %p177
    // Predicated region
    $region9: #{_lambda_.34} parent=5 // pred_check
      _
    $region10: #{_lambda_.34} parent=5 // pred_check_branch
      %180 = sbr.rel (%p177) target = $region12
    $region11: #{_lambda_.34} parent=5 // pred_region
      %s181 = ssub.s32 %s10, 1
      // Predicated region
      $region13: #{_lambda_.34} parent=11 // pred_check
        %p182 = pneg %p85
      $region14: #{_lambda_.34} parent=11 // pred_check_branch
        %184 = sbr.rel (%p182) target = $region16
      $region15: #{_lambda_.34} parent=11 // pred_region
        %s185 = smul.u32 4, %s22
        %p186 = scmp.lt.s32.totalorder %s185, 3
        %s187 = scalar_select %p186, %s185, 3
        %p188 = scmp.lt.s32.totalorder %s21, 0
        %s189 = scalar_select %p188, %s21, 0
        %s190 = sadd.s32 %s189, %s187
        %s191 = smul.addr %s190, 4
        %s192 = scalar_lea.vmem %s1, %s191
        %s193 = smul.u32 4, %s22
      $region16: #{_lambda_.34} parent=11 // pred_fallthru
        _
      // Predicated region
      $region17: #{_lambda_.34} parent=11 // pred_check
        %p194 = pneg %p111
      $region18: #{_lambda_.34} parent=11 // pred_check_branch
        %196 = sbr.rel (%p194) target = $region20
      $region19: #{_lambda_.34} parent=11 // pred_region
        %p197 = scmp.lt.s32.totalorder %s21, 0
        %s198 = scalar_select %p197, %s21, 0
        %s199 = scalar_lea.vmem %s2, %s198
      $region20: #{_lambda_.34} parent=11 // pred_fallthru
        _
    $region12: #{_lambda_.34} parent=5 // pred_fallthru
      _
    %p200 = scmp.lt.s32.totalorder %s10, 2
    // Predicated region
    $region21: #{_lambda_.34} parent=5 // pred_check
      %p201 = pneg %p200
    $region22: #{_lambda_.34} parent=5 // pred_check_branch
      %203 = sbr.rel (%p201) target = $region24
    $region23: #{_lambda_.34} parent=5 // pred_region
      // Predicated region
      $region25: #{_lambda_.34} parent=23 // pred_check
        %p204 = pneg %p51
      $region26: #{_lambda_.34} parent=23 // pred_check_branch
        %206 = sbr.rel (%p204) target = $region28
      $region27: #{_lambda_.34} parent=23 // pred_region
        %s207 = smul.u32 8, %s17
        %p208 = scmp.lt.s32.totalorder %s207, 15
        %s209 = scalar_select %p208, %s207, 15
        %p210 = scmp.lt.s32.totalorder %s19, 0
        %s211 = scalar_select %p210, %s19, 0
        %s212 = sadd.s32 %s211, %s209
        %s213 = smul.addr %s212, 4
        %s214 = scalar_lea.vmem %s0, %s213
        %s215 = smul.u32 8, %s17
      $region28: #{_lambda_.34} parent=23 // pred_fallthru
        _
      // Predicated region
      $region29: #{_lambda_.34} parent=23 // pred_check
        %p216 = pneg %p133
      $region30: #{_lambda_.34} parent=23 // pred_check_branch
        %218 = sbr.rel (%p216) target = $region32
      $region31: #{_lambda_.34} parent=23 // pred_region
        %s219 = smul.u32 8, %s17
        %p220 = scmp.lt.s32.totalorder %s219, 15
        %s221 = scalar_select %p220, %s219, 15
        %p222 = scmp.lt.s32.totalorder %s18, 0
        %s223 = scalar_select %p222, %s18, 0
        %s224 = sadd.s32 %s223, %s221
        %s225 = smul.addr %s224, 4
        %s226 = scalar_lea.vmem %s3, %s225
        %s227 = smul.u32 8, %s17
      $region32: #{_lambda_.34} parent=23 // pred_fallthru
        _
    $region24: #{_lambda_.34} parent=5 // pred_fallthru
      _
    %p228 = scmp.le.s32.totalorder 1, %s10
    %p229 = scmp.lt.s32.totalorder %s10, 3
    %p230 = pnand %p228, %p229
    %p231 = pneg %p230
    // Predicated region
    $region33: #{_lambda_.34} parent=5 // pred_check
      _
    $region34: #{_lambda_.34} parent=5 // pred_check_branch
      %233 = sbr.rel (%p230) target = $region36
    $region35: #{_lambda_.34} parent=5 // pred_region
      %s234 = ssub.s32 %s10, 1
      %s235 = smul.u32 8, %s20
      %p236 = scmp.lt.s32.totalorder %s235, 15
      %s237 = scalar_select %p236, %s235, 15
      %p238 = scmp.lt.s32.totalorder %s22, 0
      %s239 = scalar_select %p238, %s22, 0
      %s240 = sadd.s32 %s239, %s237
      %s241 = smul.addr %s240, 4
      %s242 = scalar_lea.vmem %s0, %s241
      %p243 = pneg %p57
      %p244 = pneg %p54
      %s245 = smul.u32 4, %s22
      %p246 = scmp.lt.s32.totalorder %s245, 3
      %s247 = scalar_select %p246, %s245, 3
      %p248 = scmp.lt.s32.totalorder %s21, 0
      %s249 = scalar_select %p248, %s21, 0
      %s250 = sadd.s32 %s249, %s247
      %s251 = smul.addr %s250, 4
      %s252 = scalar_lea.vmem %s1, %s251
      %p253 = pneg %p85
      %p254 = pneg %p82
      %p255 = scmp.lt.s32.totalorder %s21, 0
      %s256 = scalar_select %p255, %s21, 0
      %s257 = scalar_lea.vmem %s2, %s256
      %p258 = pneg %p111
      %p259 = pneg %p108
      %s260 = smul.u32 8, %s20
      %p261 = scmp.lt.s32.totalorder %s260, 15
      %s262 = scalar_select %p261, %s260, 15
      %p263 = scmp.lt.s32.totalorder %s21, 0
      %s264 = scalar_select %p263, %s21, 0
      %s265 = sadd.s32 %s264, %s262
      %s266 = smul.addr %s265, 4
      %s267 = scalar_lea.vmem %s3, %s266
      %p268 = pneg %p139
      %p269 = pneg %p136
      %p270 = pneg %p167
      %p271 = pneg %p164
      %s272 = smul.u32 8, %s20
      %p273 = scmp.lt.s32.totalorder %s272, 15
      %s274 = scalar_select %p273, %s272, 15
      %p275 = scmp.lt.s32.totalorder %s21, 0
      %s276 = scalar_select %p275, %s21, 0
      %s277 = sadd.s32 %s276, %s274
      %s278 = smul.addr %s277, 4
      %s279 = scalar_lea.vmem %s4, %s278
      %s280 = smul.u32 8, %s20
      %p281 = scmp.lt.s32.totalorder %s280, 15
      %s282 = scalar_select %p281, %s280, 15
      %p283 = scmp.lt.s32.totalorder %s22, 0
      %s284 = scalar_select %p283, %s22, 0
      %s285 = sadd.s32 %s284, %s282
      %s286 = smul.addr %s285, 4
      %s287 = scalar_lea.vmem %s0, %s286
      %s288 = smul.u32 8, %s20
      %s289 = smul.u32 4, %s22
      %p290 = scmp.lt.s32.totalorder %s289, 3
      %s291 = scalar_select %p290, %s289, 3
      %p292 = scmp.lt.s32.totalorder %s21, 0
      %s293 = scalar_select %p292, %s21, 0
      %s294 = sadd.s32 %s293, %s291
      %s295 = smul.addr %s294, 4
      %s296 = scalar_lea.vmem %s1, %s295
      %s297 = smul.u32 4, %s22
      %p298 = scmp.lt.s32.totalorder %s21, 0
      %s299 = scalar_select %p298, %s21, 0
      %s300 = scalar_lea.vmem %s2, %s299
      %s301 = smul.u32 8, %s20
      %p302 = scmp.lt.s32.totalorder %s301, 15
      %s303 = scalar_select %p302, %s301, 15
      %p304 = scmp.lt.s32.totalorder %s21, 0
      %s305 = scalar_select %p304, %s21, 0
      %s306 = sadd.s32 %s305, %s303
      %s307 = smul.addr %s306, 4
      %s308 = scalar_lea.vmem %s3, %s307
      %s309 = smul.u32 8, %s20
      %s310 = smul.u32 8, %s20
      %p311 = scmp.lt.s32.totalorder %s310, 15
      %s312 = scalar_select %p311, %s310, 15
      %p313 = scmp.lt.s32.totalorder %s21, 0
      %s314 = scalar_select %p313, %s21, 0
      %s315 = sadd.s32 %s314, %s312
      %s316 = smul.addr %s315, 4
      %s317 = scalar_lea.vmem %s4, %s316
      %s318 = smul.u32 8, %s20
      %p320 = scmp.eq.s32.totalorder %s22, 0
      // Predicated region
      $region37: #{_lambda_.34} parent=35 // pred_check
        %p321 = pneg %p320
      $region38: #{_lambda_.34} parent=35 // pred_check_branch
        %323 = sbr.rel (%p321) target = $region40
      $region39: #{_lambda_.34} parent=35 // pred_region
        %324 = vst [vmem:[#allocation2] sm:$0xff] 0.0
        %325 = vst [vmem:[#allocation2 + $0x8] sm:$0xff] 0.0
        %326 = vst [vmem:[#allocation2 + $0x10] sm:$0xff] 0.0
        %327 = vst [vmem:[#allocation2 + $0x18] sm:$0xff] 0.0
        %328 = vst [vmem:[#allocation2 + $0x20] sm:$0xff] 0.0
        %329 = vst [vmem:[#allocation2 + $0x28] sm:$0xff] 0.0
        %330 = vst [vmem:[#allocation2 + $0x30] sm:$0xff] 0.0
        %331 = vst [vmem:[#allocation2 + $0x38] sm:$0xff] 0.0
      $region40: #{_lambda_.34} parent=35 // pred_fallthru
        _
      %v332 = vld [vmem:[#allocation2] sm:$0xff]
      %v333 = vld [vmem:[#allocation2 + $0x8] sm:$0xff]
      %v334 = vld [vmem:[#allocation2 + $0x10] sm:$0xff]
      %v335 = vld [vmem:[#allocation2 + $0x18] sm:$0xff]
      %v336 = vld [vmem:[#allocation2 + $0x20] sm:$0xff]
      %v337 = vld [vmem:[#allocation2 + $0x28] sm:$0xff]
      %v338 = vld [vmem:[#allocation2 + $0x30] sm:$0xff]
      %v339 = vld [vmem:[#allocation2 + $0x38] sm:$0xff]
      %v340 = vld [vmem:[%s287] sm:$0xf]
      %v341 = vld [vmem:[%s287 + $0x4] sm:$0xf]
      %v342 = vld [vmem:[%s287 + $0x8] sm:$0xf]
      %v343 = vld [vmem:[%s287 + $0xc] sm:$0xf]
      %v344 = vld [vmem:[%s287 + $0x10] sm:$0xf]
      %v345 = vld [vmem:[%s287 + $0x14] sm:$0xf]
      %v346 = vld [vmem:[%s287 + $0x18] sm:$0xf]
      %v347 = vld [vmem:[%s287 + $0x1c] sm:$0xf]
      %v348 = vld [vmem:[%s296] sm:$0xf]
      %v349 = vld [vmem:[%s296 + $0x4] sm:$0xf]
      %v350 = vld [vmem:[%s296 + $0x8] sm:$0xf]
      %v351 = vld [vmem:[%s296 + $0xc] sm:$0xf]
      %v360 = vunpack.c.l.b16 %v340
      %v361 = vunpack.c.l.b16 %v341
      %v362 = vunpack.c.l.b16 %v342
      %v363 = vunpack.c.l.b16 %v343
      %v364 = vunpack.c.l.b16 %v344
      %v365 = vunpack.c.l.b16 %v345
      %v366 = vunpack.c.l.b16 %v346
      %v367 = vunpack.c.l.b16 %v347
      %v368 = vpack.c.b16 %v361, %v360
      %v369 = vpack.c.b16 %v363, %v362
      %v370 = vpack.c.b16 %v365, %v364
      %v371 = vpack.c.b16 %v367, %v366
      %v376 = vunpack.c.l.b16 %v348
      %v377 = vunpack.c.l.b16 %v349
      %v378 = vunpack.c.l.b16 %v350
      %v379 = vunpack.c.l.b16 %v351
      %v380 = vpack.c.b16 %v377, %v376
      %v381 = vpack.c.b16 %v379, %v378
      %vm384 = vcmask 261120
      %v386 = vsel %vm384, %v368, 0
      %v389 = vsel %vm384, %v369, 0
      %v392 = vsel %vm384, %v370, 0
      %v395 = vsel %vm384, %v371, 0
      %397 = vmatprep.subr.bf16.mxu0 0
      %398 = vmatpush1.bf16.msra.mxu0 %v380
      %399 = vmatprep.subr.bf16.mxu0 0
      %400 = vmatpush1.bf16.msra.mxu0 %v381
      %401 = vmatprep.subr.bf16.mxu0 0
      %402 = vmatpush1.bf16.msra.mxu0 0
      %403 = vmatprep.subr.bf16.mxu0 0
      %404 = vmatpush1.bf16.msra.mxu0 0
      %405 = vmatprep.subr.bf16.mxu0 0
      %406 = vmatpush1.bf16.msra.mxu0 0
      %407 = vmatprep.subr.bf16.mxu0 0
      %408 = vmatpush1.bf16.msra.mxu0 0
      %409 = vmatprep.subr.bf16.mxu0 0
      %410 = vmatpush1.bf16.msra.mxu0 0
      %411 = vmatprep.subr.bf16.mxu0 0
      %412 = vmatpush1.bf16.msra.mxu0 0
      %413 = vmatprep.subr.bf16.mxu0 0
      %414 = vmatpush1.bf16.msra.mxu0 0
      %415 = vmatprep.subr.bf16.mxu0 0
      %416 = vmatpush1.bf16.msra.mxu0 0
      %417 = vmatprep.subr.bf16.mxu0 0
      %418 = vmatpush1.bf16.msra.mxu0 0
      %419 = vmatprep.subr.bf16.mxu0 0
      %420 = vmatpush1.bf16.msra.mxu0 0
      %421 = vmatprep.subr.bf16.mxu0 0
      %422 = vmatpush1.bf16.msra.mxu0 0
      %423 = vmatprep.subr.bf16.mxu0 0
      %424 = vmatpush1.bf16.msra.mxu0 0
      %425 = vmatprep.subr.bf16.mxu0 0
      %426 = vmatpush1.bf16.msra.mxu0 0
      %427 = vmatprep.subr.bf16.mxu0 0
      %428 = vmatpush1.bf16.msra.mxu0 0
      %429 = vmatprep.mubr.bf16.mxu0 0
      %430 = vmatmul.mubr.bf16.gmra.mrb[0].mxu0 %v386
      %v431 = vpop.f32.mrb[0].mxu0
      %v432 = vadd.f32 0.0, %v431
      %v433 = vpop.f32.mrb[0].mxu0
      %v434 = vpop.f32.mrb[0].mxu0
      %v435 = vadd.f32 0.0, %v434
      %v436 = vpop.f32.mrb[0].mxu0
      %437 = vmatprep.mubr.bf16.mxu0 0
      %438 = vmatmul.mubr.bf16.gmra.mrb[0].mxu0 %v389
      %v439 = vpop.f32.mrb[0].mxu0
      %v440 = vadd.f32 0.0, %v439
      %v441 = vpop.f32.mrb[0].mxu0
      %v442 = vpop.f32.mrb[0].mxu0
      %v443 = vadd.f32 0.0, %v442
      %v444 = vpop.f32.mrb[0].mxu0
      %445 = vmatprep.mubr.bf16.mxu0 0
      %446 = vmatmul.mubr.bf16.gmra.mrb[0].mxu0 %v392
      %v447 = vpop.f32.mrb[0].mxu0
      %v448 = vadd.f32 0.0, %v447
      %v449 = vpop.f32.mrb[0].mxu0
      %v450 = vpop.f32.mrb[0].mxu0
      %v451 = vadd.f32 0.0, %v450
      %v452 = vpop.f32.mrb[0].mxu0
      %453 = vmatprep.mubr.bf16.mxu0 0
      %454 = vmatmul.mubr.bf16.gmra.mrb[0].mxu0 %v395
      %v455 = vpop.f32.mrb[0].mxu0
      %v456 = vadd.f32 0.0, %v455
      %v457 = vpop.f32.mrb[0].mxu0
      %v458 = vpop.f32.mrb[0].mxu0
      %v459 = vadd.f32 0.0, %v458
      %v460 = vpop.f32.mrb[0].mxu0
      %461 = vdwg.mxu0
      %v462 = vadd.f32 %v332, %v432
      %v463 = vadd.f32 %v333, %v435
      %v464 = vadd.f32 %v334, %v440
      %v465 = vadd.f32 %v335, %v443
      %v466 = vadd.f32 %v336, %v448
      %v467 = vadd.f32 %v337, %v451
      %v468 = vadd.f32 %v338, %v456
      %v469 = vadd.f32 %v339, %v459
      %470 = vst [vmem:[#allocation2] sm:$0xff] %v462
      %471 = vst [vmem:[#allocation2 + $0x8] sm:$0xff] %v463
      %472 = vst [vmem:[#allocation2 + $0x10] sm:$0xff] %v464
      %473 = vst [vmem:[#allocation2 + $0x18] sm:$0xff] %v465
      %474 = vst [vmem:[#allocation2 + $0x20] sm:$0xff] %v466
      %475 = vst [vmem:[#allocation2 + $0x28] sm:$0xff] %v467
      %476 = vst [vmem:[#allocation2 + $0x30] sm:$0xff] %v468
      %477 = vst [vmem:[#allocation2 + $0x38] sm:$0xff] %v469
      // Predicated region
      $region41: #{_lambda_.34} parent=35 // pred_check
        %p478 = pneg %p320
      $region42: #{_lambda_.34} parent=35 // pred_check_branch
        %480 = sbr.rel (%p478) target = $region44
      $region43: #{_lambda_.34} parent=35 // pred_region
        %v481 = vld [vmem:[#allocation2] sm:$0xff]
        %v482 = vld [vmem:[#allocation2 + $0x8] sm:$0xff]
        %v483 = vld [vmem:[#allocation2 + $0x10] sm:$0xff]
        %v484 = vld [vmem:[#allocation2 + $0x18] sm:$0xff]
        %v485 = vld [vmem:[#allocation2 + $0x20] sm:$0xff]
        %v486 = vld [vmem:[#allocation2 + $0x28] sm:$0xff]
        %v487 = vld [vmem:[#allocation2 + $0x30] sm:$0xff]
        %v488 = vld [vmem:[#allocation2 + $0x38] sm:$0xff]
        %v489 = vld [vmem:[%s300] sm:$0x1]
        %v491 = vlaneseq
        %v492 = vshrl.u32 %v491, 7
        %v493 = vsub.s32 0, %v492
        %v494 = vrot.slane %v489, %v493
        %v496 = vadd.f32 %v481, %v494
        %v497 = vadd.f32 %v482, %v494
        %v498 = vadd.f32 %v483, %v494
        %v499 = vadd.f32 %v484, %v494
        %v500 = vadd.f32 %v485, %v494
        %v501 = vadd.f32 %v486, %v494
        %v502 = vadd.f32 %v487, %v494
        %v503 = vadd.f32 %v488, %v494
        %v504 = vld [vmem:[%s308] sm:$0xf]
        %v505 = vld [vmem:[%s308 + $0x4] sm:$0xf]
        %v506 = vld [vmem:[%s308 + $0x8] sm:$0xf]
        %v507 = vld [vmem:[%s308 + $0xc] sm:$0xf]
        %v508 = vld [vmem:[%s308 + $0x10] sm:$0xf]
        %v509 = vld [vmem:[%s308 + $0x14] sm:$0xf]
        %v510 = vld [vmem:[%s308 + $0x18] sm:$0xf]
        %v511 = vld [vmem:[%s308 + $0x1c] sm:$0xf]
        %v512 = vunpack.c.l.bf16 %v504
        %v513 = vunpack.c.l.bf16 %v505
        %v514 = vunpack.c.l.bf16 %v506
        %v515 = vunpack.c.l.bf16 %v507
        %v516 = vunpack.c.l.bf16 %v508
        %v517 = vunpack.c.l.bf16 %v509
        %v518 = vunpack.c.l.bf16 %v510
        %v519 = vunpack.c.l.bf16 %v511
        %v520 = vadd.f32 %v496, %v512
        %v521 = vadd.f32 %v497, %v513
        %v522 = vadd.f32 %v498, %v514
        %v523 = vadd.f32 %v499, %v515
        %v524 = vadd.f32 %v500, %v516
        %v525 = vadd.f32 %v501, %v517
        %v526 = vadd.f32 %v502, %v518
        %v527 = vadd.f32 %v503, %v519
        %v528 = vmax.f32 %v520, 0.0
        %v529 = vmax.f32 %v521, 0.0
        %v530 = vmax.f32 %v522, 0.0
        %v531 = vmax.f32 %v523, 0.0
        %v532 = vmax.f32 %v524, 0.0
        %v533 = vmax.f32 %v525, 0.0
        %v534 = vmax.f32 %v526, 0.0
        %v535 = vmax.f32 %v527, 0.0
        %v536 = vpack.c.bf16 %v529, %v528
        %v537 = vpack.c.bf16 %v531, %v530
        %v538 = vpack.c.bf16 %v533, %v532
        %v539 = vpack.c.bf16 %v535, %v534
        %v544 = vunpack.c.l.b16 %v536
        %v545 = vunpack.c.h.b16 %v536
        %v546 = vunpack.c.l.b16 %v537
        %v547 = vunpack.c.h.b16 %v537
        %v548 = vunpack.c.l.b16 %v538
        %v549 = vunpack.c.h.b16 %v538
        %v550 = vunpack.c.l.b16 %v539
        %v551 = vunpack.c.h.b16 %v539
        %v552 = vpack.c.b16 %v544, %v544
        %v553 = vpack.c.b16 %v545, %v545
        %v554 = vpack.c.b16 %v546, %v546
        %v555 = vpack.c.b16 %v547, %v547
        %v556 = vpack.c.b16 %v548, %v548
        %v557 = vpack.c.b16 %v549, %v549
        %v558 = vpack.c.b16 %v550, %v550
        %v559 = vpack.c.b16 %v551, %v551
        %568 = vst [vmem:[%s317] sm:$0xf] %v552
        %569 = vst [vmem:[%s317 + $0x4] sm:$0xf] %v553
        %570 = vst [vmem:[%s317 + $0x8] sm:$0xf] %v554
        %571 = vst [vmem:[%s317 + $0xc] sm:$0xf] %v555
        %572 = vst [vmem:[%s317 + $0x10] sm:$0xf] %v556
        %573 = vst [vmem:[%s317 + $0x14] sm:$0xf] %v557
        %574 = vst [vmem:[%s317 + $0x18] sm:$0xf] %v558
        %575 = vst [vmem:[%s317 + $0x1c] sm:$0xf] %v559
      $region44: #{_lambda_.34} parent=35 // pred_fallthru
        _
      %s576 = smul.u32 8, %s20
      %p577 = scmp.lt.s32.totalorder %s576, 15
      %s578 = scalar_select %p577, %s576, 15
      %p579 = scmp.lt.s32.totalorder %s21, 0
      %s580 = scalar_select %p579, %s21, 0
      %s581 = sadd.s32 %s580, %s578
      %s582 = smul.addr %s581, 4
      %s583 = scalar_lea.vmem %s4, %s582
      // Predicated region
      $region45: #{_lambda_.34} parent=35 // pred_check
        %p584 = pneg %p164
      $region46: #{_lambda_.34} parent=35 // pred_check_branch
        %586 = sbr.rel (%p584) target = $region48
      $region47: #{_lambda_.34} parent=35 // pred_region
        %s587 = smul.u32 8, %s20
      $region48: #{_lambda_.34} parent=35 // pred_fallthru
        _
    $region36: #{_lambda_.34} parent=5 // pred_fallthru
      _
    %p588 = scmp.le.s32.totalorder 2, %s10
    // Predicated region
    $region49: #{_lambda_.34} parent=5 // pred_check
      %p589 = pneg %p588
    $region50: #{_lambda_.34} parent=5 // pred_check_branch
      %591 = sbr.rel (%p589) target = $region52
    $region51: #{_lambda_.34} parent=5 // pred_region
      %s592 = ssub.s32 %s10, 2
      // Predicated region
      $region53: #{_lambda_.34} parent=51 // pred_check
        %p593 = pneg %p170
      $region54: #{_lambda_.34} parent=51 // pred_check_branch
        %595 = sbr.rel (%p593) target = $region56
      $region55: #{_lambda_.34} parent=51 // pred_region
        %s596 = smul.u32 8, %s23
        %p597 = scmp.lt.s32.totalorder %s596, 15
        %s598 = scalar_select %p597, %s596, 15
        %p599 = scmp.lt.s32.totalorder %s24, 0
        %s600 = scalar_select %p599, %s24, 0
        %s601 = sadd.s32 %s600, %s598
        %s602 = smul.addr %s601, 4
        %s603 = scalar_lea.vmem %s4, %s602
      $region56: #{_lambda_.34} parent=51 // pred_fallthru
        _
    $region52: #{_lambda_.34} parent=5 // pred_fallthru
      _
  $region6: #{_lambda_.34} parent=0 // loop_footer
    %s14 = sadd.s32 1, %s10
  $region7: #{_lambda_.34} parent=0 // loop_footer_branch
    %9 = sbr.rel target = $region3
  $region8: #{_lambda_.34} parent=0 // loop_exit
    _

// kernel: _lambda_.35
$region0: #{_lambda_.35}
  #allocation0 [shape = 'u32[]', space=smem, size = 0x4, offset = 0x4, fixed_abs, tag = 'smem constant byte address 0x4 - core index']
  #allocation1 [shape = 'u32[144,128]{1,0:T(1,128)}', space=vmem, size = 0x12000, scoped, tag = 'internal scratch']
  #allocation2 [shape = 'f32[64,128]{1,0:T(8,128)}', space=vmem, size = 0x8000, scoped, tag = 'scratch operand']
  %s0 = inlined_call_operand.vmem [shape: bf16[128,128], index: 0, kind: input, shape index: {}]
  %s1 = inlined_call_operand.vmem [shape: bf16[128,128], index: 1, kind: input, shape index: {}]
  %s2 = inlined_call_operand.vmem [shape: f32[1,128], index: 2, kind: input, shape index: {}]
  %s3 = inlined_call_operand.vmem [shape: bf16[128,128], index: 3, kind: output, shape index: {}]
  %s4 = sld [smem:[#allocation0]]
  $region53: #{_lambda_.35} parent=0
    _
  %s6 = ssub.s32 1, %s4
  %s7 = scalar_select 0, %s6, %s4
  loop: start=0, step=1, limit=4
  $region2: #{_lambda_.35} parent=0 // loop_pre_header
    _
  $region3: #{_lambda_.35} parent=0 // loop_header
    %s9 = sphi 0, %s13
    %p10 = scmp.ge.s32.totalorder %s9, 4
    %s16 = sphi 0, %s35
    %s17 = sphi 0, %s31
    %s18 = sphi 0, %s27
    %s19 = sphi 0, %s16
    %s20 = sphi 0, %s17
    %s21 = sphi 0, %s18
    %s22 = sphi 0, %s19
    %s23 = sphi 0, %s20
    %s24 = sphi 0, %s21
    %s40 = sphi 0, %s42
    %s43 = sphi 0, %s40
    %s44 = sphi 0, %s43
    %s60 = sphi 0, %s44
    %s68 = sphi 0, %s70
    %s71 = sphi 0, %s68
    %s72 = sphi 0, %s71
    %s88 = sphi 0, %s72
    %s94 = sphi 0, %s96
    %s97 = sphi 0, %s94
    %s98 = sphi 0, %s97
    %s114 = sphi 0, %s98
    %s122 = sphi 0, %s124
    %s125 = sphi 0, %s122
    %s126 = sphi 0, %s125
    %s142 = sphi 0, %s126
  $region4: #{_lambda_.35} parent=0 // loop_header_branch
    %12 = sbr.rel (%p10) target = $region8
  $region5: #{_lambda_.35} parent=0 // loop_body
    %s14 = ssub.s32 %s9, 1
    %s15 = ssub.s32 %s9, 2
    %s25 = sadd.s32 1, %s18
    %p26 = scmp.ge.s32.totalorder %s25, 1
    %s27 = scalar_select %p26, 0, %s25
    %s28 = sadd.s32 1, %s17
    %s29 = scalar_select %p26, %s28, %s17
    %p30 = scmp.ge.s32.totalorder %s29, 1
    %s31 = scalar_select %p30, 0, %s29
    %s32 = sadd.s32 1, %s16
    %s33 = scalar_select %p30, %s32, %s16
    %p34 = scmp.ge.s32.totalorder %s33, 2
    %s35 = scalar_select %p34, 0, %s33
    %s36 = ssub.s32 %s16, %s35
    %s37 = ssub.s32 %s18, %s27
    %s38 = sor.u32 %s36, %s37
    %p39 = scmp.eq.s32.totalorder %s38, 0
    %s41 = sadd.s32 %s40, 1
    %s42 = scalar_select %p39, %s40, %s41
    %p45 = pneg %p39
    %p46 = scmp.eq.s32.totalorder %s9, 1
    %p47 = por %p45, %p46
    %p48 = scmp.ne.s32.totalorder %s40, %s43
    %p49 = scmp.eq.s32.totalorder %s9, 0
    %p50 = por %p48, %p49
    %p51 = scmp.ne.s32.totalorder %s40, %s43
    %p52 = scmp.eq.s32.totalorder %s14, 1
    %p53 = por %p51, %p52
    %p54 = scmp.ne.s32.totalorder %s43, %s44
    %p55 = scmp.eq.s32.totalorder %s14, 0
    %p56 = por %p54, %p55
    %p57 = scmp.ne.s32.totalorder %s43, %s44
    %p58 = scmp.eq.s32.totalorder %s15, 1
    %p59 = por %p57, %p58
    %p61 = scmp.ne.s32.totalorder %s44, %s60
    %p62 = scmp.eq.s32.totalorder %s15, 0
    %p63 = por %p61, %p62
    %s64 = ssub.s32 %s18, %s27
    %s65 = ssub.s32 %s17, %s31
    %s66 = sor.u32 %s64, %s65
    %p67 = scmp.eq.s32.totalorder %s66, 0
    %s69 = sadd.s32 %s68, 1
    %s70 = scalar_select %p67, %s68, %s69
    %p73 = pneg %p67
    %p74 = scmp.eq.s32.totalorder %s9, 1
    %p75 = por %p73, %p74
    %p76 = scmp.ne.s32.totalorder %s68, %s71
    %p77 = scmp.eq.s32.totalorder %s9, 0
    %p78 = por %p76, %p77
    %p79 = scmp.ne.s32.totalorder %s68, %s71
    %p80 = scmp.eq.s32.totalorder %s14, 1
    %p81 = por %p79, %p80
    %p82 = scmp.ne.s32.totalorder %s71, %s72
    %p83 = scmp.eq.s32.totalorder %s14, 0
    %p84 = por %p82, %p83
    %p85 = scmp.ne.s32.totalorder %s71, %s72
    %p86 = scmp.eq.s32.totalorder %s15, 1
    %p87 = por %p85, %p86
    %p89 = scmp.ne.s32.totalorder %s72, %s88
    %p90 = scmp.eq.s32.totalorder %s15, 0
    %p91 = por %p89, %p90
    %s92 = ssub.s32 %s17, %s31
    %p93 = scmp.eq.s32.totalorder %s92, 0
    %s95 = sadd.s32 %s94, 1
    %s96 = scalar_select %p93, %s94, %s95
    %p99 = pneg %p93
    %p100 = scmp.eq.s32.totalorder %s9, 1
    %p101 = por %p99, %p100
    %p102 = scmp.ne.s32.totalorder %s94, %s97
    %p103 = scmp.eq.s32.totalorder %s9, 0
    %p104 = por %p102, %p103
    %p105 = scmp.ne.s32.totalorder %s94, %s97
    %p106 = scmp.eq.s32.totalorder %s14, 1
    %p107 = por %p105, %p106
    %p108 = scmp.ne.s32.totalorder %s97, %s98
    %p109 = scmp.eq.s32.totalorder %s14, 0
    %p110 = por %p108, %p109
    %p111 = scmp.ne.s32.totalorder %s97, %s98
    %p112 = scmp.eq.s32.totalorder %s15, 1
    %p113 = por %p111, %p112
    %p115 = scmp.ne.s32.totalorder %s98, %s114
    %p116 = scmp.eq.s32.totalorder %s15, 0
    %p117 = por %p115, %p116
    %s118 = ssub.s32 %s16, %s35
    %s119 = ssub.s32 %s17, %s31
    %s120 = sor.u32 %s118, %s119
    %p121 = scmp.eq.s32.totalorder %s120, 0
    %s123 = sadd.s32 %s122, 1
    %s124 = scalar_select %p121, %s122, %s123
    %p127 = pneg %p121
    %p128 = scmp.eq.s32.totalorder %s9, 1
    %p129 = por %p127, %p128
    %p130 = scmp.ne.s32.totalorder %s122, %s125
    %p131 = scmp.eq.s32.totalorder %s9, 0
    %p132 = por %p130, %p131
    %p133 = scmp.ne.s32.totalorder %s122, %s125
    %p134 = scmp.eq.s32.totalorder %s14, 1
    %p135 = por %p133, %p134
    %p136 = scmp.ne.s32.totalorder %s125, %s126
    %p137 = scmp.eq.s32.totalorder %s14, 0
    %p138 = por %p136, %p137
    %p139 = scmp.ne.s32.totalorder %s125, %s126
    %p140 = scmp.eq.s32.totalorder %s15, 1
    %p141 = por %p139, %p140
    %p143 = scmp.ne.s32.totalorder %s126, %s142
    %p144 = scmp.eq.s32.totalorder %s15, 0
    %p145 = por %p143, %p144
    %p146 = scmp.le.s32.totalorder 1, %s9
    %p147 = scmp.lt.s32.totalorder %s9, 3
    %p148 = pnand %p146, %p147
    %p149 = pneg %p148
    // Predicated region
    $region9: #{_lambda_.35} parent=5 // pred_check
      _
    $region10: #{_lambda_.35} parent=5 // pred_check_branch
      %151 = sbr.rel (%p148) target = $region12
    $region11: #{_lambda_.35} parent=5 // pred_region
      %s152 = ssub.s32 %s9, 1
      // Predicated region
      $region13: #{_lambda_.35} parent=11 // pred_check
        %p153 = pneg %p84
      $region14: #{_lambda_.35} parent=11 // pred_check_branch
        %155 = sbr.rel (%p153) target = $region16
      $region15: #{_lambda_.35} parent=11 // pred_region
        %s156 = smul.u32 16, %s21
        %p157 = scmp.lt.s32.totalorder %s156, 15
        %s158 = scalar_select %p157, %s156, 15
        %p159 = scmp.lt.s32.totalorder %s20, 0
        %s160 = scalar_select %p159, %s20, 0
        %s161 = sadd.s32 %s160, %s158
        %s162 = smul.addr %s161, 4
        %s163 = scalar_lea.vmem %s1, %s162
        %s164 = smul.u32 16, %s21
      $region16: #{_lambda_.35} parent=11 // pred_fallthru
        _
      // Predicated region
      $region17: #{_lambda_.35} parent=11 // pred_check
        %p165 = pneg %p110
      $region18: #{_lambda_.35} parent=11 // pred_check_branch
        %167 = sbr.rel (%p165) target = $region20
      $region19: #{_lambda_.35} parent=11 // pred_region
        %p168 = scmp.lt.s32.totalorder %s20, 0
        %s169 = scalar_select %p168, %s20, 0
        %s170 = scalar_lea.vmem %s2, %s169
      $region20: #{_lambda_.35} parent=11 // pred_fallthru
        _
    $region12: #{_lambda_.35} parent=5 // pred_fallthru
      _
    %p171 = scmp.lt.s32.totalorder %s9, 2
    // Predicated region
    $region21: #{_lambda_.35} parent=5 // pred_check
      %p172 = pneg %p171
    $region22: #{_lambda_.35} parent=5 // pred_check_branch
      %174 = sbr.rel (%p172) target = $region24
    $region23: #{_lambda_.35} parent=5 // pred_region
      // Predicated region
      $region25: #{_lambda_.35} parent=23 // pred_check
        %p175 = pneg %p50
      $region26: #{_lambda_.35} parent=23 // pred_check_branch
        %177 = sbr.rel (%p175) target = $region28
      $region27: #{_lambda_.35} parent=23 // pred_region
        %s178 = smul.u32 8, %s16
        %p179 = scmp.lt.s32.totalorder %s178, 15
        %s180 = scalar_select %p179, %s178, 15
        %p181 = scmp.lt.s32.totalorder %s18, 0
        %s182 = scalar_select %p181, %s18, 0
        %s183 = sadd.s32 %s182, %s180
        %s184 = smul.addr %s183, 4
        %s185 = scalar_lea.vmem %s0, %s184
        %s186 = smul.u32 8, %s16
      $region28: #{_lambda_.35} parent=23 // pred_fallthru
        _
    $region24: #{_lambda_.35} parent=5 // pred_fallthru
      _
    %p187 = scmp.le.s32.totalorder 1, %s9
    %p188 = scmp.lt.s32.totalorder %s9, 3
    %p189 = pnand %p187, %p188
    %p190 = pneg %p189
    // Predicated region
    $region29: #{_lambda_.35} parent=5 // pred_check
      _
    $region30: #{_lambda_.35} parent=5 // pred_check_branch
      %192 = sbr.rel (%p189) target = $region32
    $region31: #{_lambda_.35} parent=5 // pred_region
      %s193 = ssub.s32 %s9, 1
      %s194 = smul.u32 8, %s19
      %p195 = scmp.lt.s32.totalorder %s194, 15
      %s196 = scalar_select %p195, %s194, 15
      %p197 = scmp.lt.s32.totalorder %s21, 0
      %s198 = scalar_select %p197, %s21, 0
      %s199 = sadd.s32 %s198, %s196
      %s200 = smul.addr %s199, 4
      %s201 = scalar_lea.vmem %s0, %s200
      %p202 = pneg %p56
      %p203 = pneg %p53
      %s204 = smul.u32 16, %s21
      %p205 = scmp.lt.s32.totalorder %s204, 15
      %s206 = scalar_select %p205, %s204, 15
      %p207 = scmp.lt.s32.totalorder %s20, 0
      %s208 = scalar_select %p207, %s20, 0
      %s209 = sadd.s32 %s208, %s206
      %s210 = smul.addr %s209, 4
      %s211 = scalar_lea.vmem %s1, %s210
      %p212 = pneg %p84
      %p213 = pneg %p81
      %p214 = scmp.lt.s32.totalorder %s20, 0
      %s215 = scalar_select %p214, %s20, 0
      %s216 = scalar_lea.vmem %s2, %s215
      %p217 = pneg %p110
      %p218 = pneg %p107
      %p219 = pneg %p138
      %p220 = pneg %p135
      %s221 = smul.u32 8, %s19
      %p222 = scmp.lt.s32.totalorder %s221, 15
      %s223 = scalar_select %p222, %s221, 15
      %p224 = scmp.lt.s32.totalorder %s20, 0
      %s225 = scalar_select %p224, %s20, 0
      %s226 = sadd.s32 %s225, %s223
      %s227 = smul.addr %s226, 4
      %s228 = scalar_lea.vmem %s3, %s227
      %s229 = smul.u32 8, %s19
      %p230 = scmp.lt.s32.totalorder %s229, 15
      %s231 = scalar_select %p230, %s229, 15
      %p232 = scmp.lt.s32.totalorder %s21, 0
      %s233 = scalar_select %p232, %s21, 0
      %s234 = sadd.s32 %s233, %s231
      %s235 = smul.addr %s234, 4
      %s236 = scalar_lea.vmem %s0, %s235
      %s237 = smul.u32 8, %s19
      %s238 = smul.u32 16, %s21
      %p239 = scmp.lt.s32.totalorder %s238, 15
      %s240 = scalar_select %p239, %s238, 15
      %p241 = scmp.lt.s32.totalorder %s20, 0
      %s242 = scalar_select %p241, %s20, 0
      %s243 = sadd.s32 %s242, %s240
      %s244 = smul.addr %s243, 4
      %s245 = scalar_lea.vmem %s1, %s244
      %s246 = smul.u32 16, %s21
      %p247 = scmp.lt.s32.totalorder %s20, 0
      %s248 = scalar_select %p247, %s20, 0
      %s249 = scalar_lea.vmem %s2, %s248
      %s250 = smul.u32 8, %s19
      %p251 = scmp.lt.s32.totalorder %s250, 15
      %s252 = scalar_select %p251, %s250, 15
      %p253 = scmp.lt.s32.totalorder %s20, 0
      %s254 = scalar_select %p253, %s20, 0
      %s255 = sadd.s32 %s254, %s252
      %s256 = smul.addr %s255, 4
      %s257 = scalar_lea.vmem %s3, %s256
      %s258 = smul.u32 8, %s19
      %p260 = scmp.eq.s32.totalorder %s21, 0
      // Predicated region
      $region33: #{_lambda_.35} parent=31 // pred_check
        %p261 = pneg %p260
      $region34: #{_lambda_.35} parent=31 // pred_check_branch
        %263 = sbr.rel (%p261) target = $region36
      $region35: #{_lambda_.35} parent=31 // pred_region
        %264 = vst [vmem:[#allocation2] sm:$0xff] 0.0
        %265 = vst [vmem:[#allocation2 + $0x8] sm:$0xff] 0.0
        %266 = vst [vmem:[#allocation2 + $0x10] sm:$0xff] 0.0
        %267 = vst [vmem:[#allocation2 + $0x18] sm:$0xff] 0.0
        %268 = vst [vmem:[#allocation2 + $0x20] sm:$0xff] 0.0
        %269 = vst [vmem:[#allocation2 + $0x28] sm:$0xff] 0.0
        %270 = vst [vmem:[#allocation2 + $0x30] sm:$0xff] 0.0
        %271 = vst [vmem:[#allocation2 + $0x38] sm:$0xff] 0.0
      $region36: #{_lambda_.35} parent=31 // pred_fallthru
        _
      %v272 = vld [vmem:[#allocation2] sm:$0xff]
      %v273 = vld [vmem:[#allocation2 + $0x8] sm:$0xff]
      %v274 = vld [vmem:[#allocation2 + $0x10] sm:$0xff]
      %v275 = vld [vmem:[#allocation2 + $0x18] sm:$0xff]
      %v276 = vld [vmem:[#allocation2 + $0x20] sm:$0xff]
      %v277 = vld [vmem:[#allocation2 + $0x28] sm:$0xff]
      %v278 = vld [vmem:[#allocation2 + $0x30] sm:$0xff]
      %v279 = vld [vmem:[#allocation2 + $0x38] sm:$0xff]
      %v280 = vld [vmem:[%s236] sm:$0xf]
      %v281 = vld [vmem:[%s236 + $0x4] sm:$0xf]
      %v282 = vld [vmem:[%s236 + $0x8] sm:$0xf]
      %v283 = vld [vmem:[%s236 + $0xc] sm:$0xf]
      %v284 = vld [vmem:[%s236 + $0x10] sm:$0xf]
      %v285 = vld [vmem:[%s236 + $0x14] sm:$0xf]
      %v286 = vld [vmem:[%s236 + $0x18] sm:$0xf]
      %v287 = vld [vmem:[%s236 + $0x1c] sm:$0xf]
      %v288 = vld [vmem:[%s245] sm:$0xf]
      %v289 = vld [vmem:[%s245 + $0x4] sm:$0xf]
      %v290 = vld [vmem:[%s245 + $0x8] sm:$0xf]
      %v291 = vld [vmem:[%s245 + $0xc] sm:$0xf]
      %v292 = vld [vmem:[%s245 + $0x10] sm:$0xf]
      %v293 = vld [vmem:[%s245 + $0x14] sm:$0xf]
      %v294 = vld [vmem:[%s245 + $0x18] sm:$0xf]
      %v295 = vld [vmem:[%s245 + $0x1c] sm:$0xf]
      %v296 = vld [vmem:[%s245 + $0x20] sm:$0xf]
      %v297 = vld [vmem:[%s245 + $0x24] sm:$0xf]
      %v298 = vld [vmem:[%s245 + $0x28] sm:$0xf]
      %v299 = vld [vmem:[%s245 + $0x2c] sm:$0xf]
      %v300 = vld [vmem:[%s245 + $0x30] sm:$0xf]
      %v301 = vld [vmem:[%s245 + $0x34] sm:$0xf]
      %v302 = vld [vmem:[%s245 + $0x38] sm:$0xf]
      %v303 = vld [vmem:[%s245 + $0x3c] sm:$0xf]
      %v312 = vunpack.c.l.b16 %v280
      %v313 = vunpack.c.l.b16 %v281
      %v314 = vunpack.c.l.b16 %v282
      %v315 = vunpack.c.l.b16 %v283
      %v316 = vunpack.c.l.b16 %v284
      %v317 = vunpack.c.l.b16 %v285
      %v318 = vunpack.c.l.b16 %v286
      %v319 = vunpack.c.l.b16 %v287
      %v320 = vpack.c.b16 %v313, %v312
      %v321 = vpack.c.b16 %v315, %v314
      %v322 = vpack.c.b16 %v317, %v316
      %v323 = vpack.c.b16 %v319, %v318
      %v344 = vunpack.c.l.b16 %v288
      %v345 = vunpack.c.l.b16 %v289
      %v346 = vunpack.c.l.b16 %v290
      %v347 = vunpack.c.l.b16 %v291
      %v348 = vunpack.c.l.b16 %v292
      %v349 = vunpack.c.l.b16 %v293
      %v350 = vunpack.c.l.b16 %v294
      %v351 = vunpack.c.l.b16 %v295
      %v352 = vunpack.c.l.b16 %v296
      %v353 = vunpack.c.l.b16 %v297
      %v354 = vunpack.c.l.b16 %v298
      %v355 = vunpack.c.l.b16 %v299
      %v356 = vunpack.c.l.b16 %v300
      %v357 = vunpack.c.l.b16 %v301
      %v358 = vunpack.c.l.b16 %v302
      %v359 = vunpack.c.l.b16 %v303
      %v360 = vpack.c.b16 %v345, %v344
      %v361 = vpack.c.b16 %v347, %v346
      %v362 = vpack.c.b16 %v349, %v348
      %v363 = vpack.c.b16 %v351, %v350
      %v364 = vpack.c.b16 %v353, %v352
      %v365 = vpack.c.b16 %v355, %v354
      %v366 = vpack.c.b16 %v357, %v356
      %v367 = vpack.c.b16 %v359, %v358
      %376 = vmatprep.subr.bf16.mxu0 0
      %377 = vmatpush1.bf16.msra.mxu0 %v360
      %378 = vmatprep.subr.bf16.mxu0 0
      %379 = vmatpush1.bf16.msra.mxu0 %v361
      %380 = vmatprep.subr.bf16.mxu0 0
      %381 = vmatpush1.bf16.msra.mxu0 %v362
      %382 = vmatprep.subr.bf16.mxu0 0
      %383 = vmatpush1.bf16.msra.mxu0 %v363
      %384 = vmatprep.subr.bf16.mxu0 0
      %385 = vmatpush1.bf16.msra.mxu0 %v364
      %386 = vmatprep.subr.bf16.mxu0 0
      %387 = vmatpush1.bf16.msra.mxu0 %v365
      %388 = vmatprep.subr.bf16.mxu0 0
      %389 = vmatpush1.bf16.msra.mxu0 %v366
      %390 = vmatprep.subr.bf16.mxu0 0
      %391 = vmatpush1.bf16.msra.mxu0 %v367
      %392 = vmatprep.subr.bf16.mxu0 0
      %393 = vmatpush1.bf16.msra.mxu0 0
      %394 = vmatprep.subr.bf16.mxu0 0
      %395 = vmatpush1.bf16.msra.mxu0 0
      %396 = vmatprep.subr.bf16.mxu0 0
      %397 = vmatpush1.bf16.msra.mxu0 0
      %398 = vmatprep.subr.bf16.mxu0 0
      %399 = vmatpush1.bf16.msra.mxu0 0
      %400 = vmatprep.subr.bf16.mxu0 0
      %401 = vmatpush1.bf16.msra.mxu0 0
      %402 = vmatprep.subr.bf16.mxu0 0
      %403 = vmatpush1.bf16.msra.mxu0 0
      %404 = vmatprep.subr.bf16.mxu0 0
      %405 = vmatpush1.bf16.msra.mxu0 0
      %406 = vmatprep.subr.bf16.mxu0 0
      %407 = vmatpush1.bf16.msra.mxu0 0
      %408 = vmatprep.mubr.bf16.mxu0 0
      %409 = vmatmul.mubr.bf16.gmra.mrb[0].mxu0 %v320
      %v410 = vpop.f32.mrb[0].mxu0
      %v411 = vadd.f32 0.0, %v410
      %v412 = vpop.f32.mrb[0].mxu0
      %v413 = vpop.f32.mrb[0].mxu0
      %v414 = vadd.f32 0.0, %v413
      %v415 = vpop.f32.mrb[0].mxu0
      %416 = vmatprep.mubr.bf16.mxu0 0
      %417 = vmatmul.mubr.bf16.gmra.mrb[0].mxu0 %v321
      %v418 = vpop.f32.mrb[0].mxu0
      %v419 = vadd.f32 0.0, %v418
      %v420 = vpop.f32.mrb[0].mxu0
      %v421 = vpop.f32.mrb[0].mxu0
      %v422 = vadd.f32 0.0, %v421
      %v423 = vpop.f32.mrb[0].mxu0
      %424 = vmatprep.mubr.bf16.mxu0 0
      %425 = vmatmul.mubr.bf16.gmra.mrb[0].mxu0 %v322
      %v426 = vpop.f32.mrb[0].mxu0
      %v427 = vadd.f32 0.0, %v426
      %v428 = vpop.f32.mrb[0].mxu0
      %v429 = vpop.f32.mrb[0].mxu0
      %v430 = vadd.f32 0.0, %v429
      %v431 = vpop.f32.mrb[0].mxu0
      %432 = vmatprep.mubr.bf16.mxu0 0
      %433 = vmatmul.mubr.bf16.gmra.mrb[0].mxu0 %v323
      %v434 = vpop.f32.mrb[0].mxu0
      %v435 = vadd.f32 0.0, %v434
      %v436 = vpop.f32.mrb[0].mxu0
      %v437 = vpop.f32.mrb[0].mxu0
      %v438 = vadd.f32 0.0, %v437
      %v439 = vpop.f32.mrb[0].mxu0
      %440 = vdwg.mxu0
      %v441 = vadd.f32 %v272, %v411
      %v442 = vadd.f32 %v273, %v414
      %v443 = vadd.f32 %v274, %v419
      %v444 = vadd.f32 %v275, %v422
      %v445 = vadd.f32 %v276, %v427
      %v446 = vadd.f32 %v277, %v430
      %v447 = vadd.f32 %v278, %v435
      %v448 = vadd.f32 %v279, %v438
      %449 = vst [vmem:[#allocation2] sm:$0xff] %v441
      %450 = vst [vmem:[#allocation2 + $0x8] sm:$0xff] %v442
      %451 = vst [vmem:[#allocation2 + $0x10] sm:$0xff] %v443
      %452 = vst [vmem:[#allocation2 + $0x18] sm:$0xff] %v444
      %453 = vst [vmem:[#allocation2 + $0x20] sm:$0xff] %v445
      %454 = vst [vmem:[#allocation2 + $0x28] sm:$0xff] %v446
      %455 = vst [vmem:[#allocation2 + $0x30] sm:$0xff] %v447
      %456 = vst [vmem:[#allocation2 + $0x38] sm:$0xff] %v448
      // Predicated region
      $region37: #{_lambda_.35} parent=31 // pred_check
        %p457 = pneg %p260
      $region38: #{_lambda_.35} parent=31 // pred_check_branch
        %459 = sbr.rel (%p457) target = $region40
      $region39: #{_lambda_.35} parent=31 // pred_region
        %v460 = vld [vmem:[#allocation2] sm:$0xff]
        %v461 = vld [vmem:[#allocation2 + $0x8] sm:$0xff]
        %v462 = vld [vmem:[#allocation2 + $0x10] sm:$0xff]
        %v463 = vld [vmem:[#allocation2 + $0x18] sm:$0xff]
        %v464 = vld [vmem:[#allocation2 + $0x20] sm:$0xff]
        %v465 = vld [vmem:[#allocation2 + $0x28] sm:$0xff]
        %v466 = vld [vmem:[#allocation2 + $0x30] sm:$0xff]
        %v467 = vld [vmem:[#allocation2 + $0x38] sm:$0xff]
        %v468 = vld [vmem:[%s249] sm:$0x1]
        %v470 = vlaneseq
        %v471 = vshrl.u32 %v470, 7
        %v472 = vsub.s32 0, %v471
        %v473 = vrot.slane %v468, %v472
        %v475 = vadd.f32 %v460, %v473
        %v476 = vadd.f32 %v461, %v473
        %v477 = vadd.f32 %v462, %v473
        %v478 = vadd.f32 %v463, %v473
        %v479 = vadd.f32 %v464, %v473
        %v480 = vadd.f32 %v465, %v473
        %v481 = vadd.f32 %v466, %v473
        %v482 = vadd.f32 %v467, %v473
        %v483 = vmax.f32 %v475, 0.0
        %v484 = vmax.f32 %v476, 0.0
        %v485 = vmax.f32 %v477, 0.0
        %v486 = vmax.f32 %v478, 0.0
        %v487 = vmax.f32 %v479, 0.0
        %v488 = vmax.f32 %v480, 0.0
        %v489 = vmax.f32 %v481, 0.0
        %v490 = vmax.f32 %v482, 0.0
        %v491 = vpack.c.bf16 %v484, %v483
        %v492 = vpack.c.bf16 %v486, %v485
        %v493 = vpack.c.bf16 %v488, %v487
        %v494 = vpack.c.bf16 %v490, %v489
        %v499 = vunpack.c.l.b16 %v491
        %v500 = vunpack.c.h.b16 %v491
        %v501 = vunpack.c.l.b16 %v492
        %v502 = vunpack.c.h.b16 %v492
        %v503 = vunpack.c.l.b16 %v493
        %v504 = vunpack.c.h.b16 %v493
        %v505 = vunpack.c.l.b16 %v494
        %v506 = vunpack.c.h.b16 %v494
        %v507 = vpack.c.b16 %v499, %v499
        %v508 = vpack.c.b16 %v500, %v500
        %v509 = vpack.c.b16 %v501, %v501
        %v510 = vpack.c.b16 %v502, %v502
        %v511 = vpack.c.b16 %v503, %v503
        %v512 = vpack.c.b16 %v504, %v504
        %v513 = vpack.c.b16 %v505, %v505
        %v514 = vpack.c.b16 %v506, %v506
        %523 = vst [vmem:[%s257] sm:$0xf] %v507
        %524 = vst [vmem:[%s257 + $0x4] sm:$0xf] %v508
        %525 = vst [vmem:[%s257 + $0x8] sm:$0xf] %v509
        %526 = vst [vmem:[%s257 + $0xc] sm:$0xf] %v510
        %527 = vst [vmem:[%s257 + $0x10] sm:$0xf] %v511
        %528 = vst [vmem:[%s257 + $0x14] sm:$0xf] %v512
        %529 = vst [vmem:[%s257 + $0x18] sm:$0xf] %v513
        %530 = vst [vmem:[%s257 + $0x1c] sm:$0xf] %v514
      $region40: #{_lambda_.35} parent=31 // pred_fallthru
        _
      %s531 = smul.u32 8, %s19
      %p532 = scmp.lt.s32.totalorder %s531, 15
      %s533 = scalar_select %p532, %s531, 15
      %p534 = scmp.lt.s32.totalorder %s20, 0
      %s535 = scalar_select %p534, %s20, 0
      %s536 = sadd.s32 %s535, %s533
      %s537 = smul.addr %s536, 4
      %s538 = scalar_lea.vmem %s3, %s537
      // Predicated region
      $region41: #{_lambda_.35} parent=31 // pred_check
        %p539 = pneg %p135
      $region42: #{_lambda_.35} parent=31 // pred_check_branch
        %541 = sbr.rel (%p539) target = $region44
      $region43: #{_lambda_.35} parent=31 // pred_region
        %s542 = smul.u32 8, %s19
      $region44: #{_lambda_.35} parent=31 // pred_fallthru
        _
    $region32: #{_lambda_.35} parent=5 // pred_fallthru
      _
    %p543 = scmp.le.s32.totalorder 2, %s9
    // Predicated region
    $region45: #{_lambda_.35} parent=5 // pred_check
      %p544 = pneg %p543
    $region46: #{_lambda_.35} parent=5 // pred_check_branch
      %546 = sbr.rel (%p544) target = $region48
    $region47: #{_lambda_.35} parent=5 // pred_region
      %s547 = ssub.s32 %s9, 2
      // Predicated region
      $region49: #{_lambda_.35} parent=47 // pred_check
        %p548 = pneg %p141
      $region50: #{_lambda_.35} parent=47 // pred_check_branch
        %550 = sbr.rel (%p548) target = $region52
      $region51: #{_lambda_.35} parent=47 // pred_region
        %s551 = smul.u32 8, %s22
        %p552 = scmp.lt.s32.totalorder %s551, 15
        %s553 = scalar_select %p552, %s551, 15
        %p554 = scmp.lt.s32.totalorder %s23, 0
        %s555 = scalar_select %p554, %s23, 0
        %s556 = sadd.s32 %s555, %s553
        %s557 = smul.addr %s556, 4
        %s558 = scalar_lea.vmem %s3, %s557
      $region52: #{_lambda_.35} parent=47 // pred_fallthru
        _
    $region48: #{_lambda_.35} parent=5 // pred_fallthru
      _
  $region6: #{_lambda_.35} parent=0 // loop_footer
    %s13 = sadd.s32 1, %s9
  $region7: #{_lambda_.35} parent=0 // loop_footer_branch
    %8 = sbr.rel target = $region3
  $region8: #{_lambda_.35} parent=0 // loop_exit
    _

// kernel: _lambda_.39
$region0: #{_lambda_.39}
  #allocation0 [shape = 'u32[]', space=smem, size = 0x4, offset = 0x4, fixed_abs, tag = 'smem constant byte address 0x4 - core index']
  #allocation1 [shape = 'u32[144,128]{1,0:T(1,128)}', space=vmem, size = 0x12000, scoped, tag = 'internal scratch']
  #allocation2 [shape = 'f32[32,128]{1,0:T(8,128)}', space=vmem, size = 0x4000, scoped, tag = 'scratch operand']
  %s0 = inlined_call_operand.vmem [shape: bf16[32,576], index: 0, kind: input, shape index: {}]
  %s1 = inlined_call_operand.vmem [shape: bf16[576,128], index: 1, kind: input, shape index: {}]
  %s2 = inlined_call_operand.vmem [shape: f32[1,128], index: 2, kind: input, shape index: {}]
  %s3 = inlined_call_operand.vmem [shape: bf16[32,128], index: 3, kind: output, shape index: {}]
  %s4 = sld [smem:[#allocation0]]
  $region30: #{_lambda_.39} parent=0
    _
  %s6 = ssub.s32 1, %s4
  %s7 = scalar_select 0, %s6, %s4
  // Predicated region
  $region2: #{_lambda_.39} parent=0 // pred_check
    _
  $region3: #{_lambda_.39} parent=0 // pred_check_branch
    %9 = sbr.rel (0) target = $region5
  $region4: #{_lambda_.39} parent=0 // pred_region
    _
  $region5: #{_lambda_.39} parent=0 // pred_fallthru
    _
  // Predicated region
  $region6: #{_lambda_.39} parent=0 // pred_check
    _
  $region7: #{_lambda_.39} parent=0 // pred_check_branch
    %11 = sbr.rel (0) target = $region9
  $region8: #{_lambda_.39} parent=0 // pred_region
    _
  $region9: #{_lambda_.39} parent=0 // pred_fallthru
    _
  // Predicated region
  $region10: #{_lambda_.39} parent=0 // pred_check
    _
  $region11: #{_lambda_.39} parent=0 // pred_check_branch
    %13 = sbr.rel (0) target = $region13
  $region12: #{_lambda_.39} parent=0 // pred_region
    _
  $region13: #{_lambda_.39} parent=0 // pred_fallthru
    _
  %p15 = scmp.eq.s32.totalorder 0, 0
  // Predicated region
  $region14: #{_lambda_.39} parent=0 // pred_check
    %p16 = pneg %p15
  $region15: #{_lambda_.39} parent=0 // pred_check_branch
    %18 = sbr.rel (%p16) target = $region17
  $region16: #{_lambda_.39} parent=0 // pred_region
    %19 = vst [vmem:[#allocation2] sm:$0xff] 0.0
    %20 = vst [vmem:[#allocation2 + $0x8] sm:$0xff] 0.0
    %21 = vst [vmem:[#allocation2 + $0x10] sm:$0xff] 0.0
    %22 = vst [vmem:[#allocation2 + $0x18] sm:$0xff] 0.0
  $region17: #{_lambda_.39} parent=0 // pred_fallthru
    _
  %v23 = vld [vmem:[#allocation2] sm:$0xff]
  %v24 = vld [vmem:[#allocation2 + $0x8] sm:$0xff]
  %v25 = vld [vmem:[#allocation2 + $0x10] sm:$0xff]
  %v26 = vld [vmem:[#allocation2 + $0x18] sm:$0xff]
  %v27 = vld [vmem:[%s0] sm:$0xff]
  %v28 = vld [vmem:[%s0 + $0x8] sm:$0xff]
  %v29 = vld [vmem:[%s0 + $0x10] sm:$0xf]
  %v30 = vld [vmem:[%s0 + $0x14] sm:$0xff]
  %v31 = vld [vmem:[%s0 + $0x1c] sm:$0xff]
  %v32 = vld [vmem:[%s0 + $0x24] sm:$0xf]
  %v33 = vld [vmem:[%s0 + $0x28] sm:$0xff]
  %v34 = vld [vmem:[%s0 + $0x30] sm:$0xff]
  %v35 = vld [vmem:[%s0 + $0x38] sm:$0xf]
  %v36 = vld [vmem:[%s0 + $0x3c] sm:$0xff]
  %v37 = vld [vmem:[%s0 + $0x44] sm:$0xff]
  %v38 = vld [vmem:[%s0 + $0x4c] sm:$0xf]
  %v39 = vld [vmem:[%s1] sm:$0xf]
  %v40 = vld [vmem:[%s1 + $0x4] sm:$0xf]
  %v41 = vld [vmem:[%s1 + $0x8] sm:$0xf]
  %v42 = vld [vmem:[%s1 + $0xc] sm:$0xf]
  %v43 = vld [vmem:[%s1 + $0x10] sm:$0xf]
  %v44 = vld [vmem:[%s1 + $0x14] sm:$0xf]
  %v45 = vld [vmem:[%s1 + $0x18] sm:$0xf]
  %v46 = vld [vmem:[%s1 + $0x1c] sm:$0xf]
  %v47 = vld [vmem:[%s1 + $0x20] sm:$0xf]
  %v48 = vld [vmem:[%s1 + $0x24] sm:$0xf]
  %v49 = vld [vmem:[%s1 + $0x28] sm:$0xf]
  %v50 = vld [vmem:[%s1 + $0x2c] sm:$0xf]
  %v51 = vld [vmem:[%s1 + $0x30] sm:$0xf]
  %v52 = vld [vmem:[%s1 + $0x34] sm:$0xf]
  %v53 = vld [vmem:[%s1 + $0x38] sm:$0xf]
  %v54 = vld [vmem:[%s1 + $0x3c] sm:$0xf]
  %v55 = vld [vmem:[%s1 + $0x40] sm:$0xf]
  %v56 = vld [vmem:[%s1 + $0x44] sm:$0xf]
  %v57 = vld [vmem:[%s1 + $0x48] sm:$0xf]
  %v58 = vld [vmem:[%s1 + $0x4c] sm:$0xf]
  %v59 = vld [vmem:[%s1 + $0x50] sm:$0xf]
  %v60 = vld [vmem:[%s1 + $0x54] sm:$0xf]
  %v61 = vld [vmem:[%s1 + $0x58] sm:$0xf]
  %v62 = vld [vmem:[%s1 + $0x5c] sm:$0xf]
  %v63 = vld [vmem:[%s1 + $0x60] sm:$0xf]
  %v64 = vld [vmem:[%s1 + $0x64] sm:$0xf]
  %v65 = vld [vmem:[%s1 + $0x68] sm:$0xf]
  %v66 = vld [vmem:[%s1 + $0x6c] sm:$0xf]
  %v67 = vld [vmem:[%s1 + $0x70] sm:$0xf]
  %v68 = vld [vmem:[%s1 + $0x74] sm:$0xf]
  %v69 = vld [vmem:[%s1 + $0x78] sm:$0xf]
  %v70 = vld [vmem:[%s1 + $0x7c] sm:$0xf]
  %v71 = vld [vmem:[%s1 + $0x80] sm:$0xf]
  %v72 = vld [vmem:[%s1 + $0x84] sm:$0xf]
  %v73 = vld [vmem:[%s1 + $0x88] sm:$0xf]
  %v74 = vld [vmem:[%s1 + $0x8c] sm:$0xf]
  %v75 = vld [vmem:[%s1 + $0x90] sm:$0xf]
  %v76 = vld [vmem:[%s1 + $0x94] sm:$0xf]
  %v77 = vld [vmem:[%s1 + $0x98] sm:$0xf]
  %v78 = vld [vmem:[%s1 + $0x9c] sm:$0xf]
  %v79 = vld [vmem:[%s1 + $0xa0] sm:$0xf]
  %v80 = vld [vmem:[%s1 + $0xa4] sm:$0xf]
  %v81 = vld [vmem:[%s1 + $0xa8] sm:$0xf]
  %v82 = vld [vmem:[%s1 + $0xac] sm:$0xf]
  %v83 = vld [vmem:[%s1 + $0xb0] sm:$0xf]
  %v84 = vld [vmem:[%s1 + $0xb4] sm:$0xf]
  %v85 = vld [vmem:[%s1 + $0xb8] sm:$0xf]
  %v86 = vld [vmem:[%s1 + $0xbc] sm:$0xf]
  %v87 = vld [vmem:[%s1 + $0xc0] sm:$0xf]
  %v88 = vld [vmem:[%s1 + $0xc4] sm:$0xf]
  %v89 = vld [vmem:[%s1 + $0xc8] sm:$0xf]
  %v90 = vld [vmem:[%s1 + $0xcc] sm:$0xf]
  %v91 = vld [vmem:[%s1 + $0xd0] sm:$0xf]
  %v92 = vld [vmem:[%s1 + $0xd4] sm:$0xf]
  %v93 = vld [vmem:[%s1 + $0xd8] sm:$0xf]
  %v94 = vld [vmem:[%s1 + $0xdc] sm:$0xf]
  %v95 = vld [vmem:[%s1 + $0xe0] sm:$0xf]
  %v96 = vld [vmem:[%s1 + $0xe4] sm:$0xf]
  %v97 = vld [vmem:[%s1 + $0xe8] sm:$0xf]
  %v98 = vld [vmem:[%s1 + $0xec] sm:$0xf]
  %v99 = vld [vmem:[%s1 + $0xf0] sm:$0xf]
  %v100 = vld [vmem:[%s1 + $0xf4] sm:$0xf]
  %v101 = vld [vmem:[%s1 + $0xf8] sm:$0xf]
  %v102 = vld [vmem:[%s1 + $0xfc] sm:$0xf]
  %v103 = vld [vmem:[%s1 + $0x100] sm:$0xf]
  %v104 = vld [vmem:[%s1 + $0x104] sm:$0xf]
  %v105 = vld [vmem:[%s1 + $0x108] sm:$0xf]
  %v106 = vld [vmem:[%s1 + $0x10c] sm:$0xf]
  %v107 = vld [vmem:[%s1 + $0x110] sm:$0xf]
  %v108 = vld [vmem:[%s1 + $0x114] sm:$0xf]
  %v109 = vld [vmem:[%s1 + $0x118] sm:$0xf]
  %v110 = vld [vmem:[%s1 + $0x11c] sm:$0xf]
  %v123 = vunpack.c.l.b16 %v27
  %v124 = vunpack.c.h.b16 %v27
  %v125 = vunpack.c.l.b16 %v28
  %v126 = vunpack.c.h.b16 %v28
  %v127 = vunpack.c.l.b16 %v29
  %v128 = vunpack.c.l.b16 %v30
  %v129 = vunpack.c.h.b16 %v30
  %v130 = vunpack.c.l.b16 %v31
  %v131 = vunpack.c.h.b16 %v31
  %v132 = vunpack.c.l.b16 %v32
  %v133 = vunpack.c.l.b16 %v33
  %v134 = vunpack.c.h.b16 %v33
  %v135 = vunpack.c.l.b16 %v34
  %v136 = vunpack.c.h.b16 %v34
  %v137 = vunpack.c.l.b16 %v35
  %v138 = vunpack.c.l.b16 %v36
  %v139 = vunpack.c.h.b16 %v36
  %v140 = vunpack.c.l.b16 %v37
  %v141 = vunpack.c.h.b16 %v37
  %v142 = vunpack.c.l.b16 %v38
  %v143 = vpack.c.b16 %v128, %v123
  %v144 = vpack.c.b16 %v129, %v124
  %v145 = vpack.c.b16 %v130, %v125
  %v146 = vpack.c.b16 %v131, %v126
  %v147 = vpack.c.b16 %v132, %v127
  %v148 = vpack.c.b16 %v138, %v133
  %v149 = vpack.c.b16 %v139, %v134
  %v150 = vpack.c.b16 %v140, %v135
  %v151 = vpack.c.b16 %v141, %v136
  %v152 = vpack.c.b16 %v142, %v137
  %v233 = vunpack.c.l.b16 %v39
  %v234 = vunpack.c.l.b16 %v40
  %v235 = vunpack.c.l.b16 %v41
  %v236 = vunpack.c.l.b16 %v42
  %v237 = vunpack.c.l.b16 %v43
  %v238 = vunpack.c.l.b16 %v44
  %v239 = vunpack.c.l.b16 %v45
  %v240 = vunpack.c.l.b16 %v46
  %v241 = vunpack.c.l.b16 %v47
  %v242 = vunpack.c.l.b16 %v48
  %v243 = vunpack.c.l.b16 %v49
  %v244 = vunpack.c.l.b16 %v50
  %v245 = vunpack.c.l.b16 %v51
  %v246 = vunpack.c.l.b16 %v52
  %v247 = vunpack.c.l.b16 %v53
  %v248 = vunpack.c.l.b16 %v54
  %v249 = vunpack.c.l.b16 %v55
  %v250 = vunpack.c.l.b16 %v56
  %v251 = vunpack.c.l.b16 %v57
  %v252 = vunpack.c.l.b16 %v58
  %v253 = vunpack.c.l.b16 %v59
  %v254 = vunpack.c.l.b16 %v60
  %v255 = vunpack.c.l.b16 %v61
  %v256 = vunpack.c.l.b16 %v62
  %v257 = vunpack.c.l.b16 %v63
  %v258 = vunpack.c.l.b16 %v64
  %v259 = vunpack.c.l.b16 %v65
  %v260 = vunpack.c.l.b16 %v66
  %v261 = vunpack.c.l.b16 %v67
  %v262 = vunpack.c.l.b16 %v68
  %v263 = vunpack.c.l.b16 %v69
  %v264 = vunpack.c.l.b16 %v70
  %v265 = vunpack.c.l.b16 %v71
  %v266 = vunpack.c.l.b16 %v72
  %v267 = vunpack.c.l.b16 %v73
  %v268 = vunpack.c.l.b16 %v74
  %v269 = vunpack.c.l.b16 %v75
  %v270 = vunpack.c.l.b16 %v76
  %v271 = vunpack.c.l.b16 %v77
  %v272 = vunpack.c.l.b16 %v78
  %v273 = vunpack.c.l.b16 %v79
  %v274 = vunpack.c.l.b16 %v80
  %v275 = vunpack.c.l.b16 %v81
  %v276 = vunpack.c.l.b16 %v82
  %v277 = vunpack.c.l.b16 %v83
  %v278 = vunpack.c.l.b16 %v84
  %v279 = vunpack.c.l.b16 %v85
  %v280 = vunpack.c.l.b16 %v86
  %v281 = vunpack.c.l.b16 %v87
  %v282 = vunpack.c.l.b16 %v88
  %v283 = vunpack.c.l.b16 %v89
  %v284 = vunpack.c.l.b16 %v90
  %v285 = vunpack.c.l.b16 %v91
  %v286 = vunpack.c.l.b16 %v92
  %v287 = vunpack.c.l.b16 %v93
  %v288 = vunpack.c.l.b16 %v94
  %v289 = vunpack.c.l.b16 %v95
  %v290 = vunpack.c.l.b16 %v96
  %v291 = vunpack.c.l.b16 %v97
  %v292 = vunpack.c.l.b16 %v98
  %v293 = vunpack.c.l.b16 %v99
  %v294 = vunpack.c.l.b16 %v100
  %v295 = vunpack.c.l.b16 %v101
  %v296 = vunpack.c.l.b16 %v102
  %v297 = vunpack.c.l.b16 %v103
  %v298 = vunpack.c.l.b16 %v104
  %v299 = vunpack.c.l.b16 %v105
  %v300 = vunpack.c.l.b16 %v106
  %v301 = vunpack.c.l.b16 %v107
  %v302 = vunpack.c.l.b16 %v108
  %v303 = vunpack.c.l.b16 %v109
  %v304 = vunpack.c.l.b16 %v110
  %v305 = vpack.c.b16 %v234, %v233
  %v306 = vpack.c.b16 %v236, %v235
  %v307 = vpack.c.b16 %v238, %v237
  %v308 = vpack.c.b16 %v240, %v239
  %v309 = vpack.c.b16 %v242, %v241
  %v310 = vpack.c.b16 %v244, %v243
  %v311 = vpack.c.b16 %v246, %v245
  %v312 = vpack.c.b16 %v248, %v247
  %v313 = vpack.c.b16 %v250, %v249
  %v314 = vpack.c.b16 %v252, %v251
  %v315 = vpack.c.b16 %v254, %v253
  %v316 = vpack.c.b16 %v256, %v255
  %v317 = vpack.c.b16 %v258, %v257
  %v318 = vpack.c.b16 %v260, %v259
  %v319 = vpack.c.b16 %v262, %v261
  %v320 = vpack.c.b16 %v264, %v263
  %v321 = vpack.c.b16 %v266, %v265
  %v322 = vpack.c.b16 %v268, %v267
  %v323 = vpack.c.b16 %v270, %v269
  %v324 = vpack.c.b16 %v272, %v271
  %v325 = vpack.c.b16 %v274, %v273
  %v326 = vpack.c.b16 %v276, %v275
  %v327 = vpack.c.b16 %v278, %v277
  %v328 = vpack.c.b16 %v280, %v279
  %v329 = vpack.c.b16 %v282, %v281
  %v330 = vpack.c.b16 %v284, %v283
  %v331 = vpack.c.b16 %v286, %v285
  %v332 = vpack.c.b16 %v288, %v287
  %v333 = vpack.c.b16 %v290, %v289
  %v334 = vpack.c.b16 %v292, %v291
  %v335 = vpack.c.b16 %v294, %v293
  %v336 = vpack.c.b16 %v296, %v295
  %v337 = vpack.c.b16 %v298, %v297
  %v338 = vpack.c.b16 %v300, %v299
  %v339 = vpack.c.b16 %v302, %v301
  %v340 = vpack.c.b16 %v304, %v303
  %vm377 = vcmask 523264
  %v379 = vsel %vm377, %v147, 0
  %v382 = vsel %vm377, %v152, 0
  %384 = vmatprep.subr.bf16.mxu0 0
  %385 = vmatpush1.bf16.msra.mxu0 %v305
  %386 = vmatprep.subr.bf16.mxu0 0
  %387 = vmatpush1.bf16.msra.mxu0 %v306
  %388 = vmatprep.subr.bf16.mxu0 0
  %389 = vmatpush1.bf16.msra.mxu0 %v307
  %390 = vmatprep.subr.bf16.mxu0 0
  %391 = vmatpush1.bf16.msra.mxu0 %v308
  %392 = vmatprep.subr.bf16.mxu0 0
  %393 = vmatpush1.bf16.msra.mxu0 %v309
  %394 = vmatprep.subr.bf16.mxu0 0
  %395 = vmatpush1.bf16.msra.mxu0 %v310
  %396 = vmatprep.subr.bf16.mxu0 0
  %397 = vmatpush1.bf16.msra.mxu0 %v311
  %398 = vmatprep.subr.bf16.mxu0 0
  %399 = vmatpush1.bf16.msra.mxu0 %v312
  %400 = vmatprep.subr.bf16.mxu0 0
  %401 = vmatpush1.bf16.msra.mxu0 %v313
  %402 = vmatprep.subr.bf16.mxu0 0
  %403 = vmatpush1.bf16.msra.mxu0 %v314
  %404 = vmatprep.subr.bf16.mxu0 0
  %405 = vmatpush1.bf16.msra.mxu0 %v315
  %406 = vmatprep.subr.bf16.mxu0 0
  %407 = vmatpush1.bf16.msra.mxu0 %v316
  %408 = vmatprep.subr.bf16.mxu0 0
  %409 = vmatpush1.bf16.msra.mxu0 %v317
  %410 = vmatprep.subr.bf16.mxu0 0
  %411 = vmatpush1.bf16.msra.mxu0 %v318
  %412 = vmatprep.subr.bf16.mxu0 0
  %413 = vmatpush1.bf16.msra.mxu0 %v319
  %414 = vmatprep.subr.bf16.mxu0 0
  %415 = vmatpush1.bf16.msra.mxu0 %v320
  %416 = vmatprep.mubr.bf16.mxu0 %v144
  %417 = vmatmul.mubr.bf16.gmra.mrb[0].mxu0 %v143
  %v418 = vpop.f32.mrb[0].mxu0
  %v419 = vadd.f32 0.0, %v418
  %v420 = vpop.f32.mrb[0].mxu0
  %v421 = vpop.f32.mrb[0].mxu0
  %v422 = vadd.f32 0.0, %v421
  %v423 = vpop.f32.mrb[0].mxu0
  %424 = vmatprep.mubr.bf16.mxu0 %v149
  %425 = vmatmul.mubr.bf16.gmra.mrb[0].mxu0 %v148
  %v426 = vpop.f32.mrb[0].mxu0
  %v427 = vadd.f32 0.0, %v426
  %v428 = vpop.f32.mrb[0].mxu0
  %v429 = vpop.f32.mrb[0].mxu0
  %v430 = vadd.f32 0.0, %v429
  %v431 = vpop.f32.mrb[0].mxu0
  %432 = vdwg.mxu0
  %433 = vmatprep.subr.bf16.mxu0 0
  %434 = vmatpush1.bf16.msra.mxu0 %v321
  %435 = vmatprep.subr.bf16.mxu0 0
  %436 = vmatpush1.bf16.msra.mxu0 %v322
  %437 = vmatprep.subr.bf16.mxu0 0
  %438 = vmatpush1.bf16.msra.mxu0 %v323
  %439 = vmatprep.subr.bf16.mxu0 0
  %440 = vmatpush1.bf16.msra.mxu0 %v324
  %441 = vmatprep.subr.bf16.mxu0 0
  %442 = vmatpush1.bf16.msra.mxu0 %v325
  %443 = vmatprep.subr.bf16.mxu0 0
  %444 = vmatpush1.bf16.msra.mxu0 %v326
  %445 = vmatprep.subr.bf16.mxu0 0
  %446 = vmatpush1.bf16.msra.mxu0 %v327
  %447 = vmatprep.subr.bf16.mxu0 0
  %448 = vmatpush1.bf16.msra.mxu0 %v328
  %449 = vmatprep.subr.bf16.mxu0 0
  %450 = vmatpush1.bf16.msra.mxu0 %v329
  %451 = vmatprep.subr.bf16.mxu0 0
  %452 = vmatpush1.bf16.msra.mxu0 %v330
  %453 = vmatprep.subr.bf16.mxu0 0
  %454 = vmatpush1.bf16.msra.mxu0 %v331
  %455 = vmatprep.subr.bf16.mxu0 0
  %456 = vmatpush1.bf16.msra.mxu0 %v332
  %457 = vmatprep.subr.bf16.mxu0 0
  %458 = vmatpush1.bf16.msra.mxu0 %v333
  %459 = vmatprep.subr.bf16.mxu0 0
  %460 = vmatpush1.bf16.msra.mxu0 %v334
  %461 = vmatprep.subr.bf16.mxu0 0
  %462 = vmatpush1.bf16.msra.mxu0 %v335
  %463 = vmatprep.subr.bf16.mxu0 0
  %464 = vmatpush1.bf16.msra.mxu0 %v336
  %465 = vmatprep.mubr.bf16.mxu0 %v146
  %466 = vmatmul.mubr.bf16.gmra.mrb[0].mxu0 %v145
  %v467 = vpop.f32.mrb[0].mxu0
  %v468 = vadd.f32 %v419, %v467
  %v469 = vpop.f32.mrb[0].mxu0
  %v470 = vpop.f32.mrb[0].mxu0
  %v471 = vadd.f32 %v422, %v470
  %v472 = vpop.f32.mrb[0].mxu0
  %473 = vmatprep.mubr.bf16.mxu0 %v151
  %474 = vmatmul.mubr.bf16.gmra.mrb[0].mxu0 %v150
  %v475 = vpop.f32.mrb[0].mxu0
  %v476 = vadd.f32 %v427, %v475
  %v477 = vpop.f32.mrb[0].mxu0
  %v478 = vpop.f32.mrb[0].mxu0
  %v479 = vadd.f32 %v430, %v478
  %v480 = vpop.f32.mrb[0].mxu0
  %481 = vdwg.mxu0
  %482 = vmatprep.subr.bf16.mxu0 0
  %483 = vmatpush1.bf16.msra.mxu0 %v337
  %484 = vmatprep.subr.bf16.mxu0 0
  %485 = vmatpush1.bf16.msra.mxu0 %v338
  %486 = vmatprep.subr.bf16.mxu0 0
  %487 = vmatpush1.bf16.msra.mxu0 %v339
  %488 = vmatprep.subr.bf16.mxu0 0
  %489 = vmatpush1.bf16.msra.mxu0 %v340
  %490 = vmatprep.subr.bf16.mxu0 0
  %491 = vmatpush1.bf16.msra.mxu0 0
  %492 = vmatprep.subr.bf16.mxu0 0
  %493 = vmatpush1.bf16.msra.mxu0 0
  %494 = vmatprep.subr.bf16.mxu0 0
  %495 = vmatpush1.bf16.msra.mxu0 0
  %496 = vmatprep.subr.bf16.mxu0 0
  %497 = vmatpush1.bf16.msra.mxu0 0
  %498 = vmatprep.subr.bf16.mxu0 0
  %499 = vmatpush1.bf16.msra.mxu0 0
  %500 = vmatprep.subr.bf16.mxu0 0
  %501 = vmatpush1.bf16.msra.mxu0 0
  %502 = vmatprep.subr.bf16.mxu0 0
  %503 = vmatpush1.bf16.msra.mxu0 0
  %504 = vmatprep.subr.bf16.mxu0 0
  %505 = vmatpush1.bf16.msra.mxu0 0
  %506 = vmatprep.subr.bf16.mxu0 0
  %507 = vmatpush1.bf16.msra.mxu0 0
  %508 = vmatprep.subr.bf16.mxu0 0
  %509 = vmatpush1.bf16.msra.mxu0 0
  %510 = vmatprep.subr.bf16.mxu0 0
  %511 = vmatpush1.bf16.msra.mxu0 0
  %512 = vmatprep.subr.bf16.mxu0 0
  %513 = vmatpush1.bf16.msra.mxu0 0
  %514 = vmatprep.mubr.bf16.mxu0 0
  %515 = vmatmul.mubr.bf16.gmra.mrb[0].mxu0 %v379
  %v516 = vpop.f32.mrb[0].mxu0
  %v517 = vadd.f32 %v468, %v516
  %v518 = vpop.f32.mrb[0].mxu0
  %v519 = vpop.f32.mrb[0].mxu0
  %v520 = vadd.f32 %v471, %v519
  %v521 = vpop.f32.mrb[0].mxu0
  %522 = vmatprep.mubr.bf16.mxu0 0
  %523 = vmatmul.mubr.bf16.gmra.mrb[0].mxu0 %v382
  %v524 = vpop.f32.mrb[0].mxu0
  %v525 = vadd.f32 %v476, %v524
  %v526 = vpop.f32.mrb[0].mxu0
  %v527 = vpop.f32.mrb[0].mxu0
  %v528 = vadd.f32 %v479, %v527
  %v529 = vpop.f32.mrb[0].mxu0
  %530 = vdwg.mxu0
  %v531 = vadd.f32 %v23, %v517
  %v532 = vadd.f32 %v24, %v520
  %v533 = vadd.f32 %v25, %v525
  %v534 = vadd.f32 %v26, %v528
  %535 = vst [vmem:[#allocation2] sm:$0xff] %v531
  %536 = vst [vmem:[#allocation2 + $0x8] sm:$0xff] %v532
  %537 = vst [vmem:[#allocation2 + $0x10] sm:$0xff] %v533
  %538 = vst [vmem:[#allocation2 + $0x18] sm:$0xff] %v534
  // Predicated region
  $region18: #{_lambda_.39} parent=0 // pred_check
    %p539 = pneg %p15
  $region19: #{_lambda_.39} parent=0 // pred_check_branch
    %541 = sbr.rel (%p539) target = $region21
  $region20: #{_lambda_.39} parent=0 // pred_region
    %v542 = vld [vmem:[#allocation2] sm:$0xff]
    %v543 = vld [vmem:[#allocation2 + $0x8] sm:$0xff]
    %v544 = vld [vmem:[#allocation2 + $0x10] sm:$0xff]
    %v545 = vld [vmem:[#allocation2 + $0x18] sm:$0xff]
    %v546 = vld [vmem:[%s2] sm:$0x1]
    %v548 = vlaneseq
    %v549 = vshrl.u32 %v548, 7
    %v550 = vsub.s32 0, %v549
    %v551 = vrot.slane %v546, %v550
    %v553 = vadd.f32 %v542, %v551
    %v554 = vadd.f32 %v543, %v551
    %v555 = vadd.f32 %v544, %v551
    %v556 = vadd.f32 %v545, %v551
    %v557 = vmax.f32 %v553, 0.0
    %v558 = vmax.f32 %v554, 0.0
    %v559 = vmax.f32 %v555, 0.0
    %v560 = vmax.f32 %v556, 0.0
    %v561 = vpack.c.bf16 %v558, %v557
    %v562 = vpack.c.bf16 %v560, %v559
    %v565 = vunpack.c.l.b16 %v561
    %v566 = vunpack.c.h.b16 %v561
    %v567 = vunpack.c.l.b16 %v562
    %v568 = vunpack.c.h.b16 %v562
    %v569 = vpack.c.b16 %v565, %v565
    %v570 = vpack.c.b16 %v566, %v566
    %v571 = vpack.c.b16 %v567, %v567
    %v572 = vpack.c.b16 %v568, %v568
    %577 = vst [vmem:[%s3] sm:$0xf] %v569
    %578 = vst [vmem:[%s3 + $0x4] sm:$0xf] %v570
    %579 = vst [vmem:[%s3 + $0x8] sm:$0xf] %v571
    %580 = vst [vmem:[%s3 + $0xc] sm:$0xf] %v572
  $region21: #{_lambda_.39} parent=0 // pred_fallthru
    _
  // Predicated region
  $region22: #{_lambda_.39} parent=0 // pred_check
    _
  $region23: #{_lambda_.39} parent=0 // pred_check_branch
    %582 = sbr.rel (0) target = $region25
  $region24: #{_lambda_.39} parent=0 // pred_region
    _
  $region25: #{_lambda_.39} parent=0 // pred_fallthru
    _
  // Predicated region
  $region26: #{_lambda_.39} parent=0 // pred_check
    _
  $region27: #{_lambda_.39} parent=0 // pred_check_branch
    %584 = sbr.rel (0) target = $region29
  $region28: #{_lambda_.39} parent=0 // pred_region
    _
  $region29: #{_lambda_.39} parent=0 // pred_fallthru
    _

// kernel: _lambda_.40
$region0: #{_lambda_.40}
  #allocation0 [shape = 'u32[]', space=smem, size = 0x4, offset = 0x4, fixed_abs, tag = 'smem constant byte address 0x4 - core index']
  #allocation1 [shape = 'u32[144,128]{1,0:T(1,128)}', space=vmem, size = 0x12000, scoped, tag = 'internal scratch']
  #allocation2 [shape = 'f32[32,256]{1,0:T(8,128)}', space=vmem, size = 0x8000, scoped, tag = 'scratch operand']
  %s0 = inlined_call_operand.vmem [shape: bf16[32,128], index: 0, kind: input, shape index: {}]
  %s1 = inlined_call_operand.vmem [shape: bf16[128,256], index: 1, kind: input, shape index: {}]
  %s2 = inlined_call_operand.vmem [shape: f32[1,256], index: 2, kind: input, shape index: {}]
  %s3 = inlined_call_operand.vmem [shape: bf16[32,256], index: 3, kind: output, shape index: {}]
  %s4 = sld [smem:[#allocation0]]
  $region30: #{_lambda_.40} parent=0
    _
  %s6 = ssub.s32 1, %s4
  %s7 = scalar_select 0, %s6, %s4
  // Predicated region
  $region2: #{_lambda_.40} parent=0 // pred_check
    _
  $region3: #{_lambda_.40} parent=0 // pred_check_branch
    %9 = sbr.rel (0) target = $region5
  $region4: #{_lambda_.40} parent=0 // pred_region
    _
  $region5: #{_lambda_.40} parent=0 // pred_fallthru
    _
  // Predicated region
  $region6: #{_lambda_.40} parent=0 // pred_check
    _
  $region7: #{_lambda_.40} parent=0 // pred_check_branch
    %11 = sbr.rel (0) target = $region9
  $region8: #{_lambda_.40} parent=0 // pred_region
    _
  $region9: #{_lambda_.40} parent=0 // pred_fallthru
    _
  // Predicated region
  $region10: #{_lambda_.40} parent=0 // pred_check
    _
  $region11: #{_lambda_.40} parent=0 // pred_check_branch
    %13 = sbr.rel (0) target = $region13
  $region12: #{_lambda_.40} parent=0 // pred_region
    _
  $region13: #{_lambda_.40} parent=0 // pred_fallthru
    _
  %p15 = scmp.eq.s32.totalorder 0, 0
  // Predicated region
  $region14: #{_lambda_.40} parent=0 // pred_check
    %p16 = pneg %p15
  $region15: #{_lambda_.40} parent=0 // pred_check_branch
    %18 = sbr.rel (%p16) target = $region17
  $region16: #{_lambda_.40} parent=0 // pred_region
    %19 = vst [vmem:[#allocation2] sm:$0xff] 0.0
    %20 = vst [vmem:[#allocation2 + $0x8] sm:$0xff] 0.0
    %21 = vst [vmem:[#allocation2 + $0x10] sm:$0xff] 0.0
    %22 = vst [vmem:[#allocation2 + $0x18] sm:$0xff] 0.0
    %23 = vst [vmem:[#allocation2 + $0x20] sm:$0xff] 0.0
    %24 = vst [vmem:[#allocation2 + $0x28] sm:$0xff] 0.0
    %25 = vst [vmem:[#allocation2 + $0x30] sm:$0xff] 0.0
    %26 = vst [vmem:[#allocation2 + $0x38] sm:$0xff] 0.0
  $region17: #{_lambda_.40} parent=0 // pred_fallthru
    _
  %v27 = vld [vmem:[#allocation2] sm:$0xff]
  %v28 = vld [vmem:[#allocation2 + $0x8] sm:$0xff]
  %v29 = vld [vmem:[#allocation2 + $0x10] sm:$0xff]
  %v30 = vld [vmem:[#allocation2 + $0x18] sm:$0xff]
  %v31 = vld [vmem:[#allocation2 + $0x20] sm:$0xff]
  %v32 = vld [vmem:[#allocation2 + $0x28] sm:$0xff]
  %v33 = vld [vmem:[#allocation2 + $0x30] sm:$0xff]
  %v34 = vld [vmem:[#allocation2 + $0x38] sm:$0xff]
  %v35 = vld [vmem:[%s0] sm:$0xf]
  %v36 = vld [vmem:[%s0 + $0x4] sm:$0xf]
  %v37 = vld [vmem:[%s0 + $0x8] sm:$0xf]
  %v38 = vld [vmem:[%s0 + $0xc] sm:$0xf]
  %v39 = vld [vmem:[%s1] sm:$0xff]
  %v40 = vld [vmem:[%s1 + $0x8] sm:$0xff]
  %v41 = vld [vmem:[%s1 + $0x10] sm:$0xff]
  %v42 = vld [vmem:[%s1 + $0x18] sm:$0xff]
  %v43 = vld [vmem:[%s1 + $0x20] sm:$0xff]
  %v44 = vld [vmem:[%s1 + $0x28] sm:$0xff]
  %v45 = vld [vmem:[%s1 + $0x30] sm:$0xff]
  %v46 = vld [vmem:[%s1 + $0x38] sm:$0xff]
  %v47 = vld [vmem:[%s1 + $0x40] sm:$0xff]
  %v48 = vld [vmem:[%s1 + $0x48] sm:$0xff]
  %v49 = vld [vmem:[%s1 + $0x50] sm:$0xff]
  %v50 = vld [vmem:[%s1 + $0x58] sm:$0xff]
  %v51 = vld [vmem:[%s1 + $0x60] sm:$0xff]
  %v52 = vld [vmem:[%s1 + $0x68] sm:$0xff]
  %v53 = vld [vmem:[%s1 + $0x70] sm:$0xff]
  %v54 = vld [vmem:[%s1 + $0x78] sm:$0xff]
  %v59 = vunpack.c.l.b16 %v35
  %v60 = vunpack.c.l.b16 %v36
  %v61 = vunpack.c.l.b16 %v37
  %v62 = vunpack.c.l.b16 %v38
  %v63 = vpack.c.b16 %v60, %v59
  %v64 = vpack.c.b16 %v62, %v61
  %v83 = vunpack.c.l.b16 %v39
  %v84 = vunpack.c.h.b16 %v39
  %v85 = vunpack.c.l.b16 %v40
  %v86 = vunpack.c.h.b16 %v40
  %v87 = vunpack.c.l.b16 %v41
  %v88 = vunpack.c.h.b16 %v41
  %v89 = vunpack.c.l.b16 %v42
  %v90 = vunpack.c.h.b16 %v42
  %v91 = vunpack.c.l.b16 %v43
  %v92 = vunpack.c.h.b16 %v43
  %v93 = vunpack.c.l.b16 %v44
  %v94 = vunpack.c.h.b16 %v44
  %v95 = vunpack.c.l.b16 %v45
  %v96 = vunpack.c.h.b16 %v45
  %v97 = vunpack.c.l.b16 %v46
  %v98 = vunpack.c.h.b16 %v46
  %v99 = vunpack.c.l.b16 %v47
  %v100 = vunpack.c.h.b16 %v47
  %v101 = vunpack.c.l.b16 %v48
  %v102 = vunpack.c.h.b16 %v48
  %v103 = vunpack.c.l.b16 %v49
  %v104 = vunpack.c.h.b16 %v49
  %v105 = vunpack.c.l.b16 %v50
  %v106 = vunpack.c.h.b16 %v50
  %v107 = vunpack.c.l.b16 %v51
  %v108 = vunpack.c.h.b16 %v51
  %v109 = vunpack.c.l.b16 %v52
  %v110 = vunpack.c.h.b16 %v52
  %v111 = vunpack.c.l.b16 %v53
  %v112 = vunpack.c.h.b16 %v53
  %v113 = vunpack.c.l.b16 %v54
  %v114 = vunpack.c.h.b16 %v54
  %v115 = vpack.c.b16 %v85, %v83
  %v116 = vpack.c.b16 %v86, %v84
  %v117 = vpack.c.b16 %v89, %v87
  %v118 = vpack.c.b16 %v90, %v88
  %v119 = vpack.c.b16 %v93, %v91
  %v120 = vpack.c.b16 %v94, %v92
  %v121 = vpack.c.b16 %v97, %v95
  %v122 = vpack.c.b16 %v98, %v96
  %v123 = vpack.c.b16 %v101, %v99
  %v124 = vpack.c.b16 %v102, %v100
  %v125 = vpack.c.b16 %v105, %v103
  %v126 = vpack.c.b16 %v106, %v104
  %v127 = vpack.c.b16 %v109, %v107
  %v128 = vpack.c.b16 %v110, %v108
  %v129 = vpack.c.b16 %v113, %v111
  %v130 = vpack.c.b16 %v114, %v112
  %147 = vmatprep.subr.bf16.mxu0 %v116
  %148 = vmatpush1.bf16.msra.mxu0 %v115
  %149 = vmatprep.subr.bf16.mxu0 %v118
  %150 = vmatpush1.bf16.msra.mxu0 %v117
  %151 = vmatprep.subr.bf16.mxu0 %v120
  %152 = vmatpush1.bf16.msra.mxu0 %v119
  %153 = vmatprep.subr.bf16.mxu0 %v122
  %154 = vmatpush1.bf16.msra.mxu0 %v121
  %155 = vmatprep.subr.bf16.mxu0 %v124
  %156 = vmatpush1.bf16.msra.mxu0 %v123
  %157 = vmatprep.subr.bf16.mxu0 %v126
  %158 = vmatpush1.bf16.msra.mxu0 %v125
  %159 = vmatprep.subr.bf16.mxu0 %v128
  %160 = vmatpush1.bf16.msra.mxu0 %v127
  %161 = vmatprep.subr.bf16.mxu0 %v130
  %162 = vmatpush1.bf16.msra.mxu0 %v129
  %163 = vmatprep.subr.bf16.mxu0 0
  %164 = vmatpush1.bf16.msra.mxu0 0
  %165 = vmatprep.subr.bf16.mxu0 0
  %166 = vmatpush1.bf16.msra.mxu0 0
  %167 = vmatprep.subr.bf16.mxu0 0
  %168 = vmatpush1.bf16.msra.mxu0 0
  %169 = vmatprep.subr.bf16.mxu0 0
  %170 = vmatpush1.bf16.msra.mxu0 0
  %171 = vmatprep.subr.bf16.mxu0 0
  %172 = vmatpush1.bf16.msra.mxu0 0
  %173 = vmatprep.subr.bf16.mxu0 0
  %174 = vmatpush1.bf16.msra.mxu0 0
  %175 = vmatprep.subr.bf16.mxu0 0
  %176 = vmatpush1.bf16.msra.mxu0 0
  %177 = vmatprep.subr.bf16.mxu0 0
  %178 = vmatpush1.bf16.msra.mxu0 0
  %179 = vmatprep.mubr.bf16.mxu0 0
  %180 = vmatmul.mubr.bf16.gmra.mrb[0].mxu0 %v63
  %v181 = vpop.f32.mrb[0].mxu0
  %v182 = vadd.f32 0.0, %v181
  %v183 = vpop.f32.mrb[0].mxu0
  %v184 = vadd.f32 0.0, %v183
  %v185 = vpop.f32.mrb[0].mxu0
  %v186 = vadd.f32 0.0, %v185
  %v187 = vpop.f32.mrb[0].mxu0
  %v188 = vadd.f32 0.0, %v187
  %189 = vmatprep.mubr.bf16.mxu0 0
  %190 = vmatmul.mubr.bf16.gmra.mrb[0].mxu0 %v64
  %v191 = vpop.f32.mrb[0].mxu0
  %v192 = vadd.f32 0.0, %v191
  %v193 = vpop.f32.mrb[0].mxu0
  %v194 = vadd.f32 0.0, %v193
  %v195 = vpop.f32.mrb[0].mxu0
  %v196 = vadd.f32 0.0, %v195
  %v197 = vpop.f32.mrb[0].mxu0
  %v198 = vadd.f32 0.0, %v197
  %199 = vdwg.mxu0
  %v200 = vadd.f32 %v27, %v182
  %v201 = vadd.f32 %v28, %v184
  %v202 = vadd.f32 %v29, %v186
  %v203 = vadd.f32 %v30, %v188
  %v204 = vadd.f32 %v31, %v192
  %v205 = vadd.f32 %v32, %v194
  %v206 = vadd.f32 %v33, %v196
  %v207 = vadd.f32 %v34, %v198
  %208 = vst [vmem:[#allocation2] sm:$0xff] %v200
  %209 = vst [vmem:[#allocation2 + $0x8] sm:$0xff] %v201
  %210 = vst [vmem:[#allocation2 + $0x10] sm:$0xff] %v202
  %211 = vst [vmem:[#allocation2 + $0x18] sm:$0xff] %v203
  %212 = vst [vmem:[#allocation2 + $0x20] sm:$0xff] %v204
  %213 = vst [vmem:[#allocation2 + $0x28] sm:$0xff] %v205
  %214 = vst [vmem:[#allocation2 + $0x30] sm:$0xff] %v206
  %215 = vst [vmem:[#allocation2 + $0x38] sm:$0xff] %v207
  // Predicated region
  $region18: #{_lambda_.40} parent=0 // pred_check
    %p216 = pneg %p15
  $region19: #{_lambda_.40} parent=0 // pred_check_branch
    %218 = sbr.rel (%p216) target = $region21
  $region20: #{_lambda_.40} parent=0 // pred_region
    %v219 = vld [vmem:[#allocation2] sm:$0xff]
    %v220 = vld [vmem:[#allocation2 + $0x8] sm:$0xff]
    %v221 = vld [vmem:[#allocation2 + $0x10] sm:$0xff]
    %v222 = vld [vmem:[#allocation2 + $0x18] sm:$0xff]
    %v223 = vld [vmem:[#allocation2 + $0x20] sm:$0xff]
    %v224 = vld [vmem:[#allocation2 + $0x28] sm:$0xff]
    %v225 = vld [vmem:[#allocation2 + $0x30] sm:$0xff]
    %v226 = vld [vmem:[#allocation2 + $0x38] sm:$0xff]
    %v227 = vld [vmem:[%s2] sm:$0x3]
    %v229 = vlaneseq
    %v230 = vshrl.u32 %v229, 7
    %v231 = vsub.s32 0, %v230
    %v232 = vrot.slane %v227, %v231
    %v233 = vlaneseq
    %v234 = vshrl.u32 %v233, 7
    %v235 = vsub.s32 1, %v234
    %v236 = vrot.slane %v227, %v235
    %v239 = vadd.f32 %v219, %v232
    %v240 = vadd.f32 %v220, %v236
    %v241 = vadd.f32 %v221, %v232
    %v242 = vadd.f32 %v222, %v236
    %v243 = vadd.f32 %v223, %v232
    %v244 = vadd.f32 %v224, %v236
    %v245 = vadd.f32 %v225, %v232
    %v246 = vadd.f32 %v226, %v236
    %v247 = vpack.c.bf16 %v241, %v239
    %v248 = vpack.c.bf16 %v242, %v240
    %v249 = vpack.c.bf16 %v245, %v243
    %v250 = vpack.c.bf16 %v246, %v244
    %v255 = vunpack.c.l.b16 %v247
    %v256 = vunpack.c.l.b16 %v248
    %v257 = vunpack.c.h.b16 %v247
    %v258 = vunpack.c.h.b16 %v248
    %v259 = vunpack.c.l.b16 %v249
    %v260 = vunpack.c.l.b16 %v250
    %v261 = vunpack.c.h.b16 %v249
    %v262 = vunpack.c.h.b16 %v250
    %v263 = vpack.c.b16 %v256, %v255
    %v264 = vpack.c.b16 %v258, %v257
    %v265 = vpack.c.b16 %v260, %v259
    %v266 = vpack.c.b16 %v262, %v261
    %271 = vst [vmem:[%s3] sm:$0xff] %v263
    %272 = vst [vmem:[%s3 + $0x8] sm:$0xff] %v264
    %273 = vst [vmem:[%s3 + $0x10] sm:$0xff] %v265
    %274 = vst [vmem:[%s3 + $0x18] sm:$0xff] %v266
  $region21: #{_lambda_.40} parent=0 // pred_fallthru
    _
  // Predicated region
  $region22: #{_lambda_.40} parent=0 // pred_check
    _
  $region23: #{_lambda_.40} parent=0 // pred_check_branch
    %276 = sbr.rel (0) target = $region25
  $region24: #{_lambda_.40} parent=0 // pred_region
    _
  $region25: #{_lambda_.40} parent=0 // pred_fallthru
    _
  // Predicated region
  $region26: #{_lambda_.40} parent=0 // pred_check
    _
  $region27: #{_lambda_.40} parent=0 // pred_check_branch
    %278 = sbr.rel (0) target = $region29
  $region28: #{_lambda_.40} parent=0 // pred_region
    _
  $region29: #{_lambda_.40} parent=0 // pred_fallthru
    _

// kernel: _lambda_.41
$region0: #{_lambda_.41}
  #allocation0 [shape = 'u32[]', space=smem, size = 0x4, offset = 0x4, fixed_abs, tag = 'smem constant byte address 0x4 - core index']
  #allocation1 [shape = 'u32[144,128]{1,0:T(1,128)}', space=vmem, size = 0x12000, scoped, tag = 'internal scratch']
  #allocation2 [shape = 'f32[32,256]{1,0:T(8,128)}', space=vmem, size = 0x8000, scoped, tag = 'scratch operand']
  %s0 = inlined_call_operand.vmem [shape: bf16[32,64], index: 0, kind: input, shape index: {}]
  %s1 = inlined_call_operand.vmem [shape: bf16[64,256], index: 1, kind: input, shape index: {}]
  %s2 = inlined_call_operand.vmem [shape: f32[1,256], index: 2, kind: input, shape index: {}]
  %s3 = inlined_call_operand.vmem [shape: bf16[32,256], index: 3, kind: input, shape index: {}]
  %s4 = inlined_call_operand.vmem [shape: bf16[32,256], index: 4, kind: output, shape index: {}]
  %s5 = sld [smem:[#allocation0]]
  $region34: #{_lambda_.41} parent=0
    _
  %s7 = ssub.s32 1, %s5
  %s8 = scalar_select 0, %s7, %s5
  // Predicated region
  $region2: #{_lambda_.41} parent=0 // pred_check
    _
  $region3: #{_lambda_.41} parent=0 // pred_check_branch
    %10 = sbr.rel (0) target = $region5
  $region4: #{_lambda_.41} parent=0 // pred_region
    _
  $region5: #{_lambda_.41} parent=0 // pred_fallthru
    _
  // Predicated region
  $region6: #{_lambda_.41} parent=0 // pred_check
    _
  $region7: #{_lambda_.41} parent=0 // pred_check_branch
    %12 = sbr.rel (0) target = $region9
  $region8: #{_lambda_.41} parent=0 // pred_region
    _
  $region9: #{_lambda_.41} parent=0 // pred_fallthru
    _
  // Predicated region
  $region10: #{_lambda_.41} parent=0 // pred_check
    _
  $region11: #{_lambda_.41} parent=0 // pred_check_branch
    %14 = sbr.rel (0) target = $region13
  $region12: #{_lambda_.41} parent=0 // pred_region
    _
  $region13: #{_lambda_.41} parent=0 // pred_fallthru
    _
  // Predicated region
  $region14: #{_lambda_.41} parent=0 // pred_check
    _
  $region15: #{_lambda_.41} parent=0 // pred_check_branch
    %16 = sbr.rel (0) target = $region17
  $region16: #{_lambda_.41} parent=0 // pred_region
    _
  $region17: #{_lambda_.41} parent=0 // pred_fallthru
    _
  %p18 = scmp.eq.s32.totalorder 0, 0
  // Predicated region
  $region18: #{_lambda_.41} parent=0 // pred_check
    %p19 = pneg %p18
  $region19: #{_lambda_.41} parent=0 // pred_check_branch
    %21 = sbr.rel (%p19) target = $region21
  $region20: #{_lambda_.41} parent=0 // pred_region
    %22 = vst [vmem:[#allocation2] sm:$0xff] 0.0
    %23 = vst [vmem:[#allocation2 + $0x8] sm:$0xff] 0.0
    %24 = vst [vmem:[#allocation2 + $0x10] sm:$0xff] 0.0
    %25 = vst [vmem:[#allocation2 + $0x18] sm:$0xff] 0.0
    %26 = vst [vmem:[#allocation2 + $0x20] sm:$0xff] 0.0
    %27 = vst [vmem:[#allocation2 + $0x28] sm:$0xff] 0.0
    %28 = vst [vmem:[#allocation2 + $0x30] sm:$0xff] 0.0
    %29 = vst [vmem:[#allocation2 + $0x38] sm:$0xff] 0.0
  $region21: #{_lambda_.41} parent=0 // pred_fallthru
    _
  %v30 = vld [vmem:[#allocation2] sm:$0xff]
  %v31 = vld [vmem:[#allocation2 + $0x8] sm:$0xff]
  %v32 = vld [vmem:[#allocation2 + $0x10] sm:$0xff]
  %v33 = vld [vmem:[#allocation2 + $0x18] sm:$0xff]
  %v34 = vld [vmem:[#allocation2 + $0x20] sm:$0xff]
  %v35 = vld [vmem:[#allocation2 + $0x28] sm:$0xff]
  %v36 = vld [vmem:[#allocation2 + $0x30] sm:$0xff]
  %v37 = vld [vmem:[#allocation2 + $0x38] sm:$0xff]
  %v38 = vld [vmem:[%s0] sm:$0xf]
  %v39 = vld [vmem:[%s0 + $0x4] sm:$0xf]
  %v40 = vld [vmem:[%s0 + $0x8] sm:$0xf]
  %v41 = vld [vmem:[%s0 + $0xc] sm:$0xf]
  %v42 = vld [vmem:[%s1] sm:$0xff]
  %v43 = vld [vmem:[%s1 + $0x8] sm:$0xff]
  %v44 = vld [vmem:[%s1 + $0x10] sm:$0xff]
  %v45 = vld [vmem:[%s1 + $0x18] sm:$0xff]
  %v46 = vld [vmem:[%s1 + $0x20] sm:$0xff]
  %v47 = vld [vmem:[%s1 + $0x28] sm:$0xff]
  %v48 = vld [vmem:[%s1 + $0x30] sm:$0xff]
  %v49 = vld [vmem:[%s1 + $0x38] sm:$0xff]
  %v54 = vunpack.c.l.b16 %v38
  %v55 = vunpack.c.l.b16 %v39
  %v56 = vunpack.c.l.b16 %v40
  %v57 = vunpack.c.l.b16 %v41
  %v58 = vpack.c.b16 %v55, %v54
  %v59 = vpack.c.b16 %v57, %v56
  %v68 = vunpack.c.l.b16 %v42
  %v69 = vunpack.c.h.b16 %v42
  %v70 = vunpack.c.l.b16 %v43
  %v71 = vunpack.c.h.b16 %v43
  %v72 = vunpack.c.l.b16 %v44
  %v73 = vunpack.c.h.b16 %v44
  %v74 = vunpack.c.l.b16 %v45
  %v75 = vunpack.c.h.b16 %v45
  %v76 = vunpack.c.l.b16 %v46
  %v77 = vunpack.c.h.b16 %v46
  %v78 = vunpack.c.l.b16 %v47
  %v79 = vunpack.c.h.b16 %v47
  %v80 = vunpack.c.l.b16 %v48
  %v81 = vunpack.c.h.b16 %v48
  %v82 = vunpack.c.l.b16 %v49
  %v83 = vunpack.c.h.b16 %v49
  %v84 = vpack.c.b16 %v70, %v68
  %v85 = vpack.c.b16 %v71, %v69
  %v86 = vpack.c.b16 %v74, %v72
  %v87 = vpack.c.b16 %v75, %v73
  %v88 = vpack.c.b16 %v78, %v76
  %v89 = vpack.c.b16 %v79, %v77
  %v90 = vpack.c.b16 %v82, %v80
  %v91 = vpack.c.b16 %v83, %v81
  %vm100 = vcmask 523264
  %v102 = vsel %vm100, %v58, 0
  %v105 = vsel %vm100, %v59, 0
  %107 = vmatprep.subr.bf16.mxu0 %v85
  %108 = vmatpush1.bf16.msra.mxu0 %v84
  %109 = vmatprep.subr.bf16.mxu0 %v87
  %110 = vmatpush1.bf16.msra.mxu0 %v86
  %111 = vmatprep.subr.bf16.mxu0 %v89
  %112 = vmatpush1.bf16.msra.mxu0 %v88
  %113 = vmatprep.subr.bf16.mxu0 %v91
  %114 = vmatpush1.bf16.msra.mxu0 %v90
  %115 = vmatprep.subr.bf16.mxu0 0
  %116 = vmatpush1.bf16.msra.mxu0 0
  %117 = vmatprep.subr.bf16.mxu0 0
  %118 = vmatpush1.bf16.msra.mxu0 0
  %119 = vmatprep.subr.bf16.mxu0 0
  %120 = vmatpush1.bf16.msra.mxu0 0
  %121 = vmatprep.subr.bf16.mxu0 0
  %122 = vmatpush1.bf16.msra.mxu0 0
  %123 = vmatprep.subr.bf16.mxu0 0
  %124 = vmatpush1.bf16.msra.mxu0 0
  %125 = vmatprep.subr.bf16.mxu0 0
  %126 = vmatpush1.bf16.msra.mxu0 0
  %127 = vmatprep.subr.bf16.mxu0 0
  %128 = vmatpush1.bf16.msra.mxu0 0
  %129 = vmatprep.subr.bf16.mxu0 0
  %130 = vmatpush1.bf16.msra.mxu0 0
  %131 = vmatprep.subr.bf16.mxu0 0
  %132 = vmatpush1.bf16.msra.mxu0 0
  %133 = vmatprep.subr.bf16.mxu0 0
  %134 = vmatpush1.bf16.msra.mxu0 0
  %135 = vmatprep.subr.bf16.mxu0 0
  %136 = vmatpush1.bf16.msra.mxu0 0
  %137 = vmatprep.subr.bf16.mxu0 0
  %138 = vmatpush1.bf16.msra.mxu0 0
  %139 = vmatprep.mubr.bf16.mxu0 0
  %140 = vmatmul.mubr.bf16.gmra.mrb[0].mxu0 %v102
  %v141 = vpop.f32.mrb[0].mxu0
  %v142 = vadd.f32 0.0, %v141
  %v143 = vpop.f32.mrb[0].mxu0
  %v144 = vadd.f32 0.0, %v143
  %v145 = vpop.f32.mrb[0].mxu0
  %v146 = vadd.f32 0.0, %v145
  %v147 = vpop.f32.mrb[0].mxu0
  %v148 = vadd.f32 0.0, %v147
  %149 = vmatprep.mubr.bf16.mxu0 0
  %150 = vmatmul.mubr.bf16.gmra.mrb[0].mxu0 %v105
  %v151 = vpop.f32.mrb[0].mxu0
  %v152 = vadd.f32 0.0, %v151
  %v153 = vpop.f32.mrb[0].mxu0
  %v154 = vadd.f32 0.0, %v153
  %v155 = vpop.f32.mrb[0].mxu0
  %v156 = vadd.f32 0.0, %v155
  %v157 = vpop.f32.mrb[0].mxu0
  %v158 = vadd.f32 0.0, %v157
  %159 = vdwg.mxu0
  %v160 = vadd.f32 %v30, %v142
  %v161 = vadd.f32 %v31, %v144
  %v162 = vadd.f32 %v32, %v146
  %v163 = vadd.f32 %v33, %v148
  %v164 = vadd.f32 %v34, %v152
  %v165 = vadd.f32 %v35, %v154
  %v166 = vadd.f32 %v36, %v156
  %v167 = vadd.f32 %v37, %v158
  %168 = vst [vmem:[#allocation2] sm:$0xff] %v160
  %169 = vst [vmem:[#allocation2 + $0x8] sm:$0xff] %v161
  %170 = vst [vmem:[#allocation2 + $0x10] sm:$0xff] %v162
  %171 = vst [vmem:[#allocation2 + $0x18] sm:$0xff] %v163
  %172 = vst [vmem:[#allocation2 + $0x20] sm:$0xff] %v164
  %173 = vst [vmem:[#allocation2 + $0x28] sm:$0xff] %v165
  %174 = vst [vmem:[#allocation2 + $0x30] sm:$0xff] %v166
  %175 = vst [vmem:[#allocation2 + $0x38] sm:$0xff] %v167
  // Predicated region
  $region22: #{_lambda_.41} parent=0 // pred_check
    %p176 = pneg %p18
  $region23: #{_lambda_.41} parent=0 // pred_check_branch
    %178 = sbr.rel (%p176) target = $region25
  $region24: #{_lambda_.41} parent=0 // pred_region
    %v179 = vld [vmem:[#allocation2] sm:$0xff]
    %v180 = vld [vmem:[#allocation2 + $0x8] sm:$0xff]
    %v181 = vld [vmem:[#allocation2 + $0x10] sm:$0xff]
    %v182 = vld [vmem:[#allocation2 + $0x18] sm:$0xff]
    %v183 = vld [vmem:[#allocation2 + $0x20] sm:$0xff]
    %v184 = vld [vmem:[#allocation2 + $0x28] sm:$0xff]
    %v185 = vld [vmem:[#allocation2 + $0x30] sm:$0xff]
    %v186 = vld [vmem:[#allocation2 + $0x38] sm:$0xff]
    %v187 = vld [vmem:[%s2] sm:$0x3]
    %v189 = vlaneseq
    %v190 = vshrl.u32 %v189, 7
    %v191 = vsub.s32 0, %v190
    %v192 = vrot.slane %v187, %v191
    %v193 = vlaneseq
    %v194 = vshrl.u32 %v193, 7
    %v195 = vsub.s32 1, %v194
    %v196 = vrot.slane %v187, %v195
    %v199 = vadd.f32 %v179, %v192
    %v200 = vadd.f32 %v180, %v196
    %v201 = vadd.f32 %v181, %v192
    %v202 = vadd.f32 %v182, %v196
    %v203 = vadd.f32 %v183, %v192
    %v204 = vadd.f32 %v184, %v196
    %v205 = vadd.f32 %v185, %v192
    %v206 = vadd.f32 %v186, %v196
    %v207 = vld [vmem:[%s3] sm:$0xff]
    %v208 = vld [vmem:[%s3 + $0x8] sm:$0xff]
    %v209 = vld [vmem:[%s3 + $0x10] sm:$0xff]
    %v210 = vld [vmem:[%s3 + $0x18] sm:$0xff]
    %v211 = vunpack.c.l.bf16 %v207
    %v212 = vunpack.c.h.bf16 %v207
    %v213 = vunpack.c.l.bf16 %v208
    %v214 = vunpack.c.h.bf16 %v208
    %v215 = vunpack.c.l.bf16 %v209
    %v216 = vunpack.c.h.bf16 %v209
    %v217 = vunpack.c.l.bf16 %v210
    %v218 = vunpack.c.h.bf16 %v210
    %v219 = vadd.f32 %v199, %v211
    %v220 = vadd.f32 %v200, %v212
    %v221 = vadd.f32 %v201, %v213
    %v222 = vadd.f32 %v202, %v214
    %v223 = vadd.f32 %v203, %v215
    %v224 = vadd.f32 %v204, %v216
    %v225 = vadd.f32 %v205, %v217
    %v226 = vadd.f32 %v206, %v218
    %v227 = vmax.f32 %v219, 0.0
    %v228 = vmax.f32 %v220, 0.0
    %v229 = vmax.f32 %v221, 0.0
    %v230 = vmax.f32 %v222, 0.0
    %v231 = vmax.f32 %v223, 0.0
    %v232 = vmax.f32 %v224, 0.0
    %v233 = vmax.f32 %v225, 0.0
    %v234 = vmax.f32 %v226, 0.0
    %v235 = vpack.c.bf16 %v229, %v227
    %v236 = vpack.c.bf16 %v230, %v228
    %v237 = vpack.c.bf16 %v233, %v231
    %v238 = vpack.c.bf16 %v234, %v232
    %v243 = vunpack.c.l.b16 %v235
    %v244 = vunpack.c.l.b16 %v236
    %v245 = vunpack.c.h.b16 %v235
    %v246 = vunpack.c.h.b16 %v236
    %v247 = vunpack.c.l.b16 %v237
    %v248 = vunpack.c.l.b16 %v238
    %v249 = vunpack.c.h.b16 %v237
    %v250 = vunpack.c.h.b16 %v238
    %v251 = vpack.c.b16 %v244, %v243
    %v252 = vpack.c.b16 %v246, %v245
    %v253 = vpack.c.b16 %v248, %v247
    %v254 = vpack.c.b16 %v250, %v249
    %259 = vst [vmem:[%s4] sm:$0xff] %v251
    %260 = vst [vmem:[%s4 + $0x8] sm:$0xff] %v252
    %261 = vst [vmem:[%s4 + $0x10] sm:$0xff] %v253
    %262 = vst [vmem:[%s4 + $0x18] sm:$0xff] %v254
  $region25: #{_lambda_.41} parent=0 // pred_fallthru
    _
  // Predicated region
  $region26: #{_lambda_.41} parent=0 // pred_check
    _
  $region27: #{_lambda_.41} parent=0 // pred_check_branch
    %264 = sbr.rel (0) target = $region29
  $region28: #{_lambda_.41} parent=0 // pred_region
    _
  $region29: #{_lambda_.41} parent=0 // pred_fallthru
    _
  // Predicated region
  $region30: #{_lambda_.41} parent=0 // pred_check
    _
  $region31: #{_lambda_.41} parent=0 // pred_check_branch
    %266 = sbr.rel (0) target = $region33
  $region32: #{_lambda_.41} parent=0 // pred_region
    _
  $region33: #{_lambda_.41} parent=0 // pred_fallthru
    _

// kernel: _lambda_.42
$region0: #{_lambda_.42}
  #allocation0 [shape = 'u32[]', space=smem, size = 0x4, offset = 0x4, fixed_abs, tag = 'smem constant byte address 0x4 - core index']
  #allocation1 [shape = 'u32[144,128]{1,0:T(1,128)}', space=vmem, size = 0x12000, scoped, tag = 'internal scratch']
  #allocation2 [shape = 'f32[32,128]{1,0:T(8,128)}', space=vmem, size = 0x4000, scoped, tag = 'scratch operand']
  %s0 = inlined_call_operand.vmem [shape: bf16[32,256], index: 0, kind: input, shape index: {}]
  %s1 = inlined_call_operand.vmem [shape: bf16[256,128], index: 1, kind: input, shape index: {}]
  %s2 = inlined_call_operand.vmem [shape: f32[1,128], index: 2, kind: input, shape index: {}]
  %s3 = inlined_call_operand.vmem [shape: bf16[32,128], index: 3, kind: output, shape index: {}]
  %s4 = sld [smem:[#allocation0]]
  $region30: #{_lambda_.42} parent=0
    _
  %s6 = ssub.s32 1, %s4
  %s7 = scalar_select 0, %s6, %s4
  // Predicated region
  $region2: #{_lambda_.42} parent=0 // pred_check
    _
  $region3: #{_lambda_.42} parent=0 // pred_check_branch
    %9 = sbr.rel (0) target = $region5
  $region4: #{_lambda_.42} parent=0 // pred_region
    _
  $region5: #{_lambda_.42} parent=0 // pred_fallthru
    _
  // Predicated region
  $region6: #{_lambda_.42} parent=0 // pred_check
    _
  $region7: #{_lambda_.42} parent=0 // pred_check_branch
    %11 = sbr.rel (0) target = $region9
  $region8: #{_lambda_.42} parent=0 // pred_region
    _
  $region9: #{_lambda_.42} parent=0 // pred_fallthru
    _
  // Predicated region
  $region10: #{_lambda_.42} parent=0 // pred_check
    _
  $region11: #{_lambda_.42} parent=0 // pred_check_branch
    %13 = sbr.rel (0) target = $region13
  $region12: #{_lambda_.42} parent=0 // pred_region
    _
  $region13: #{_lambda_.42} parent=0 // pred_fallthru
    _
  %p15 = scmp.eq.s32.totalorder 0, 0
  // Predicated region
  $region14: #{_lambda_.42} parent=0 // pred_check
    %p16 = pneg %p15
  $region15: #{_lambda_.42} parent=0 // pred_check_branch
    %18 = sbr.rel (%p16) target = $region17
  $region16: #{_lambda_.42} parent=0 // pred_region
    %19 = vst [vmem:[#allocation2] sm:$0xff] 0.0
    %20 = vst [vmem:[#allocation2 + $0x8] sm:$0xff] 0.0
    %21 = vst [vmem:[#allocation2 + $0x10] sm:$0xff] 0.0
    %22 = vst [vmem:[#allocation2 + $0x18] sm:$0xff] 0.0
  $region17: #{_lambda_.42} parent=0 // pred_fallthru
    _
  %v23 = vld [vmem:[#allocation2] sm:$0xff]
  %v24 = vld [vmem:[#allocation2 + $0x8] sm:$0xff]
  %v25 = vld [vmem:[#allocation2 + $0x10] sm:$0xff]
  %v26 = vld [vmem:[#allocation2 + $0x18] sm:$0xff]
  %v27 = vld [vmem:[%s0] sm:$0xff]
  %v28 = vld [vmem:[%s0 + $0x8] sm:$0xff]
  %v29 = vld [vmem:[%s0 + $0x10] sm:$0xff]
  %v30 = vld [vmem:[%s0 + $0x18] sm:$0xff]
  %v31 = vld [vmem:[%s1] sm:$0xf]
  %v32 = vld [vmem:[%s1 + $0x4] sm:$0xf]
  %v33 = vld [vmem:[%s1 + $0x8] sm:$0xf]
  %v34 = vld [vmem:[%s1 + $0xc] sm:$0xf]
  %v35 = vld [vmem:[%s1 + $0x10] sm:$0xf]
  %v36 = vld [vmem:[%s1 + $0x14] sm:$0xf]
  %v37 = vld [vmem:[%s1 + $0x18] sm:$0xf]
  %v38 = vld [vmem:[%s1 + $0x1c] sm:$0xf]
  %v39 = vld [vmem:[%s1 + $0x20] sm:$0xf]
  %v40 = vld [vmem:[%s1 + $0x24] sm:$0xf]
  %v41 = vld [vmem:[%s1 + $0x28] sm:$0xf]
  %v42 = vld [vmem:[%s1 + $0x2c] sm:$0xf]
  %v43 = vld [vmem:[%s1 + $0x30] sm:$0xf]
  %v44 = vld [vmem:[%s1 + $0x34] sm:$0xf]
  %v45 = vld [vmem:[%s1 + $0x38] sm:$0xf]
  %v46 = vld [vmem:[%s1 + $0x3c] sm:$0xf]
  %v47 = vld [vmem:[%s1 + $0x40] sm:$0xf]
  %v48 = vld [vmem:[%s1 + $0x44] sm:$0xf]
  %v49 = vld [vmem:[%s1 + $0x48] sm:$0xf]
  %v50 = vld [vmem:[%s1 + $0x4c] sm:$0xf]
  %v51 = vld [vmem:[%s1 + $0x50] sm:$0xf]
  %v52 = vld [vmem:[%s1 + $0x54] sm:$0xf]
  %v53 = vld [vmem:[%s1 + $0x58] sm:$0xf]
  %v54 = vld [vmem:[%s1 + $0x5c] sm:$0xf]
  %v55 = vld [vmem:[%s1 + $0x60] sm:$0xf]
  %v56 = vld [vmem:[%s1 + $0x64] sm:$0xf]
  %v57 = vld [vmem:[%s1 + $0x68] sm:$0xf]
  %v58 = vld [vmem:[%s1 + $0x6c] sm:$0xf]
  %v59 = vld [vmem:[%s1 + $0x70] sm:$0xf]
  %v60 = vld [vmem:[%s1 + $0x74] sm:$0xf]
  %v61 = vld [vmem:[%s1 + $0x78] sm:$0xf]
  %v62 = vld [vmem:[%s1 + $0x7c] sm:$0xf]
  %v67 = vunpack.c.l.b16 %v27
  %v68 = vunpack.c.h.b16 %v27
  %v69 = vunpack.c.l.b16 %v28
  %v70 = vunpack.c.h.b16 %v28
  %v71 = vunpack.c.l.b16 %v29
  %v72 = vunpack.c.h.b16 %v29
  %v73 = vunpack.c.l.b16 %v30
  %v74 = vunpack.c.h.b16 %v30
  %v75 = vpack.c.b16 %v69, %v67
  %v76 = vpack.c.b16 %v70, %v68
  %v77 = vpack.c.b16 %v73, %v71
  %v78 = vpack.c.b16 %v74, %v72
  %v115 = vunpack.c.l.b16 %v31
  %v116 = vunpack.c.l.b16 %v32
  %v117 = vunpack.c.l.b16 %v33
  %v118 = vunpack.c.l.b16 %v34
  %v119 = vunpack.c.l.b16 %v35
  %v120 = vunpack.c.l.b16 %v36
  %v121 = vunpack.c.l.b16 %v37
  %v122 = vunpack.c.l.b16 %v38
  %v123 = vunpack.c.l.b16 %v39
  %v124 = vunpack.c.l.b16 %v40
  %v125 = vunpack.c.l.b16 %v41
  %v126 = vunpack.c.l.b16 %v42
  %v127 = vunpack.c.l.b16 %v43
  %v128 = vunpack.c.l.b16 %v44
  %v129 = vunpack.c.l.b16 %v45
  %v130 = vunpack.c.l.b16 %v46
  %v131 = vunpack.c.l.b16 %v47
  %v132 = vunpack.c.l.b16 %v48
  %v133 = vunpack.c.l.b16 %v49
  %v134 = vunpack.c.l.b16 %v50
  %v135 = vunpack.c.l.b16 %v51
  %v136 = vunpack.c.l.b16 %v52
  %v137 = vunpack.c.l.b16 %v53
  %v138 = vunpack.c.l.b16 %v54
  %v139 = vunpack.c.l.b16 %v55
  %v140 = vunpack.c.l.b16 %v56
  %v141 = vunpack.c.l.b16 %v57
  %v142 = vunpack.c.l.b16 %v58
  %v143 = vunpack.c.l.b16 %v59
  %v144 = vunpack.c.l.b16 %v60
  %v145 = vunpack.c.l.b16 %v61
  %v146 = vunpack.c.l.b16 %v62
  %v147 = vpack.c.b16 %v116, %v115
  %v148 = vpack.c.b16 %v118, %v117
  %v149 = vpack.c.b16 %v120, %v119
  %v150 = vpack.c.b16 %v122, %v121
  %v151 = vpack.c.b16 %v124, %v123
  %v152 = vpack.c.b16 %v126, %v125
  %v153 = vpack.c.b16 %v128, %v127
  %v154 = vpack.c.b16 %v130, %v129
  %v155 = vpack.c.b16 %v132, %v131
  %v156 = vpack.c.b16 %v134, %v133
  %v157 = vpack.c.b16 %v136, %v135
  %v158 = vpack.c.b16 %v138, %v137
  %v159 = vpack.c.b16 %v140, %v139
  %v160 = vpack.c.b16 %v142, %v141
  %v161 = vpack.c.b16 %v144, %v143
  %v162 = vpack.c.b16 %v146, %v145
  %179 = vmatprep.subr.bf16.mxu0 0
  %180 = vmatpush1.bf16.msra.mxu0 %v147
  %181 = vmatprep.subr.bf16.mxu0 0
  %182 = vmatpush1.bf16.msra.mxu0 %v148
  %183 = vmatprep.subr.bf16.mxu0 0
  %184 = vmatpush1.bf16.msra.mxu0 %v149
  %185 = vmatprep.subr.bf16.mxu0 0
  %186 = vmatpush1.bf16.msra.mxu0 %v150
  %187 = vmatprep.subr.bf16.mxu0 0
  %188 = vmatpush1.bf16.msra.mxu0 %v151
  %189 = vmatprep.subr.bf16.mxu0 0
  %190 = vmatpush1.bf16.msra.mxu0 %v152
  %191 = vmatprep.subr.bf16.mxu0 0
  %192 = vmatpush1.bf16.msra.mxu0 %v153
  %193 = vmatprep.subr.bf16.mxu0 0
  %194 = vmatpush1.bf16.msra.mxu0 %v154
  %195 = vmatprep.subr.bf16.mxu0 0
  %196 = vmatpush1.bf16.msra.mxu0 %v155
  %197 = vmatprep.subr.bf16.mxu0 0
  %198 = vmatpush1.bf16.msra.mxu0 %v156
  %199 = vmatprep.subr.bf16.mxu0 0
  %200 = vmatpush1.bf16.msra.mxu0 %v157
  %201 = vmatprep.subr.bf16.mxu0 0
  %202 = vmatpush1.bf16.msra.mxu0 %v158
  %203 = vmatprep.subr.bf16.mxu0 0
  %204 = vmatpush1.bf16.msra.mxu0 %v159
  %205 = vmatprep.subr.bf16.mxu0 0
  %206 = vmatpush1.bf16.msra.mxu0 %v160
  %207 = vmatprep.subr.bf16.mxu0 0
  %208 = vmatpush1.bf16.msra.mxu0 %v161
  %209 = vmatprep.subr.bf16.mxu0 0
  %210 = vmatpush1.bf16.msra.mxu0 %v162
  %211 = vmatprep.mubr.bf16.mxu0 %v76
  %212 = vmatmul.mubr.bf16.gmra.mrb[0].mxu0 %v75
  %v213 = vpop.f32.mrb[0].mxu0
  %v214 = vadd.f32 0.0, %v213
  %v215 = vpop.f32.mrb[0].mxu0
  %v216 = vpop.f32.mrb[0].mxu0
  %v217 = vadd.f32 0.0, %v216
  %v218 = vpop.f32.mrb[0].mxu0
  %219 = vmatprep.mubr.bf16.mxu0 %v78
  %220 = vmatmul.mubr.bf16.gmra.mrb[0].mxu0 %v77
  %v221 = vpop.f32.mrb[0].mxu0
  %v222 = vadd.f32 0.0, %v221
  %v223 = vpop.f32.mrb[0].mxu0
  %v224 = vpop.f32.mrb[0].mxu0
  %v225 = vadd.f32 0.0, %v224
  %v226 = vpop.f32.mrb[0].mxu0
  %227 = vdwg.mxu0
  %v228 = vadd.f32 %v23, %v214
  %v229 = vadd.f32 %v24, %v217
  %v230 = vadd.f32 %v25, %v222
  %v231 = vadd.f32 %v26, %v225
  %232 = vst [vmem:[#allocation2] sm:$0xff] %v228
  %233 = vst [vmem:[#allocation2 + $0x8] sm:$0xff] %v229
  %234 = vst [vmem:[#allocation2 + $0x10] sm:$0xff] %v230
  %235 = vst [vmem:[#allocation2 + $0x18] sm:$0xff] %v231
  // Predicated region
  $region18: #{_lambda_.42} parent=0 // pred_check
    %p236 = pneg %p15
  $region19: #{_lambda_.42} parent=0 // pred_check_branch
    %238 = sbr.rel (%p236) target = $region21
  $region20: #{_lambda_.42} parent=0 // pred_region
    %v239 = vld [vmem:[#allocation2] sm:$0xff]
    %v240 = vld [vmem:[#allocation2 + $0x8] sm:$0xff]
    %v241 = vld [vmem:[#allocation2 + $0x10] sm:$0xff]
    %v242 = vld [vmem:[#allocation2 + $0x18] sm:$0xff]
    %v243 = vld [vmem:[%s2] sm:$0x1]
    %v245 = vlaneseq
    %v246 = vshrl.u32 %v245, 7
    %v247 = vsub.s32 0, %v246
    %v248 = vrot.slane %v243, %v247
    %v250 = vadd.f32 %v239, %v248
    %v251 = vadd.f32 %v240, %v248
    %v252 = vadd.f32 %v241, %v248
    %v253 = vadd.f32 %v242, %v248
    %v254 = vmax.f32 %v250, 0.0
    %v255 = vmax.f32 %v251, 0.0
    %v256 = vmax.f32 %v252, 0.0
    %v257 = vmax.f32 %v253, 0.0
    %v258 = vpack.c.bf16 %v255, %v254
    %v259 = vpack.c.bf16 %v257, %v256
    %v262 = vunpack.c.l.b16 %v258
    %v263 = vunpack.c.h.b16 %v258
    %v264 = vunpack.c.l.b16 %v259
    %v265 = vunpack.c.h.b16 %v259
    %v266 = vpack.c.b16 %v262, %v262
    %v267 = vpack.c.b16 %v263, %v263
    %v268 = vpack.c.b16 %v264, %v264
    %v269 = vpack.c.b16 %v265, %v265
    %274 = vst [vmem:[%s3] sm:$0xf] %v266
    %275 = vst [vmem:[%s3 + $0x4] sm:$0xf] %v267
    %276 = vst [vmem:[%s3 + $0x8] sm:$0xf] %v268
    %277 = vst [vmem:[%s3 + $0xc] sm:$0xf] %v269
  $region21: #{_lambda_.42} parent=0 // pred_fallthru
    _
  // Predicated region
  $region22: #{_lambda_.42} parent=0 // pred_check
    _
  $region23: #{_lambda_.42} parent=0 // pred_check_branch
    %279 = sbr.rel (0) target = $region25
  $region24: #{_lambda_.42} parent=0 // pred_region
    _
  $region25: #{_lambda_.42} parent=0 // pred_fallthru
    _
  // Predicated region
  $region26: #{_lambda_.42} parent=0 // pred_check
    _
  $region27: #{_lambda_.42} parent=0 // pred_check_branch
    %281 = sbr.rel (0) target = $region29
  $region28: #{_lambda_.42} parent=0 // pred_region
    _
  $region29: #{_lambda_.42} parent=0 // pred_fallthru
    _

// kernel: _lambda_.45
$region0: #{_lambda_.45}
  #allocation0 [shape = 'u32[]', space=smem, size = 0x4, offset = 0x4, fixed_abs, tag = 'smem constant byte address 0x4 - core index']
  #allocation1 [shape = 'u32[144,128]{1,0:T(1,128)}', space=vmem, size = 0x12000, scoped, tag = 'internal scratch']
  #allocation2 [shape = 'f32[8,128]{1,0:T(8,128)}', space=vmem, size = 0x1000, scoped, tag = 'scratch operand']
  %s0 = inlined_call_operand.vmem [shape: bf16[8,256], index: 0, kind: input, shape index: {}]
  %s1 = inlined_call_operand.vmem [shape: bf16[256,128], index: 1, kind: input, shape index: {}]
  %s2 = inlined_call_operand.vmem [shape: f32[1,128], index: 2, kind: input, shape index: {}]
  %s3 = inlined_call_operand.vmem [shape: f32[8,128], index: 3, kind: output, shape index: {}]
  %s4 = sld [smem:[#allocation0]]
  $region30: #{_lambda_.45} parent=0
    _
  %s6 = ssub.s32 1, %s4
  %s7 = scalar_select 0, %s6, %s4
  // Predicated region
  $region2: #{_lambda_.45} parent=0 // pred_check
    _
  $region3: #{_lambda_.45} parent=0 // pred_check_branch
    %9 = sbr.rel (0) target = $region5
  $region4: #{_lambda_.45} parent=0 // pred_region
    _
  $region5: #{_lambda_.45} parent=0 // pred_fallthru
    _
  // Predicated region
  $region6: #{_lambda_.45} parent=0 // pred_check
    _
  $region7: #{_lambda_.45} parent=0 // pred_check_branch
    %11 = sbr.rel (0) target = $region9
  $region8: #{_lambda_.45} parent=0 // pred_region
    _
  $region9: #{_lambda_.45} parent=0 // pred_fallthru
    _
  // Predicated region
  $region10: #{_lambda_.45} parent=0 // pred_check
    _
  $region11: #{_lambda_.45} parent=0 // pred_check_branch
    %13 = sbr.rel (0) target = $region13
  $region12: #{_lambda_.45} parent=0 // pred_region
    _
  $region13: #{_lambda_.45} parent=0 // pred_fallthru
    _
  %p15 = scmp.eq.s32.totalorder 0, 0
  // Predicated region
  $region14: #{_lambda_.45} parent=0 // pred_check
    %p16 = pneg %p15
  $region15: #{_lambda_.45} parent=0 // pred_check_branch
    %18 = sbr.rel (%p16) target = $region17
  $region16: #{_lambda_.45} parent=0 // pred_region
    %19 = vst [vmem:[#allocation2] sm:$0xff] 0.0
  $region17: #{_lambda_.45} parent=0 // pred_fallthru
    _
  %v20 = vld [vmem:[#allocation2] sm:$0xff]
  %v21 = vld [vmem:[%s0] sm:$0xff]
  %v22 = vld [vmem:[%s1] sm:$0xf]
  %v23 = vld [vmem:[%s1 + $0x4] sm:$0xf]
  %v24 = vld [vmem:[%s1 + $0x8] sm:$0xf]
  %v25 = vld [vmem:[%s1 + $0xc] sm:$0xf]
  %v26 = vld [vmem:[%s1 + $0x10] sm:$0xf]
  %v27 = vld [vmem:[%s1 + $0x14] sm:$0xf]
  %v28 = vld [vmem:[%s1 + $0x18] sm:$0xf]
  %v29 = vld [vmem:[%s1 + $0x1c] sm:$0xf]
  %v30 = vld [vmem:[%s1 + $0x20] sm:$0xf]
  %v31 = vld [vmem:[%s1 + $0x24] sm:$0xf]
  %v32 = vld [vmem:[%s1 + $0x28] sm:$0xf]
  %v33 = vld [vmem:[%s1 + $0x2c] sm:$0xf]
  %v34 = vld [vmem:[%s1 + $0x30] sm:$0xf]
  %v35 = vld [vmem:[%s1 + $0x34] sm:$0xf]
  %v36 = vld [vmem:[%s1 + $0x38] sm:$0xf]
  %v37 = vld [vmem:[%s1 + $0x3c] sm:$0xf]
  %v38 = vld [vmem:[%s1 + $0x40] sm:$0xf]
  %v39 = vld [vmem:[%s1 + $0x44] sm:$0xf]
  %v40 = vld [vmem:[%s1 + $0x48] sm:$0xf]
  %v41 = vld [vmem:[%s1 + $0x4c] sm:$0xf]
  %v42 = vld [vmem:[%s1 + $0x50] sm:$0xf]
  %v43 = vld [vmem:[%s1 + $0x54] sm:$0xf]
  %v44 = vld [vmem:[%s1 + $0x58] sm:$0xf]
  %v45 = vld [vmem:[%s1 + $0x5c] sm:$0xf]
  %v46 = vld [vmem:[%s1 + $0x60] sm:$0xf]
  %v47 = vld [vmem:[%s1 + $0x64] sm:$0xf]
  %v48 = vld [vmem:[%s1 + $0x68] sm:$0xf]
  %v49 = vld [vmem:[%s1 + $0x6c] sm:$0xf]
  %v50 = vld [vmem:[%s1 + $0x70] sm:$0xf]
  %v51 = vld [vmem:[%s1 + $0x74] sm:$0xf]
  %v52 = vld [vmem:[%s1 + $0x78] sm:$0xf]
  %v53 = vld [vmem:[%s1 + $0x7c] sm:$0xf]
  %v55 = vunpack.c.l.b16 %v21
  %v56 = vunpack.c.h.b16 %v21
  %v57 = vpack.c.b16 %v55, %v55
  %v58 = vpack.c.b16 %v56, %v56
  %v93 = vunpack.c.l.b16 %v22
  %v94 = vunpack.c.l.b16 %v23
  %v95 = vunpack.c.l.b16 %v24
  %v96 = vunpack.c.l.b16 %v25
  %v97 = vunpack.c.l.b16 %v26
  %v98 = vunpack.c.l.b16 %v27
  %v99 = vunpack.c.l.b16 %v28
  %v100 = vunpack.c.l.b16 %v29
  %v101 = vunpack.c.l.b16 %v30
  %v102 = vunpack.c.l.b16 %v31
  %v103 = vunpack.c.l.b16 %v32
  %v104 = vunpack.c.l.b16 %v33
  %v105 = vunpack.c.l.b16 %v34
  %v106 = vunpack.c.l.b16 %v35
  %v107 = vunpack.c.l.b16 %v36
  %v108 = vunpack.c.l.b16 %v37
  %v109 = vunpack.c.l.b16 %v38
  %v110 = vunpack.c.l.b16 %v39
  %v111 = vunpack.c.l.b16 %v40
  %v112 = vunpack.c.l.b16 %v41
  %v113 = vunpack.c.l.b16 %v42
  %v114 = vunpack.c.l.b16 %v43
  %v115 = vunpack.c.l.b16 %v44
  %v116 = vunpack.c.l.b16 %v45
  %v117 = vunpack.c.l.b16 %v46
  %v118 = vunpack.c.l.b16 %v47
  %v119 = vunpack.c.l.b16 %v48
  %v120 = vunpack.c.l.b16 %v49
  %v121 = vunpack.c.l.b16 %v50
  %v122 = vunpack.c.l.b16 %v51
  %v123 = vunpack.c.l.b16 %v52
  %v124 = vunpack.c.l.b16 %v53
  %v125 = vpack.c.b16 %v94, %v93
  %v126 = vpack.c.b16 %v96, %v95
  %v127 = vpack.c.b16 %v98, %v97
  %v128 = vpack.c.b16 %v100, %v99
  %v129 = vpack.c.b16 %v102, %v101
  %v130 = vpack.c.b16 %v104, %v103
  %v131 = vpack.c.b16 %v106, %v105
  %v132 = vpack.c.b16 %v108, %v107
  %v133 = vpack.c.b16 %v110, %v109
  %v134 = vpack.c.b16 %v112, %v111
  %v135 = vpack.c.b16 %v114, %v113
  %v136 = vpack.c.b16 %v116, %v115
  %v137 = vpack.c.b16 %v118, %v117
  %v138 = vpack.c.b16 %v120, %v119
  %v139 = vpack.c.b16 %v122, %v121
  %v140 = vpack.c.b16 %v124, %v123
  %157 = vmatprep.subr.bf16.mxu0 0
  %158 = vmatpush1.bf16.msra.mxu0 %v125
  %159 = vmatprep.subr.bf16.mxu0 0
  %160 = vmatpush1.bf16.msra.mxu0 %v126
  %161 = vmatprep.subr.bf16.mxu0 0
  %162 = vmatpush1.bf16.msra.mxu0 %v127
  %163 = vmatprep.subr.bf16.mxu0 0
  %164 = vmatpush1.bf16.msra.mxu0 %v128
  %165 = vmatprep.subr.bf16.mxu0 0
  %166 = vmatpush1.bf16.msra.mxu0 %v129
  %167 = vmatprep.subr.bf16.mxu0 0
  %168 = vmatpush1.bf16.msra.mxu0 %v130
  %169 = vmatprep.subr.bf16.mxu0 0
  %170 = vmatpush1.bf16.msra.mxu0 %v131
  %171 = vmatprep.subr.bf16.mxu0 0
  %172 = vmatpush1.bf16.msra.mxu0 %v132
  %173 = vmatprep.subr.bf16.mxu0 0
  %174 = vmatpush1.bf16.msra.mxu0 %v133
  %175 = vmatprep.subr.bf16.mxu0 0
  %176 = vmatpush1.bf16.msra.mxu0 %v134
  %177 = vmatprep.subr.bf16.mxu0 0
  %178 = vmatpush1.bf16.msra.mxu0 %v135
  %179 = vmatprep.subr.bf16.mxu0 0
  %180 = vmatpush1.bf16.msra.mxu0 %v136
  %181 = vmatprep.subr.bf16.mxu0 0
  %182 = vmatpush1.bf16.msra.mxu0 %v137
  %183 = vmatprep.subr.bf16.mxu0 0
  %184 = vmatpush1.bf16.msra.mxu0 %v138
  %185 = vmatprep.subr.bf16.mxu0 0
  %186 = vmatpush1.bf16.msra.mxu0 %v139
  %187 = vmatprep.subr.bf16.mxu0 0
  %188 = vmatpush1.bf16.msra.mxu0 %v140
  %189 = vmatprep.mubr.bf16.mxu0 %v58
  %190 = vmatmul.mubr.bf16.gmra.mrb[0].mxu0 %v57
  %v191 = vpop.f32.mrb[0].mxu0
  %v192 = vadd.f32 0.0, %v191
  %v193 = vpop.f32.mrb[0].mxu0
  %v194 = vpop.f32.mrb[0].mxu0
  %v195 = vpop.f32.mrb[0].mxu0
  %196 = vdwg.mxu0
  %v197 = vadd.f32 %v20, %v192
  %198 = vst [vmem:[#allocation2] sm:$0xff] %v197
  // Predicated region
  $region18: #{_lambda_.45} parent=0 // pred_check
    %p199 = pneg %p15
  $region19: #{_lambda_.45} parent=0 // pred_check_branch
    %201 = sbr.rel (%p199) target = $region21
  $region20: #{_lambda_.45} parent=0 // pred_region
    %v202 = vld [vmem:[#allocation2] sm:$0xff]
    %v203 = vld [vmem:[%s2] sm:$0x1]
    %v205 = vlaneseq
    %v206 = vshrl.u32 %v205, 7
    %v207 = vsub.s32 0, %v206
    %v208 = vrot.slane %v203, %v207
    %v210 = vadd.f32 %v202, %v208
    %211 = vmax.xlane.f32.xlu0 %v210
    %v212 = vpop.xlane.xlu0 %211
    %v213 = vsub.f32 %v210, %v212
    %v214 = vmul.f32 %v213, 1.442695
    %v215 = vpow.pop %v214
    %216 = vadd.xlane.f32.xlu0 %v215
    %v217 = vpop.xlane.xlu0 %216
    %v218 = vrcp.pop %v217
    %v219 = vmul.f32 %v215, %v218
    %220 = vst [vmem:[%s3] sm:$0xff] %v219
  $region21: #{_lambda_.45} parent=0 // pred_fallthru
    _
  // Predicated region
  $region22: #{_lambda_.45} parent=0 // pred_check
    _
  $region23: #{_lambda_.45} parent=0 // pred_check_branch
    %222 = sbr.rel (0) target = $region25
  $region24: #{_lambda_.45} parent=0 // pred_region
    _
  $region25: #{_lambda_.45} parent=0 // pred_fallthru
    _
  // Predicated region
  $region26: #{_lambda_.45} parent=0 // pred_check
    _
  $region27: #{_lambda_.45} parent=0 // pred_check_branch
    %224 = sbr.rel (0) target = $region29
  $region28: #{_lambda_.45} parent=0 // pred_region
    _
  $region29: #{_lambda_.45} parent=0 // pred_fallthru
    _

</llo_original>
